<compile_context>
chip_gen: v5e
topology: v5e:2x2
jax: 0.10.0
libtpu: 0.0.40
codegen_flags: <defaults>
</compile_context>

<pallas_src>
import functools

import jax
import jax.numpy as jnp
from jax import lax
from jax.experimental import pallas as pl
from jax.experimental.pallas import tpu as pltpu


# shift (sy, sx) -> parities p = di*2 + dj it contributes to
_PAIR_SHIFTS = (            # shifts feeding exactly two parities
    ((-1, 0), (0, 1)),
    ((1, 0), (2, 3)),
    ((0, -1), (0, 2)),
    ((0, 1), (1, 3)),
)
_CORNER_SHIFTS = (          # shifts feeding exactly one parity
    ((-1, -1), 0),
    ((-1, 1), 1),
    ((1, -1), 2),
    ((1, 1), 3),
)
# (parity-axis value, shift along that axis) -> collapsed 3x3 kernel taps
_TAPS = {(0, -1): (0,), (0, 0): (1, 2), (1, 0): (0, 1), (1, 1): (2,)}


# ----------------------------------------------------------------------------
# Kernel
# ----------------------------------------------------------------------------
def _upsample_conv_kernel(*refs, W, C, pad, tiled):
    """One row-tile of one batch element.

    tiled=True refs : top_ref (1,W,C), x_ref (1,RT,C), bot_ref (1,W,C),
                      wc (C,4C), wp (4,C,2C), wk (4,C,C), b (1,C),
                      o_ref (1,4,RT,C), xs_ref (RT+2*pad,C), acc_ref (4,RT,C)
    tiled=False refs: same without top_ref/bot_ref (halo rows are the image
                      border -> zeros).
    """
    if tiled:
        (top_ref, x_ref, bot_ref, wc_ref, wp_ref, wk_ref, b_ref,
         o_ref, xs_ref, acc_ref) = refs
    else:
        (x_ref, wc_ref, wp_ref, wk_ref, b_ref,
         o_ref, xs_ref, acc_ref) = refs
        top_ref = bot_ref = None

    RT = x_ref.shape[1]                       # rows-per-tile * W (flat)
    zrow = jnp.zeros((W, C), xs_ref.dtype)

    # Assemble the zero-halo'd flat tile in VMEM (replaces the old HBM
    # jnp.pad pass).  Interior at [pad, pad+RT); one image row of halo on
    # each side.  The <8 sentinel rows outside the halo are only reached by
    # corner shifts at column-masked positions, so they need no init.
    xs_ref[pl.ds(pad, RT), :] = x_ref[0]
    if tiled:
        t = pl.program_id(1)
        last = pl.num_programs(1) - 1

        @pl.when(t == 0)
        def _():
            xs_ref[pl.ds(pad - W, W), :] = zrow

        @pl.when(t > 0)
        def _():
            xs_ref[pl.ds(pad - W, W), :] = top_ref[0]

        @pl.when(t == last)
        def _():
            xs_ref[pl.ds(pad + RT, W), :] = zrow

        @pl.when(t < last)
        def _():
            xs_ref[pl.ds(pad + RT, W), :] = bot_ref[0]
    else:
        xs_ref[pl.ds(pad - W, W), :] = zrow
        xs_ref[pl.ds(pad + RT, W), :] = zrow

    # Column index of each flat row; masks broadcast across lanes for free.
    j = lax.broadcasted_iota(jnp.int32, (RT, 1), 0) % W
    m_left = j > 0            # column j-1 exists (needed when sx == -1)
    m_right = j < (W - 1)     # column j+1 exists (needed when sx == +1)

    def shifted(sy, sx):
        xsv = xs_ref[pl.ds(pad + sy * W + sx, RT), :]
        if sx == 1:
            xsv = jnp.where(m_right, xsv, 0)
        elif sx == -1:
            xsv = jnp.where(m_left, xsv, 0)
        return xsv

    # Center shift feeds all four parities: one (RT,C)@(C,4C) matmul
    # initializes the accumulator slabs (no explicit zeroing).
    res = jnp.dot(x_ref[0], wc_ref[...], preferred_element_type=jnp.float32)
    for p in range(4):
        acc_ref[p] = res[:, p * C:(p + 1) * C]

    # Edge shifts: each feeds two parities -> one (RT,C)@(C,2C) matmul.
    for e, ((sy, sx), (p0, p1)) in enumerate(_PAIR_SHIFTS):
        r = jnp.dot(shifted(sy, sx), wp_ref[e],
                    preferred_element_type=jnp.float32)
        acc_ref[p0] += r[:, :C]
        acc_ref[p1] += r[:, C:]

    # Corner shifts: each feeds one parity.
    for e, ((sy, sx), p) in enumerate(_CORNER_SHIFTS):
        acc_ref[p] += jnp.dot(shifted(sy, sx), wk_ref[e],
                              preferred_element_type=jnp.float32)

    # Bias folded once per parity slab; aligned full-slab stores.
    for p in range(4):
        o_ref[0, p] = (acc_ref[p] + b_ref[...]).astype(o_ref.dtype)


# ----------------------------------------------------------------------------
# Glue: weight collapsing, VMEM budgeting, tiling selection
# ----------------------------------------------------------------------------
def _collapse_weights_packed(w_oihw):
    """(Co, Ci, 3, 3) OIHW -> per-shift collapsed (Ci, k*Co) blocks."""
    w = jnp.transpose(w_oihw, (2, 3, 1, 0))  # (ky, kx, Ci, Co)

    def block(p, sy, sx):
        di, dj = p // 2, p % 2
        return sum(w[ky, kx] for ky in _TAPS[(di, sy)] for kx in _TAPS[(dj, sx)])

    w_center = jnp.concatenate([block(p, 0, 0) for p in range(4)], axis=-1)
    w_pairs = jnp.stack(
        [jnp.concatenate([block(p, sy, sx) for p in ps], axis=-1)
         for (sy, sx), ps in _PAIR_SHIFTS], axis=0)
    w_corners = jnp.stack(
        [block(p, sy, sx) for (sy, sx), p in _CORNER_SHIFTS], axis=0)
    return w_center, w_pairs, w_corners       # (Ci,4Co), (4,Ci,2Co), (4,Ci,Co)


def _vmem_budget_bytes():
    """Generation-aware scoped-VMEM budget (~80% of physical capacity)."""
    cap = 64 << 20
    try:
        info = pltpu.get_tpu_info()
        cap = int(getattr(info, "vmem_capacity_bytes", cap)) or cap
    except Exception:
        pass
    return max(32 << 20, int(cap * 0.80))


def _conv_vmem_need(RT, W, C, isz, pad, tiled):
    """Per-grid-step VMEM footprint, incl. compiler-managed f32 temps."""
    in_blk = RT * C * isz
    out_blk = RT * 4 * C * isz
    halo = (2 * W * C * isz) if tiled else 0
    w_bytes = 16 * C * C * isz + C * 4
    xs = (RT + 2 * pad) * C * isz
    acc = RT * 4 * C * 4
    f32_tmp = 3 * RT * 4 * C * 4      # dot results / bias-add / cast temps
    return (2 * (in_blk + out_blk + halo + w_bytes)
            + xs + acc + f32_tmp + (2 << 20))


def _pick_row_tile(H, W, C, isz, pad, budget, max_rows):
    """Largest rows-per-tile (divisor of H) whose footprint fits the budget."""
    cands = []
    for d in range(H, 0, -1):
        if H % d:
            continue
        # Tiled (<H) needs the (1, W, C) halo blocks to satisfy the sublane
        # rule; untiled (==H) always allowed (block == full array dims).
        if d == H or (W % 8 == 0 and (d * W) % 8 == 0):
            cands.append(d)
    if max_rows is not None:
        limited = [d for d in cands if d <= max_rows]
        cands = limited or cands
    for d in cands:
        if _conv_vmem_need(d * W, W, C, isz, pad, d < H) <= budget:
            return d
    return cands[-1]


# ----------------------------------------------------------------------------
# Forward wrapper
# ----------------------------------------------------------------------------
@functools.partial(jax.jit, static_argnames=("use_conv", "max_rows_per_tile"))
def upsample_forward(x_nchw, use_conv, weight=None, bias=None,
                     max_rows_per_tile=None):
    """x_nchw: (N, C, H, W).  Returns (N, C, 2H, 2W) in x's dtype."""
    N, C, H, W = x_nchw.shape
    HW = H * W
    dtype = x_nchw.dtype
    isz = dtype.itemsize

    if not use_conv:
        # Pure nearest-2x is a single mem-bound replication pass; a Pallas
        # kernel here only adds an extra HBM round trip (perf review #11).
        u = jnp.broadcast_to(x_nchw[:, :, :, None, :, None],
                             (N, C, H, 2, W, 2))
        return u.reshape(N, C, 2 * H, 2 * W)

    # NHWC, spatial flattened: each tile is a (rows, C) matrix (C on lanes).
    x_flat = jnp.transpose(x_nchw, (0, 2, 3, 1)).reshape(N, HW, C)

    wc, wp, wk = _collapse_weights_packed(weight.astype(jnp.float32))
    wc, wp, wk = wc.astype(dtype), wp.astype(dtype), wk.astype(dtype)
    b2 = bias.astype(jnp.float32).reshape(1, C)

    pad = max(8, -(-(W + 1) // 8) * 8)   # >= W+1 and 8-aligned scratch interior
    budget = _vmem_budget_bytes()
    TM = _pick_row_tile(H, W, C, isz, pad, budget, max_rows_per_tile)
    T = H // TM
    RT = TM * W
    tiled = T > 1

    need = _conv_vmem_need(RT, W, C, isz, pad, tiled)
    cparams = pltpu.CompilerParams(
        dimension_semantics=("parallel", "parallel") if tiled else ("parallel",),
        vmem_limit_bytes=int(min(budget, max(need, 32 << 20))))

    kernel = functools.partial(_upsample_conv_kernel, W=W, C=C, pad=pad,
                               tiled=tiled)
    out_shape = jax.ShapeDtypeStruct((N, 4, HW, C), dtype)
    scratch = [pltpu.VMEM((RT + 2 * pad, C), dtype),      # halo'd input tile
               pltpu.VMEM((4, RT, C), jnp.float32)]        # parity accumulators

    # TODO(synk): single-buffer the grid-invariant weight/bias blocks
    # (pipeline_mode=pl.Buffered(1)), K-pack shift pairs when C<=128 for the
    # 256-wide v6e/v7x MXU, and batch several N per block for tiny HW*C.
    if tiled:
        in_specs = [
            pl.BlockSpec((1, W, C),
                         lambda n, t: (n, jnp.maximum(t * TM - 1, 0), 0)),
            pl.BlockSpec((1, RT, C), lambda n, t: (n, t, 0)),
            pl.BlockSpec((1, W, C),
                         lambda n, t: (n, jnp.minimum((t + 1) * TM, H - 1), 0)),
            pl.BlockSpec((C, 4 * C), lambda n, t: (0, 0)),
            pl.BlockSpec((4, C, 2 * C), lambda n, t: (0, 0, 0)),
            pl.BlockSpec((4, C, C), lambda n, t: (0, 0, 0)),
            pl.BlockSpec((1, C), lambda n, t: (0, 0)),
        ]
        out_specs = pl.BlockSpec((1, 4, RT, C), lambda n, t: (n, 0, t, 0))
        grid = (N, T)
        args = (x_flat, x_flat, x_flat, wc, wp, wk, b2)
    else:
        in_specs = [
            pl.BlockSpec((1, HW, C), lambda n: (n, 0, 0)),
            pl.BlockSpec((C, 4 * C), lambda n: (0, 0)),
            pl.BlockSpec((4, C, 2 * C), lambda n: (0, 0, 0)),
            pl.BlockSpec((4, C, C), lambda n: (0, 0, 0)),
            pl.BlockSpec((1, C), lambda n: (0, 0)),
        ]
        out_specs = pl.BlockSpec((1, 4, HW, C), lambda n: (n, 0, 0, 0))
        grid = (N,)
        args = (x_flat, wc, wp, wk, b2)

    out = pl.pallas_call(
        kernel,
        out_shape=out_shape,
        grid=grid,
        in_specs=in_specs,
        out_specs=out_specs,
        scratch_shapes=scratch,
        compiler_params=cparams,
    )(*args)

    # (N, 4=di*2+dj, HW, C) -> (N, H, 2, W, 2, C) -> NCHW.  Under jit XLA
    # fuses this into a single transpose.
    # TODO(synk): emit NCHW (or lane-dense interleaved NHWC for C % 128 == 0)
    # directly from the kernel to remove this last HBM pass.
    y = out.reshape(N, 2, 2, H, W, C).transpose(0, 3, 1, 4, 2, 5)
    y = y.reshape(N, 2 * H, 2 * W, C)
    return jnp.transpose(y, (0, 3, 1, 2))


class Upsample:
    """JAX/Pallas port of the PyTorch Upsample module (deterministic init)."""

    def __init__(self, channels: int, use_conv: bool, key=None):
        self.channels = channels
        self.use_conv = use_conv
        self.weight = None
        self.bias = None
        if use_conv:
            key = jax.random.PRNGKey(42) if key is None else key
            kw, kb = jax.random.split(key)
            fan_in = channels * 3 * 3
            bound = 1.0 / (fan_in ** 0.5)  # matches PyTorch Conv2d default init
            self.weight = jax.random.uniform(
                kw, (channels, channels, 3, 3), jnp.float32, -bound, bound
            )  # OIHW
            self.bias = jax.random.uniform(
                kb, (channels,), jnp.float32, -bound, bound
            )

    def __call__(self, x_nchw):
        return upsample_forward(
            x_nchw, use_conv=self.use_conv, weight=self.weight, bias=self.bias)


# ----------------------------------------------------------------------------
# Reference (plain JAX / XLA) for validation
# ----------------------------------------------------------------------------
def _reference(x_nchw, use_conv, weight, bias):
    u = jnp.repeat(jnp.repeat(x_nchw, 2, axis=2), 2, axis=3)
    if not use_conv:
        return u
    y = lax.conv_general_dilated(
        u, weight, window_strides=(1, 1), padding=((1, 1), (1, 1)),
        dimension_numbers=("NCHW", "OIHW", "NCHW"),
    )
    return y + bias.reshape(1, -1, 1, 1)


if __name__ == "__main__":
    key = jax.random.PRNGKey(0)
    N, C, H, W = 2, 4, 16, 16
    x = jax.random.normal(key, (N, C, H, W), jnp.float32)

    # use_conv = True path (upsample + 3x3 conv), one full image per block.
    mod = Upsample(C, use_conv=True)
    y_ref = _reference(x, True, mod.weight, mod.bias)
    y = jax.block_until_ready(mod(x))
    assert y.shape == (N, C, 2 * H, 2 * W), y.shape
    assert y.dtype == x.dtype, y.dtype
    err = float(jnp.max(jnp.abs(y - y_ref)))
    assert jnp.allclose(y, y_ref, atol=1e-4, rtol=1e-4), err

    # use_conv = True with forced row tiling (exercises the halo-row grid axis).
    y_t = jax.block_until_ready(
        upsample_forward(x, use_conv=True, weight=mod.weight, bias=mod.bias,
                         max_rows_per_tile=4))
    err_t = float(jnp.max(jnp.abs(y_t - y_ref)))
    assert jnp.allclose(y_t, y_ref, atol=1e-4, rtol=1e-4), err_t

    # use_conv = False path (pure nearest upsample, XLA replication).
    mod2 = Upsample(C, use_conv=False)
    y2 = jax.block_until_ready(mod2(x))
    y2_ref = _reference(x, False, None, None)
    assert y2.shape == (N, C, 2 * H, 2 * W), y2.shape
    assert jnp.allclose(y2, y2_ref), float(jnp.max(jnp.abs(y2 - y2_ref)))

    print("KERNEL_OK")
</pallas_src>

<mosaic_0001>
module attributes {stable_mosaic.version = 11 : i64} {
  func.func @_upsample_conv_kernel(%arg0: i32, %arg1: memref<1x256x4xf32, #tpu.memory_space<vmem>>, %arg2: memref<4x16xf32, #tpu.memory_space<vmem>>, %arg3: memref<4x4x8xf32, #tpu.memory_space<vmem>>, %arg4: memref<4x4x4xf32, #tpu.memory_space<vmem>>, %arg5: memref<1x4xf32, #tpu.memory_space<vmem>>, %arg6: memref<1x4x256x4xf32, #tpu.memory_space<vmem>>, %arg7: memref<304x4xf32, #tpu.memory_space<vmem>>, %arg8: memref<4x256x4xf32, #tpu.memory_space<vmem>>) attributes {dimension_semantics = [#tpu.dimension_semantics<parallel>], iteration_bounds = array<i64: 2>, scalar_prefetch = 0 : i64, scratch_operands = 2 : i64, tpu.core_type = #tpu.core_type<tc>, window_params = [{transform_indices = @transform_0, window_bounds = array<i64: 1, 256, 4>}, {pipeline_mode = #tpu.pipeline_mode<synchronous>, transform_indices = @transform_1, window_bounds = array<i64: 4, 16>}, {pipeline_mode = #tpu.pipeline_mode<synchronous>, transform_indices = @transform_2, window_bounds = array<i64: 4, 4, 8>}, {pipeline_mode = #tpu.pipeline_mode<synchronous>, transform_indices = @transform_3, window_bounds = array<i64: 4, 4, 4>}, {pipeline_mode = #tpu.pipeline_mode<synchronous>, transform_indices = @transform_4, window_bounds = array<i64: 1, 4>}, {transform_indices = @transform_5, window_bounds = array<i64: 1, 4, 256, 4>}]} {
    %cst = arith.constant 0.000000e+00 : f32
    %0 = vector.broadcast %cst : f32 to vector<16x4xf32>
    %c0 = arith.constant 0 : index
    %c0_0 = arith.constant 0 : index
    %c0_1 = arith.constant 0 : index
    %1 = vector.load %arg1[%c0, %c0_0, %c0_1] : memref<1x256x4xf32, #tpu.memory_space<vmem>>, vector<1x256x4xf32>
    %2 = vector.shape_cast %1 : vector<1x256x4xf32> to vector<256x4xf32>
    %c24 = arith.constant 24 : index
    %c0_2 = arith.constant 0 : index
    %3 = vector.load %arg7[%c24, %c0_2] : memref<304x4xf32, #tpu.memory_space<vmem>>, vector<256x4xf32>
    tpu.vector_store %arg7[%c24, %c0_2], %2 {strides = array<i32>} : memref<304x4xf32, #tpu.memory_space<vmem>>, vector<256x4xf32>,
    %c8 = arith.constant 8 : index
    %c0_3 = arith.constant 0 : index
    %4 = vector.load %arg7[%c8, %c0_3] : memref<304x4xf32, #tpu.memory_space<vmem>>, vector<16x4xf32>
    tpu.vector_store %arg7[%c8, %c0_3], %0 {strides = array<i32>} : memref<304x4xf32, #tpu.memory_space<vmem>>, vector<16x4xf32>,
    %c280 = arith.constant 280 : index
    %c0_4 = arith.constant 0 : index
    %5 = vector.load %arg7[%c280, %c0_4] : memref<304x4xf32, #tpu.memory_space<vmem>>, vector<16x4xf32>
    tpu.vector_store %arg7[%c280, %c0_4], %0 {strides = array<i32>} : memref<304x4xf32, #tpu.memory_space<vmem>>, vector<16x4xf32>,
    %6 = tpu.iota {dimensions = array<i32: 0>} : vector<256x1xi32>
    %c16_i32 = arith.constant 16 : i32
    %c0_i32 = arith.constant 0 : i32
    %7 = arith.cmpi eq, %c16_i32, %c0_i32 : i32
    %c1_i32 = arith.constant 1 : i32
    %8 = arith.select %7, %c1_i32, %c16_i32 : i32
    %9 = vector.broadcast %8 : i32 to vector<256x1xi32>
    %10 = arith.remsi %6, %9 : vector<256x1xi32>
    %c0_i32_5 = arith.constant 0 : i32
    %11 = vector.broadcast %c0_i32_5 : i32 to vector<256x1xi32>
    %12 = arith.cmpi ne, %10, %11 : vector<256x1xi32>
    %c0_i32_6 = arith.constant 0 : i32
    %13 = vector.broadcast %c0_i32_6 : i32 to vector<256x1xi32>
    %14 = arith.cmpi slt, %10, %13 : vector<256x1xi32>
    %c0_i32_7 = arith.constant 0 : i32
    %15 = arith.cmpi slt, %8, %c0_i32_7 : i32
    %16 = vector.broadcast %15 : i1 to vector<256x1xi1>
    %17 = vector.broadcast %16 : vector<256x1xi1> to vector<256x1xi1>
    %18 = arith.xori %14, %17 : vector<256x1xi1>
    %19 = arith.andi %18, %12 : vector<256x1xi1>
    %20 = vector.broadcast %8 : i32 to vector<256x1xi32>
    %21 = arith.addi %10, %20 : vector<256x1xi32>
    %22 = arith.select %19, %21, %10 : vector<256x1xi1>, vector<256x1xi32>
    %c0_i32_8 = arith.constant 0 : i32
    %23 = vector.broadcast %c0_i32_8 : i32 to vector<256x1xi32>
    %24 = arith.cmpi sgt, %22, %23 : vector<256x1xi32>
    %c15_i32 = arith.constant 15 : i32
    %25 = vector.broadcast %c15_i32 : i32 to vector<256x1xi32>
    %26 = arith.cmpi slt, %22, %25 : vector<256x1xi32>
    %c0_9 = arith.constant 0 : index
    %c0_10 = arith.constant 0 : index
    %c0_11 = arith.constant 0 : index
    %27 = vector.load %arg1[%c0_9, %c0_10, %c0_11] : memref<1x256x4xf32, #tpu.memory_space<vmem>>, vector<1x256x4xf32>
    %28 = vector.shape_cast %27 : vector<1x256x4xf32> to vector<256x4xf32>
    %c0_12 = arith.constant 0 : index
    %c0_13 = arith.constant 0 : index
    %29 = vector.load %arg2[%c0_12, %c0_13] : memref<4x16xf32, #tpu.memory_space<vmem>>, vector<4x16xf32>
    %cst_14 = arith.constant dense<0.000000e+00> : vector<256x16xf32>
    %30 = tpu.matmul %28, %29, %cst_14 {dimension_numbers = #tpu.dot_dimension_numbers<[1], [0], [0], [1], [0, 0, 1, 1], [], []>} : vector<256x4xf32>, vector<4x16xf32>, vector<256x16xf32> -> vector<256x16xf32>
    %31 = vector.extract_strided_slice %30 {offsets = [0, 0], sizes = [256, 4], strides = [1, 1]} : vector<256x16xf32> to vector<256x4xf32>
    %c0_15 = arith.constant 0 : index
    %c0_16 = arith.constant 0 : index
    %c0_17 = arith.constant 0 : index
    %32 = vector.load %arg8[%c0_15, %c0_16, %c0_17] : memref<4x256x4xf32, #tpu.memory_space<vmem>>, vector<1x256x4xf32>
    %33 = vector.shape_cast %32 : vector<1x256x4xf32> to vector<256x4xf32>
    %34 = vector.shape_cast %31 : vector<256x4xf32> to vector<1x256x4xf32>
    tpu.vector_store %arg8[%c0_15, %c0_16, %c0_17], %34 {strides = array<i32>} : memref<4x256x4xf32, #tpu.memory_space<vmem>>, vector<1x256x4xf32>,
    %35 = vector.extract_strided_slice %30 {offsets = [0, 4], sizes = [256, 4], strides = [1, 1]} : vector<256x16xf32> to vector<256x4xf32>
    %c1 = arith.constant 1 : index
    %c0_18 = arith.constant 0 : index
    %c0_19 = arith.constant 0 : index
    %36 = vector.load %arg8[%c1, %c0_18, %c0_19] : memref<4x256x4xf32, #tpu.memory_space<vmem>>, vector<1x256x4xf32>
    %37 = vector.shape_cast %36 : vector<1x256x4xf32> to vector<256x4xf32>
    %38 = vector.shape_cast %35 : vector<256x4xf32> to vector<1x256x4xf32>
    tpu.vector_store %arg8[%c1, %c0_18, %c0_19], %38 {strides = array<i32>} : memref<4x256x4xf32, #tpu.memory_space<vmem>>, vector<1x256x4xf32>,
    %39 = vector.extract_strided_slice %30 {offsets = [0, 8], sizes = [256, 4], strides = [1, 1]} : vector<256x16xf32> to vector<256x4xf32>
    %c2 = arith.constant 2 : index
    %c0_20 = arith.constant 0 : index
    %c0_21 = arith.constant 0 : index
    %40 = vector.load %arg8[%c2, %c0_20, %c0_21] : memref<4x256x4xf32, #tpu.memory_space<vmem>>, vector<1x256x4xf32>
    %41 = vector.shape_cast %40 : vector<1x256x4xf32> to vector<256x4xf32>
    %42 = vector.shape_cast %39 : vector<256x4xf32> to vector<1x256x4xf32>
    tpu.vector_store %arg8[%c2, %c0_20, %c0_21], %42 {strides = array<i32>} : memref<4x256x4xf32, #tpu.memory_space<vmem>>, vector<1x256x4xf32>,
    %43 = vector.extract_strided_slice %30 {offsets = [0, 12], sizes = [256, 4], strides = [1, 1]} : vector<256x16xf32> to vector<256x4xf32>
    %c3 = arith.constant 3 : index
    %c0_22 = arith.constant 0 : index
    %c0_23 = arith.constant 0 : index
    %44 = vector.load %arg8[%c3, %c0_22, %c0_23] : memref<4x256x4xf32, #tpu.memory_space<vmem>>, vector<1x256x4xf32>
    %45 = vector.shape_cast %44 : vector<1x256x4xf32> to vector<256x4xf32>
    %46 = vector.shape_cast %43 : vector<256x4xf32> to vector<1x256x4xf32>
    tpu.vector_store %arg8[%c3, %c0_22, %c0_23], %46 {strides = array<i32>} : memref<4x256x4xf32, #tpu.memory_space<vmem>>, vector<1x256x4xf32>,
    %c8_24 = arith.constant 8 : index
    %c0_25 = arith.constant 0 : index
    %47 = vector.load %arg7[%c8_24, %c0_25] : memref<304x4xf32, #tpu.memory_space<vmem>>, vector<256x4xf32>
    %c0_26 = arith.constant 0 : index
    %c0_27 = arith.constant 0 : index
    %c0_28 = arith.constant 0 : index
    %48 = vector.load %arg3[%c0_26, %c0_27, %c0_28] : memref<4x4x8xf32, #tpu.memory_space<vmem>>, vector<1x4x8xf32>
    %49 = vector.shape_cast %48 : vector<1x4x8xf32> to vector<4x8xf32>
    %cst_29 = arith.constant dense<0.000000e+00> : vector<256x8xf32>
    %50 = tpu.matmul %47, %49, %cst_29 {dimension_numbers = #tpu.dot_dimension_numbers<[1], [0], [0], [1], [0, 0, 1, 1], [], []>} : vector<256x4xf32>, vector<4x8xf32>, vector<256x8xf32> -> vector<256x8xf32>
    %c0_30 = arith.constant 0 : index
    %c0_31 = arith.constant 0 : index
    %c0_32 = arith.constant 0 : index
    %51 = vector.load %arg8[%c0_30, %c0_31, %c0_32] : memref<4x256x4xf32, #tpu.memory_space<vmem>>, vector<1x256x4xf32>
    %52 = vector.shape_cast %51 : vector<1x256x4xf32> to vector<256x4xf32>
    %53 = vector.extract_strided_slice %50 {offsets = [0, 0], sizes = [256, 4], strides = [1, 1]} : vector<256x8xf32> to vector<256x4xf32>
    %54 = arith.addf %52, %53 : vector<256x4xf32>
    %c0_33 = arith.constant 0 : index
    %c0_34 = arith.constant 0 : index
    %c0_35 = arith.constant 0 : index
    %55 = vector.load %arg8[%c0_33, %c0_34, %c0_35] : memref<4x256x4xf32, #tpu.memory_space<vmem>>, vector<1x256x4xf32>
    %56 = vector.shape_cast %55 : vector<1x256x4xf32> to vector<256x4xf32>
    %57 = vector.shape_cast %54 : vector<256x4xf32> to vector<1x256x4xf32>
    tpu.vector_store %arg8[%c0_33, %c0_34, %c0_35], %57 {strides = array<i32>} : memref<4x256x4xf32, #tpu.memory_space<vmem>>, vector<1x256x4xf32>,
    %c1_36 = arith.constant 1 : index
    %c0_37 = arith.constant 0 : index
    %c0_38 = arith.constant 0 : index
    %58 = vector.load %arg8[%c1_36, %c0_37, %c0_38] : memref<4x256x4xf32, #tpu.memory_space<vmem>>, vector<1x256x4xf32>
    %59 = vector.shape_cast %58 : vector<1x256x4xf32> to vector<256x4xf32>
    %60 = vector.extract_strided_slice %50 {offsets = [0, 4], sizes = [256, 4], strides = [1, 1]} : vector<256x8xf32> to vector<256x4xf32>
    %61 = arith.addf %59, %60 : vector<256x4xf32>
    %c1_39 = arith.constant 1 : index
    %c0_40 = arith.constant 0 : index
    %c0_41 = arith.constant 0 : index
    %62 = vector.load %arg8[%c1_39, %c0_40, %c0_41] : memref<4x256x4xf32, #tpu.memory_space<vmem>>, vector<1x256x4xf32>
    %63 = vector.shape_cast %62 : vector<1x256x4xf32> to vector<256x4xf32>
    %64 = vector.shape_cast %61 : vector<256x4xf32> to vector<1x256x4xf32>
    tpu.vector_store %arg8[%c1_39, %c0_40, %c0_41], %64 {strides = array<i32>} : memref<4x256x4xf32, #tpu.memory_space<vmem>>, vector<1x256x4xf32>,
    %c40 = arith.constant 40 : index
    %c0_42 = arith.constant 0 : index
    %65 = vector.load %arg7[%c40, %c0_42] : memref<304x4xf32, #tpu.memory_space<vmem>>, vector<256x4xf32>
    %c1_43 = arith.constant 1 : index
    %c0_44 = arith.constant 0 : index
    %c0_45 = arith.constant 0 : index
    %66 = vector.load %arg3[%c1_43, %c0_44, %c0_45] : memref<4x4x8xf32, #tpu.memory_space<vmem>>, vector<1x4x8xf32>
    %67 = vector.shape_cast %66 : vector<1x4x8xf32> to vector<4x8xf32>
    %cst_46 = arith.constant dense<0.000000e+00> : vector<256x8xf32>
    %68 = tpu.matmul %65, %67, %cst_46 {dimension_numbers = #tpu.dot_dimension_numbers<[1], [0], [0], [1], [0, 0, 1, 1], [], []>} : vector<256x4xf32>, vector<4x8xf32>, vector<256x8xf32> -> vector<256x8xf32>
    %c2_47 = arith.constant 2 : index
    %c0_48 = arith.constant 0 : index
    %c0_49 = arith.constant 0 : index
    %69 = vector.load %arg8[%c2_47, %c0_48, %c0_49] : memref<4x256x4xf32, #tpu.memory_space<vmem>>, vector<1x256x4xf32>
    %70 = vector.shape_cast %69 : vector<1x256x4xf32> to vector<256x4xf32>
    %71 = vector.extract_strided_slice %68 {offsets = [0, 0], sizes = [256, 4], strides = [1, 1]} : vector<256x8xf32> to vector<256x4xf32>
    %72 = arith.addf %70, %71 : vector<256x4xf32>
    %c2_50 = arith.constant 2 : index
    %c0_51 = arith.constant 0 : index
    %c0_52 = arith.constant 0 : index
    %73 = vector.load %arg8[%c2_50, %c0_51, %c0_52] : memref<4x256x4xf32, #tpu.memory_space<vmem>>, vector<1x256x4xf32>
    %74 = vector.shape_cast %73 : vector<1x256x4xf32> to vector<256x4xf32>
    %75 = vector.shape_cast %72 : vector<256x4xf32> to vector<1x256x4xf32>
    tpu.vector_store %arg8[%c2_50, %c0_51, %c0_52], %75 {strides = array<i32>} : memref<4x256x4xf32, #tpu.memory_space<vmem>>, vector<1x256x4xf32>,
    %c3_53 = arith.constant 3 : index
    %c0_54 = arith.constant 0 : index
    %c0_55 = arith.constant 0 : index
    %76 = vector.load %arg8[%c3_53, %c0_54, %c0_55] : memref<4x256x4xf32, #tpu.memory_space<vmem>>, vector<1x256x4xf32>
    %77 = vector.shape_cast %76 : vector<1x256x4xf32> to vector<256x4xf32>
    %78 = vector.extract_strided_slice %68 {offsets = [0, 4], sizes = [256, 4], strides = [1, 1]} : vector<256x8xf32> to vector<256x4xf32>
    %79 = arith.addf %77, %78 : vector<256x4xf32>
    %c3_56 = arith.constant 3 : index
    %c0_57 = arith.constant 0 : index
    %c0_58 = arith.constant 0 : index
    %80 = vector.load %arg8[%c3_56, %c0_57, %c0_58] : memref<4x256x4xf32, #tpu.memory_space<vmem>>, vector<1x256x4xf32>
    %81 = vector.shape_cast %80 : vector<1x256x4xf32> to vector<256x4xf32>
    %82 = vector.shape_cast %79 : vector<256x4xf32> to vector<1x256x4xf32>
    tpu.vector_store %arg8[%c3_56, %c0_57, %c0_58], %82 {strides = array<i32>} : memref<4x256x4xf32, #tpu.memory_space<vmem>>, vector<1x256x4xf32>,
    %c23 = arith.constant 23 : index
    %c0_59 = arith.constant 0 : index
    %83 = vector.load %arg7[%c23, %c0_59] : memref<304x4xf32, #tpu.memory_space<vmem>>, vector<256x4xf32>
    %c0_i32_60 = arith.constant 0 : i32
    %84 = arith.sitofp %c0_i32_60 : i32 to f32
    %85 = vector.shape_cast %24 : vector<256x1xi1> to vector<256x1xi1>
    %86 = vector.broadcast %85 : vector<256x1xi1> to vector<256x4xi1>
    %87 = vector.broadcast %84 : f32 to vector<256x4xf32>
    %88 = arith.select %86, %83, %87 : vector<256x4xi1>, vector<256x4xf32>
    %c2_61 = arith.constant 2 : index
    %c0_62 = arith.constant 0 : index
    %c0_63 = arith.constant 0 : index
    %89 = vector.load %arg3[%c2_61, %c0_62, %c0_63] : memref<4x4x8xf32, #tpu.memory_space<vmem>>, vector<1x4x8xf32>
    %90 = vector.shape_cast %89 : vector<1x4x8xf32> to vector<4x8xf32>
    %cst_64 = arith.constant dense<0.000000e+00> : vector<256x8xf32>
    %91 = tpu.matmul %88, %90, %cst_64 {dimension_numbers = #tpu.dot_dimension_numbers<[1], [0], [0], [1], [0, 0, 1, 1], [], []>} : vector<256x4xf32>, vector<4x8xf32>, vector<256x8xf32> -> vector<256x8xf32>
    %c0_65 = arith.constant 0 : index
    %c0_66 = arith.constant 0 : index
    %c0_67 = arith.constant 0 : index
    %92 = vector.load %arg8[%c0_65, %c0_66, %c0_67] : memref<4x256x4xf32, #tpu.memory_space<vmem>>, vector<1x256x4xf32>
    %93 = vector.shape_cast %92 : vector<1x256x4xf32> to vector<256x4xf32>
    %94 = vector.extract_strided_slice %91 {offsets = [0, 0], sizes = [256, 4], strides = [1, 1]} : vector<256x8xf32> to vector<256x4xf32>
    %95 = arith.addf %93, %94 : vector<256x4xf32>
    %c0_68 = arith.constant 0 : index
    %c0_69 = arith.constant 0 : index
    %c0_70 = arith.constant 0 : index
    %96 = vector.load %arg8[%c0_68, %c0_69, %c0_70] : memref<4x256x4xf32, #tpu.memory_space<vmem>>, vector<1x256x4xf32>
    %97 = vector.shape_cast %96 : vector<1x256x4xf32> to vector<256x4xf32>
    %98 = vector.shape_cast %95 : vector<256x4xf32> to vector<1x256x4xf32>
    tpu.vector_store %arg8[%c0_68, %c0_69, %c0_70], %98 {strides = array<i32>} : memref<4x256x4xf32, #tpu.memory_space<vmem>>, vector<1x256x4xf32>,
    %c2_71 = arith.constant 2 : index
    %c0_72 = arith.constant 0 : index
    %c0_73 = arith.constant 0 : index
    %99 = vector.load %arg8[%c2_71, %c0_72, %c0_73] : memref<4x256x4xf32, #tpu.memory_space<vmem>>, vector<1x256x4xf32>
    %100 = vector.shape_cast %99 : vector<1x256x4xf32> to vector<256x4xf32>
    %101 = vector.extract_strided_slice %91 {offsets = [0, 4], sizes = [256, 4], strides = [1, 1]} : vector<256x8xf32> to vector<256x4xf32>
    %102 = arith.addf %100, %101 : vector<256x4xf32>
    %c2_74 = arith.constant 2 : index
    %c0_75 = arith.constant 0 : index
    %c0_76 = arith.constant 0 : index
    %103 = vector.load %arg8[%c2_74, %c0_75, %c0_76] : memref<4x256x4xf32, #tpu.memory_space<vmem>>, vector<1x256x4xf32>
    %104 = vector.shape_cast %103 : vector<1x256x4xf32> to vector<256x4xf32>
    %105 = vector.shape_cast %102 : vector<256x4xf32> to vector<1x256x4xf32>
    tpu.vector_store %arg8[%c2_74, %c0_75, %c0_76], %105 {strides = array<i32>} : memref<4x256x4xf32, #tpu.memory_space<vmem>>, vector<1x256x4xf32>,
    %c25 = arith.constant 25 : index
    %c0_77 = arith.constant 0 : index
    %106 = vector.load %arg7[%c25, %c0_77] : memref<304x4xf32, #tpu.memory_space<vmem>>, vector<256x4xf32>
    %c0_i32_78 = arith.constant 0 : i32
    %107 = arith.sitofp %c0_i32_78 : i32 to f32
    %108 = vector.shape_cast %26 : vector<256x1xi1> to vector<256x1xi1>
    %109 = vector.broadcast %108 : vector<256x1xi1> to vector<256x4xi1>
    %110 = vector.broadcast %107 : f32 to vector<256x4xf32>
    %111 = arith.select %109, %106, %110 : vector<256x4xi1>, vector<256x4xf32>
    %c3_79 = arith.constant 3 : index
    %c0_80 = arith.constant 0 : index
    %c0_81 = arith.constant 0 : index
    %112 = vector.load %arg3[%c3_79, %c0_80, %c0_81] : memref<4x4x8xf32, #tpu.memory_space<vmem>>, vector<1x4x8xf32>
    %113 = vector.shape_cast %112 : vector<1x4x8xf32> to vector<4x8xf32>
    %cst_82 = arith.constant dense<0.000000e+00> : vector<256x8xf32>
    %114 = tpu.matmul %111, %113, %cst_82 {dimension_numbers = #tpu.dot_dimension_numbers<[1], [0], [0], [1], [0, 0, 1, 1], [], []>} : vector<256x4xf32>, vector<4x8xf32>, vector<256x8xf32> -> vector<256x8xf32>
    %c1_83 = arith.constant 1 : index
    %c0_84 = arith.constant 0 : index
    %c0_85 = arith.constant 0 : index
    %115 = vector.load %arg8[%c1_83, %c0_84, %c0_85] : memref<4x256x4xf32, #tpu.memory_space<vmem>>, vector<1x256x4xf32>
    %116 = vector.shape_cast %115 : vector<1x256x4xf32> to vector<256x4xf32>
    %117 = vector.extract_strided_slice %114 {offsets = [0, 0], sizes = [256, 4], strides = [1, 1]} : vector<256x8xf32> to vector<256x4xf32>
    %118 = arith.addf %116, %117 : vector<256x4xf32>
    %c1_86 = arith.constant 1 : index
    %c0_87 = arith.constant 0 : index
    %c0_88 = arith.constant 0 : index
    %119 = vector.load %arg8[%c1_86, %c0_87, %c0_88] : memref<4x256x4xf32, #tpu.memory_space<vmem>>, vector<1x256x4xf32>
    %120 = vector.shape_cast %119 : vector<1x256x4xf32> to vector<256x4xf32>
    %121 = vector.shape_cast %118 : vector<256x4xf32> to vector<1x256x4xf32>
    tpu.vector_store %arg8[%c1_86, %c0_87, %c0_88], %121 {strides = array<i32>} : memref<4x256x4xf32, #tpu.memory_space<vmem>>, vector<1x256x4xf32>,
    %c3_89 = arith.constant 3 : index
    %c0_90 = arith.constant 0 : index
    %c0_91 = arith.constant 0 : index
    %122 = vector.load %arg8[%c3_89, %c0_90, %c0_91] : memref<4x256x4xf32, #tpu.memory_space<vmem>>, vector<1x256x4xf32>
    %123 = vector.shape_cast %122 : vector<1x256x4xf32> to vector<256x4xf32>
    %124 = vector.extract_strided_slice %114 {offsets = [0, 4], sizes = [256, 4], strides = [1, 1]} : vector<256x8xf32> to vector<256x4xf32>
    %125 = arith.addf %123, %124 : vector<256x4xf32>
    %c3_92 = arith.constant 3 : index
    %c0_93 = arith.constant 0 : index
    %c0_94 = arith.constant 0 : index
    %126 = vector.load %arg8[%c3_92, %c0_93, %c0_94] : memref<4x256x4xf32, #tpu.memory_space<vmem>>, vector<1x256x4xf32>
    %127 = vector.shape_cast %126 : vector<1x256x4xf32> to vector<256x4xf32>
    %128 = vector.shape_cast %125 : vector<256x4xf32> to vector<1x256x4xf32>
    tpu.vector_store %arg8[%c3_92, %c0_93, %c0_94], %128 {strides = array<i32>} : memref<4x256x4xf32, #tpu.memory_space<vmem>>, vector<1x256x4xf32>,
    %c0_95 = arith.constant 0 : index
    %c0_96 = arith.constant 0 : index
    %c0_97 = arith.constant 0 : index
    %129 = vector.load %arg8[%c0_95, %c0_96, %c0_97] : memref<4x256x4xf32, #tpu.memory_space<vmem>>, vector<1x256x4xf32>
    %130 = vector.shape_cast %129 : vector<1x256x4xf32> to vector<256x4xf32>
    %c7 = arith.constant 7 : index
    %c0_98 = arith.constant 0 : index
    %131 = vector.load %arg7[%c7, %c0_98] : memref<304x4xf32, #tpu.memory_space<vmem>>, vector<256x4xf32>
    %c0_i32_99 = arith.constant 0 : i32
    %132 = arith.sitofp %c0_i32_99 : i32 to f32
    %133 = vector.shape_cast %24 : vector<256x1xi1> to vector<256x1xi1>
    %134 = vector.broadcast %133 : vector<256x1xi1> to vector<256x4xi1>
    %135 = vector.broadcast %132 : f32 to vector<256x4xf32>
    %136 = arith.select %134, %131, %135 : vector<256x4xi1>, vector<256x4xf32>
    %c0_100 = arith.constant 0 : index
    %c0_101 = arith.constant 0 : index
    %c0_102 = arith.constant 0 : index
    %137 = vector.load %arg4[%c0_100, %c0_101, %c0_102] : memref<4x4x4xf32, #tpu.memory_space<vmem>>, vector<1x4x4xf32>
    %138 = vector.shape_cast %137 : vector<1x4x4xf32> to vector<4x4xf32>
    %cst_103 = arith.constant dense<0.000000e+00> : vector<256x4xf32>
    %139 = tpu.matmul %136, %138, %cst_103 {dimension_numbers = #tpu.dot_dimension_numbers<[1], [0], [0], [1], [0, 0, 1, 1], [], []>} : vector<256x4xf32>, vector<4x4xf32>, vector<256x4xf32> -> vector<256x4xf32>
    %140 = arith.addf %130, %139 : vector<256x4xf32>
    %c0_104 = arith.constant 0 : index
    %c0_105 = arith.constant 0 : index
    %c0_106 = arith.constant 0 : index
    %141 = vector.load %arg8[%c0_104, %c0_105, %c0_106] : memref<4x256x4xf32, #tpu.memory_space<vmem>>, vector<1x256x4xf32>
    %142 = vector.shape_cast %141 : vector<1x256x4xf32> to vector<256x4xf32>
    %143 = vector.shape_cast %140 : vector<256x4xf32> to vector<1x256x4xf32>
    tpu.vector_store %arg8[%c0_104, %c0_105, %c0_106], %143 {strides = array<i32>} : memref<4x256x4xf32, #tpu.memory_space<vmem>>, vector<1x256x4xf32>,
    %c1_107 = arith.constant 1 : index
    %c0_108 = arith.constant 0 : index
    %c0_109 = arith.constant 0 : index
    %144 = vector.load %arg8[%c1_107, %c0_108, %c0_109] : memref<4x256x4xf32, #tpu.memory_space<vmem>>, vector<1x256x4xf32>
    %145 = vector.shape_cast %144 : vector<1x256x4xf32> to vector<256x4xf32>
    %c9 = arith.constant 9 : index
    %c0_110 = arith.constant 0 : index
    %146 = vector.load %arg7[%c9, %c0_110] : memref<304x4xf32, #tpu.memory_space<vmem>>, vector<256x4xf32>
    %c0_i32_111 = arith.constant 0 : i32
    %147 = arith.sitofp %c0_i32_111 : i32 to f32
    %148 = vector.shape_cast %26 : vector<256x1xi1> to vector<256x1xi1>
    %149 = vector.broadcast %148 : vector<256x1xi1> to vector<256x4xi1>
    %150 = vector.broadcast %147 : f32 to vector<256x4xf32>
    %151 = arith.select %149, %146, %150 : vector<256x4xi1>, vector<256x4xf32>
    %c1_112 = arith.constant 1 : index
    %c0_113 = arith.constant 0 : index
    %c0_114 = arith.constant 0 : index
    %152 = vector.load %arg4[%c1_112, %c0_113, %c0_114] : memref<4x4x4xf32, #tpu.memory_space<vmem>>, vector<1x4x4xf32>
    %153 = vector.shape_cast %152 : vector<1x4x4xf32> to vector<4x4xf32>
    %cst_115 = arith.constant dense<0.000000e+00> : vector<256x4xf32>
    %154 = tpu.matmul %151, %153, %cst_115 {dimension_numbers = #tpu.dot_dimension_numbers<[1], [0], [0], [1], [0, 0, 1, 1], [], []>} : vector<256x4xf32>, vector<4x4xf32>, vector<256x4xf32> -> vector<256x4xf32>
    %155 = arith.addf %145, %154 : vector<256x4xf32>
    %c1_116 = arith.constant 1 : index
    %c0_117 = arith.constant 0 : index
    %c0_118 = arith.constant 0 : index
    %156 = vector.load %arg8[%c1_116, %c0_117, %c0_118] : memref<4x256x4xf32, #tpu.memory_space<vmem>>, vector<1x256x4xf32>
    %157 = vector.shape_cast %156 : vector<1x256x4xf32> to vector<256x4xf32>
    %158 = vector.shape_cast %155 : vector<256x4xf32> to vector<1x256x4xf32>
    tpu.vector_store %arg8[%c1_116, %c0_117, %c0_118], %158 {strides = array<i32>} : memref<4x256x4xf32, #tpu.memory_space<vmem>>, vector<1x256x4xf32>,
    %c2_119 = arith.constant 2 : index
    %c0_120 = arith.constant 0 : index
    %c0_121 = arith.constant 0 : index
    %159 = vector.load %arg8[%c2_119, %c0_120, %c0_121] : memref<4x256x4xf32, #tpu.memory_space<vmem>>, vector<1x256x4xf32>
    %160 = vector.shape_cast %159 : vector<1x256x4xf32> to vector<256x4xf32>
    %c39 = arith.constant 39 : index
    %c0_122 = arith.constant 0 : index
    %161 = vector.load %arg7[%c39, %c0_122] : memref<304x4xf32, #tpu.memory_space<vmem>>, vector<256x4xf32>
    %c0_i32_123 = arith.constant 0 : i32
    %162 = arith.sitofp %c0_i32_123 : i32 to f32
    %163 = vector.shape_cast %24 : vector<256x1xi1> to vector<256x1xi1>
    %164 = vector.broadcast %163 : vector<256x1xi1> to vector<256x4xi1>
    %165 = vector.broadcast %162 : f32 to vector<256x4xf32>
    %166 = arith.select %164, %161, %165 : vector<256x4xi1>, vector<256x4xf32>
    %c2_124 = arith.constant 2 : index
    %c0_125 = arith.constant 0 : index
    %c0_126 = arith.constant 0 : index
    %167 = vector.load %arg4[%c2_124, %c0_125, %c0_126] : memref<4x4x4xf32, #tpu.memory_space<vmem>>, vector<1x4x4xf32>
    %168 = vector.shape_cast %167 : vector<1x4x4xf32> to vector<4x4xf32>
    %cst_127 = arith.constant dense<0.000000e+00> : vector<256x4xf32>
    %169 = tpu.matmul %166, %168, %cst_127 {dimension_numbers = #tpu.dot_dimension_numbers<[1], [0], [0], [1], [0, 0, 1, 1], [], []>} : vector<256x4xf32>, vector<4x4xf32>, vector<256x4xf32> -> vector<256x4xf32>
    %170 = arith.addf %160, %169 : vector<256x4xf32>
    %c2_128 = arith.constant 2 : index
    %c0_129 = arith.constant 0 : index
    %c0_130 = arith.constant 0 : index
    %171 = vector.load %arg8[%c2_128, %c0_129, %c0_130] : memref<4x256x4xf32, #tpu.memory_space<vmem>>, vector<1x256x4xf32>
    %172 = vector.shape_cast %171 : vector<1x256x4xf32> to vector<256x4xf32>
    %173 = vector.shape_cast %170 : vector<256x4xf32> to vector<1x256x4xf32>
    tpu.vector_store %arg8[%c2_128, %c0_129, %c0_130], %173 {strides = array<i32>} : memref<4x256x4xf32, #tpu.memory_space<vmem>>, vector<1x256x4xf32>,
    %c3_131 = arith.constant 3 : index
    %c0_132 = arith.constant 0 : index
    %c0_133 = arith.constant 0 : index
    %174 = vector.load %arg8[%c3_131, %c0_132, %c0_133] : memref<4x256x4xf32, #tpu.memory_space<vmem>>, vector<1x256x4xf32>
    %175 = vector.shape_cast %174 : vector<1x256x4xf32> to vector<256x4xf32>
    %c41 = arith.constant 41 : index
    %c0_134 = arith.constant 0 : index
    %176 = vector.load %arg7[%c41, %c0_134] : memref<304x4xf32, #tpu.memory_space<vmem>>, vector<256x4xf32>
    %c0_i32_135 = arith.constant 0 : i32
    %177 = arith.sitofp %c0_i32_135 : i32 to f32
    %178 = vector.shape_cast %26 : vector<256x1xi1> to vector<256x1xi1>
    %179 = vector.broadcast %178 : vector<256x1xi1> to vector<256x4xi1>
    %180 = vector.broadcast %177 : f32 to vector<256x4xf32>
    %181 = arith.select %179, %176, %180 : vector<256x4xi1>, vector<256x4xf32>
    %c3_136 = arith.constant 3 : index
    %c0_137 = arith.constant 0 : index
    %c0_138 = arith.constant 0 : index
    %182 = vector.load %arg4[%c3_136, %c0_137, %c0_138] : memref<4x4x4xf32, #tpu.memory_space<vmem>>, vector<1x4x4xf32>
    %183 = vector.shape_cast %182 : vector<1x4x4xf32> to vector<4x4xf32>
    %cst_139 = arith.constant dense<0.000000e+00> : vector<256x4xf32>
    %184 = tpu.matmul %181, %183, %cst_139 {dimension_numbers = #tpu.dot_dimension_numbers<[1], [0], [0], [1], [0, 0, 1, 1], [], []>} : vector<256x4xf32>, vector<4x4xf32>, vector<256x4xf32> -> vector<256x4xf32>
    %185 = arith.addf %175, %184 : vector<256x4xf32>
    %c3_140 = arith.constant 3 : index
    %c0_141 = arith.constant 0 : index
    %c0_142 = arith.constant 0 : index
    %186 = vector.load %arg8[%c3_140, %c0_141, %c0_142] : memref<4x256x4xf32, #tpu.memory_space<vmem>>, vector<1x256x4xf32>
    %187 = vector.shape_cast %186 : vector<1x256x4xf32> to vector<256x4xf32>
    %188 = vector.shape_cast %185 : vector<256x4xf32> to vector<1x256x4xf32>
    tpu.vector_store %arg8[%c3_140, %c0_141, %c0_142], %188 {strides = array<i32>} : memref<4x256x4xf32, #tpu.memory_space<vmem>>, vector<1x256x4xf32>,
    %c0_143 = arith.constant 0 : index
    %c0_144 = arith.constant 0 : index
    %c0_145 = arith.constant 0 : index
    %189 = vector.load %arg8[%c0_143, %c0_144, %c0_145] : memref<4x256x4xf32, #tpu.memory_space<vmem>>, vector<1x256x4xf32>
    %190 = vector.shape_cast %189 : vector<1x256x4xf32> to vector<256x4xf32>
    %c0_146 = arith.constant 0 : index
    %c0_147 = arith.constant 0 : index
    %191 = vector.load %arg5[%c0_146, %c0_147] : memref<1x4xf32, #tpu.memory_space<vmem>>, vector<1x4xf32>
    %192 = vector.broadcast %191 : vector<1x4xf32> to vector<256x4xf32>
    %193 = arith.addf %190, %192 : vector<256x4xf32>
    %c0_148 = arith.constant 0 : index
    %c0_149 = arith.constant 0 : index
    %c0_150 = arith.constant 0 : index
    %c0_151 = arith.constant 0 : index
    %194 = vector.load %arg6[%c0_148, %c0_149, %c0_150, %c0_151] : memref<1x4x256x4xf32, #tpu.memory_space<vmem>>, vector<1x1x256x4xf32>
    %195 = vector.shape_cast %194 : vector<1x1x256x4xf32> to vector<256x4xf32>
    %196 = vector.shape_cast %193 : vector<256x4xf32> to vector<1x1x256x4xf32>
    tpu.vector_store %arg6[%c0_148, %c0_149, %c0_150, %c0_151], %196 {strides = array<i32>} : memref<1x4x256x4xf32, #tpu.memory_space<vmem>>, vector<1x1x256x4xf32>,
    %c1_152 = arith.constant 1 : index
    %c0_153 = arith.constant 0 : index
    %c0_154 = arith.constant 0 : index
    %197 = vector.load %arg8[%c1_152, %c0_153, %c0_154] : memref<4x256x4xf32, #tpu.memory_space<vmem>>, vector<1x256x4xf32>
    %198 = vector.shape_cast %197 : vector<1x256x4xf32> to vector<256x4xf32>
    %c0_155 = arith.constant 0 : index
    %c0_156 = arith.constant 0 : index
    %199 = vector.load %arg5[%c0_155, %c0_156] : memref<1x4xf32, #tpu.memory_space<vmem>>, vector<1x4xf32>
    %200 = vector.broadcast %199 : vector<1x4xf32> to vector<256x4xf32>
    %201 = arith.addf %198, %200 : vector<256x4xf32>
    %c0_157 = arith.constant 0 : index
    %c1_158 = arith.constant 1 : index
    %c0_159 = arith.constant 0 : index
    %c0_160 = arith.constant 0 : index
    %202 = vector.load %arg6[%c0_157, %c1_158, %c0_159, %c0_160] : memref<1x4x256x4xf32, #tpu.memory_space<vmem>>, vector<1x1x256x4xf32>
    %203 = vector.shape_cast %202 : vector<1x1x256x4xf32> to vector<256x4xf32>
    %204 = vector.shape_cast %201 : vector<256x4xf32> to vector<1x1x256x4xf32>
    tpu.vector_store %arg6[%c0_157, %c1_158, %c0_159, %c0_160], %204 {strides = array<i32>} : memref<1x4x256x4xf32, #tpu.memory_space<vmem>>, vector<1x1x256x4xf32>,
    %c2_161 = arith.constant 2 : index
    %c0_162 = arith.constant 0 : index
    %c0_163 = arith.constant 0 : index
    %205 = vector.load %arg8[%c2_161, %c0_162, %c0_163] : memref<4x256x4xf32, #tpu.memory_space<vmem>>, vector<1x256x4xf32>
    %206 = vector.shape_cast %205 : vector<1x256x4xf32> to vector<256x4xf32>
    %c0_164 = arith.constant 0 : index
    %c0_165 = arith.constant 0 : index
    %207 = vector.load %arg5[%c0_164, %c0_165] : memref<1x4xf32, #tpu.memory_space<vmem>>, vector<1x4xf32>
    %208 = vector.broadcast %207 : vector<1x4xf32> to vector<256x4xf32>
    %209 = arith.addf %206, %208 : vector<256x4xf32>
    %c0_166 = arith.constant 0 : index
    %c2_167 = arith.constant 2 : index
    %c0_168 = arith.constant 0 : index
    %c0_169 = arith.constant 0 : index
    %210 = vector.load %arg6[%c0_166, %c2_167, %c0_168, %c0_169] : memref<1x4x256x4xf32, #tpu.memory_space<vmem>>, vector<1x1x256x4xf32>
    %211 = vector.shape_cast %210 : vector<1x1x256x4xf32> to vector<256x4xf32>
    %212 = vector.shape_cast %209 : vector<256x4xf32> to vector<1x1x256x4xf32>
    tpu.vector_store %arg6[%c0_166, %c2_167, %c0_168, %c0_169], %212 {strides = array<i32>} : memref<1x4x256x4xf32, #tpu.memory_space<vmem>>, vector<1x1x256x4xf32>,
    %c3_170 = arith.constant 3 : index
    %c0_171 = arith.constant 0 : index
    %c0_172 = arith.constant 0 : index
    %213 = vector.load %arg8[%c3_170, %c0_171, %c0_172] : memref<4x256x4xf32, #tpu.memory_space<vmem>>, vector<1x256x4xf32>
    %214 = vector.shape_cast %213 : vector<1x256x4xf32> to vector<256x4xf32>
    %c0_173 = arith.constant 0 : index
    %c0_174 = arith.constant 0 : index
    %215 = vector.load %arg5[%c0_173, %c0_174] : memref<1x4xf32, #tpu.memory_space<vmem>>, vector<1x4xf32>
    %216 = vector.broadcast %215 : vector<1x4xf32> to vector<256x4xf32>
    %217 = arith.addf %214, %216 : vector<256x4xf32>
    %c0_175 = arith.constant 0 : index
    %c3_176 = arith.constant 3 : index
    %c0_177 = arith.constant 0 : index
    %c0_178 = arith.constant 0 : index
    %218 = vector.load %arg6[%c0_175, %c3_176, %c0_177, %c0_178] : memref<1x4x256x4xf32, #tpu.memory_space<vmem>>, vector<1x1x256x4xf32>
    %219 = vector.shape_cast %218 : vector<1x1x256x4xf32> to vector<256x4xf32>
    %220 = vector.shape_cast %217 : vector<256x4xf32> to vector<1x1x256x4xf32>
    tpu.vector_store %arg6[%c0_175, %c3_176, %c0_177, %c0_178], %220 {strides = array<i32>} : memref<1x4x256x4xf32, #tpu.memory_space<vmem>>, vector<1x1x256x4xf32>,
    return
  }
  func.func @transform_0(%arg0: i32) -> (i32, i32, i32) {
    %c0_i32 = arith.constant 0 : i32
    %c0_i32_0 = arith.constant 0 : i32
    %c0_i32_1 = arith.constant 0 : i32
    return %arg0, %c0_i32, %c0_i32_0 : i32, i32, i32
  }
  func.func @transform_1(%arg0: i32) -> (i32, i32) {
    %c0_i32 = arith.constant 0 : i32
    %c0_i32_0 = arith.constant 0 : i32
    %c0_i32_1 = arith.constant 0 : i32
    return %c0_i32, %c0_i32_0 : i32, i32
  }
  func.func @transform_2(%arg0: i32) -> (i32, i32, i32) {
    %c0_i32 = arith.constant 0 : i32
    %c0_i32_0 = arith.constant 0 : i32
    %c0_i32_1 = arith.constant 0 : i32
    %c0_i32_2 = arith.constant 0 : i32
    return %c0_i32, %c0_i32_0, %c0_i32_1 : i32, i32, i32
  }
  func.func @transform_3(%arg0: i32) -> (i32, i32, i32) {
    %c0_i32 = arith.constant 0 : i32
    %c0_i32_0 = arith.constant 0 : i32
    %c0_i32_1 = arith.constant 0 : i32
    %c0_i32_2 = arith.constant 0 : i32
    return %c0_i32, %c0_i32_0, %c0_i32_1 : i32, i32, i32
  }
  func.func @transform_4(%arg0: i32) -> (i32, i32) {
    %c0_i32 = arith.constant 0 : i32
    %c0_i32_0 = arith.constant 0 : i32
    %c0_i32_1 = arith.constant 0 : i32
    return %c0_i32, %c0_i32_0 : i32, i32
  }
  func.func @transform_5(%arg0: i32) -> (i32, i32, i32, i32) {
    %c0_i32 = arith.constant 0 : i32
    %c0_i32_0 = arith.constant 0 : i32
    %c0_i32_1 = arith.constant 0 : i32
    %c0_i32_2 = arith.constant 0 : i32
    return %arg0, %c0_i32, %c0_i32_0, %c0_i32_1 : i32, i32, i32, i32
  }
}

</mosaic_0001>

<llo_original>
// kernel: upsample_forward.1
$region0: #{upsample_forward.1}
  #allocation0 [shape = 'u32[]', space=smem, size = 0x4, offset = 0x4, fixed_abs, tag = 'smem constant byte address 0x4 - core index']
  #allocation1 [shape = 'u32[72,128]{1,0:T(1,128)}', space=vmem, size = 0x9000, scoped, tag = 'internal scratch']
  #allocation2 [shape = 'f32[304,4]{1,0:T(8,128)}', space=vmem, size = 0x26000, scoped, tag = 'scratch operand']
  #allocation3 [shape = 'f32[4,256,4]{2,1,0:T(8,128)}', space=vmem, size = 0x80000, scoped, tag = 'scratch operand']
  %s0 = inlined_call_operand.vmem [shape: f32[2,256,4], index: 0, kind: input, shape index: {}]
  %s1 = inlined_call_operand.vmem [shape: f32[4,16], index: 1, kind: input, shape index: {}]
  %s2 = inlined_call_operand.vmem [shape: f32[4,4,8], index: 2, kind: input, shape index: {}]
  %s3 = inlined_call_operand.vmem [shape: f32[4,4,4], index: 3, kind: input, shape index: {}]
  %s4 = inlined_call_operand.vmem [shape: f32[1,4], index: 4, kind: input, shape index: {}]
  %s5 = inlined_call_operand.vmem [shape: f32[2,4,256,4], index: 5, kind: output, shape index: {}]
  %s6 = sld [smem:[#allocation0]]
  $region53: #{upsample_forward.1} parent=0
    _
  %s8 = ssub.s32 1, %s6
  %s9 = scalar_select 0, %s8, %s6
  loop: start=0, step=1, limit=4
  $region2: #{upsample_forward.1} parent=0 // loop_pre_header
    _
  $region3: #{upsample_forward.1} parent=0 // loop_header
    %s11 = sphi 0, %s15
    %p12 = scmp.ge.s32.totalorder %s11, 4
    %s21 = sphi 0, %s23
    %s24 = sphi 0, %s21
    %s25 = sphi 0, %s24
    %s41 = sphi 0, %s25
    %s45 = sphi 0, %s45
    %s47 = sphi 0, %s45
    %s48 = sphi 0, %s47
    %s62 = sphi 0, %s48
    %s66 = sphi 0, %s66
    %s68 = sphi 0, %s66
    %s69 = sphi 0, %s68
    %s83 = sphi 0, %s69
    %s87 = sphi 0, %s87
    %s89 = sphi 0, %s87
    %s90 = sphi 0, %s89
    %s104 = sphi 0, %s90
    %s108 = sphi 0, %s108
    %s110 = sphi 0, %s108
    %s111 = sphi 0, %s110
    %s125 = sphi 0, %s111
    %s131 = sphi 0, %s133
    %s134 = sphi 0, %s131
    %s135 = sphi 0, %s134
    %s151 = sphi 0, %s135
  $region4: #{upsample_forward.1} parent=0 // loop_header_branch
    %14 = sbr.rel (%p12) target = $region8
  $region5: #{upsample_forward.1} parent=0 // loop_body
    %s16 = ssub.s32 %s11, 1
    %s17 = ssub.s32 %s11, 2
    %s18 = sadd.s32 %s11, 1
    %s19 = ssub.s32 %s11, %s18
    %p20 = scmp.eq.s32.totalorder %s19, 0
    %s22 = sadd.s32 %s21, 1
    %s23 = scalar_select %p20, %s21, %s22
    %p26 = pneg %p20
    %p27 = scmp.eq.s32.totalorder %s11, 1
    %p28 = por %p26, %p27
    %p29 = scmp.ne.s32.totalorder %s21, %s24
    %p30 = scmp.eq.s32.totalorder %s11, 0
    %p31 = por %p29, %p30
    %p32 = scmp.ne.s32.totalorder %s21, %s24
    %p33 = scmp.eq.s32.totalorder %s16, 1
    %p34 = por %p32, %p33
    %p35 = scmp.ne.s32.totalorder %s24, %s25
    %p36 = scmp.eq.s32.totalorder %s16, 0
    %p37 = por %p35, %p36
    %p38 = scmp.ne.s32.totalorder %s24, %s25
    %p39 = scmp.eq.s32.totalorder %s17, 1
    %p40 = por %p38, %p39
    %p42 = scmp.ne.s32.totalorder %s25, %s41
    %p43 = scmp.eq.s32.totalorder %s17, 0
    %p44 = por %p42, %p43
    %s46 = sadd.s32 %s45, 1
    %p49 = scmp.eq.s32.totalorder %s11, 1
    %p50 = scmp.ne.s32.totalorder %s45, %s47
    %p51 = scmp.eq.s32.totalorder %s11, 0
    %p52 = por %p50, %p51
    %p53 = scmp.ne.s32.totalorder %s45, %s47
    %p54 = scmp.eq.s32.totalorder %s16, 1
    %p55 = por %p53, %p54
    %p56 = scmp.ne.s32.totalorder %s47, %s48
    %p57 = scmp.eq.s32.totalorder %s16, 0
    %p58 = por %p56, %p57
    %p59 = scmp.ne.s32.totalorder %s47, %s48
    %p60 = scmp.eq.s32.totalorder %s17, 1
    %p61 = por %p59, %p60
    %p63 = scmp.ne.s32.totalorder %s48, %s62
    %p64 = scmp.eq.s32.totalorder %s17, 0
    %p65 = por %p63, %p64
    %s67 = sadd.s32 %s66, 1
    %p70 = scmp.eq.s32.totalorder %s11, 1
    %p71 = scmp.ne.s32.totalorder %s66, %s68
    %p72 = scmp.eq.s32.totalorder %s11, 0
    %p73 = por %p71, %p72
    %p74 = scmp.ne.s32.totalorder %s66, %s68
    %p75 = scmp.eq.s32.totalorder %s16, 1
    %p76 = por %p74, %p75
    %p77 = scmp.ne.s32.totalorder %s68, %s69
    %p78 = scmp.eq.s32.totalorder %s16, 0
    %p79 = por %p77, %p78
    %p80 = scmp.ne.s32.totalorder %s68, %s69
    %p81 = scmp.eq.s32.totalorder %s17, 1
    %p82 = por %p80, %p81
    %p84 = scmp.ne.s32.totalorder %s69, %s83
    %p85 = scmp.eq.s32.totalorder %s17, 0
    %p86 = por %p84, %p85
    %s88 = sadd.s32 %s87, 1
    %p91 = scmp.eq.s32.totalorder %s11, 1
    %p92 = scmp.ne.s32.totalorder %s87, %s89
    %p93 = scmp.eq.s32.totalorder %s11, 0
    %p94 = por %p92, %p93
    %p95 = scmp.ne.s32.totalorder %s87, %s89
    %p96 = scmp.eq.s32.totalorder %s16, 1
    %p97 = por %p95, %p96
    %p98 = scmp.ne.s32.totalorder %s89, %s90
    %p99 = scmp.eq.s32.totalorder %s16, 0
    %p100 = por %p98, %p99
    %p101 = scmp.ne.s32.totalorder %s89, %s90
    %p102 = scmp.eq.s32.totalorder %s17, 1
    %p103 = por %p101, %p102
    %p105 = scmp.ne.s32.totalorder %s90, %s104
    %p106 = scmp.eq.s32.totalorder %s17, 0
    %p107 = por %p105, %p106
    %s109 = sadd.s32 %s108, 1
    %p112 = scmp.eq.s32.totalorder %s11, 1
    %p113 = scmp.ne.s32.totalorder %s108, %s110
    %p114 = scmp.eq.s32.totalorder %s11, 0
    %p115 = por %p113, %p114
    %p116 = scmp.ne.s32.totalorder %s108, %s110
    %p117 = scmp.eq.s32.totalorder %s16, 1
    %p118 = por %p116, %p117
    %p119 = scmp.ne.s32.totalorder %s110, %s111
    %p120 = scmp.eq.s32.totalorder %s16, 0
    %p121 = por %p119, %p120
    %p122 = scmp.ne.s32.totalorder %s110, %s111
    %p123 = scmp.eq.s32.totalorder %s17, 1
    %p124 = por %p122, %p123
    %p126 = scmp.ne.s32.totalorder %s111, %s125
    %p127 = scmp.eq.s32.totalorder %s17, 0
    %p128 = por %p126, %p127
    %s129 = ssub.s32 %s11, %s18
    %p130 = scmp.eq.s32.totalorder %s129, 0
    %s132 = sadd.s32 %s131, 1
    %s133 = scalar_select %p130, %s131, %s132
    %p136 = pneg %p130
    %p137 = scmp.eq.s32.totalorder %s11, 1
    %p138 = por %p136, %p137
    %p139 = scmp.ne.s32.totalorder %s131, %s134
    %p140 = scmp.eq.s32.totalorder %s11, 0
    %p141 = por %p139, %p140
    %p142 = scmp.ne.s32.totalorder %s131, %s134
    %p143 = scmp.eq.s32.totalorder %s16, 1
    %p144 = por %p142, %p143
    %p145 = scmp.ne.s32.totalorder %s134, %s135
    %p146 = scmp.eq.s32.totalorder %s16, 0
    %p147 = por %p145, %p146
    %p148 = scmp.ne.s32.totalorder %s134, %s135
    %p149 = scmp.eq.s32.totalorder %s17, 1
    %p150 = por %p148, %p149
    %p152 = scmp.ne.s32.totalorder %s135, %s151
    %p153 = scmp.eq.s32.totalorder %s17, 0
    %p154 = por %p152, %p153
    %p155 = scmp.le.s32.totalorder 1, %s11
    %p156 = scmp.lt.s32.totalorder %s11, 3
    %p157 = pnand %p155, %p156
    %p158 = pneg %p157
    // Predicated region
    $region9: #{upsample_forward.1} parent=5 // pred_check
      _
    $region10: #{upsample_forward.1} parent=5 // pred_check_branch
      %160 = sbr.rel (%p157) target = $region12
    $region11: #{upsample_forward.1} parent=5 // pred_region
      %s161 = ssub.s32 %s11, 1
      // Predicated region
      $region13: #{upsample_forward.1} parent=11 // pred_check
        %p162 = pneg %p58
      $region14: #{upsample_forward.1} parent=11 // pred_check_branch
        %164 = sbr.rel (%p162) target = $region16
      $region15: #{upsample_forward.1} parent=11 // pred_region
        _
      $region16: #{upsample_forward.1} parent=11 // pred_fallthru
        _
      // Predicated region
      $region17: #{upsample_forward.1} parent=11 // pred_check
        %p165 = pneg %p79
      $region18: #{upsample_forward.1} parent=11 // pred_check_branch
        %167 = sbr.rel (%p165) target = $region20
      $region19: #{upsample_forward.1} parent=11 // pred_region
        _
      $region20: #{upsample_forward.1} parent=11 // pred_fallthru
        _
      // Predicated region
      $region21: #{upsample_forward.1} parent=11 // pred_check
        %p168 = pneg %p100
      $region22: #{upsample_forward.1} parent=11 // pred_check_branch
        %170 = sbr.rel (%p168) target = $region24
      $region23: #{upsample_forward.1} parent=11 // pred_region
        _
      $region24: #{upsample_forward.1} parent=11 // pred_fallthru
        _
      // Predicated region
      $region25: #{upsample_forward.1} parent=11 // pred_check
        %p171 = pneg %p121
      $region26: #{upsample_forward.1} parent=11 // pred_check_branch
        %173 = sbr.rel (%p171) target = $region28
      $region27: #{upsample_forward.1} parent=11 // pred_region
        _
      $region28: #{upsample_forward.1} parent=11 // pred_fallthru
        _
    $region12: #{upsample_forward.1} parent=5 // pred_fallthru
      _
    %p174 = scmp.lt.s32.totalorder %s11, 2
    // Predicated region
    $region29: #{upsample_forward.1} parent=5 // pred_check
      %p175 = pneg %p174
    $region30: #{upsample_forward.1} parent=5 // pred_check_branch
      %177 = sbr.rel (%p175) target = $region32
    $region31: #{upsample_forward.1} parent=5 // pred_region
      // Predicated region
      $region33: #{upsample_forward.1} parent=31 // pred_check
        %p178 = pneg %p31
      $region34: #{upsample_forward.1} parent=31 // pred_check_branch
        %180 = sbr.rel (%p178) target = $region36
      $region35: #{upsample_forward.1} parent=31 // pred_region
        %p181 = scmp.lt.s32.totalorder %s11, 1
        %s182 = scalar_select %p181, %s11, 1
        %s183 = smul.addr %s182, 32
        %s184 = smul.addr %s183, 8
        %s185 = scalar_lea.vmem %s0, %s184
      $region36: #{upsample_forward.1} parent=31 // pred_fallthru
        _
    $region32: #{upsample_forward.1} parent=5 // pred_fallthru
      _
    %p186 = scmp.le.s32.totalorder 1, %s11
    %p187 = scmp.lt.s32.totalorder %s11, 3
    %p188 = pnand %p186, %p187
    %p189 = pneg %p188
    // Predicated region
    $region37: #{upsample_forward.1} parent=5 // pred_check
      _
    $region38: #{upsample_forward.1} parent=5 // pred_check_branch
      %191 = sbr.rel (%p188) target = $region40
    $region39: #{upsample_forward.1} parent=5 // pred_region
      %s192 = ssub.s32 %s11, 1
      %p193 = scmp.lt.s32.totalorder %s16, 1
      %s194 = scalar_select %p193, %s16, 1
      %s195 = smul.addr %s194, 32
      %s196 = smul.addr %s195, 8
      %s197 = scalar_lea.vmem %s0, %s196
      %p198 = pneg %p37
      %p199 = pneg %p34
      %p200 = pneg %p58
      %p201 = pneg %p55
      %p202 = pneg %p79
      %p203 = pneg %p76
      %p204 = pneg %p100
      %p205 = pneg %p97
      %p206 = pneg %p121
      %p207 = pneg %p118
      %p208 = pneg %p147
      %p209 = pneg %p144
      %p210 = scmp.lt.s32.totalorder %s16, 1
      %s211 = scalar_select %p210, %s16, 1
      %s212 = smul.addr %s211, 128
      %s213 = smul.addr %s212, 8
      %s214 = scalar_lea.vmem %s5, %s213
      %p215 = scmp.lt.s32.totalorder %s16, 1
      %s216 = scalar_select %p215, %s16, 1
      %s217 = smul.addr %s216, 32
      %s218 = smul.addr %s217, 8
      %s219 = scalar_lea.vmem %s0, %s218
      %p220 = scmp.lt.s32.totalorder %s16, 1
      %s221 = scalar_select %p220, %s16, 1
      %s222 = smul.addr %s221, 128
      %s223 = smul.addr %s222, 8
      %s224 = scalar_lea.vmem %s5, %s223
      %v225 = vld [vmem:[%s219] sm:$0xff]
      %v226 = vld [vmem:[%s219 + $0x8] sm:$0xff]
      %v227 = vld [vmem:[%s219 + $0x10] sm:$0xff]
      %v228 = vld [vmem:[%s219 + $0x18] sm:$0xff]
      %v229 = vld [vmem:[%s219 + $0x20] sm:$0xff]
      %v230 = vld [vmem:[%s219 + $0x28] sm:$0xff]
      %v231 = vld [vmem:[%s219 + $0x30] sm:$0xff]
      %v232 = vld [vmem:[%s219 + $0x38] sm:$0xff]
      %v233 = vld [vmem:[%s219 + $0x40] sm:$0xff]
      %v234 = vld [vmem:[%s219 + $0x48] sm:$0xff]
      %v235 = vld [vmem:[%s219 + $0x50] sm:$0xff]
      %v236 = vld [vmem:[%s219 + $0x58] sm:$0xff]
      %v237 = vld [vmem:[%s219 + $0x60] sm:$0xff]
      %v238 = vld [vmem:[%s219 + $0x68] sm:$0xff]
      %v239 = vld [vmem:[%s219 + $0x70] sm:$0xff]
      %v240 = vld [vmem:[%s219 + $0x78] sm:$0xff]
      %v241 = vld [vmem:[%s219 + $0x80] sm:$0xff]
      %v242 = vld [vmem:[%s219 + $0x88] sm:$0xff]
      %v243 = vld [vmem:[%s219 + $0x90] sm:$0xff]
      %v244 = vld [vmem:[%s219 + $0x98] sm:$0xff]
      %v245 = vld [vmem:[%s219 + $0xa0] sm:$0xff]
      %v246 = vld [vmem:[%s219 + $0xa8] sm:$0xff]
      %v247 = vld [vmem:[%s219 + $0xb0] sm:$0xff]
      %v248 = vld [vmem:[%s219 + $0xb8] sm:$0xff]
      %v249 = vld [vmem:[%s219 + $0xc0] sm:$0xff]
      %v250 = vld [vmem:[%s219 + $0xc8] sm:$0xff]
      %v251 = vld [vmem:[%s219 + $0xd0] sm:$0xff]
      %v252 = vld [vmem:[%s219 + $0xd8] sm:$0xff]
      %v253 = vld [vmem:[%s219 + $0xe0] sm:$0xff]
      %v254 = vld [vmem:[%s219 + $0xe8] sm:$0xff]
      %v255 = vld [vmem:[%s219 + $0xf0] sm:$0xff]
      %v256 = vld [vmem:[%s219 + $0xf8] sm:$0xff]
      %vm257 = vcmask 31744
      %258 = vst.msk [vmem:[#allocation2 + $0x18] sm:$0xff] %vm257, %v225
      %259 = vst.msk [vmem:[#allocation2 + $0x20] sm:$0xff] %vm257, %v226
      %260 = vst.msk [vmem:[#allocation2 + $0x28] sm:$0xff] %vm257, %v227
      %261 = vst.msk [vmem:[#allocation2 + $0x30] sm:$0xff] %vm257, %v228
      %262 = vst.msk [vmem:[#allocation2 + $0x38] sm:$0xff] %vm257, %v229
      %263 = vst.msk [vmem:[#allocation2 + $0x40] sm:$0xff] %vm257, %v230
      %264 = vst.msk [vmem:[#allocation2 + $0x48] sm:$0xff] %vm257, %v231
      %265 = vst.msk [vmem:[#allocation2 + $0x50] sm:$0xff] %vm257, %v232
      %266 = vst.msk [vmem:[#allocation2 + $0x58] sm:$0xff] %vm257, %v233
      %267 = vst.msk [vmem:[#allocation2 + $0x60] sm:$0xff] %vm257, %v234
      %268 = vst.msk [vmem:[#allocation2 + $0x68] sm:$0xff] %vm257, %v235
      %269 = vst.msk [vmem:[#allocation2 + $0x70] sm:$0xff] %vm257, %v236
      %270 = vst.msk [vmem:[#allocation2 + $0x78] sm:$0xff] %vm257, %v237
      %271 = vst.msk [vmem:[#allocation2 + $0x80] sm:$0xff] %vm257, %v238
      %272 = vst.msk [vmem:[#allocation2 + $0x88] sm:$0xff] %vm257, %v239
      %273 = vst.msk [vmem:[#allocation2 + $0x90] sm:$0xff] %vm257, %v240
      %274 = vst.msk [vmem:[#allocation2 + $0x98] sm:$0xff] %vm257, %v241
      %275 = vst.msk [vmem:[#allocation2 + $0xa0] sm:$0xff] %vm257, %v242
      %276 = vst.msk [vmem:[#allocation2 + $0xa8] sm:$0xff] %vm257, %v243
      %277 = vst.msk [vmem:[#allocation2 + $0xb0] sm:$0xff] %vm257, %v244
      %278 = vst.msk [vmem:[#allocation2 + $0xb8] sm:$0xff] %vm257, %v245
      %279 = vst.msk [vmem:[#allocation2 + $0xc0] sm:$0xff] %vm257, %v246
      %280 = vst.msk [vmem:[#allocation2 + $0xc8] sm:$0xff] %vm257, %v247
      %281 = vst.msk [vmem:[#allocation2 + $0xd0] sm:$0xff] %vm257, %v248
      %282 = vst.msk [vmem:[#allocation2 + $0xd8] sm:$0xff] %vm257, %v249
      %283 = vst.msk [vmem:[#allocation2 + $0xe0] sm:$0xff] %vm257, %v250
      %284 = vst.msk [vmem:[#allocation2 + $0xe8] sm:$0xff] %vm257, %v251
      %285 = vst.msk [vmem:[#allocation2 + $0xf0] sm:$0xff] %vm257, %v252
      %286 = vst.msk [vmem:[#allocation2 + $0xf8] sm:$0xff] %vm257, %v253
      %287 = vst.msk [vmem:[#allocation2 + $0x100] sm:$0xff] %vm257, %v254
      %288 = vst.msk [vmem:[#allocation2 + $0x108] sm:$0xff] %vm257, %v255
      %289 = vst.msk [vmem:[#allocation2 + $0x110] sm:$0xff] %vm257, %v256
      %290 = vst.msk [vmem:[#allocation2 + $0x8] sm:$0xff] %vm257, 0.0
      %291 = vst.msk [vmem:[#allocation2 + $0x10] sm:$0xff] %vm257, 0.0
      %292 = vst.msk [vmem:[#allocation2 + $0x118] sm:$0xff] %vm257, 0.0
      %293 = vst.msk [vmem:[#allocation2 + $0x120] sm:$0xff] %vm257, 0.0
      %v294 = vlaneseq
      %v295 = vshrl.u32 %v294, 7
      %v296 = vadd.s32 %v295, 8
      %v297 = vadd.s32 %v295, 16
      %v298 = vadd.s32 %v295, 24
      %v299 = vadd.s32 %v295, 32
      %v300 = vadd.s32 %v295, 40
      %v301 = vadd.s32 %v295, 48
      %v302 = vadd.s32 %v295, 56
      %v303 = vadd.s32 %v295, 64
      %v304 = vadd.s32 %v295, 72
      %v305 = vadd.s32 %v295, 80
      %v306 = vadd.s32 %v295, 88
      %v307 = vadd.s32 %v295, 96
      %v308 = vadd.s32 %v295, 104
      %v309 = vadd.s32 %v295, 112
      %v310 = vadd.s32 %v295, 120
      %v311 = vadd.s32 %v295, 128
      %v312 = vadd.s32 %v295, 136
      %v313 = vadd.s32 %v295, 144
      %v314 = vadd.s32 %v295, 152
      %v315 = vadd.s32 %v295, 160
      %v316 = vadd.s32 %v295, 168
      %v317 = vadd.s32 %v295, 176
      %v318 = vadd.s32 %v295, 184
      %v319 = vadd.s32 %v295, 192
      %v320 = vadd.s32 %v295, 200
      %v321 = vadd.s32 %v295, 208
      %v322 = vadd.s32 %v295, 216
      %v323 = vadd.s32 %v295, 224
      %v324 = vadd.s32 %v295, 232
      %v325 = vadd.s32 %v295, 240
      %v326 = vadd.s32 %v295, 248
      %vm327 = vcmp.lt.s32.totalorder %v295, 0
      %v328 = vsub.s32 0, %v295
      %v329 = vsel %vm327, %v328, %v295
      %v330 = vshrl.u32 %v329, 4
      %v331 = vand.u32 %v329, 15
      %v332 = vsub.s32 0, %v331
      %v333 = vsel %vm327, %v332, %v331
      %vm334 = vcmp.lt.s32.totalorder %v296, 0
      %v335 = vsub.s32 0, %v296
      %v336 = vsel %vm334, %v335, %v296
      %v337 = vshrl.u32 %v336, 4
      %v338 = vand.u32 %v336, 15
      %v339 = vsub.s32 0, %v338
      %v340 = vsel %vm334, %v339, %v338
      %vm341 = vcmp.lt.s32.totalorder %v297, 0
      %v342 = vsub.s32 0, %v297
      %v343 = vsel %vm341, %v342, %v297
      %v344 = vshrl.u32 %v343, 4
      %v345 = vand.u32 %v343, 15
      %v346 = vsub.s32 0, %v345
      %v347 = vsel %vm341, %v346, %v345
      %vm348 = vcmp.lt.s32.totalorder %v298, 0
      %v349 = vsub.s32 0, %v298
      %v350 = vsel %vm348, %v349, %v298
      %v351 = vshrl.u32 %v350, 4
      %v352 = vand.u32 %v350, 15
      %v353 = vsub.s32 0, %v352
      %v354 = vsel %vm348, %v353, %v352
      %vm355 = vcmp.lt.s32.totalorder %v299, 0
      %v356 = vsub.s32 0, %v299
      %v357 = vsel %vm355, %v356, %v299
      %v358 = vshrl.u32 %v357, 4
      %v359 = vand.u32 %v357, 15
      %v360 = vsub.s32 0, %v359
      %v361 = vsel %vm355, %v360, %v359
      %vm362 = vcmp.lt.s32.totalorder %v300, 0
      %v363 = vsub.s32 0, %v300
      %v364 = vsel %vm362, %v363, %v300
      %v365 = vshrl.u32 %v364, 4
      %v366 = vand.u32 %v364, 15
      %v367 = vsub.s32 0, %v366
      %v368 = vsel %vm362, %v367, %v366
      %vm369 = vcmp.lt.s32.totalorder %v301, 0
      %v370 = vsub.s32 0, %v301
      %v371 = vsel %vm369, %v370, %v301
      %v372 = vshrl.u32 %v371, 4
      %v373 = vand.u32 %v371, 15
      %v374 = vsub.s32 0, %v373
      %v375 = vsel %vm369, %v374, %v373
      %vm376 = vcmp.lt.s32.totalorder %v302, 0
      %v377 = vsub.s32 0, %v302
      %v378 = vsel %vm376, %v377, %v302
      %v379 = vshrl.u32 %v378, 4
      %v380 = vand.u32 %v378, 15
      %v381 = vsub.s32 0, %v380
      %v382 = vsel %vm376, %v381, %v380
      %vm383 = vcmp.lt.s32.totalorder %v303, 0
      %v384 = vsub.s32 0, %v303
      %v385 = vsel %vm383, %v384, %v303
      %v386 = vshrl.u32 %v385, 4
      %v387 = vand.u32 %v385, 15
      %v388 = vsub.s32 0, %v387
      %v389 = vsel %vm383, %v388, %v387
      %vm390 = vcmp.lt.s32.totalorder %v304, 0
      %v391 = vsub.s32 0, %v304
      %v392 = vsel %vm390, %v391, %v304
      %v393 = vshrl.u32 %v392, 4
      %v394 = vand.u32 %v392, 15
      %v395 = vsub.s32 0, %v394
      %v396 = vsel %vm390, %v395, %v394
      %vm397 = vcmp.lt.s32.totalorder %v305, 0
      %v398 = vsub.s32 0, %v305
      %v399 = vsel %vm397, %v398, %v305
      %v400 = vshrl.u32 %v399, 4
      %v401 = vand.u32 %v399, 15
      %v402 = vsub.s32 0, %v401
      %v403 = vsel %vm397, %v402, %v401
      %vm404 = vcmp.lt.s32.totalorder %v306, 0
      %v405 = vsub.s32 0, %v306
      %v406 = vsel %vm404, %v405, %v306
      %v407 = vshrl.u32 %v406, 4
      %v408 = vand.u32 %v406, 15
      %v409 = vsub.s32 0, %v408
      %v410 = vsel %vm404, %v409, %v408
      %vm411 = vcmp.lt.s32.totalorder %v307, 0
      %v412 = vsub.s32 0, %v307
      %v413 = vsel %vm411, %v412, %v307
      %v414 = vshrl.u32 %v413, 4
      %v415 = vand.u32 %v413, 15
      %v416 = vsub.s32 0, %v415
      %v417 = vsel %vm411, %v416, %v415
      %vm418 = vcmp.lt.s32.totalorder %v308, 0
      %v419 = vsub.s32 0, %v308
      %v420 = vsel %vm418, %v419, %v308
      %v421 = vshrl.u32 %v420, 4
      %v422 = vand.u32 %v420, 15
      %v423 = vsub.s32 0, %v422
      %v424 = vsel %vm418, %v423, %v422
      %vm425 = vcmp.lt.s32.totalorder %v309, 0
      %v426 = vsub.s32 0, %v309
      %v427 = vsel %vm425, %v426, %v309
      %v428 = vshrl.u32 %v427, 4
      %v429 = vand.u32 %v427, 15
      %v430 = vsub.s32 0, %v429
      %v431 = vsel %vm425, %v430, %v429
      %vm432 = vcmp.lt.s32.totalorder %v310, 0
      %v433 = vsub.s32 0, %v310
      %v434 = vsel %vm432, %v433, %v310
      %v435 = vshrl.u32 %v434, 4
      %v436 = vand.u32 %v434, 15
      %v437 = vsub.s32 0, %v436
      %v438 = vsel %vm432, %v437, %v436
      %vm439 = vcmp.lt.s32.totalorder %v311, 0
      %v440 = vsub.s32 0, %v311
      %v441 = vsel %vm439, %v440, %v311
      %v442 = vshrl.u32 %v441, 4
      %v443 = vand.u32 %v441, 15
      %v444 = vsub.s32 0, %v443
      %v445 = vsel %vm439, %v444, %v443
      %vm446 = vcmp.lt.s32.totalorder %v312, 0
      %v447 = vsub.s32 0, %v312
      %v448 = vsel %vm446, %v447, %v312
      %v449 = vshrl.u32 %v448, 4
      %v450 = vand.u32 %v448, 15
      %v451 = vsub.s32 0, %v450
      %v452 = vsel %vm446, %v451, %v450
      %vm453 = vcmp.lt.s32.totalorder %v313, 0
      %v454 = vsub.s32 0, %v313
      %v455 = vsel %vm453, %v454, %v313
      %v456 = vshrl.u32 %v455, 4
      %v457 = vand.u32 %v455, 15
      %v458 = vsub.s32 0, %v457
      %v459 = vsel %vm453, %v458, %v457
      %vm460 = vcmp.lt.s32.totalorder %v314, 0
      %v461 = vsub.s32 0, %v314
      %v462 = vsel %vm460, %v461, %v314
      %v463 = vshrl.u32 %v462, 4
      %v464 = vand.u32 %v462, 15
      %v465 = vsub.s32 0, %v464
      %v466 = vsel %vm460, %v465, %v464
      %vm467 = vcmp.lt.s32.totalorder %v315, 0
      %v468 = vsub.s32 0, %v315
      %v469 = vsel %vm467, %v468, %v315
      %v470 = vshrl.u32 %v469, 4
      %v471 = vand.u32 %v469, 15
      %v472 = vsub.s32 0, %v471
      %v473 = vsel %vm467, %v472, %v471
      %vm474 = vcmp.lt.s32.totalorder %v316, 0
      %v475 = vsub.s32 0, %v316
      %v476 = vsel %vm474, %v475, %v316
      %v477 = vshrl.u32 %v476, 4
      %v478 = vand.u32 %v476, 15
      %v479 = vsub.s32 0, %v478
      %v480 = vsel %vm474, %v479, %v478
      %vm481 = vcmp.lt.s32.totalorder %v317, 0
      %v482 = vsub.s32 0, %v317
      %v483 = vsel %vm481, %v482, %v317
      %v484 = vshrl.u32 %v483, 4
      %v485 = vand.u32 %v483, 15
      %v486 = vsub.s32 0, %v485
      %v487 = vsel %vm481, %v486, %v485
      %vm488 = vcmp.lt.s32.totalorder %v318, 0
      %v489 = vsub.s32 0, %v318
      %v490 = vsel %vm488, %v489, %v318
      %v491 = vshrl.u32 %v490, 4
      %v492 = vand.u32 %v490, 15
      %v493 = vsub.s32 0, %v492
      %v494 = vsel %vm488, %v493, %v492
      %vm495 = vcmp.lt.s32.totalorder %v319, 0
      %v496 = vsub.s32 0, %v319
      %v497 = vsel %vm495, %v496, %v319
      %v498 = vshrl.u32 %v497, 4
      %v499 = vand.u32 %v497, 15
      %v500 = vsub.s32 0, %v499
      %v501 = vsel %vm495, %v500, %v499
      %vm502 = vcmp.lt.s32.totalorder %v320, 0
      %v503 = vsub.s32 0, %v320
      %v504 = vsel %vm502, %v503, %v320
      %v505 = vshrl.u32 %v504, 4
      %v506 = vand.u32 %v504, 15
      %v507 = vsub.s32 0, %v506
      %v508 = vsel %vm502, %v507, %v506
      %vm509 = vcmp.lt.s32.totalorder %v321, 0
      %v510 = vsub.s32 0, %v321
      %v511 = vsel %vm509, %v510, %v321
      %v512 = vshrl.u32 %v511, 4
      %v513 = vand.u32 %v511, 15
      %v514 = vsub.s32 0, %v513
      %v515 = vsel %vm509, %v514, %v513
      %vm516 = vcmp.lt.s32.totalorder %v322, 0
      %v517 = vsub.s32 0, %v322
      %v518 = vsel %vm516, %v517, %v322
      %v519 = vshrl.u32 %v518, 4
      %v520 = vand.u32 %v518, 15
      %v521 = vsub.s32 0, %v520
      %v522 = vsel %vm516, %v521, %v520
      %vm523 = vcmp.lt.s32.totalorder %v323, 0
      %v524 = vsub.s32 0, %v323
      %v525 = vsel %vm523, %v524, %v323
      %v526 = vshrl.u32 %v525, 4
      %v527 = vand.u32 %v525, 15
      %v528 = vsub.s32 0, %v527
      %v529 = vsel %vm523, %v528, %v527
      %vm530 = vcmp.lt.s32.totalorder %v324, 0
      %v531 = vsub.s32 0, %v324
      %v532 = vsel %vm530, %v531, %v324
      %v533 = vshrl.u32 %v532, 4
      %v534 = vand.u32 %v532, 15
      %v535 = vsub.s32 0, %v534
      %v536 = vsel %vm530, %v535, %v534
      %vm537 = vcmp.lt.s32.totalorder %v325, 0
      %v538 = vsub.s32 0, %v325
      %v539 = vsel %vm537, %v538, %v325
      %v540 = vshrl.u32 %v539, 4
      %v541 = vand.u32 %v539, 15
      %v542 = vsub.s32 0, %v541
      %v543 = vsel %vm537, %v542, %v541
      %vm544 = vcmp.lt.s32.totalorder %v326, 0
      %v545 = vsub.s32 0, %v326
      %v546 = vsel %vm544, %v545, %v326
      %v547 = vshrl.u32 %v546, 4
      %v548 = vand.u32 %v546, 15
      %v549 = vsub.s32 0, %v548
      %v550 = vsel %vm544, %v549, %v548
      %vm551 = vcmp.ne.s32.totalorder %v333, 0
      %vm552 = vcmp.ne.s32.totalorder %v340, 0
      %vm553 = vcmp.ne.s32.totalorder %v347, 0
      %vm554 = vcmp.ne.s32.totalorder %v354, 0
      %vm555 = vcmp.ne.s32.totalorder %v361, 0
      %vm556 = vcmp.ne.s32.totalorder %v368, 0
      %vm557 = vcmp.ne.s32.totalorder %v375, 0
      %vm558 = vcmp.ne.s32.totalorder %v382, 0
      %vm559 = vcmp.ne.s32.totalorder %v389, 0
      %vm560 = vcmp.ne.s32.totalorder %v396, 0
      %vm561 = vcmp.ne.s32.totalorder %v403, 0
      %vm562 = vcmp.ne.s32.totalorder %v410, 0
      %vm563 = vcmp.ne.s32.totalorder %v417, 0
      %vm564 = vcmp.ne.s32.totalorder %v424, 0
      %vm565 = vcmp.ne.s32.totalorder %v431, 0
      %vm566 = vcmp.ne.s32.totalorder %v438, 0
      %vm567 = vcmp.ne.s32.totalorder %v445, 0
      %vm568 = vcmp.ne.s32.totalorder %v452, 0
      %vm569 = vcmp.ne.s32.totalorder %v459, 0
      %vm570 = vcmp.ne.s32.totalorder %v466, 0
      %vm571 = vcmp.ne.s32.totalorder %v473, 0
      %vm572 = vcmp.ne.s32.totalorder %v480, 0
      %vm573 = vcmp.ne.s32.totalorder %v487, 0
      %vm574 = vcmp.ne.s32.totalorder %v494, 0
      %vm575 = vcmp.ne.s32.totalorder %v501, 0
      %vm576 = vcmp.ne.s32.totalorder %v508, 0
      %vm577 = vcmp.ne.s32.totalorder %v515, 0
      %vm578 = vcmp.ne.s32.totalorder %v522, 0
      %vm579 = vcmp.ne.s32.totalorder %v529, 0
      %vm580 = vcmp.ne.s32.totalorder %v536, 0
      %vm581 = vcmp.ne.s32.totalorder %v543, 0
      %vm582 = vcmp.ne.s32.totalorder %v550, 0
      %vm583 = vcmp.lt.s32.totalorder %v333, 0
      %vm584 = vcmp.lt.s32.totalorder %v340, 0
      %vm585 = vcmp.lt.s32.totalorder %v347, 0
      %vm586 = vcmp.lt.s32.totalorder %v354, 0
      %vm587 = vcmp.lt.s32.totalorder %v361, 0
      %vm588 = vcmp.lt.s32.totalorder %v368, 0
      %vm589 = vcmp.lt.s32.totalorder %v375, 0
      %vm590 = vcmp.lt.s32.totalorder %v382, 0
      %vm591 = vcmp.lt.s32.totalorder %v389, 0
      %vm592 = vcmp.lt.s32.totalorder %v396, 0
      %vm593 = vcmp.lt.s32.totalorder %v403, 0
      %vm594 = vcmp.lt.s32.totalorder %v410, 0
      %vm595 = vcmp.lt.s32.totalorder %v417, 0
      %vm596 = vcmp.lt.s32.totalorder %v424, 0
      %vm597 = vcmp.lt.s32.totalorder %v431, 0
      %vm598 = vcmp.lt.s32.totalorder %v438, 0
      %vm599 = vcmp.lt.s32.totalorder %v445, 0
      %vm600 = vcmp.lt.s32.totalorder %v452, 0
      %vm601 = vcmp.lt.s32.totalorder %v459, 0
      %vm602 = vcmp.lt.s32.totalorder %v466, 0
      %vm603 = vcmp.lt.s32.totalorder %v473, 0
      %vm604 = vcmp.lt.s32.totalorder %v480, 0
      %vm605 = vcmp.lt.s32.totalorder %v487, 0
      %vm606 = vcmp.lt.s32.totalorder %v494, 0
      %vm607 = vcmp.lt.s32.totalorder %v501, 0
      %vm608 = vcmp.lt.s32.totalorder %v508, 0
      %vm609 = vcmp.lt.s32.totalorder %v515, 0
      %vm610 = vcmp.lt.s32.totalorder %v522, 0
      %vm611 = vcmp.lt.s32.totalorder %v529, 0
      %vm612 = vcmp.lt.s32.totalorder %v536, 0
      %vm613 = vcmp.lt.s32.totalorder %v543, 0
      %vm614 = vcmp.lt.s32.totalorder %v550, 0
      %vm615 = vmand %vm583, %vm551
      %vm616 = vmand %vm584, %vm552
      %vm617 = vmand %vm585, %vm553
      %vm618 = vmand %vm586, %vm554
      %vm619 = vmand %vm587, %vm555
      %vm620 = vmand %vm588, %vm556
      %vm621 = vmand %vm589, %vm557
      %vm622 = vmand %vm590, %vm558
      %vm623 = vmand %vm591, %vm559
      %vm624 = vmand %vm592, %vm560
      %vm625 = vmand %vm593, %vm561
      %vm626 = vmand %vm594, %vm562
      %vm627 = vmand %vm595, %vm563
      %vm628 = vmand %vm596, %vm564
      %vm629 = vmand %vm597, %vm565
      %vm630 = vmand %vm598, %vm566
      %vm631 = vmand %vm599, %vm567
      %vm632 = vmand %vm600, %vm568
      %vm633 = vmand %vm601, %vm569
      %vm634 = vmand %vm602, %vm570
      %vm635 = vmand %vm603, %vm571
      %vm636 = vmand %vm604, %vm572
      %vm637 = vmand %vm605, %vm573
      %vm638 = vmand %vm606, %vm574
      %vm639 = vmand %vm607, %vm575
      %vm640 = vmand %vm608, %vm576
      %vm641 = vmand %vm609, %vm577
      %vm642 = vmand %vm610, %vm578
      %vm643 = vmand %vm611, %vm579
      %vm644 = vmand %vm612, %vm580
      %vm645 = vmand %vm613, %vm581
      %vm646 = vmand %vm614, %vm582
      %v647 = vadd.s32 %v333, 16
      %v648 = vadd.s32 %v340, 16
      %v649 = vadd.s32 %v347, 16
      %v650 = vadd.s32 %v354, 16
      %v651 = vadd.s32 %v361, 16
      %v652 = vadd.s32 %v368, 16
      %v653 = vadd.s32 %v375, 16
      %v654 = vadd.s32 %v382, 16
      %v655 = vadd.s32 %v389, 16
      %v656 = vadd.s32 %v396, 16
      %v657 = vadd.s32 %v403, 16
      %v658 = vadd.s32 %v410, 16
      %v659 = vadd.s32 %v417, 16
      %v660 = vadd.s32 %v424, 16
      %v661 = vadd.s32 %v431, 16
      %v662 = vadd.s32 %v438, 16
      %v663 = vadd.s32 %v445, 16
      %v664 = vadd.s32 %v452, 16
      %v665 = vadd.s32 %v459, 16
      %v666 = vadd.s32 %v466, 16
      %v667 = vadd.s32 %v473, 16
      %v668 = vadd.s32 %v480, 16
      %v669 = vadd.s32 %v487, 16
      %v670 = vadd.s32 %v494, 16
      %v671 = vadd.s32 %v501, 16
      %v672 = vadd.s32 %v508, 16
      %v673 = vadd.s32 %v515, 16
      %v674 = vadd.s32 %v522, 16
      %v675 = vadd.s32 %v529, 16
      %v676 = vadd.s32 %v536, 16
      %v677 = vadd.s32 %v543, 16
      %v678 = vadd.s32 %v550, 16
      %v679 = vsel %vm615, %v647, %v333
      %v680 = vsel %vm616, %v648, %v340
      %v681 = vsel %vm617, %v649, %v347
      %v682 = vsel %vm618, %v650, %v354
      %v683 = vsel %vm619, %v651, %v361
      %v684 = vsel %vm620, %v652, %v368
      %v685 = vsel %vm621, %v653, %v375
      %v686 = vsel %vm622, %v654, %v382
      %v687 = vsel %vm623, %v655, %v389
      %v688 = vsel %vm624, %v656, %v396
      %v689 = vsel %vm625, %v657, %v403
      %v690 = vsel %vm626, %v658, %v410
      %v691 = vsel %vm627, %v659, %v417
      %v692 = vsel %vm628, %v660, %v424
      %v693 = vsel %vm629, %v661, %v431
      %v694 = vsel %vm630, %v662, %v438
      %v695 = vsel %vm631, %v663, %v445
      %v696 = vsel %vm632, %v664, %v452
      %v697 = vsel %vm633, %v665, %v459
      %v698 = vsel %vm634, %v666, %v466
      %v699 = vsel %vm635, %v667, %v473
      %v700 = vsel %vm636, %v668, %v480
      %v701 = vsel %vm637, %v669, %v487
      %v702 = vsel %vm638, %v670, %v494
      %v703 = vsel %vm639, %v671, %v501
      %v704 = vsel %vm640, %v672, %v508
      %v705 = vsel %vm641, %v673, %v515
      %v706 = vsel %vm642, %v674, %v522
      %v707 = vsel %vm643, %v675, %v529
      %v708 = vsel %vm644, %v676, %v536
      %v709 = vsel %vm645, %v677, %v543
      %v710 = vsel %vm646, %v678, %v550
      %vm711 = vcmp.gt.s32.totalorder %v679, 0
      %vm712 = vcmp.gt.s32.totalorder %v680, 0
      %vm713 = vcmp.gt.s32.totalorder %v681, 0
      %vm714 = vcmp.gt.s32.totalorder %v682, 0
      %vm715 = vcmp.gt.s32.totalorder %v683, 0
      %vm716 = vcmp.gt.s32.totalorder %v684, 0
      %vm717 = vcmp.gt.s32.totalorder %v685, 0
      %vm718 = vcmp.gt.s32.totalorder %v686, 0
      %vm719 = vcmp.gt.s32.totalorder %v687, 0
      %vm720 = vcmp.gt.s32.totalorder %v688, 0
      %vm721 = vcmp.gt.s32.totalorder %v689, 0
      %vm722 = vcmp.gt.s32.totalorder %v690, 0
      %vm723 = vcmp.gt.s32.totalorder %v691, 0
      %vm724 = vcmp.gt.s32.totalorder %v692, 0
      %vm725 = vcmp.gt.s32.totalorder %v693, 0
      %vm726 = vcmp.gt.s32.totalorder %v694, 0
      %vm727 = vcmp.gt.s32.totalorder %v695, 0
      %vm728 = vcmp.gt.s32.totalorder %v696, 0
      %vm729 = vcmp.gt.s32.totalorder %v697, 0
      %vm730 = vcmp.gt.s32.totalorder %v698, 0
      %vm731 = vcmp.gt.s32.totalorder %v699, 0
      %vm732 = vcmp.gt.s32.totalorder %v700, 0
      %vm733 = vcmp.gt.s32.totalorder %v701, 0
      %vm734 = vcmp.gt.s32.totalorder %v702, 0
      %vm735 = vcmp.gt.s32.totalorder %v703, 0
      %vm736 = vcmp.gt.s32.totalorder %v704, 0
      %vm737 = vcmp.gt.s32.totalorder %v705, 0
      %vm738 = vcmp.gt.s32.totalorder %v706, 0
      %vm739 = vcmp.gt.s32.totalorder %v707, 0
      %vm740 = vcmp.gt.s32.totalorder %v708, 0
      %vm741 = vcmp.gt.s32.totalorder %v709, 0
      %vm742 = vcmp.gt.s32.totalorder %v710, 0
      %vm743 = vcmp.lt.s32.totalorder %v679, 15
      %vm744 = vcmp.lt.s32.totalorder %v680, 15
      %vm745 = vcmp.lt.s32.totalorder %v681, 15
      %vm746 = vcmp.lt.s32.totalorder %v682, 15
      %vm747 = vcmp.lt.s32.totalorder %v683, 15
      %vm748 = vcmp.lt.s32.totalorder %v684, 15
      %vm749 = vcmp.lt.s32.totalorder %v685, 15
      %vm750 = vcmp.lt.s32.totalorder %v686, 15
      %vm751 = vcmp.lt.s32.totalorder %v687, 15
      %vm752 = vcmp.lt.s32.totalorder %v688, 15
      %vm753 = vcmp.lt.s32.totalorder %v689, 15
      %vm754 = vcmp.lt.s32.totalorder %v690, 15
      %vm755 = vcmp.lt.s32.totalorder %v691, 15
      %vm756 = vcmp.lt.s32.totalorder %v692, 15
      %vm757 = vcmp.lt.s32.totalorder %v693, 15
      %vm758 = vcmp.lt.s32.totalorder %v694, 15
      %vm759 = vcmp.lt.s32.totalorder %v695, 15
      %vm760 = vcmp.lt.s32.totalorder %v696, 15
      %vm761 = vcmp.lt.s32.totalorder %v697, 15
      %vm762 = vcmp.lt.s32.totalorder %v698, 15
      %vm763 = vcmp.lt.s32.totalorder %v699, 15
      %vm764 = vcmp.lt.s32.totalorder %v700, 15
      %vm765 = vcmp.lt.s32.totalorder %v701, 15
      %vm766 = vcmp.lt.s32.totalorder %v702, 15
      %vm767 = vcmp.lt.s32.totalorder %v703, 15
      %vm768 = vcmp.lt.s32.totalorder %v704, 15
      %vm769 = vcmp.lt.s32.totalorder %v705, 15
      %vm770 = vcmp.lt.s32.totalorder %v706, 15
      %vm771 = vcmp.lt.s32.totalorder %v707, 15
      %vm772 = vcmp.lt.s32.totalorder %v708, 15
      %vm773 = vcmp.lt.s32.totalorder %v709, 15
      %vm774 = vcmp.lt.s32.totalorder %v710, 15
      %v775 = vld [vmem:[%s219] sm:$0xff]
      %v776 = vld [vmem:[%s219 + $0x8] sm:$0xff]
      %v777 = vld [vmem:[%s219 + $0x10] sm:$0xff]
      %v778 = vld [vmem:[%s219 + $0x18] sm:$0xff]
      %v779 = vld [vmem:[%s219 + $0x20] sm:$0xff]
      %v780 = vld [vmem:[%s219 + $0x28] sm:$0xff]
      %v781 = vld [vmem:[%s219 + $0x30] sm:$0xff]
      %v782 = vld [vmem:[%s219 + $0x38] sm:$0xff]
      %v783 = vld [vmem:[%s219 + $0x40] sm:$0xff]
      %v784 = vld [vmem:[%s219 + $0x48] sm:$0xff]
      %v785 = vld [vmem:[%s219 + $0x50] sm:$0xff]
      %v786 = vld [vmem:[%s219 + $0x58] sm:$0xff]
      %v787 = vld [vmem:[%s219 + $0x60] sm:$0xff]
      %v788 = vld [vmem:[%s219 + $0x68] sm:$0xff]
      %v789 = vld [vmem:[%s219 + $0x70] sm:$0xff]
      %v790 = vld [vmem:[%s219 + $0x78] sm:$0xff]
      %v791 = vld [vmem:[%s219 + $0x80] sm:$0xff]
      %v792 = vld [vmem:[%s219 + $0x88] sm:$0xff]
      %v793 = vld [vmem:[%s219 + $0x90] sm:$0xff]
      %v794 = vld [vmem:[%s219 + $0x98] sm:$0xff]
      %v795 = vld [vmem:[%s219 + $0xa0] sm:$0xff]
      %v796 = vld [vmem:[%s219 + $0xa8] sm:$0xff]
      %v797 = vld [vmem:[%s219 + $0xb0] sm:$0xff]
      %v798 = vld [vmem:[%s219 + $0xb8] sm:$0xff]
      %v799 = vld [vmem:[%s219 + $0xc0] sm:$0xff]
      %v800 = vld [vmem:[%s219 + $0xc8] sm:$0xff]
      %v801 = vld [vmem:[%s219 + $0xd0] sm:$0xff]
      %v802 = vld [vmem:[%s219 + $0xd8] sm:$0xff]
      %v803 = vld [vmem:[%s219 + $0xe0] sm:$0xff]
      %v804 = vld [vmem:[%s219 + $0xe8] sm:$0xff]
      %v805 = vld [vmem:[%s219 + $0xf0] sm:$0xff]
      %v806 = vld [vmem:[%s219 + $0xf8] sm:$0xff]
      %v807 = vld [vmem:[%s1] sm:$0xf]
      %v809 = vsel %vm257, %v775, 0
      %v812 = vsel %vm257, %v776, 0
      %v815 = vsel %vm257, %v777, 0
      %v818 = vsel %vm257, %v778, 0
      %v821 = vsel %vm257, %v779, 0
      %v824 = vsel %vm257, %v780, 0
      %v827 = vsel %vm257, %v781, 0
      %v830 = vsel %vm257, %v782, 0
      %v833 = vsel %vm257, %v783, 0
      %v836 = vsel %vm257, %v784, 0
      %v839 = vsel %vm257, %v785, 0
      %v842 = vsel %vm257, %v786, 0
      %v845 = vsel %vm257, %v787, 0
      %v848 = vsel %vm257, %v788, 0
      %v851 = vsel %vm257, %v789, 0
      %v854 = vsel %vm257, %v790, 0
      %v857 = vsel %vm257, %v791, 0
      %v860 = vsel %vm257, %v792, 0
      %v863 = vsel %vm257, %v793, 0
      %v866 = vsel %vm257, %v794, 0
      %v869 = vsel %vm257, %v795, 0
      %v872 = vsel %vm257, %v796, 0
      %v875 = vsel %vm257, %v797, 0
      %v878 = vsel %vm257, %v798, 0
      %v881 = vsel %vm257, %v799, 0
      %v884 = vsel %vm257, %v800, 0
      %v887 = vsel %vm257, %v801, 0
      %v890 = vsel %vm257, %v802, 0
      %v893 = vsel %vm257, %v803, 0
      %v896 = vsel %vm257, %v804, 0
      %v899 = vsel %vm257, %v805, 0
      %v902 = vsel %vm257, %v806, 0
      %vm904 = vcmask 1043456
      %v906 = vsel %vm904, %v807, 0
      %908 = vmatpush.msra.mxu0 0.0
      %909 = vmatpush.msra.mxu0 0.0
      %910 = vmatpush.msra.mxu0 0.0
      %911 = vmatpush.msra.mxu0 0.0
      %912 = vmatpush.msra.mxu0 0.0
      %913 = vmatpush.msra.mxu0 0.0
      %914 = vmatpush.msra.mxu0 0.0
      %915 = vmatpush.msra.mxu0 0.0
      %916 = vmatpush.msra.mxu0 0.0
      %917 = vmatpush.msra.mxu0 0.0
      %918 = vmatpush.msra.mxu0 0.0
      %919 = vmatpush.msra.mxu0 0.0
      %920 = vmatpush.msra.mxu0 0.0
      %921 = vmatpush.msra.mxu0 0.0
      %922 = vmatpush.msra.mxu0 0.0
      %923 = vmatpush.msra.mxu0 %v906
      %924 = vmatmul.f32.gmra.mxu0 %v809
      %v925 = vpop.f32.mrf.mxu0
      %v926 = vadd.f32 0.0, %v925
      %927 = vmatmul.f32.gmra.mxu0 %v812
      %v928 = vpop.f32.mrf.mxu0
      %v929 = vadd.f32 0.0, %v928
      %930 = vmatmul.f32.gmra.mxu0 %v815
      %v931 = vpop.f32.mrf.mxu0
      %v932 = vadd.f32 0.0, %v931
      %933 = vmatmul.f32.gmra.mxu0 %v818
      %v934 = vpop.f32.mrf.mxu0
      %v935 = vadd.f32 0.0, %v934
      %936 = vmatmul.f32.gmra.mxu0 %v821
      %v937 = vpop.f32.mrf.mxu0
      %v938 = vadd.f32 0.0, %v937
      %939 = vmatmul.f32.gmra.mxu0 %v824
      %v940 = vpop.f32.mrf.mxu0
      %v941 = vadd.f32 0.0, %v940
      %942 = vmatmul.f32.gmra.mxu0 %v827
      %v943 = vpop.f32.mrf.mxu0
      %v944 = vadd.f32 0.0, %v943
      %945 = vmatmul.f32.gmra.mxu0 %v830
      %v946 = vpop.f32.mrf.mxu0
      %v947 = vadd.f32 0.0, %v946
      %948 = vmatmul.f32.gmra.mxu0 %v833
      %v949 = vpop.f32.mrf.mxu0
      %v950 = vadd.f32 0.0, %v949
      %951 = vmatmul.f32.gmra.mxu0 %v836
      %v952 = vpop.f32.mrf.mxu0
      %v953 = vadd.f32 0.0, %v952
      %954 = vmatmul.f32.gmra.mxu0 %v839
      %v955 = vpop.f32.mrf.mxu0
      %v956 = vadd.f32 0.0, %v955
      %957 = vmatmul.f32.gmra.mxu0 %v842
      %v958 = vpop.f32.mrf.mxu0
      %v959 = vadd.f32 0.0, %v958
      %960 = vmatmul.f32.gmra.mxu0 %v845
      %v961 = vpop.f32.mrf.mxu0
      %v962 = vadd.f32 0.0, %v961
      %963 = vmatmul.f32.gmra.mxu0 %v848
      %v964 = vpop.f32.mrf.mxu0
      %v965 = vadd.f32 0.0, %v964
      %966 = vmatmul.f32.gmra.mxu0 %v851
      %v967 = vpop.f32.mrf.mxu0
      %v968 = vadd.f32 0.0, %v967
      %969 = vmatmul.f32.gmra.mxu0 %v854
      %v970 = vpop.f32.mrf.mxu0
      %v971 = vadd.f32 0.0, %v970
      %972 = vmatmul.f32.gmra.mxu0 %v857
      %v973 = vpop.f32.mrf.mxu0
      %v974 = vadd.f32 0.0, %v973
      %975 = vmatmul.f32.gmra.mxu0 %v860
      %v976 = vpop.f32.mrf.mxu0
      %v977 = vadd.f32 0.0, %v976
      %978 = vmatmul.f32.gmra.mxu0 %v863
      %v979 = vpop.f32.mrf.mxu0
      %v980 = vadd.f32 0.0, %v979
      %981 = vmatmul.f32.gmra.mxu0 %v866
      %v982 = vpop.f32.mrf.mxu0
      %v983 = vadd.f32 0.0, %v982
      %984 = vmatmul.f32.gmra.mxu0 %v869
      %v985 = vpop.f32.mrf.mxu0
      %v986 = vadd.f32 0.0, %v985
      %987 = vmatmul.f32.gmra.mxu0 %v872
      %v988 = vpop.f32.mrf.mxu0
      %v989 = vadd.f32 0.0, %v988
      %990 = vmatmul.f32.gmra.mxu0 %v875
      %v991 = vpop.f32.mrf.mxu0
      %v992 = vadd.f32 0.0, %v991
      %993 = vmatmul.f32.gmra.mxu0 %v878
      %v994 = vpop.f32.mrf.mxu0
      %v995 = vadd.f32 0.0, %v994
      %996 = vmatmul.f32.gmra.mxu0 %v881
      %v997 = vpop.f32.mrf.mxu0
      %v998 = vadd.f32 0.0, %v997
      %999 = vmatmul.f32.gmra.mxu0 %v884
      %v1000 = vpop.f32.mrf.mxu0
      %v1001 = vadd.f32 0.0, %v1000
      %1002 = vmatmul.f32.gmra.mxu0 %v887
      %v1003 = vpop.f32.mrf.mxu0
      %v1004 = vadd.f32 0.0, %v1003
      %1005 = vmatmul.f32.gmra.mxu0 %v890
      %v1006 = vpop.f32.mrf.mxu0
      %v1007 = vadd.f32 0.0, %v1006
      %1008 = vmatmul.f32.gmra.mxu0 %v893
      %v1009 = vpop.f32.mrf.mxu0
      %v1010 = vadd.f32 0.0, %v1009
      %1011 = vmatmul.f32.gmra.mxu0 %v896
      %v1012 = vpop.f32.mrf.mxu0
      %v1013 = vadd.f32 0.0, %v1012
      %1014 = vmatmul.f32.gmra.mxu0 %v899
      %v1015 = vpop.f32.mrf.mxu0
      %v1016 = vadd.f32 0.0, %v1015
      %1017 = vmatmul.f32.gmra.mxu0 %v902
      %v1018 = vpop.f32.mrf.mxu0
      %v1019 = vadd.f32 0.0, %v1018
      %1020 = vdwg.mxu0
      %1021 = vst.msk [vmem:[#allocation3] sm:$0xff] %vm257, %v926
      %1022 = vst.msk [vmem:[#allocation3 + $0x8] sm:$0xff] %vm257, %v929
      %1023 = vst.msk [vmem:[#allocation3 + $0x10] sm:$0xff] %vm257, %v932
      %1024 = vst.msk [vmem:[#allocation3 + $0x18] sm:$0xff] %vm257, %v935
      %1025 = vst.msk [vmem:[#allocation3 + $0x20] sm:$0xff] %vm257, %v938
      %1026 = vst.msk [vmem:[#allocation3 + $0x28] sm:$0xff] %vm257, %v941
      %1027 = vst.msk [vmem:[#allocation3 + $0x30] sm:$0xff] %vm257, %v944
      %1028 = vst.msk [vmem:[#allocation3 + $0x38] sm:$0xff] %vm257, %v947
      %1029 = vst.msk [vmem:[#allocation3 + $0x40] sm:$0xff] %vm257, %v950
      %1030 = vst.msk [vmem:[#allocation3 + $0x48] sm:$0xff] %vm257, %v953
      %1031 = vst.msk [vmem:[#allocation3 + $0x50] sm:$0xff] %vm257, %v956
      %1032 = vst.msk [vmem:[#allocation3 + $0x58] sm:$0xff] %vm257, %v959
      %1033 = vst.msk [vmem:[#allocation3 + $0x60] sm:$0xff] %vm257, %v962
      %1034 = vst.msk [vmem:[#allocation3 + $0x68] sm:$0xff] %vm257, %v965
      %1035 = vst.msk [vmem:[#allocation3 + $0x70] sm:$0xff] %vm257, %v968
      %1036 = vst.msk [vmem:[#allocation3 + $0x78] sm:$0xff] %vm257, %v971
      %1037 = vst.msk [vmem:[#allocation3 + $0x80] sm:$0xff] %vm257, %v974
      %1038 = vst.msk [vmem:[#allocation3 + $0x88] sm:$0xff] %vm257, %v977
      %1039 = vst.msk [vmem:[#allocation3 + $0x90] sm:$0xff] %vm257, %v980
      %1040 = vst.msk [vmem:[#allocation3 + $0x98] sm:$0xff] %vm257, %v983
      %1041 = vst.msk [vmem:[#allocation3 + $0xa0] sm:$0xff] %vm257, %v986
      %1042 = vst.msk [vmem:[#allocation3 + $0xa8] sm:$0xff] %vm257, %v989
      %1043 = vst.msk [vmem:[#allocation3 + $0xb0] sm:$0xff] %vm257, %v992
      %1044 = vst.msk [vmem:[#allocation3 + $0xb8] sm:$0xff] %vm257, %v995
      %1045 = vst.msk [vmem:[#allocation3 + $0xc0] sm:$0xff] %vm257, %v998
      %1046 = vst.msk [vmem:[#allocation3 + $0xc8] sm:$0xff] %vm257, %v1001
      %1047 = vst.msk [vmem:[#allocation3 + $0xd0] sm:$0xff] %vm257, %v1004
      %1048 = vst.msk [vmem:[#allocation3 + $0xd8] sm:$0xff] %vm257, %v1007
      %1049 = vst.msk [vmem:[#allocation3 + $0xe0] sm:$0xff] %vm257, %v1010
      %1050 = vst.msk [vmem:[#allocation3 + $0xe8] sm:$0xff] %vm257, %v1013
      %1051 = vst.msk [vmem:[#allocation3 + $0xf0] sm:$0xff] %vm257, %v1016
      %1052 = vst.msk [vmem:[#allocation3 + $0xf8] sm:$0xff] %vm257, %v1019
      %1085 = vrot.lane.b32.xlu0 %v926, 124
      %v1086 = vpop.permute.xlu0 %1085
      %1087 = vrot.lane.b32.xlu0 %v929, 124
      %v1088 = vpop.permute.xlu0 %1087
      %1089 = vrot.lane.b32.xlu0 %v932, 124
      %v1090 = vpop.permute.xlu0 %1089
      %1091 = vrot.lane.b32.xlu0 %v935, 124
      %v1092 = vpop.permute.xlu0 %1091
      %1093 = vrot.lane.b32.xlu0 %v938, 124
      %v1094 = vpop.permute.xlu0 %1093
      %1095 = vrot.lane.b32.xlu0 %v941, 124
      %v1096 = vpop.permute.xlu0 %1095
      %1097 = vrot.lane.b32.xlu0 %v944, 124
      %v1098 = vpop.permute.xlu0 %1097
      %1099 = vrot.lane.b32.xlu0 %v947, 124
      %v1100 = vpop.permute.xlu0 %1099
      %1101 = vrot.lane.b32.xlu0 %v950, 124
      %v1102 = vpop.permute.xlu0 %1101
      %1103 = vrot.lane.b32.xlu0 %v953, 124
      %v1104 = vpop.permute.xlu0 %1103
      %1105 = vrot.lane.b32.xlu0 %v956, 124
      %v1106 = vpop.permute.xlu0 %1105
      %1107 = vrot.lane.b32.xlu0 %v959, 124
      %v1108 = vpop.permute.xlu0 %1107
      %1109 = vrot.lane.b32.xlu0 %v962, 124
      %v1110 = vpop.permute.xlu0 %1109
      %1111 = vrot.lane.b32.xlu0 %v965, 124
      %v1112 = vpop.permute.xlu0 %1111
      %1113 = vrot.lane.b32.xlu0 %v968, 124
      %v1114 = vpop.permute.xlu0 %1113
      %1115 = vrot.lane.b32.xlu0 %v971, 124
      %v1116 = vpop.permute.xlu0 %1115
      %1117 = vrot.lane.b32.xlu0 %v974, 124
      %v1118 = vpop.permute.xlu0 %1117
      %1119 = vrot.lane.b32.xlu0 %v977, 124
      %v1120 = vpop.permute.xlu0 %1119
      %1121 = vrot.lane.b32.xlu0 %v980, 124
      %v1122 = vpop.permute.xlu0 %1121
      %1123 = vrot.lane.b32.xlu0 %v983, 124
      %v1124 = vpop.permute.xlu0 %1123
      %1125 = vrot.lane.b32.xlu0 %v986, 124
      %v1126 = vpop.permute.xlu0 %1125
      %1127 = vrot.lane.b32.xlu0 %v989, 124
      %v1128 = vpop.permute.xlu0 %1127
      %1129 = vrot.lane.b32.xlu0 %v992, 124
      %v1130 = vpop.permute.xlu0 %1129
      %1131 = vrot.lane.b32.xlu0 %v995, 124
      %v1132 = vpop.permute.xlu0 %1131
      %1133 = vrot.lane.b32.xlu0 %v998, 124
      %v1134 = vpop.permute.xlu0 %1133
      %1135 = vrot.lane.b32.xlu0 %v1001, 124
      %v1136 = vpop.permute.xlu0 %1135
      %1137 = vrot.lane.b32.xlu0 %v1004, 124
      %v1138 = vpop.permute.xlu0 %1137
      %1139 = vrot.lane.b32.xlu0 %v1007, 124
      %v1140 = vpop.permute.xlu0 %1139
      %1141 = vrot.lane.b32.xlu0 %v1010, 124
      %v1142 = vpop.permute.xlu0 %1141
      %1143 = vrot.lane.b32.xlu0 %v1013, 124
      %v1144 = vpop.permute.xlu0 %1143
      %1145 = vrot.lane.b32.xlu0 %v1016, 124
      %v1146 = vpop.permute.xlu0 %1145
      %1147 = vrot.lane.b32.xlu0 %v1019, 124
      %v1148 = vpop.permute.xlu0 %1147
      %s1181 = scalar_lea.vmem [#allocation3], 256
      %1182 = vst.msk [vmem:[%s1181] sm:$0xff] %vm257, %v1086
      %1183 = vst.msk [vmem:[%s1181 + $0x8] sm:$0xff] %vm257, %v1088
      %1184 = vst.msk [vmem:[%s1181 + $0x10] sm:$0xff] %vm257, %v1090
      %1185 = vst.msk [vmem:[%s1181 + $0x18] sm:$0xff] %vm257, %v1092
      %1186 = vst.msk [vmem:[%s1181 + $0x20] sm:$0xff] %vm257, %v1094
      %1187 = vst.msk [vmem:[%s1181 + $0x28] sm:$0xff] %vm257, %v1096
      %1188 = vst.msk [vmem:[%s1181 + $0x30] sm:$0xff] %vm257, %v1098
      %1189 = vst.msk [vmem:[%s1181 + $0x38] sm:$0xff] %vm257, %v1100
      %1190 = vst.msk [vmem:[%s1181 + $0x40] sm:$0xff] %vm257, %v1102
      %1191 = vst.msk [vmem:[%s1181 + $0x48] sm:$0xff] %vm257, %v1104
      %1192 = vst.msk [vmem:[%s1181 + $0x50] sm:$0xff] %vm257, %v1106
      %1193 = vst.msk [vmem:[%s1181 + $0x58] sm:$0xff] %vm257, %v1108
      %1194 = vst.msk [vmem:[%s1181 + $0x60] sm:$0xff] %vm257, %v1110
      %1195 = vst.msk [vmem:[%s1181 + $0x68] sm:$0xff] %vm257, %v1112
      %1196 = vst.msk [vmem:[%s1181 + $0x70] sm:$0xff] %vm257, %v1114
      %1197 = vst.msk [vmem:[%s1181 + $0x78] sm:$0xff] %vm257, %v1116
      %1198 = vst.msk [vmem:[%s1181 + $0x80] sm:$0xff] %vm257, %v1118
      %1199 = vst.msk [vmem:[%s1181 + $0x88] sm:$0xff] %vm257, %v1120
      %1200 = vst.msk [vmem:[%s1181 + $0x90] sm:$0xff] %vm257, %v1122
      %1201 = vst.msk [vmem:[%s1181 + $0x98] sm:$0xff] %vm257, %v1124
      %1202 = vst.msk [vmem:[%s1181 + $0xa0] sm:$0xff] %vm257, %v1126
      %1203 = vst.msk [vmem:[%s1181 + $0xa8] sm:$0xff] %vm257, %v1128
      %1204 = vst.msk [vmem:[%s1181 + $0xb0] sm:$0xff] %vm257, %v1130
      %1205 = vst.msk [vmem:[%s1181 + $0xb8] sm:$0xff] %vm257, %v1132
      %1206 = vst.msk [vmem:[%s1181 + $0xc0] sm:$0xff] %vm257, %v1134
      %1207 = vst.msk [vmem:[%s1181 + $0xc8] sm:$0xff] %vm257, %v1136
      %1208 = vst.msk [vmem:[%s1181 + $0xd0] sm:$0xff] %vm257, %v1138
      %1209 = vst.msk [vmem:[%s1181 + $0xd8] sm:$0xff] %vm257, %v1140
      %1210 = vst.msk [vmem:[%s1181 + $0xe0] sm:$0xff] %vm257, %v1142
      %1211 = vst.msk [vmem:[%s1181 + $0xe8] sm:$0xff] %vm257, %v1144
      %1212 = vst.msk [vmem:[%s1181 + $0xf0] sm:$0xff] %vm257, %v1146
      %1213 = vst.msk [vmem:[%s1181 + $0xf8] sm:$0xff] %vm257, %v1148
      %1214 = vrot.lane.b32.xlu0 %v926, 120
      %v1215 = vpop.permute.xlu0 %1214
      %1216 = vrot.lane.b32.xlu0 %v929, 120
      %v1217 = vpop.permute.xlu0 %1216
      %1218 = vrot.lane.b32.xlu0 %v932, 120
      %v1219 = vpop.permute.xlu0 %1218
      %1220 = vrot.lane.b32.xlu0 %v935, 120
      %v1221 = vpop.permute.xlu0 %1220
      %1222 = vrot.lane.b32.xlu0 %v938, 120
      %v1223 = vpop.permute.xlu0 %1222
      %1224 = vrot.lane.b32.xlu0 %v941, 120
      %v1225 = vpop.permute.xlu0 %1224
      %1226 = vrot.lane.b32.xlu0 %v944, 120
      %v1227 = vpop.permute.xlu0 %1226
      %1228 = vrot.lane.b32.xlu0 %v947, 120
      %v1229 = vpop.permute.xlu0 %1228
      %1230 = vrot.lane.b32.xlu0 %v950, 120
      %v1231 = vpop.permute.xlu0 %1230
      %1232 = vrot.lane.b32.xlu0 %v953, 120
      %v1233 = vpop.permute.xlu0 %1232
      %1234 = vrot.lane.b32.xlu0 %v956, 120
      %v1235 = vpop.permute.xlu0 %1234
      %1236 = vrot.lane.b32.xlu0 %v959, 120
      %v1237 = vpop.permute.xlu0 %1236
      %1238 = vrot.lane.b32.xlu0 %v962, 120
      %v1239 = vpop.permute.xlu0 %1238
      %1240 = vrot.lane.b32.xlu0 %v965, 120
      %v1241 = vpop.permute.xlu0 %1240
      %1242 = vrot.lane.b32.xlu0 %v968, 120
      %v1243 = vpop.permute.xlu0 %1242
      %1244 = vrot.lane.b32.xlu0 %v971, 120
      %v1245 = vpop.permute.xlu0 %1244
      %1246 = vrot.lane.b32.xlu0 %v974, 120
      %v1247 = vpop.permute.xlu0 %1246
      %1248 = vrot.lane.b32.xlu0 %v977, 120
      %v1249 = vpop.permute.xlu0 %1248
      %1250 = vrot.lane.b32.xlu0 %v980, 120
      %v1251 = vpop.permute.xlu0 %1250
      %1252 = vrot.lane.b32.xlu0 %v983, 120
      %v1253 = vpop.permute.xlu0 %1252
      %1254 = vrot.lane.b32.xlu0 %v986, 120
      %v1255 = vpop.permute.xlu0 %1254
      %1256 = vrot.lane.b32.xlu0 %v989, 120
      %v1257 = vpop.permute.xlu0 %1256
      %1258 = vrot.lane.b32.xlu0 %v992, 120
      %v1259 = vpop.permute.xlu0 %1258
      %1260 = vrot.lane.b32.xlu0 %v995, 120
      %v1261 = vpop.permute.xlu0 %1260
      %1262 = vrot.lane.b32.xlu0 %v998, 120
      %v1263 = vpop.permute.xlu0 %1262
      %1264 = vrot.lane.b32.xlu0 %v1001, 120
      %v1265 = vpop.permute.xlu0 %1264
      %1266 = vrot.lane.b32.xlu0 %v1004, 120
      %v1267 = vpop.permute.xlu0 %1266
      %1268 = vrot.lane.b32.xlu0 %v1007, 120
      %v1269 = vpop.permute.xlu0 %1268
      %1270 = vrot.lane.b32.xlu0 %v1010, 120
      %v1271 = vpop.permute.xlu0 %1270
      %1272 = vrot.lane.b32.xlu0 %v1013, 120
      %v1273 = vpop.permute.xlu0 %1272
      %1274 = vrot.lane.b32.xlu0 %v1016, 120
      %v1275 = vpop.permute.xlu0 %1274
      %1276 = vrot.lane.b32.xlu0 %v1019, 120
      %v1277 = vpop.permute.xlu0 %1276
      %s1310 = scalar_lea.vmem [#allocation3], 512
      %1311 = vst.msk [vmem:[%s1310] sm:$0xff] %vm257, %v1215
      %1312 = vst.msk [vmem:[%s1310 + $0x8] sm:$0xff] %vm257, %v1217
      %1313 = vst.msk [vmem:[%s1310 + $0x10] sm:$0xff] %vm257, %v1219
      %1314 = vst.msk [vmem:[%s1310 + $0x18] sm:$0xff] %vm257, %v1221
      %1315 = vst.msk [vmem:[%s1310 + $0x20] sm:$0xff] %vm257, %v1223
      %1316 = vst.msk [vmem:[%s1310 + $0x28] sm:$0xff] %vm257, %v1225
      %1317 = vst.msk [vmem:[%s1310 + $0x30] sm:$0xff] %vm257, %v1227
      %1318 = vst.msk [vmem:[%s1310 + $0x38] sm:$0xff] %vm257, %v1229
      %1319 = vst.msk [vmem:[%s1310 + $0x40] sm:$0xff] %vm257, %v1231
      %1320 = vst.msk [vmem:[%s1310 + $0x48] sm:$0xff] %vm257, %v1233
      %1321 = vst.msk [vmem:[%s1310 + $0x50] sm:$0xff] %vm257, %v1235
      %1322 = vst.msk [vmem:[%s1310 + $0x58] sm:$0xff] %vm257, %v1237
      %1323 = vst.msk [vmem:[%s1310 + $0x60] sm:$0xff] %vm257, %v1239
      %1324 = vst.msk [vmem:[%s1310 + $0x68] sm:$0xff] %vm257, %v1241
      %1325 = vst.msk [vmem:[%s1310 + $0x70] sm:$0xff] %vm257, %v1243
      %1326 = vst.msk [vmem:[%s1310 + $0x78] sm:$0xff] %vm257, %v1245
      %1327 = vst.msk [vmem:[%s1310 + $0x80] sm:$0xff] %vm257, %v1247
      %1328 = vst.msk [vmem:[%s1310 + $0x88] sm:$0xff] %vm257, %v1249
      %1329 = vst.msk [vmem:[%s1310 + $0x90] sm:$0xff] %vm257, %v1251
      %1330 = vst.msk [vmem:[%s1310 + $0x98] sm:$0xff] %vm257, %v1253
      %1331 = vst.msk [vmem:[%s1310 + $0xa0] sm:$0xff] %vm257, %v1255
      %1332 = vst.msk [vmem:[%s1310 + $0xa8] sm:$0xff] %vm257, %v1257
      %1333 = vst.msk [vmem:[%s1310 + $0xb0] sm:$0xff] %vm257, %v1259
      %1334 = vst.msk [vmem:[%s1310 + $0xb8] sm:$0xff] %vm257, %v1261
      %1335 = vst.msk [vmem:[%s1310 + $0xc0] sm:$0xff] %vm257, %v1263
      %1336 = vst.msk [vmem:[%s1310 + $0xc8] sm:$0xff] %vm257, %v1265
      %1337 = vst.msk [vmem:[%s1310 + $0xd0] sm:$0xff] %vm257, %v1267
      %1338 = vst.msk [vmem:[%s1310 + $0xd8] sm:$0xff] %vm257, %v1269
      %1339 = vst.msk [vmem:[%s1310 + $0xe0] sm:$0xff] %vm257, %v1271
      %1340 = vst.msk [vmem:[%s1310 + $0xe8] sm:$0xff] %vm257, %v1273
      %1341 = vst.msk [vmem:[%s1310 + $0xf0] sm:$0xff] %vm257, %v1275
      %1342 = vst.msk [vmem:[%s1310 + $0xf8] sm:$0xff] %vm257, %v1277
      %1343 = vrot.lane.b32.xlu0 %v926, 116
      %v1344 = vpop.permute.xlu0 %1343
      %1345 = vrot.lane.b32.xlu0 %v929, 116
      %v1346 = vpop.permute.xlu0 %1345
      %1347 = vrot.lane.b32.xlu0 %v932, 116
      %v1348 = vpop.permute.xlu0 %1347
      %1349 = vrot.lane.b32.xlu0 %v935, 116
      %v1350 = vpop.permute.xlu0 %1349
      %1351 = vrot.lane.b32.xlu0 %v938, 116
      %v1352 = vpop.permute.xlu0 %1351
      %1353 = vrot.lane.b32.xlu0 %v941, 116
      %v1354 = vpop.permute.xlu0 %1353
      %1355 = vrot.lane.b32.xlu0 %v944, 116
      %v1356 = vpop.permute.xlu0 %1355
      %1357 = vrot.lane.b32.xlu0 %v947, 116
      %v1358 = vpop.permute.xlu0 %1357
      %1359 = vrot.lane.b32.xlu0 %v950, 116
      %v1360 = vpop.permute.xlu0 %1359
      %1361 = vrot.lane.b32.xlu0 %v953, 116
      %v1362 = vpop.permute.xlu0 %1361
      %1363 = vrot.lane.b32.xlu0 %v956, 116
      %v1364 = vpop.permute.xlu0 %1363
      %1365 = vrot.lane.b32.xlu0 %v959, 116
      %v1366 = vpop.permute.xlu0 %1365
      %1367 = vrot.lane.b32.xlu0 %v962, 116
      %v1368 = vpop.permute.xlu0 %1367
      %1369 = vrot.lane.b32.xlu0 %v965, 116
      %v1370 = vpop.permute.xlu0 %1369
      %1371 = vrot.lane.b32.xlu0 %v968, 116
      %v1372 = vpop.permute.xlu0 %1371
      %1373 = vrot.lane.b32.xlu0 %v971, 116
      %v1374 = vpop.permute.xlu0 %1373
      %1375 = vrot.lane.b32.xlu0 %v974, 116
      %v1376 = vpop.permute.xlu0 %1375
      %1377 = vrot.lane.b32.xlu0 %v977, 116
      %v1378 = vpop.permute.xlu0 %1377
      %1379 = vrot.lane.b32.xlu0 %v980, 116
      %v1380 = vpop.permute.xlu0 %1379
      %1381 = vrot.lane.b32.xlu0 %v983, 116
      %v1382 = vpop.permute.xlu0 %1381
      %1383 = vrot.lane.b32.xlu0 %v986, 116
      %v1384 = vpop.permute.xlu0 %1383
      %1385 = vrot.lane.b32.xlu0 %v989, 116
      %v1386 = vpop.permute.xlu0 %1385
      %1387 = vrot.lane.b32.xlu0 %v992, 116
      %v1388 = vpop.permute.xlu0 %1387
      %1389 = vrot.lane.b32.xlu0 %v995, 116
      %v1390 = vpop.permute.xlu0 %1389
      %1391 = vrot.lane.b32.xlu0 %v998, 116
      %v1392 = vpop.permute.xlu0 %1391
      %1393 = vrot.lane.b32.xlu0 %v1001, 116
      %v1394 = vpop.permute.xlu0 %1393
      %1395 = vrot.lane.b32.xlu0 %v1004, 116
      %v1396 = vpop.permute.xlu0 %1395
      %1397 = vrot.lane.b32.xlu0 %v1007, 116
      %v1398 = vpop.permute.xlu0 %1397
      %1399 = vrot.lane.b32.xlu0 %v1010, 116
      %v1400 = vpop.permute.xlu0 %1399
      %1401 = vrot.lane.b32.xlu0 %v1013, 116
      %v1402 = vpop.permute.xlu0 %1401
      %1403 = vrot.lane.b32.xlu0 %v1016, 116
      %v1404 = vpop.permute.xlu0 %1403
      %1405 = vrot.lane.b32.xlu0 %v1019, 116
      %v1406 = vpop.permute.xlu0 %1405
      %s1439 = scalar_lea.vmem [#allocation3], 768
      %1440 = vst.msk [vmem:[%s1439] sm:$0xff] %vm257, %v1344
      %1441 = vst.msk [vmem:[%s1439 + $0x8] sm:$0xff] %vm257, %v1346
      %1442 = vst.msk [vmem:[%s1439 + $0x10] sm:$0xff] %vm257, %v1348
      %1443 = vst.msk [vmem:[%s1439 + $0x18] sm:$0xff] %vm257, %v1350
      %1444 = vst.msk [vmem:[%s1439 + $0x20] sm:$0xff] %vm257, %v1352
      %1445 = vst.msk [vmem:[%s1439 + $0x28] sm:$0xff] %vm257, %v1354
      %1446 = vst.msk [vmem:[%s1439 + $0x30] sm:$0xff] %vm257, %v1356
      %1447 = vst.msk [vmem:[%s1439 + $0x38] sm:$0xff] %vm257, %v1358
      %1448 = vst.msk [vmem:[%s1439 + $0x40] sm:$0xff] %vm257, %v1360
      %1449 = vst.msk [vmem:[%s1439 + $0x48] sm:$0xff] %vm257, %v1362
      %1450 = vst.msk [vmem:[%s1439 + $0x50] sm:$0xff] %vm257, %v1364
      %1451 = vst.msk [vmem:[%s1439 + $0x58] sm:$0xff] %vm257, %v1366
      %1452 = vst.msk [vmem:[%s1439 + $0x60] sm:$0xff] %vm257, %v1368
      %1453 = vst.msk [vmem:[%s1439 + $0x68] sm:$0xff] %vm257, %v1370
      %1454 = vst.msk [vmem:[%s1439 + $0x70] sm:$0xff] %vm257, %v1372
      %1455 = vst.msk [vmem:[%s1439 + $0x78] sm:$0xff] %vm257, %v1374
      %1456 = vst.msk [vmem:[%s1439 + $0x80] sm:$0xff] %vm257, %v1376
      %1457 = vst.msk [vmem:[%s1439 + $0x88] sm:$0xff] %vm257, %v1378
      %1458 = vst.msk [vmem:[%s1439 + $0x90] sm:$0xff] %vm257, %v1380
      %1459 = vst.msk [vmem:[%s1439 + $0x98] sm:$0xff] %vm257, %v1382
      %1460 = vst.msk [vmem:[%s1439 + $0xa0] sm:$0xff] %vm257, %v1384
      %1461 = vst.msk [vmem:[%s1439 + $0xa8] sm:$0xff] %vm257, %v1386
      %1462 = vst.msk [vmem:[%s1439 + $0xb0] sm:$0xff] %vm257, %v1388
      %1463 = vst.msk [vmem:[%s1439 + $0xb8] sm:$0xff] %vm257, %v1390
      %1464 = vst.msk [vmem:[%s1439 + $0xc0] sm:$0xff] %vm257, %v1392
      %1465 = vst.msk [vmem:[%s1439 + $0xc8] sm:$0xff] %vm257, %v1394
      %1466 = vst.msk [vmem:[%s1439 + $0xd0] sm:$0xff] %vm257, %v1396
      %1467 = vst.msk [vmem:[%s1439 + $0xd8] sm:$0xff] %vm257, %v1398
      %1468 = vst.msk [vmem:[%s1439 + $0xe0] sm:$0xff] %vm257, %v1400
      %1469 = vst.msk [vmem:[%s1439 + $0xe8] sm:$0xff] %vm257, %v1402
      %1470 = vst.msk [vmem:[%s1439 + $0xf0] sm:$0xff] %vm257, %v1404
      %1471 = vst.msk [vmem:[%s1439 + $0xf8] sm:$0xff] %vm257, %v1406
      %v1472 = vld [vmem:[#allocation2 + $0x8] sm:$0xff]
      %v1473 = vld [vmem:[#allocation2 + $0x10] sm:$0xff]
      %v1474 = vld [vmem:[#allocation2 + $0x18] sm:$0xff]
      %v1475 = vld [vmem:[#allocation2 + $0x20] sm:$0xff]
      %v1476 = vld [vmem:[#allocation2 + $0x28] sm:$0xff]
      %v1477 = vld [vmem:[#allocation2 + $0x30] sm:$0xff]
      %v1478 = vld [vmem:[#allocation2 + $0x38] sm:$0xff]
      %v1479 = vld [vmem:[#allocation2 + $0x40] sm:$0xff]
      %v1480 = vld [vmem:[#allocation2 + $0x48] sm:$0xff]
      %v1481 = vld [vmem:[#allocation2 + $0x50] sm:$0xff]
      %v1482 = vld [vmem:[#allocation2 + $0x58] sm:$0xff]
      %v1483 = vld [vmem:[#allocation2 + $0x60] sm:$0xff]
      %v1484 = vld [vmem:[#allocation2 + $0x68] sm:$0xff]
      %v1485 = vld [vmem:[#allocation2 + $0x70] sm:$0xff]
      %v1486 = vld [vmem:[#allocation2 + $0x78] sm:$0xff]
      %v1487 = vld [vmem:[#allocation2 + $0x80] sm:$0xff]
      %v1488 = vld [vmem:[#allocation2 + $0x88] sm:$0xff]
      %v1489 = vld [vmem:[#allocation2 + $0x90] sm:$0xff]
      %v1490 = vld [vmem:[#allocation2 + $0x98] sm:$0xff]
      %v1491 = vld [vmem:[#allocation2 + $0xa0] sm:$0xff]
      %v1492 = vld [vmem:[#allocation2 + $0xa8] sm:$0xff]
      %v1493 = vld [vmem:[#allocation2 + $0xb0] sm:$0xff]
      %v1494 = vld [vmem:[#allocation2 + $0xb8] sm:$0xff]
      %v1495 = vld [vmem:[#allocation2 + $0xc0] sm:$0xff]
      %v1496 = vld [vmem:[#allocation2 + $0xc8] sm:$0xff]
      %v1497 = vld [vmem:[#allocation2 + $0xd0] sm:$0xff]
      %v1498 = vld [vmem:[#allocation2 + $0xd8] sm:$0xff]
      %v1499 = vld [vmem:[#allocation2 + $0xe0] sm:$0xff]
      %v1500 = vld [vmem:[#allocation2 + $0xe8] sm:$0xff]
      %v1501 = vld [vmem:[#allocation2 + $0xf0] sm:$0xff]
      %v1502 = vld [vmem:[#allocation2 + $0xf8] sm:$0xff]
      %v1503 = vld [vmem:[#allocation2 + $0x100] sm:$0xff]
      %v1504 = vld [vmem:[%s2] sm:$0xf]
      %v1506 = vsel %vm257, %v1472, 0
      %v1509 = vsel %vm257, %v1473, 0
      %v1512 = vsel %vm257, %v1474, 0
      %v1515 = vsel %vm257, %v1475, 0
      %v1518 = vsel %vm257, %v1476, 0
      %v1521 = vsel %vm257, %v1477, 0
      %v1524 = vsel %vm257, %v1478, 0
      %v1527 = vsel %vm257, %v1479, 0
      %v1530 = vsel %vm257, %v1480, 0
      %v1533 = vsel %vm257, %v1481, 0
      %v1536 = vsel %vm257, %v1482, 0
      %v1539 = vsel %vm257, %v1483, 0
      %v1542 = vsel %vm257, %v1484, 0
      %v1545 = vsel %vm257, %v1485, 0
      %v1548 = vsel %vm257, %v1486, 0
      %v1551 = vsel %vm257, %v1487, 0
      %v1554 = vsel %vm257, %v1488, 0
      %v1557 = vsel %vm257, %v1489, 0
      %v1560 = vsel %vm257, %v1490, 0
      %v1563 = vsel %vm257, %v1491, 0
      %v1566 = vsel %vm257, %v1492, 0
      %v1569 = vsel %vm257, %v1493, 0
      %v1572 = vsel %vm257, %v1494, 0
      %v1575 = vsel %vm257, %v1495, 0
      %v1578 = vsel %vm257, %v1496, 0
      %v1581 = vsel %vm257, %v1497, 0
      %v1584 = vsel %vm257, %v1498, 0
      %v1587 = vsel %vm257, %v1499, 0
      %v1590 = vsel %vm257, %v1500, 0
      %v1593 = vsel %vm257, %v1501, 0
      %v1596 = vsel %vm257, %v1502, 0
      %v1599 = vsel %vm257, %v1503, 0
      %v1602 = vsel %vm904, %v1504, 0
      %1604 = vmatpush.msra.mxu0 0.0
      %1605 = vmatpush.msra.mxu0 0.0
      %1606 = vmatpush.msra.mxu0 0.0
      %1607 = vmatpush.msra.mxu0 0.0
      %1608 = vmatpush.msra.mxu0 0.0
      %1609 = vmatpush.msra.mxu0 0.0
      %1610 = vmatpush.msra.mxu0 0.0
      %1611 = vmatpush.msra.mxu0 0.0
      %1612 = vmatpush.msra.mxu0 0.0
      %1613 = vmatpush.msra.mxu0 0.0
      %1614 = vmatpush.msra.mxu0 0.0
      %1615 = vmatpush.msra.mxu0 0.0
      %1616 = vmatpush.msra.mxu0 0.0
      %1617 = vmatpush.msra.mxu0 0.0
      %1618 = vmatpush.msra.mxu0 0.0
      %1619 = vmatpush.msra.mxu0 %v1602
      %1620 = vmatmul.f32.gmra.mxu0 %v1506
      %v1621 = vpop.f32.mrf.mxu0
      %v1622 = vadd.f32 0.0, %v1621
      %1623 = vmatmul.f32.gmra.mxu0 %v1509
      %v1624 = vpop.f32.mrf.mxu0
      %v1625 = vadd.f32 0.0, %v1624
      %1626 = vmatmul.f32.gmra.mxu0 %v1512
      %v1627 = vpop.f32.mrf.mxu0
      %v1628 = vadd.f32 0.0, %v1627
      %1629 = vmatmul.f32.gmra.mxu0 %v1515
      %v1630 = vpop.f32.mrf.mxu0
      %v1631 = vadd.f32 0.0, %v1630
      %1632 = vmatmul.f32.gmra.mxu0 %v1518
      %v1633 = vpop.f32.mrf.mxu0
      %v1634 = vadd.f32 0.0, %v1633
      %1635 = vmatmul.f32.gmra.mxu0 %v1521
      %v1636 = vpop.f32.mrf.mxu0
      %v1637 = vadd.f32 0.0, %v1636
      %1638 = vmatmul.f32.gmra.mxu0 %v1524
      %v1639 = vpop.f32.mrf.mxu0
      %v1640 = vadd.f32 0.0, %v1639
      %1641 = vmatmul.f32.gmra.mxu0 %v1527
      %v1642 = vpop.f32.mrf.mxu0
      %v1643 = vadd.f32 0.0, %v1642
      %1644 = vmatmul.f32.gmra.mxu0 %v1530
      %v1645 = vpop.f32.mrf.mxu0
      %v1646 = vadd.f32 0.0, %v1645
      %1647 = vmatmul.f32.gmra.mxu0 %v1533
      %v1648 = vpop.f32.mrf.mxu0
      %v1649 = vadd.f32 0.0, %v1648
      %1650 = vmatmul.f32.gmra.mxu0 %v1536
      %v1651 = vpop.f32.mrf.mxu0
      %v1652 = vadd.f32 0.0, %v1651
      %1653 = vmatmul.f32.gmra.mxu0 %v1539
      %v1654 = vpop.f32.mrf.mxu0
      %v1655 = vadd.f32 0.0, %v1654
      %1656 = vmatmul.f32.gmra.mxu0 %v1542
      %v1657 = vpop.f32.mrf.mxu0
      %v1658 = vadd.f32 0.0, %v1657
      %1659 = vmatmul.f32.gmra.mxu0 %v1545
      %v1660 = vpop.f32.mrf.mxu0
      %v1661 = vadd.f32 0.0, %v1660
      %1662 = vmatmul.f32.gmra.mxu0 %v1548
      %v1663 = vpop.f32.mrf.mxu0
      %v1664 = vadd.f32 0.0, %v1663
      %1665 = vmatmul.f32.gmra.mxu0 %v1551
      %v1666 = vpop.f32.mrf.mxu0
      %v1667 = vadd.f32 0.0, %v1666
      %1668 = vmatmul.f32.gmra.mxu0 %v1554
      %v1669 = vpop.f32.mrf.mxu0
      %v1670 = vadd.f32 0.0, %v1669
      %1671 = vmatmul.f32.gmra.mxu0 %v1557
      %v1672 = vpop.f32.mrf.mxu0
      %v1673 = vadd.f32 0.0, %v1672
      %1674 = vmatmul.f32.gmra.mxu0 %v1560
      %v1675 = vpop.f32.mrf.mxu0
      %v1676 = vadd.f32 0.0, %v1675
      %1677 = vmatmul.f32.gmra.mxu0 %v1563
      %v1678 = vpop.f32.mrf.mxu0
      %v1679 = vadd.f32 0.0, %v1678
      %1680 = vmatmul.f32.gmra.mxu0 %v1566
      %v1681 = vpop.f32.mrf.mxu0
      %v1682 = vadd.f32 0.0, %v1681
      %1683 = vmatmul.f32.gmra.mxu0 %v1569
      %v1684 = vpop.f32.mrf.mxu0
      %v1685 = vadd.f32 0.0, %v1684
      %1686 = vmatmul.f32.gmra.mxu0 %v1572
      %v1687 = vpop.f32.mrf.mxu0
      %v1688 = vadd.f32 0.0, %v1687
      %1689 = vmatmul.f32.gmra.mxu0 %v1575
      %v1690 = vpop.f32.mrf.mxu0
      %v1691 = vadd.f32 0.0, %v1690
      %1692 = vmatmul.f32.gmra.mxu0 %v1578
      %v1693 = vpop.f32.mrf.mxu0
      %v1694 = vadd.f32 0.0, %v1693
      %1695 = vmatmul.f32.gmra.mxu0 %v1581
      %v1696 = vpop.f32.mrf.mxu0
      %v1697 = vadd.f32 0.0, %v1696
      %1698 = vmatmul.f32.gmra.mxu0 %v1584
      %v1699 = vpop.f32.mrf.mxu0
      %v1700 = vadd.f32 0.0, %v1699
      %1701 = vmatmul.f32.gmra.mxu0 %v1587
      %v1702 = vpop.f32.mrf.mxu0
      %v1703 = vadd.f32 0.0, %v1702
      %1704 = vmatmul.f32.gmra.mxu0 %v1590
      %v1705 = vpop.f32.mrf.mxu0
      %v1706 = vadd.f32 0.0, %v1705
      %1707 = vmatmul.f32.gmra.mxu0 %v1593
      %v1708 = vpop.f32.mrf.mxu0
      %v1709 = vadd.f32 0.0, %v1708
      %1710 = vmatmul.f32.gmra.mxu0 %v1596
      %v1711 = vpop.f32.mrf.mxu0
      %v1712 = vadd.f32 0.0, %v1711
      %1713 = vmatmul.f32.gmra.mxu0 %v1599
      %v1714 = vpop.f32.mrf.mxu0
      %v1715 = vadd.f32 0.0, %v1714
      %1716 = vdwg.mxu0
      %v1717 = vld [vmem:[#allocation3] sm:$0xff]
      %v1718 = vld [vmem:[#allocation3 + $0x8] sm:$0xff]
      %v1719 = vld [vmem:[#allocation3 + $0x10] sm:$0xff]
      %v1720 = vld [vmem:[#allocation3 + $0x18] sm:$0xff]
      %v1721 = vld [vmem:[#allocation3 + $0x20] sm:$0xff]
      %v1722 = vld [vmem:[#allocation3 + $0x28] sm:$0xff]
      %v1723 = vld [vmem:[#allocation3 + $0x30] sm:$0xff]
      %v1724 = vld [vmem:[#allocation3 + $0x38] sm:$0xff]
      %v1725 = vld [vmem:[#allocation3 + $0x40] sm:$0xff]
      %v1726 = vld [vmem:[#allocation3 + $0x48] sm:$0xff]
      %v1727 = vld [vmem:[#allocation3 + $0x50] sm:$0xff]
      %v1728 = vld [vmem:[#allocation3 + $0x58] sm:$0xff]
      %v1729 = vld [vmem:[#allocation3 + $0x60] sm:$0xff]
      %v1730 = vld [vmem:[#allocation3 + $0x68] sm:$0xff]
      %v1731 = vld [vmem:[#allocation3 + $0x70] sm:$0xff]
      %v1732 = vld [vmem:[#allocation3 + $0x78] sm:$0xff]
      %v1733 = vld [vmem:[#allocation3 + $0x80] sm:$0xff]
      %v1734 = vld [vmem:[#allocation3 + $0x88] sm:$0xff]
      %v1735 = vld [vmem:[#allocation3 + $0x90] sm:$0xff]
      %v1736 = vld [vmem:[#allocation3 + $0x98] sm:$0xff]
      %v1737 = vld [vmem:[#allocation3 + $0xa0] sm:$0xff]
      %v1738 = vld [vmem:[#allocation3 + $0xa8] sm:$0xff]
      %v1739 = vld [vmem:[#allocation3 + $0xb0] sm:$0xff]
      %v1740 = vld [vmem:[#allocation3 + $0xb8] sm:$0xff]
      %v1741 = vld [vmem:[#allocation3 + $0xc0] sm:$0xff]
      %v1742 = vld [vmem:[#allocation3 + $0xc8] sm:$0xff]
      %v1743 = vld [vmem:[#allocation3 + $0xd0] sm:$0xff]
      %v1744 = vld [vmem:[#allocation3 + $0xd8] sm:$0xff]
      %v1745 = vld [vmem:[#allocation3 + $0xe0] sm:$0xff]
      %v1746 = vld [vmem:[#allocation3 + $0xe8] sm:$0xff]
      %v1747 = vld [vmem:[#allocation3 + $0xf0] sm:$0xff]
      %v1748 = vld [vmem:[#allocation3 + $0xf8] sm:$0xff]
      %v1749 = vadd.f32 %v1717, %v1622
      %v1750 = vadd.f32 %v1718, %v1625
      %v1751 = vadd.f32 %v1719, %v1628
      %v1752 = vadd.f32 %v1720, %v1631
      %v1753 = vadd.f32 %v1721, %v1634
      %v1754 = vadd.f32 %v1722, %v1637
      %v1755 = vadd.f32 %v1723, %v1640
      %v1756 = vadd.f32 %v1724, %v1643
      %v1757 = vadd.f32 %v1725, %v1646
      %v1758 = vadd.f32 %v1726, %v1649
      %v1759 = vadd.f32 %v1727, %v1652
      %v1760 = vadd.f32 %v1728, %v1655
      %v1761 = vadd.f32 %v1729, %v1658
      %v1762 = vadd.f32 %v1730, %v1661
      %v1763 = vadd.f32 %v1731, %v1664
      %v1764 = vadd.f32 %v1732, %v1667
      %v1765 = vadd.f32 %v1733, %v1670
      %v1766 = vadd.f32 %v1734, %v1673
      %v1767 = vadd.f32 %v1735, %v1676
      %v1768 = vadd.f32 %v1736, %v1679
      %v1769 = vadd.f32 %v1737, %v1682
      %v1770 = vadd.f32 %v1738, %v1685
      %v1771 = vadd.f32 %v1739, %v1688
      %v1772 = vadd.f32 %v1740, %v1691
      %v1773 = vadd.f32 %v1741, %v1694
      %v1774 = vadd.f32 %v1742, %v1697
      %v1775 = vadd.f32 %v1743, %v1700
      %v1776 = vadd.f32 %v1744, %v1703
      %v1777 = vadd.f32 %v1745, %v1706
      %v1778 = vadd.f32 %v1746, %v1709
      %v1779 = vadd.f32 %v1747, %v1712
      %v1780 = vadd.f32 %v1748, %v1715
      %1781 = vst.msk [vmem:[#allocation3] sm:$0xff] %vm257, %v1749
      %1782 = vst.msk [vmem:[#allocation3 + $0x8] sm:$0xff] %vm257, %v1750
      %1783 = vst.msk [vmem:[#allocation3 + $0x10] sm:$0xff] %vm257, %v1751
      %1784 = vst.msk [vmem:[#allocation3 + $0x18] sm:$0xff] %vm257, %v1752
      %1785 = vst.msk [vmem:[#allocation3 + $0x20] sm:$0xff] %vm257, %v1753
      %1786 = vst.msk [vmem:[#allocation3 + $0x28] sm:$0xff] %vm257, %v1754
      %1787 = vst.msk [vmem:[#allocation3 + $0x30] sm:$0xff] %vm257, %v1755
      %1788 = vst.msk [vmem:[#allocation3 + $0x38] sm:$0xff] %vm257, %v1756
      %1789 = vst.msk [vmem:[#allocation3 + $0x40] sm:$0xff] %vm257, %v1757
      %1790 = vst.msk [vmem:[#allocation3 + $0x48] sm:$0xff] %vm257, %v1758
      %1791 = vst.msk [vmem:[#allocation3 + $0x50] sm:$0xff] %vm257, %v1759
      %1792 = vst.msk [vmem:[#allocation3 + $0x58] sm:$0xff] %vm257, %v1760
      %1793 = vst.msk [vmem:[#allocation3 + $0x60] sm:$0xff] %vm257, %v1761
      %1794 = vst.msk [vmem:[#allocation3 + $0x68] sm:$0xff] %vm257, %v1762
      %1795 = vst.msk [vmem:[#allocation3 + $0x70] sm:$0xff] %vm257, %v1763
      %1796 = vst.msk [vmem:[#allocation3 + $0x78] sm:$0xff] %vm257, %v1764
      %1797 = vst.msk [vmem:[#allocation3 + $0x80] sm:$0xff] %vm257, %v1765
      %1798 = vst.msk [vmem:[#allocation3 + $0x88] sm:$0xff] %vm257, %v1766
      %1799 = vst.msk [vmem:[#allocation3 + $0x90] sm:$0xff] %vm257, %v1767
      %1800 = vst.msk [vmem:[#allocation3 + $0x98] sm:$0xff] %vm257, %v1768
      %1801 = vst.msk [vmem:[#allocation3 + $0xa0] sm:$0xff] %vm257, %v1769
      %1802 = vst.msk [vmem:[#allocation3 + $0xa8] sm:$0xff] %vm257, %v1770
      %1803 = vst.msk [vmem:[#allocation3 + $0xb0] sm:$0xff] %vm257, %v1771
      %1804 = vst.msk [vmem:[#allocation3 + $0xb8] sm:$0xff] %vm257, %v1772
      %1805 = vst.msk [vmem:[#allocation3 + $0xc0] sm:$0xff] %vm257, %v1773
      %1806 = vst.msk [vmem:[#allocation3 + $0xc8] sm:$0xff] %vm257, %v1774
      %1807 = vst.msk [vmem:[#allocation3 + $0xd0] sm:$0xff] %vm257, %v1775
      %1808 = vst.msk [vmem:[#allocation3 + $0xd8] sm:$0xff] %vm257, %v1776
      %1809 = vst.msk [vmem:[#allocation3 + $0xe0] sm:$0xff] %vm257, %v1777
      %1810 = vst.msk [vmem:[#allocation3 + $0xe8] sm:$0xff] %vm257, %v1778
      %1811 = vst.msk [vmem:[#allocation3 + $0xf0] sm:$0xff] %vm257, %v1779
      %1812 = vst.msk [vmem:[#allocation3 + $0xf8] sm:$0xff] %vm257, %v1780
      %v1813 = vld [vmem:[%s1181] sm:$0xff]
      %v1814 = vld [vmem:[%s1181 + $0x8] sm:$0xff]
      %v1815 = vld [vmem:[%s1181 + $0x10] sm:$0xff]
      %v1816 = vld [vmem:[%s1181 + $0x18] sm:$0xff]
      %v1817 = vld [vmem:[%s1181 + $0x20] sm:$0xff]
      %v1818 = vld [vmem:[%s1181 + $0x28] sm:$0xff]
      %v1819 = vld [vmem:[%s1181 + $0x30] sm:$0xff]
      %v1820 = vld [vmem:[%s1181 + $0x38] sm:$0xff]
      %v1821 = vld [vmem:[%s1181 + $0x40] sm:$0xff]
      %v1822 = vld [vmem:[%s1181 + $0x48] sm:$0xff]
      %v1823 = vld [vmem:[%s1181 + $0x50] sm:$0xff]
      %v1824 = vld [vmem:[%s1181 + $0x58] sm:$0xff]
      %v1825 = vld [vmem:[%s1181 + $0x60] sm:$0xff]
      %v1826 = vld [vmem:[%s1181 + $0x68] sm:$0xff]
      %v1827 = vld [vmem:[%s1181 + $0x70] sm:$0xff]
      %v1828 = vld [vmem:[%s1181 + $0x78] sm:$0xff]
      %v1829 = vld [vmem:[%s1181 + $0x80] sm:$0xff]
      %v1830 = vld [vmem:[%s1181 + $0x88] sm:$0xff]
      %v1831 = vld [vmem:[%s1181 + $0x90] sm:$0xff]
      %v1832 = vld [vmem:[%s1181 + $0x98] sm:$0xff]
      %v1833 = vld [vmem:[%s1181 + $0xa0] sm:$0xff]
      %v1834 = vld [vmem:[%s1181 + $0xa8] sm:$0xff]
      %v1835 = vld [vmem:[%s1181 + $0xb0] sm:$0xff]
      %v1836 = vld [vmem:[%s1181 + $0xb8] sm:$0xff]
      %v1837 = vld [vmem:[%s1181 + $0xc0] sm:$0xff]
      %v1838 = vld [vmem:[%s1181 + $0xc8] sm:$0xff]
      %v1839 = vld [vmem:[%s1181 + $0xd0] sm:$0xff]
      %v1840 = vld [vmem:[%s1181 + $0xd8] sm:$0xff]
      %v1841 = vld [vmem:[%s1181 + $0xe0] sm:$0xff]
      %v1842 = vld [vmem:[%s1181 + $0xe8] sm:$0xff]
      %v1843 = vld [vmem:[%s1181 + $0xf0] sm:$0xff]
      %v1844 = vld [vmem:[%s1181 + $0xf8] sm:$0xff]
      %1877 = vrot.lane.b32.xlu0 %v1622, 124
      %v1878 = vpop.permute.xlu0 %1877
      %1879 = vrot.lane.b32.xlu0 %v1625, 124
      %v1880 = vpop.permute.xlu0 %1879
      %1881 = vrot.lane.b32.xlu0 %v1628, 124
      %v1882 = vpop.permute.xlu0 %1881
      %1883 = vrot.lane.b32.xlu0 %v1631, 124
      %v1884 = vpop.permute.xlu0 %1883
      %1885 = vrot.lane.b32.xlu0 %v1634, 124
      %v1886 = vpop.permute.xlu0 %1885
      %1887 = vrot.lane.b32.xlu0 %v1637, 124
      %v1888 = vpop.permute.xlu0 %1887
      %1889 = vrot.lane.b32.xlu0 %v1640, 124
      %v1890 = vpop.permute.xlu0 %1889
      %1891 = vrot.lane.b32.xlu0 %v1643, 124
      %v1892 = vpop.permute.xlu0 %1891
      %1893 = vrot.lane.b32.xlu0 %v1646, 124
      %v1894 = vpop.permute.xlu0 %1893
      %1895 = vrot.lane.b32.xlu0 %v1649, 124
      %v1896 = vpop.permute.xlu0 %1895
      %1897 = vrot.lane.b32.xlu0 %v1652, 124
      %v1898 = vpop.permute.xlu0 %1897
      %1899 = vrot.lane.b32.xlu0 %v1655, 124
      %v1900 = vpop.permute.xlu0 %1899
      %1901 = vrot.lane.b32.xlu0 %v1658, 124
      %v1902 = vpop.permute.xlu0 %1901
      %1903 = vrot.lane.b32.xlu0 %v1661, 124
      %v1904 = vpop.permute.xlu0 %1903
      %1905 = vrot.lane.b32.xlu0 %v1664, 124
      %v1906 = vpop.permute.xlu0 %1905
      %1907 = vrot.lane.b32.xlu0 %v1667, 124
      %v1908 = vpop.permute.xlu0 %1907
      %1909 = vrot.lane.b32.xlu0 %v1670, 124
      %v1910 = vpop.permute.xlu0 %1909
      %1911 = vrot.lane.b32.xlu0 %v1673, 124
      %v1912 = vpop.permute.xlu0 %1911
      %1913 = vrot.lane.b32.xlu0 %v1676, 124
      %v1914 = vpop.permute.xlu0 %1913
      %1915 = vrot.lane.b32.xlu0 %v1679, 124
      %v1916 = vpop.permute.xlu0 %1915
      %1917 = vrot.lane.b32.xlu0 %v1682, 124
      %v1918 = vpop.permute.xlu0 %1917
      %1919 = vrot.lane.b32.xlu0 %v1685, 124
      %v1920 = vpop.permute.xlu0 %1919
      %1921 = vrot.lane.b32.xlu0 %v1688, 124
      %v1922 = vpop.permute.xlu0 %1921
      %1923 = vrot.lane.b32.xlu0 %v1691, 124
      %v1924 = vpop.permute.xlu0 %1923
      %1925 = vrot.lane.b32.xlu0 %v1694, 124
      %v1926 = vpop.permute.xlu0 %1925
      %1927 = vrot.lane.b32.xlu0 %v1697, 124
      %v1928 = vpop.permute.xlu0 %1927
      %1929 = vrot.lane.b32.xlu0 %v1700, 124
      %v1930 = vpop.permute.xlu0 %1929
      %1931 = vrot.lane.b32.xlu0 %v1703, 124
      %v1932 = vpop.permute.xlu0 %1931
      %1933 = vrot.lane.b32.xlu0 %v1706, 124
      %v1934 = vpop.permute.xlu0 %1933
      %1935 = vrot.lane.b32.xlu0 %v1709, 124
      %v1936 = vpop.permute.xlu0 %1935
      %1937 = vrot.lane.b32.xlu0 %v1712, 124
      %v1938 = vpop.permute.xlu0 %1937
      %1939 = vrot.lane.b32.xlu0 %v1715, 124
      %v1940 = vpop.permute.xlu0 %1939
      %v1973 = vadd.f32 %v1813, %v1878
      %v1974 = vadd.f32 %v1814, %v1880
      %v1975 = vadd.f32 %v1815, %v1882
      %v1976 = vadd.f32 %v1816, %v1884
      %v1977 = vadd.f32 %v1817, %v1886
      %v1978 = vadd.f32 %v1818, %v1888
      %v1979 = vadd.f32 %v1819, %v1890
      %v1980 = vadd.f32 %v1820, %v1892
      %v1981 = vadd.f32 %v1821, %v1894
      %v1982 = vadd.f32 %v1822, %v1896
      %v1983 = vadd.f32 %v1823, %v1898
      %v1984 = vadd.f32 %v1824, %v1900
      %v1985 = vadd.f32 %v1825, %v1902
      %v1986 = vadd.f32 %v1826, %v1904
      %v1987 = vadd.f32 %v1827, %v1906
      %v1988 = vadd.f32 %v1828, %v1908
      %v1989 = vadd.f32 %v1829, %v1910
      %v1990 = vadd.f32 %v1830, %v1912
      %v1991 = vadd.f32 %v1831, %v1914
      %v1992 = vadd.f32 %v1832, %v1916
      %v1993 = vadd.f32 %v1833, %v1918
      %v1994 = vadd.f32 %v1834, %v1920
      %v1995 = vadd.f32 %v1835, %v1922
      %v1996 = vadd.f32 %v1836, %v1924
      %v1997 = vadd.f32 %v1837, %v1926
      %v1998 = vadd.f32 %v1838, %v1928
      %v1999 = vadd.f32 %v1839, %v1930
      %v2000 = vadd.f32 %v1840, %v1932
      %v2001 = vadd.f32 %v1841, %v1934
      %v2002 = vadd.f32 %v1842, %v1936
      %v2003 = vadd.f32 %v1843, %v1938
      %v2004 = vadd.f32 %v1844, %v1940
      %2005 = vst.msk [vmem:[%s1181] sm:$0xff] %vm257, %v1973
      %2006 = vst.msk [vmem:[%s1181 + $0x8] sm:$0xff] %vm257, %v1974
      %2007 = vst.msk [vmem:[%s1181 + $0x10] sm:$0xff] %vm257, %v1975
      %2008 = vst.msk [vmem:[%s1181 + $0x18] sm:$0xff] %vm257, %v1976
      %2009 = vst.msk [vmem:[%s1181 + $0x20] sm:$0xff] %vm257, %v1977
      %2010 = vst.msk [vmem:[%s1181 + $0x28] sm:$0xff] %vm257, %v1978
      %2011 = vst.msk [vmem:[%s1181 + $0x30] sm:$0xff] %vm257, %v1979
      %2012 = vst.msk [vmem:[%s1181 + $0x38] sm:$0xff] %vm257, %v1980
      %2013 = vst.msk [vmem:[%s1181 + $0x40] sm:$0xff] %vm257, %v1981
      %2014 = vst.msk [vmem:[%s1181 + $0x48] sm:$0xff] %vm257, %v1982
      %2015 = vst.msk [vmem:[%s1181 + $0x50] sm:$0xff] %vm257, %v1983
      %2016 = vst.msk [vmem:[%s1181 + $0x58] sm:$0xff] %vm257, %v1984
      %2017 = vst.msk [vmem:[%s1181 + $0x60] sm:$0xff] %vm257, %v1985
      %2018 = vst.msk [vmem:[%s1181 + $0x68] sm:$0xff] %vm257, %v1986
      %2019 = vst.msk [vmem:[%s1181 + $0x70] sm:$0xff] %vm257, %v1987
      %2020 = vst.msk [vmem:[%s1181 + $0x78] sm:$0xff] %vm257, %v1988
      %2021 = vst.msk [vmem:[%s1181 + $0x80] sm:$0xff] %vm257, %v1989
      %2022 = vst.msk [vmem:[%s1181 + $0x88] sm:$0xff] %vm257, %v1990
      %2023 = vst.msk [vmem:[%s1181 + $0x90] sm:$0xff] %vm257, %v1991
      %2024 = vst.msk [vmem:[%s1181 + $0x98] sm:$0xff] %vm257, %v1992
      %2025 = vst.msk [vmem:[%s1181 + $0xa0] sm:$0xff] %vm257, %v1993
      %2026 = vst.msk [vmem:[%s1181 + $0xa8] sm:$0xff] %vm257, %v1994
      %2027 = vst.msk [vmem:[%s1181 + $0xb0] sm:$0xff] %vm257, %v1995
      %2028 = vst.msk [vmem:[%s1181 + $0xb8] sm:$0xff] %vm257, %v1996
      %2029 = vst.msk [vmem:[%s1181 + $0xc0] sm:$0xff] %vm257, %v1997
      %2030 = vst.msk [vmem:[%s1181 + $0xc8] sm:$0xff] %vm257, %v1998
      %2031 = vst.msk [vmem:[%s1181 + $0xd0] sm:$0xff] %vm257, %v1999
      %2032 = vst.msk [vmem:[%s1181 + $0xd8] sm:$0xff] %vm257, %v2000
      %2033 = vst.msk [vmem:[%s1181 + $0xe0] sm:$0xff] %vm257, %v2001
      %2034 = vst.msk [vmem:[%s1181 + $0xe8] sm:$0xff] %vm257, %v2002
      %2035 = vst.msk [vmem:[%s1181 + $0xf0] sm:$0xff] %vm257, %v2003
      %2036 = vst.msk [vmem:[%s1181 + $0xf8] sm:$0xff] %vm257, %v2004
      %v2037 = vld [vmem:[#allocation2 + $0x28] sm:$0xff]
      %v2038 = vld [vmem:[#allocation2 + $0x30] sm:$0xff]
      %v2039 = vld [vmem:[#allocation2 + $0x38] sm:$0xff]
      %v2040 = vld [vmem:[#allocation2 + $0x40] sm:$0xff]
      %v2041 = vld [vmem:[#allocation2 + $0x48] sm:$0xff]
      %v2042 = vld [vmem:[#allocation2 + $0x50] sm:$0xff]
      %v2043 = vld [vmem:[#allocation2 + $0x58] sm:$0xff]
      %v2044 = vld [vmem:[#allocation2 + $0x60] sm:$0xff]
      %v2045 = vld [vmem:[#allocation2 + $0x68] sm:$0xff]
      %v2046 = vld [vmem:[#allocation2 + $0x70] sm:$0xff]
      %v2047 = vld [vmem:[#allocation2 + $0x78] sm:$0xff]
      %v2048 = vld [vmem:[#allocation2 + $0x80] sm:$0xff]
      %v2049 = vld [vmem:[#allocation2 + $0x88] sm:$0xff]
      %v2050 = vld [vmem:[#allocation2 + $0x90] sm:$0xff]
      %v2051 = vld [vmem:[#allocation2 + $0x98] sm:$0xff]
      %v2052 = vld [vmem:[#allocation2 + $0xa0] sm:$0xff]
      %v2053 = vld [vmem:[#allocation2 + $0xa8] sm:$0xff]
      %v2054 = vld [vmem:[#allocation2 + $0xb0] sm:$0xff]
      %v2055 = vld [vmem:[#allocation2 + $0xb8] sm:$0xff]
      %v2056 = vld [vmem:[#allocation2 + $0xc0] sm:$0xff]
      %v2057 = vld [vmem:[#allocation2 + $0xc8] sm:$0xff]
      %v2058 = vld [vmem:[#allocation2 + $0xd0] sm:$0xff]
      %v2059 = vld [vmem:[#allocation2 + $0xd8] sm:$0xff]
      %v2060 = vld [vmem:[#allocation2 + $0xe0] sm:$0xff]
      %v2061 = vld [vmem:[#allocation2 + $0xe8] sm:$0xff]
      %v2062 = vld [vmem:[#allocation2 + $0xf0] sm:$0xff]
      %v2063 = vld [vmem:[#allocation2 + $0xf8] sm:$0xff]
      %v2064 = vld [vmem:[#allocation2 + $0x100] sm:$0xff]
      %v2065 = vld [vmem:[#allocation2 + $0x108] sm:$0xff]
      %v2066 = vld [vmem:[#allocation2 + $0x110] sm:$0xff]
      %v2067 = vld [vmem:[#allocation2 + $0x118] sm:$0xff]
      %v2068 = vld [vmem:[#allocation2 + $0x120] sm:$0xff]
      %s2069 = scalar_lea.vmem %s2, 4
      %v2070 = vld [vmem:[%s2069] sm:$0xf]
      %v2072 = vsel %vm257, %v2037, 0
      %v2075 = vsel %vm257, %v2038, 0
      %v2078 = vsel %vm257, %v2039, 0
      %v2081 = vsel %vm257, %v2040, 0
      %v2084 = vsel %vm257, %v2041, 0
      %v2087 = vsel %vm257, %v2042, 0
      %v2090 = vsel %vm257, %v2043, 0
      %v2093 = vsel %vm257, %v2044, 0
      %v2096 = vsel %vm257, %v2045, 0
      %v2099 = vsel %vm257, %v2046, 0
      %v2102 = vsel %vm257, %v2047, 0
      %v2105 = vsel %vm257, %v2048, 0
      %v2108 = vsel %vm257, %v2049, 0
      %v2111 = vsel %vm257, %v2050, 0
      %v2114 = vsel %vm257, %v2051, 0
      %v2117 = vsel %vm257, %v2052, 0
      %v2120 = vsel %vm257, %v2053, 0
      %v2123 = vsel %vm257, %v2054, 0
      %v2126 = vsel %vm257, %v2055, 0
      %v2129 = vsel %vm257, %v2056, 0
      %v2132 = vsel %vm257, %v2057, 0
      %v2135 = vsel %vm257, %v2058, 0
      %v2138 = vsel %vm257, %v2059, 0
      %v2141 = vsel %vm257, %v2060, 0
      %v2144 = vsel %vm257, %v2061, 0
      %v2147 = vsel %vm257, %v2062, 0
      %v2150 = vsel %vm257, %v2063, 0
      %v2153 = vsel %vm257, %v2064, 0
      %v2156 = vsel %vm257, %v2065, 0
      %v2159 = vsel %vm257, %v2066, 0
      %v2162 = vsel %vm257, %v2067, 0
      %v2165 = vsel %vm257, %v2068, 0
      %v2168 = vsel %vm904, %v2070, 0
      %2170 = vmatpush.msra.mxu0 0.0
      %2171 = vmatpush.msra.mxu0 0.0
      %2172 = vmatpush.msra.mxu0 0.0
      %2173 = vmatpush.msra.mxu0 0.0
      %2174 = vmatpush.msra.mxu0 0.0
      %2175 = vmatpush.msra.mxu0 0.0
      %2176 = vmatpush.msra.mxu0 0.0
      %2177 = vmatpush.msra.mxu0 0.0
      %2178 = vmatpush.msra.mxu0 0.0
      %2179 = vmatpush.msra.mxu0 0.0
      %2180 = vmatpush.msra.mxu0 0.0
      %2181 = vmatpush.msra.mxu0 0.0
      %2182 = vmatpush.msra.mxu0 0.0
      %2183 = vmatpush.msra.mxu0 0.0
      %2184 = vmatpush.msra.mxu0 0.0
      %2185 = vmatpush.msra.mxu0 %v2168
      %2186 = vmatmul.f32.gmra.mxu0 %v2072
      %v2187 = vpop.f32.mrf.mxu0
      %v2188 = vadd.f32 0.0, %v2187
      %2189 = vmatmul.f32.gmra.mxu0 %v2075
      %v2190 = vpop.f32.mrf.mxu0
      %v2191 = vadd.f32 0.0, %v2190
      %2192 = vmatmul.f32.gmra.mxu0 %v2078
      %v2193 = vpop.f32.mrf.mxu0
      %v2194 = vadd.f32 0.0, %v2193
      %2195 = vmatmul.f32.gmra.mxu0 %v2081
      %v2196 = vpop.f32.mrf.mxu0
      %v2197 = vadd.f32 0.0, %v2196
      %2198 = vmatmul.f32.gmra.mxu0 %v2084
      %v2199 = vpop.f32.mrf.mxu0
      %v2200 = vadd.f32 0.0, %v2199
      %2201 = vmatmul.f32.gmra.mxu0 %v2087
      %v2202 = vpop.f32.mrf.mxu0
      %v2203 = vadd.f32 0.0, %v2202
      %2204 = vmatmul.f32.gmra.mxu0 %v2090
      %v2205 = vpop.f32.mrf.mxu0
      %v2206 = vadd.f32 0.0, %v2205
      %2207 = vmatmul.f32.gmra.mxu0 %v2093
      %v2208 = vpop.f32.mrf.mxu0
      %v2209 = vadd.f32 0.0, %v2208
      %2210 = vmatmul.f32.gmra.mxu0 %v2096
      %v2211 = vpop.f32.mrf.mxu0
      %v2212 = vadd.f32 0.0, %v2211
      %2213 = vmatmul.f32.gmra.mxu0 %v2099
      %v2214 = vpop.f32.mrf.mxu0
      %v2215 = vadd.f32 0.0, %v2214
      %2216 = vmatmul.f32.gmra.mxu0 %v2102
      %v2217 = vpop.f32.mrf.mxu0
      %v2218 = vadd.f32 0.0, %v2217
      %2219 = vmatmul.f32.gmra.mxu0 %v2105
      %v2220 = vpop.f32.mrf.mxu0
      %v2221 = vadd.f32 0.0, %v2220
      %2222 = vmatmul.f32.gmra.mxu0 %v2108
      %v2223 = vpop.f32.mrf.mxu0
      %v2224 = vadd.f32 0.0, %v2223
      %2225 = vmatmul.f32.gmra.mxu0 %v2111
      %v2226 = vpop.f32.mrf.mxu0
      %v2227 = vadd.f32 0.0, %v2226
      %2228 = vmatmul.f32.gmra.mxu0 %v2114
      %v2229 = vpop.f32.mrf.mxu0
      %v2230 = vadd.f32 0.0, %v2229
      %2231 = vmatmul.f32.gmra.mxu0 %v2117
      %v2232 = vpop.f32.mrf.mxu0
      %v2233 = vadd.f32 0.0, %v2232
      %2234 = vmatmul.f32.gmra.mxu0 %v2120
      %v2235 = vpop.f32.mrf.mxu0
      %v2236 = vadd.f32 0.0, %v2235
      %2237 = vmatmul.f32.gmra.mxu0 %v2123
      %v2238 = vpop.f32.mrf.mxu0
      %v2239 = vadd.f32 0.0, %v2238
      %2240 = vmatmul.f32.gmra.mxu0 %v2126
      %v2241 = vpop.f32.mrf.mxu0
      %v2242 = vadd.f32 0.0, %v2241
      %2243 = vmatmul.f32.gmra.mxu0 %v2129
      %v2244 = vpop.f32.mrf.mxu0
      %v2245 = vadd.f32 0.0, %v2244
      %2246 = vmatmul.f32.gmra.mxu0 %v2132
      %v2247 = vpop.f32.mrf.mxu0
      %v2248 = vadd.f32 0.0, %v2247
      %2249 = vmatmul.f32.gmra.mxu0 %v2135
      %v2250 = vpop.f32.mrf.mxu0
      %v2251 = vadd.f32 0.0, %v2250
      %2252 = vmatmul.f32.gmra.mxu0 %v2138
      %v2253 = vpop.f32.mrf.mxu0
      %v2254 = vadd.f32 0.0, %v2253
      %2255 = vmatmul.f32.gmra.mxu0 %v2141
      %v2256 = vpop.f32.mrf.mxu0
      %v2257 = vadd.f32 0.0, %v2256
      %2258 = vmatmul.f32.gmra.mxu0 %v2144
      %v2259 = vpop.f32.mrf.mxu0
      %v2260 = vadd.f32 0.0, %v2259
      %2261 = vmatmul.f32.gmra.mxu0 %v2147
      %v2262 = vpop.f32.mrf.mxu0
      %v2263 = vadd.f32 0.0, %v2262
      %2264 = vmatmul.f32.gmra.mxu0 %v2150
      %v2265 = vpop.f32.mrf.mxu0
      %v2266 = vadd.f32 0.0, %v2265
      %2267 = vmatmul.f32.gmra.mxu0 %v2153
      %v2268 = vpop.f32.mrf.mxu0
      %v2269 = vadd.f32 0.0, %v2268
      %2270 = vmatmul.f32.gmra.mxu0 %v2156
      %v2271 = vpop.f32.mrf.mxu0
      %v2272 = vadd.f32 0.0, %v2271
      %2273 = vmatmul.f32.gmra.mxu0 %v2159
      %v2274 = vpop.f32.mrf.mxu0
      %v2275 = vadd.f32 0.0, %v2274
      %2276 = vmatmul.f32.gmra.mxu0 %v2162
      %v2277 = vpop.f32.mrf.mxu0
      %v2278 = vadd.f32 0.0, %v2277
      %2279 = vmatmul.f32.gmra.mxu0 %v2165
      %v2280 = vpop.f32.mrf.mxu0
      %v2281 = vadd.f32 0.0, %v2280
      %2282 = vdwg.mxu0
      %v2283 = vld [vmem:[%s1310] sm:$0xff]
      %v2284 = vld [vmem:[%s1310 + $0x8] sm:$0xff]
      %v2285 = vld [vmem:[%s1310 + $0x10] sm:$0xff]
      %v2286 = vld [vmem:[%s1310 + $0x18] sm:$0xff]
      %v2287 = vld [vmem:[%s1310 + $0x20] sm:$0xff]
      %v2288 = vld [vmem:[%s1310 + $0x28] sm:$0xff]
      %v2289 = vld [vmem:[%s1310 + $0x30] sm:$0xff]
      %v2290 = vld [vmem:[%s1310 + $0x38] sm:$0xff]
      %v2291 = vld [vmem:[%s1310 + $0x40] sm:$0xff]
      %v2292 = vld [vmem:[%s1310 + $0x48] sm:$0xff]
      %v2293 = vld [vmem:[%s1310 + $0x50] sm:$0xff]
      %v2294 = vld [vmem:[%s1310 + $0x58] sm:$0xff]
      %v2295 = vld [vmem:[%s1310 + $0x60] sm:$0xff]
      %v2296 = vld [vmem:[%s1310 + $0x68] sm:$0xff]
      %v2297 = vld [vmem:[%s1310 + $0x70] sm:$0xff]
      %v2298 = vld [vmem:[%s1310 + $0x78] sm:$0xff]
      %v2299 = vld [vmem:[%s1310 + $0x80] sm:$0xff]
      %v2300 = vld [vmem:[%s1310 + $0x88] sm:$0xff]
      %v2301 = vld [vmem:[%s1310 + $0x90] sm:$0xff]
      %v2302 = vld [vmem:[%s1310 + $0x98] sm:$0xff]
      %v2303 = vld [vmem:[%s1310 + $0xa0] sm:$0xff]
      %v2304 = vld [vmem:[%s1310 + $0xa8] sm:$0xff]
      %v2305 = vld [vmem:[%s1310 + $0xb0] sm:$0xff]
      %v2306 = vld [vmem:[%s1310 + $0xb8] sm:$0xff]
      %v2307 = vld [vmem:[%s1310 + $0xc0] sm:$0xff]
      %v2308 = vld [vmem:[%s1310 + $0xc8] sm:$0xff]
      %v2309 = vld [vmem:[%s1310 + $0xd0] sm:$0xff]
      %v2310 = vld [vmem:[%s1310 + $0xd8] sm:$0xff]
      %v2311 = vld [vmem:[%s1310 + $0xe0] sm:$0xff]
      %v2312 = vld [vmem:[%s1310 + $0xe8] sm:$0xff]
      %v2313 = vld [vmem:[%s1310 + $0xf0] sm:$0xff]
      %v2314 = vld [vmem:[%s1310 + $0xf8] sm:$0xff]
      %v2315 = vadd.f32 %v2283, %v2188
      %v2316 = vadd.f32 %v2284, %v2191
      %v2317 = vadd.f32 %v2285, %v2194
      %v2318 = vadd.f32 %v2286, %v2197
      %v2319 = vadd.f32 %v2287, %v2200
      %v2320 = vadd.f32 %v2288, %v2203
      %v2321 = vadd.f32 %v2289, %v2206
      %v2322 = vadd.f32 %v2290, %v2209
      %v2323 = vadd.f32 %v2291, %v2212
      %v2324 = vadd.f32 %v2292, %v2215
      %v2325 = vadd.f32 %v2293, %v2218
      %v2326 = vadd.f32 %v2294, %v2221
      %v2327 = vadd.f32 %v2295, %v2224
      %v2328 = vadd.f32 %v2296, %v2227
      %v2329 = vadd.f32 %v2297, %v2230
      %v2330 = vadd.f32 %v2298, %v2233
      %v2331 = vadd.f32 %v2299, %v2236
      %v2332 = vadd.f32 %v2300, %v2239
      %v2333 = vadd.f32 %v2301, %v2242
      %v2334 = vadd.f32 %v2302, %v2245
      %v2335 = vadd.f32 %v2303, %v2248
      %v2336 = vadd.f32 %v2304, %v2251
      %v2337 = vadd.f32 %v2305, %v2254
      %v2338 = vadd.f32 %v2306, %v2257
      %v2339 = vadd.f32 %v2307, %v2260
      %v2340 = vadd.f32 %v2308, %v2263
      %v2341 = vadd.f32 %v2309, %v2266
      %v2342 = vadd.f32 %v2310, %v2269
      %v2343 = vadd.f32 %v2311, %v2272
      %v2344 = vadd.f32 %v2312, %v2275
      %v2345 = vadd.f32 %v2313, %v2278
      %v2346 = vadd.f32 %v2314, %v2281
      %2347 = vst.msk [vmem:[%s1310] sm:$0xff] %vm257, %v2315
      %2348 = vst.msk [vmem:[%s1310 + $0x8] sm:$0xff] %vm257, %v2316
      %2349 = vst.msk [vmem:[%s1310 + $0x10] sm:$0xff] %vm257, %v2317
      %2350 = vst.msk [vmem:[%s1310 + $0x18] sm:$0xff] %vm257, %v2318
      %2351 = vst.msk [vmem:[%s1310 + $0x20] sm:$0xff] %vm257, %v2319
      %2352 = vst.msk [vmem:[%s1310 + $0x28] sm:$0xff] %vm257, %v2320
      %2353 = vst.msk [vmem:[%s1310 + $0x30] sm:$0xff] %vm257, %v2321
      %2354 = vst.msk [vmem:[%s1310 + $0x38] sm:$0xff] %vm257, %v2322
      %2355 = vst.msk [vmem:[%s1310 + $0x40] sm:$0xff] %vm257, %v2323
      %2356 = vst.msk [vmem:[%s1310 + $0x48] sm:$0xff] %vm257, %v2324
      %2357 = vst.msk [vmem:[%s1310 + $0x50] sm:$0xff] %vm257, %v2325
      %2358 = vst.msk [vmem:[%s1310 + $0x58] sm:$0xff] %vm257, %v2326
      %2359 = vst.msk [vmem:[%s1310 + $0x60] sm:$0xff] %vm257, %v2327
      %2360 = vst.msk [vmem:[%s1310 + $0x68] sm:$0xff] %vm257, %v2328
      %2361 = vst.msk [vmem:[%s1310 + $0x70] sm:$0xff] %vm257, %v2329
      %2362 = vst.msk [vmem:[%s1310 + $0x78] sm:$0xff] %vm257, %v2330
      %2363 = vst.msk [vmem:[%s1310 + $0x80] sm:$0xff] %vm257, %v2331
      %2364 = vst.msk [vmem:[%s1310 + $0x88] sm:$0xff] %vm257, %v2332
      %2365 = vst.msk [vmem:[%s1310 + $0x90] sm:$0xff] %vm257, %v2333
      %2366 = vst.msk [vmem:[%s1310 + $0x98] sm:$0xff] %vm257, %v2334
      %2367 = vst.msk [vmem:[%s1310 + $0xa0] sm:$0xff] %vm257, %v2335
      %2368 = vst.msk [vmem:[%s1310 + $0xa8] sm:$0xff] %vm257, %v2336
      %2369 = vst.msk [vmem:[%s1310 + $0xb0] sm:$0xff] %vm257, %v2337
      %2370 = vst.msk [vmem:[%s1310 + $0xb8] sm:$0xff] %vm257, %v2338
      %2371 = vst.msk [vmem:[%s1310 + $0xc0] sm:$0xff] %vm257, %v2339
      %2372 = vst.msk [vmem:[%s1310 + $0xc8] sm:$0xff] %vm257, %v2340
      %2373 = vst.msk [vmem:[%s1310 + $0xd0] sm:$0xff] %vm257, %v2341
      %2374 = vst.msk [vmem:[%s1310 + $0xd8] sm:$0xff] %vm257, %v2342
      %2375 = vst.msk [vmem:[%s1310 + $0xe0] sm:$0xff] %vm257, %v2343
      %2376 = vst.msk [vmem:[%s1310 + $0xe8] sm:$0xff] %vm257, %v2344
      %2377 = vst.msk [vmem:[%s1310 + $0xf0] sm:$0xff] %vm257, %v2345
      %2378 = vst.msk [vmem:[%s1310 + $0xf8] sm:$0xff] %vm257, %v2346
      %v2379 = vld [vmem:[%s1439] sm:$0xff]
      %v2380 = vld [vmem:[%s1439 + $0x8] sm:$0xff]
      %v2381 = vld [vmem:[%s1439 + $0x10] sm:$0xff]
      %v2382 = vld [vmem:[%s1439 + $0x18] sm:$0xff]
      %v2383 = vld [vmem:[%s1439 + $0x20] sm:$0xff]
      %v2384 = vld [vmem:[%s1439 + $0x28] sm:$0xff]
      %v2385 = vld [vmem:[%s1439 + $0x30] sm:$0xff]
      %v2386 = vld [vmem:[%s1439 + $0x38] sm:$0xff]
      %v2387 = vld [vmem:[%s1439 + $0x40] sm:$0xff]
      %v2388 = vld [vmem:[%s1439 + $0x48] sm:$0xff]
      %v2389 = vld [vmem:[%s1439 + $0x50] sm:$0xff]
      %v2390 = vld [vmem:[%s1439 + $0x58] sm:$0xff]
      %v2391 = vld [vmem:[%s1439 + $0x60] sm:$0xff]
      %v2392 = vld [vmem:[%s1439 + $0x68] sm:$0xff]
      %v2393 = vld [vmem:[%s1439 + $0x70] sm:$0xff]
      %v2394 = vld [vmem:[%s1439 + $0x78] sm:$0xff]
      %v2395 = vld [vmem:[%s1439 + $0x80] sm:$0xff]
      %v2396 = vld [vmem:[%s1439 + $0x88] sm:$0xff]
      %v2397 = vld [vmem:[%s1439 + $0x90] sm:$0xff]
      %v2398 = vld [vmem:[%s1439 + $0x98] sm:$0xff]
      %v2399 = vld [vmem:[%s1439 + $0xa0] sm:$0xff]
      %v2400 = vld [vmem:[%s1439 + $0xa8] sm:$0xff]
      %v2401 = vld [vmem:[%s1439 + $0xb0] sm:$0xff]
      %v2402 = vld [vmem:[%s1439 + $0xb8] sm:$0xff]
      %v2403 = vld [vmem:[%s1439 + $0xc0] sm:$0xff]
      %v2404 = vld [vmem:[%s1439 + $0xc8] sm:$0xff]
      %v2405 = vld [vmem:[%s1439 + $0xd0] sm:$0xff]
      %v2406 = vld [vmem:[%s1439 + $0xd8] sm:$0xff]
      %v2407 = vld [vmem:[%s1439 + $0xe0] sm:$0xff]
      %v2408 = vld [vmem:[%s1439 + $0xe8] sm:$0xff]
      %v2409 = vld [vmem:[%s1439 + $0xf0] sm:$0xff]
      %v2410 = vld [vmem:[%s1439 + $0xf8] sm:$0xff]
      %2443 = vrot.lane.b32.xlu0 %v2188, 124
      %v2444 = vpop.permute.xlu0 %2443
      %2445 = vrot.lane.b32.xlu0 %v2191, 124
      %v2446 = vpop.permute.xlu0 %2445
      %2447 = vrot.lane.b32.xlu0 %v2194, 124
      %v2448 = vpop.permute.xlu0 %2447
      %2449 = vrot.lane.b32.xlu0 %v2197, 124
      %v2450 = vpop.permute.xlu0 %2449
      %2451 = vrot.lane.b32.xlu0 %v2200, 124
      %v2452 = vpop.permute.xlu0 %2451
      %2453 = vrot.lane.b32.xlu0 %v2203, 124
      %v2454 = vpop.permute.xlu0 %2453
      %2455 = vrot.lane.b32.xlu0 %v2206, 124
      %v2456 = vpop.permute.xlu0 %2455
      %2457 = vrot.lane.b32.xlu0 %v2209, 124
      %v2458 = vpop.permute.xlu0 %2457
      %2459 = vrot.lane.b32.xlu0 %v2212, 124
      %v2460 = vpop.permute.xlu0 %2459
      %2461 = vrot.lane.b32.xlu0 %v2215, 124
      %v2462 = vpop.permute.xlu0 %2461
      %2463 = vrot.lane.b32.xlu0 %v2218, 124
      %v2464 = vpop.permute.xlu0 %2463
      %2465 = vrot.lane.b32.xlu0 %v2221, 124
      %v2466 = vpop.permute.xlu0 %2465
      %2467 = vrot.lane.b32.xlu0 %v2224, 124
      %v2468 = vpop.permute.xlu0 %2467
      %2469 = vrot.lane.b32.xlu0 %v2227, 124
      %v2470 = vpop.permute.xlu0 %2469
      %2471 = vrot.lane.b32.xlu0 %v2230, 124
      %v2472 = vpop.permute.xlu0 %2471
      %2473 = vrot.lane.b32.xlu0 %v2233, 124
      %v2474 = vpop.permute.xlu0 %2473
      %2475 = vrot.lane.b32.xlu0 %v2236, 124
      %v2476 = vpop.permute.xlu0 %2475
      %2477 = vrot.lane.b32.xlu0 %v2239, 124
      %v2478 = vpop.permute.xlu0 %2477
      %2479 = vrot.lane.b32.xlu0 %v2242, 124
      %v2480 = vpop.permute.xlu0 %2479
      %2481 = vrot.lane.b32.xlu0 %v2245, 124
      %v2482 = vpop.permute.xlu0 %2481
      %2483 = vrot.lane.b32.xlu0 %v2248, 124
      %v2484 = vpop.permute.xlu0 %2483
      %2485 = vrot.lane.b32.xlu0 %v2251, 124
      %v2486 = vpop.permute.xlu0 %2485
      %2487 = vrot.lane.b32.xlu0 %v2254, 124
      %v2488 = vpop.permute.xlu0 %2487
      %2489 = vrot.lane.b32.xlu0 %v2257, 124
      %v2490 = vpop.permute.xlu0 %2489
      %2491 = vrot.lane.b32.xlu0 %v2260, 124
      %v2492 = vpop.permute.xlu0 %2491
      %2493 = vrot.lane.b32.xlu0 %v2263, 124
      %v2494 = vpop.permute.xlu0 %2493
      %2495 = vrot.lane.b32.xlu0 %v2266, 124
      %v2496 = vpop.permute.xlu0 %2495
      %2497 = vrot.lane.b32.xlu0 %v2269, 124
      %v2498 = vpop.permute.xlu0 %2497
      %2499 = vrot.lane.b32.xlu0 %v2272, 124
      %v2500 = vpop.permute.xlu0 %2499
      %2501 = vrot.lane.b32.xlu0 %v2275, 124
      %v2502 = vpop.permute.xlu0 %2501
      %2503 = vrot.lane.b32.xlu0 %v2278, 124
      %v2504 = vpop.permute.xlu0 %2503
      %2505 = vrot.lane.b32.xlu0 %v2281, 124
      %v2506 = vpop.permute.xlu0 %2505
      %v2539 = vadd.f32 %v2379, %v2444
      %v2540 = vadd.f32 %v2380, %v2446
      %v2541 = vadd.f32 %v2381, %v2448
      %v2542 = vadd.f32 %v2382, %v2450
      %v2543 = vadd.f32 %v2383, %v2452
      %v2544 = vadd.f32 %v2384, %v2454
      %v2545 = vadd.f32 %v2385, %v2456
      %v2546 = vadd.f32 %v2386, %v2458
      %v2547 = vadd.f32 %v2387, %v2460
      %v2548 = vadd.f32 %v2388, %v2462
      %v2549 = vadd.f32 %v2389, %v2464
      %v2550 = vadd.f32 %v2390, %v2466
      %v2551 = vadd.f32 %v2391, %v2468
      %v2552 = vadd.f32 %v2392, %v2470
      %v2553 = vadd.f32 %v2393, %v2472
      %v2554 = vadd.f32 %v2394, %v2474
      %v2555 = vadd.f32 %v2395, %v2476
      %v2556 = vadd.f32 %v2396, %v2478
      %v2557 = vadd.f32 %v2397, %v2480
      %v2558 = vadd.f32 %v2398, %v2482
      %v2559 = vadd.f32 %v2399, %v2484
      %v2560 = vadd.f32 %v2400, %v2486
      %v2561 = vadd.f32 %v2401, %v2488
      %v2562 = vadd.f32 %v2402, %v2490
      %v2563 = vadd.f32 %v2403, %v2492
      %v2564 = vadd.f32 %v2404, %v2494
      %v2565 = vadd.f32 %v2405, %v2496
      %v2566 = vadd.f32 %v2406, %v2498
      %v2567 = vadd.f32 %v2407, %v2500
      %v2568 = vadd.f32 %v2408, %v2502
      %v2569 = vadd.f32 %v2409, %v2504
      %v2570 = vadd.f32 %v2410, %v2506
      %2571 = vst.msk [vmem:[%s1439] sm:$0xff] %vm257, %v2539
      %2572 = vst.msk [vmem:[%s1439 + $0x8] sm:$0xff] %vm257, %v2540
      %2573 = vst.msk [vmem:[%s1439 + $0x10] sm:$0xff] %vm257, %v2541
      %2574 = vst.msk [vmem:[%s1439 + $0x18] sm:$0xff] %vm257, %v2542
      %2575 = vst.msk [vmem:[%s1439 + $0x20] sm:$0xff] %vm257, %v2543
      %2576 = vst.msk [vmem:[%s1439 + $0x28] sm:$0xff] %vm257, %v2544
      %2577 = vst.msk [vmem:[%s1439 + $0x30] sm:$0xff] %vm257, %v2545
      %2578 = vst.msk [vmem:[%s1439 + $0x38] sm:$0xff] %vm257, %v2546
      %2579 = vst.msk [vmem:[%s1439 + $0x40] sm:$0xff] %vm257, %v2547
      %2580 = vst.msk [vmem:[%s1439 + $0x48] sm:$0xff] %vm257, %v2548
      %2581 = vst.msk [vmem:[%s1439 + $0x50] sm:$0xff] %vm257, %v2549
      %2582 = vst.msk [vmem:[%s1439 + $0x58] sm:$0xff] %vm257, %v2550
      %2583 = vst.msk [vmem:[%s1439 + $0x60] sm:$0xff] %vm257, %v2551
      %2584 = vst.msk [vmem:[%s1439 + $0x68] sm:$0xff] %vm257, %v2552
      %2585 = vst.msk [vmem:[%s1439 + $0x70] sm:$0xff] %vm257, %v2553
      %2586 = vst.msk [vmem:[%s1439 + $0x78] sm:$0xff] %vm257, %v2554
      %2587 = vst.msk [vmem:[%s1439 + $0x80] sm:$0xff] %vm257, %v2555
      %2588 = vst.msk [vmem:[%s1439 + $0x88] sm:$0xff] %vm257, %v2556
      %2589 = vst.msk [vmem:[%s1439 + $0x90] sm:$0xff] %vm257, %v2557
      %2590 = vst.msk [vmem:[%s1439 + $0x98] sm:$0xff] %vm257, %v2558
      %2591 = vst.msk [vmem:[%s1439 + $0xa0] sm:$0xff] %vm257, %v2559
      %2592 = vst.msk [vmem:[%s1439 + $0xa8] sm:$0xff] %vm257, %v2560
      %2593 = vst.msk [vmem:[%s1439 + $0xb0] sm:$0xff] %vm257, %v2561
      %2594 = vst.msk [vmem:[%s1439 + $0xb8] sm:$0xff] %vm257, %v2562
      %2595 = vst.msk [vmem:[%s1439 + $0xc0] sm:$0xff] %vm257, %v2563
      %2596 = vst.msk [vmem:[%s1439 + $0xc8] sm:$0xff] %vm257, %v2564
      %2597 = vst.msk [vmem:[%s1439 + $0xd0] sm:$0xff] %vm257, %v2565
      %2598 = vst.msk [vmem:[%s1439 + $0xd8] sm:$0xff] %vm257, %v2566
      %2599 = vst.msk [vmem:[%s1439 + $0xe0] sm:$0xff] %vm257, %v2567
      %2600 = vst.msk [vmem:[%s1439 + $0xe8] sm:$0xff] %vm257, %v2568
      %2601 = vst.msk [vmem:[%s1439 + $0xf0] sm:$0xff] %vm257, %v2569
      %2602 = vst.msk [vmem:[%s1439 + $0xf8] sm:$0xff] %vm257, %v2570
      %v2603 = vld [vmem:[#allocation2 + $0x17] sm:$0xff]
      %v2604 = vld [vmem:[#allocation2 + $0x1f] sm:$0xff]
      %v2605 = vld [vmem:[#allocation2 + $0x27] sm:$0xff]
      %v2606 = vld [vmem:[#allocation2 + $0x2f] sm:$0xff]
      %v2607 = vld [vmem:[#allocation2 + $0x37] sm:$0xff]
      %v2608 = vld [vmem:[#allocation2 + $0x3f] sm:$0xff]
      %v2609 = vld [vmem:[#allocation2 + $0x47] sm:$0xff]
      %v2610 = vld [vmem:[#allocation2 + $0x4f] sm:$0xff]
      %v2611 = vld [vmem:[#allocation2 + $0x57] sm:$0xff]
      %v2612 = vld [vmem:[#allocation2 + $0x5f] sm:$0xff]
      %v2613 = vld [vmem:[#allocation2 + $0x67] sm:$0xff]
      %v2614 = vld [vmem:[#allocation2 + $0x6f] sm:$0xff]
      %v2615 = vld [vmem:[#allocation2 + $0x77] sm:$0xff]
      %v2616 = vld [vmem:[#allocation2 + $0x7f] sm:$0xff]
      %v2617 = vld [vmem:[#allocation2 + $0x87] sm:$0xff]
      %v2618 = vld [vmem:[#allocation2 + $0x8f] sm:$0xff]
      %v2619 = vld [vmem:[#allocation2 + $0x97] sm:$0xff]
      %v2620 = vld [vmem:[#allocation2 + $0x9f] sm:$0xff]
      %v2621 = vld [vmem:[#allocation2 + $0xa7] sm:$0xff]
      %v2622 = vld [vmem:[#allocation2 + $0xaf] sm:$0xff]
      %v2623 = vld [vmem:[#allocation2 + $0xb7] sm:$0xff]
      %v2624 = vld [vmem:[#allocation2 + $0xbf] sm:$0xff]
      %v2625 = vld [vmem:[#allocation2 + $0xc7] sm:$0xff]
      %v2626 = vld [vmem:[#allocation2 + $0xcf] sm:$0xff]
      %v2627 = vld [vmem:[#allocation2 + $0xd7] sm:$0xff]
      %v2628 = vld [vmem:[#allocation2 + $0xdf] sm:$0xff]
      %v2629 = vld [vmem:[#allocation2 + $0xe7] sm:$0xff]
      %v2630 = vld [vmem:[#allocation2 + $0xef] sm:$0xff]
      %v2631 = vld [vmem:[#allocation2 + $0xf7] sm:$0xff]
      %v2632 = vld [vmem:[#allocation2 + $0xff] sm:$0xff]
      %v2633 = vld [vmem:[#allocation2 + $0x107] sm:$0xff]
      %v2634 = vld [vmem:[#allocation2 + $0x10f] sm:$0xff]
      %v2635 = vsel %vm711, 1, 0
      %v2636 = vsel %vm712, 1, 0
      %v2637 = vsel %vm713, 1, 0
      %v2638 = vsel %vm714, 1, 0
      %v2639 = vsel %vm715, 1, 0
      %v2640 = vsel %vm716, 1, 0
      %v2641 = vsel %vm717, 1, 0
      %v2642 = vsel %vm718, 1, 0
      %v2643 = vsel %vm719, 1, 0
      %v2644 = vsel %vm720, 1, 0
      %v2645 = vsel %vm721, 1, 0
      %v2646 = vsel %vm722, 1, 0
      %v2647 = vsel %vm723, 1, 0
      %v2648 = vsel %vm724, 1, 0
      %v2649 = vsel %vm725, 1, 0
      %v2650 = vsel %vm726, 1, 0
      %v2651 = vsel %vm727, 1, 0
      %v2652 = vsel %vm728, 1, 0
      %v2653 = vsel %vm729, 1, 0
      %v2654 = vsel %vm730, 1, 0
      %v2655 = vsel %vm731, 1, 0
      %v2656 = vsel %vm732, 1, 0
      %v2657 = vsel %vm733, 1, 0
      %v2658 = vsel %vm734, 1, 0
      %v2659 = vsel %vm735, 1, 0
      %v2660 = vsel %vm736, 1, 0
      %v2661 = vsel %vm737, 1, 0
      %v2662 = vsel %vm738, 1, 0
      %v2663 = vsel %vm739, 1, 0
      %v2664 = vsel %vm740, 1, 0
      %v2665 = vsel %vm741, 1, 0
      %v2666 = vsel %vm742, 1, 0
      %vm2667 = vcmp.eq.s32.totalorder %v2635, 1
      %vm2668 = vcmp.eq.s32.totalorder %v2636, 1
      %vm2669 = vcmp.eq.s32.totalorder %v2637, 1
      %vm2670 = vcmp.eq.s32.totalorder %v2638, 1
      %vm2671 = vcmp.eq.s32.totalorder %v2639, 1
      %vm2672 = vcmp.eq.s32.totalorder %v2640, 1
      %vm2673 = vcmp.eq.s32.totalorder %v2641, 1
      %vm2674 = vcmp.eq.s32.totalorder %v2642, 1
      %vm2675 = vcmp.eq.s32.totalorder %v2643, 1
      %vm2676 = vcmp.eq.s32.totalorder %v2644, 1
      %vm2677 = vcmp.eq.s32.totalorder %v2645, 1
      %vm2678 = vcmp.eq.s32.totalorder %v2646, 1
      %vm2679 = vcmp.eq.s32.totalorder %v2647, 1
      %vm2680 = vcmp.eq.s32.totalorder %v2648, 1
      %vm2681 = vcmp.eq.s32.totalorder %v2649, 1
      %vm2682 = vcmp.eq.s32.totalorder %v2650, 1
      %vm2683 = vcmp.eq.s32.totalorder %v2651, 1
      %vm2684 = vcmp.eq.s32.totalorder %v2652, 1
      %vm2685 = vcmp.eq.s32.totalorder %v2653, 1
      %vm2686 = vcmp.eq.s32.totalorder %v2654, 1
      %vm2687 = vcmp.eq.s32.totalorder %v2655, 1
      %vm2688 = vcmp.eq.s32.totalorder %v2656, 1
      %vm2689 = vcmp.eq.s32.totalorder %v2657, 1
      %vm2690 = vcmp.eq.s32.totalorder %v2658, 1
      %vm2691 = vcmp.eq.s32.totalorder %v2659, 1
      %vm2692 = vcmp.eq.s32.totalorder %v2660, 1
      %vm2693 = vcmp.eq.s32.totalorder %v2661, 1
      %vm2694 = vcmp.eq.s32.totalorder %v2662, 1
      %vm2695 = vcmp.eq.s32.totalorder %v2663, 1
      %vm2696 = vcmp.eq.s32.totalorder %v2664, 1
      %vm2697 = vcmp.eq.s32.totalorder %v2665, 1
      %vm2698 = vcmp.eq.s32.totalorder %v2666, 1
      %v2699 = vsel %vm2667, %v2603, 0.0
      %v2700 = vsel %vm2668, %v2604, 0.0
      %v2701 = vsel %vm2669, %v2605, 0.0
      %v2702 = vsel %vm2670, %v2606, 0.0
      %v2703 = vsel %vm2671, %v2607, 0.0
      %v2704 = vsel %vm2672, %v2608, 0.0
      %v2705 = vsel %vm2673, %v2609, 0.0
      %v2706 = vsel %vm2674, %v2610, 0.0
      %v2707 = vsel %vm2675, %v2611, 0.0
      %v2708 = vsel %vm2676, %v2612, 0.0
      %v2709 = vsel %vm2677, %v2613, 0.0
      %v2710 = vsel %vm2678, %v2614, 0.0
      %v2711 = vsel %vm2679, %v2615, 0.0
      %v2712 = vsel %vm2680, %v2616, 0.0
      %v2713 = vsel %vm2681, %v2617, 0.0
      %v2714 = vsel %vm2682, %v2618, 0.0
      %v2715 = vsel %vm2683, %v2619, 0.0
      %v2716 = vsel %vm2684, %v2620, 0.0
      %v2717 = vsel %vm2685, %v2621, 0.0
      %v2718 = vsel %vm2686, %v2622, 0.0
      %v2719 = vsel %vm2687, %v2623, 0.0
      %v2720 = vsel %vm2688, %v2624, 0.0
      %v2721 = vsel %vm2689, %v2625, 0.0
      %v2722 = vsel %vm2690, %v2626, 0.0
      %v2723 = vsel %vm2691, %v2627, 0.0
      %v2724 = vsel %vm2692, %v2628, 0.0
      %v2725 = vsel %vm2693, %v2629, 0.0
      %v2726 = vsel %vm2694, %v2630, 0.0
      %v2727 = vsel %vm2695, %v2631, 0.0
      %v2728 = vsel %vm2696, %v2632, 0.0
      %v2729 = vsel %vm2697, %v2633, 0.0
      %v2730 = vsel %vm2698, %v2634, 0.0
      %s2731 = scalar_lea.vmem %s2, 8
      %v2732 = vld [vmem:[%s2731] sm:$0xf]
      %v2734 = vsel %vm257, %v2699, 0
      %v2737 = vsel %vm257, %v2700, 0
      %v2740 = vsel %vm257, %v2701, 0
      %v2743 = vsel %vm257, %v2702, 0
      %v2746 = vsel %vm257, %v2703, 0
      %v2749 = vsel %vm257, %v2704, 0
      %v2752 = vsel %vm257, %v2705, 0
      %v2755 = vsel %vm257, %v2706, 0
      %v2758 = vsel %vm257, %v2707, 0
      %v2761 = vsel %vm257, %v2708, 0
      %v2764 = vsel %vm257, %v2709, 0
      %v2767 = vsel %vm257, %v2710, 0
      %v2770 = vsel %vm257, %v2711, 0
      %v2773 = vsel %vm257, %v2712, 0
      %v2776 = vsel %vm257, %v2713, 0
      %v2779 = vsel %vm257, %v2714, 0
      %v2782 = vsel %vm257, %v2715, 0
      %v2785 = vsel %vm257, %v2716, 0
      %v2788 = vsel %vm257, %v2717, 0
      %v2791 = vsel %vm257, %v2718, 0
      %v2794 = vsel %vm257, %v2719, 0
      %v2797 = vsel %vm257, %v2720, 0
      %v2800 = vsel %vm257, %v2721, 0
      %v2803 = vsel %vm257, %v2722, 0
      %v2806 = vsel %vm257, %v2723, 0
      %v2809 = vsel %vm257, %v2724, 0
      %v2812 = vsel %vm257, %v2725, 0
      %v2815 = vsel %vm257, %v2726, 0
      %v2818 = vsel %vm257, %v2727, 0
      %v2821 = vsel %vm257, %v2728, 0
      %v2824 = vsel %vm257, %v2729, 0
      %v2827 = vsel %vm257, %v2730, 0
      %v2830 = vsel %vm904, %v2732, 0
      %2832 = vmatpush.msra.mxu0 0.0
      %2833 = vmatpush.msra.mxu0 0.0
      %2834 = vmatpush.msra.mxu0 0.0
      %2835 = vmatpush.msra.mxu0 0.0
      %2836 = vmatpush.msra.mxu0 0.0
      %2837 = vmatpush.msra.mxu0 0.0
      %2838 = vmatpush.msra.mxu0 0.0
      %2839 = vmatpush.msra.mxu0 0.0
      %2840 = vmatpush.msra.mxu0 0.0
      %2841 = vmatpush.msra.mxu0 0.0
      %2842 = vmatpush.msra.mxu0 0.0
      %2843 = vmatpush.msra.mxu0 0.0
      %2844 = vmatpush.msra.mxu0 0.0
      %2845 = vmatpush.msra.mxu0 0.0
      %2846 = vmatpush.msra.mxu0 0.0
      %2847 = vmatpush.msra.mxu0 %v2830
      %2848 = vmatmul.f32.gmra.mxu0 %v2734
      %v2849 = vpop.f32.mrf.mxu0
      %v2850 = vadd.f32 0.0, %v2849
      %2851 = vmatmul.f32.gmra.mxu0 %v2737
      %v2852 = vpop.f32.mrf.mxu0
      %v2853 = vadd.f32 0.0, %v2852
      %2854 = vmatmul.f32.gmra.mxu0 %v2740
      %v2855 = vpop.f32.mrf.mxu0
      %v2856 = vadd.f32 0.0, %v2855
      %2857 = vmatmul.f32.gmra.mxu0 %v2743
      %v2858 = vpop.f32.mrf.mxu0
      %v2859 = vadd.f32 0.0, %v2858
      %2860 = vmatmul.f32.gmra.mxu0 %v2746
      %v2861 = vpop.f32.mrf.mxu0
      %v2862 = vadd.f32 0.0, %v2861
      %2863 = vmatmul.f32.gmra.mxu0 %v2749
      %v2864 = vpop.f32.mrf.mxu0
      %v2865 = vadd.f32 0.0, %v2864
      %2866 = vmatmul.f32.gmra.mxu0 %v2752
      %v2867 = vpop.f32.mrf.mxu0
      %v2868 = vadd.f32 0.0, %v2867
      %2869 = vmatmul.f32.gmra.mxu0 %v2755
      %v2870 = vpop.f32.mrf.mxu0
      %v2871 = vadd.f32 0.0, %v2870
      %2872 = vmatmul.f32.gmra.mxu0 %v2758
      %v2873 = vpop.f32.mrf.mxu0
      %v2874 = vadd.f32 0.0, %v2873
      %2875 = vmatmul.f32.gmra.mxu0 %v2761
      %v2876 = vpop.f32.mrf.mxu0
      %v2877 = vadd.f32 0.0, %v2876
      %2878 = vmatmul.f32.gmra.mxu0 %v2764
      %v2879 = vpop.f32.mrf.mxu0
      %v2880 = vadd.f32 0.0, %v2879
      %2881 = vmatmul.f32.gmra.mxu0 %v2767
      %v2882 = vpop.f32.mrf.mxu0
      %v2883 = vadd.f32 0.0, %v2882
      %2884 = vmatmul.f32.gmra.mxu0 %v2770
      %v2885 = vpop.f32.mrf.mxu0
      %v2886 = vadd.f32 0.0, %v2885
      %2887 = vmatmul.f32.gmra.mxu0 %v2773
      %v2888 = vpop.f32.mrf.mxu0
      %v2889 = vadd.f32 0.0, %v2888
      %2890 = vmatmul.f32.gmra.mxu0 %v2776
      %v2891 = vpop.f32.mrf.mxu0
      %v2892 = vadd.f32 0.0, %v2891
      %2893 = vmatmul.f32.gmra.mxu0 %v2779
      %v2894 = vpop.f32.mrf.mxu0
      %v2895 = vadd.f32 0.0, %v2894
      %2896 = vmatmul.f32.gmra.mxu0 %v2782
      %v2897 = vpop.f32.mrf.mxu0
      %v2898 = vadd.f32 0.0, %v2897
      %2899 = vmatmul.f32.gmra.mxu0 %v2785
      %v2900 = vpop.f32.mrf.mxu0
      %v2901 = vadd.f32 0.0, %v2900
      %2902 = vmatmul.f32.gmra.mxu0 %v2788
      %v2903 = vpop.f32.mrf.mxu0
      %v2904 = vadd.f32 0.0, %v2903
      %2905 = vmatmul.f32.gmra.mxu0 %v2791
      %v2906 = vpop.f32.mrf.mxu0
      %v2907 = vadd.f32 0.0, %v2906
      %2908 = vmatmul.f32.gmra.mxu0 %v2794
      %v2909 = vpop.f32.mrf.mxu0
      %v2910 = vadd.f32 0.0, %v2909
      %2911 = vmatmul.f32.gmra.mxu0 %v2797
      %v2912 = vpop.f32.mrf.mxu0
      %v2913 = vadd.f32 0.0, %v2912
      %2914 = vmatmul.f32.gmra.mxu0 %v2800
      %v2915 = vpop.f32.mrf.mxu0
      %v2916 = vadd.f32 0.0, %v2915
      %2917 = vmatmul.f32.gmra.mxu0 %v2803
      %v2918 = vpop.f32.mrf.mxu0
      %v2919 = vadd.f32 0.0, %v2918
      %2920 = vmatmul.f32.gmra.mxu0 %v2806
      %v2921 = vpop.f32.mrf.mxu0
      %v2922 = vadd.f32 0.0, %v2921
      %2923 = vmatmul.f32.gmra.mxu0 %v2809
      %v2924 = vpop.f32.mrf.mxu0
      %v2925 = vadd.f32 0.0, %v2924
      %2926 = vmatmul.f32.gmra.mxu0 %v2812
      %v2927 = vpop.f32.mrf.mxu0
      %v2928 = vadd.f32 0.0, %v2927
      %2929 = vmatmul.f32.gmra.mxu0 %v2815
      %v2930 = vpop.f32.mrf.mxu0
      %v2931 = vadd.f32 0.0, %v2930
      %2932 = vmatmul.f32.gmra.mxu0 %v2818
      %v2933 = vpop.f32.mrf.mxu0
      %v2934 = vadd.f32 0.0, %v2933
      %2935 = vmatmul.f32.gmra.mxu0 %v2821
      %v2936 = vpop.f32.mrf.mxu0
      %v2937 = vadd.f32 0.0, %v2936
      %2938 = vmatmul.f32.gmra.mxu0 %v2824
      %v2939 = vpop.f32.mrf.mxu0
      %v2940 = vadd.f32 0.0, %v2939
      %2941 = vmatmul.f32.gmra.mxu0 %v2827
      %v2942 = vpop.f32.mrf.mxu0
      %v2943 = vadd.f32 0.0, %v2942
      %2944 = vdwg.mxu0
      %v2945 = vld [vmem:[#allocation3] sm:$0xff]
      %v2946 = vld [vmem:[#allocation3 + $0x8] sm:$0xff]
      %v2947 = vld [vmem:[#allocation3 + $0x10] sm:$0xff]
      %v2948 = vld [vmem:[#allocation3 + $0x18] sm:$0xff]
      %v2949 = vld [vmem:[#allocation3 + $0x20] sm:$0xff]
      %v2950 = vld [vmem:[#allocation3 + $0x28] sm:$0xff]
      %v2951 = vld [vmem:[#allocation3 + $0x30] sm:$0xff]
      %v2952 = vld [vmem:[#allocation3 + $0x38] sm:$0xff]
      %v2953 = vld [vmem:[#allocation3 + $0x40] sm:$0xff]
      %v2954 = vld [vmem:[#allocation3 + $0x48] sm:$0xff]
      %v2955 = vld [vmem:[#allocation3 + $0x50] sm:$0xff]
      %v2956 = vld [vmem:[#allocation3 + $0x58] sm:$0xff]
      %v2957 = vld [vmem:[#allocation3 + $0x60] sm:$0xff]
      %v2958 = vld [vmem:[#allocation3 + $0x68] sm:$0xff]
      %v2959 = vld [vmem:[#allocation3 + $0x70] sm:$0xff]
      %v2960 = vld [vmem:[#allocation3 + $0x78] sm:$0xff]
      %v2961 = vld [vmem:[#allocation3 + $0x80] sm:$0xff]
      %v2962 = vld [vmem:[#allocation3 + $0x88] sm:$0xff]
      %v2963 = vld [vmem:[#allocation3 + $0x90] sm:$0xff]
      %v2964 = vld [vmem:[#allocation3 + $0x98] sm:$0xff]
      %v2965 = vld [vmem:[#allocation3 + $0xa0] sm:$0xff]
      %v2966 = vld [vmem:[#allocation3 + $0xa8] sm:$0xff]
      %v2967 = vld [vmem:[#allocation3 + $0xb0] sm:$0xff]
      %v2968 = vld [vmem:[#allocation3 + $0xb8] sm:$0xff]
      %v2969 = vld [vmem:[#allocation3 + $0xc0] sm:$0xff]
      %v2970 = vld [vmem:[#allocation3 + $0xc8] sm:$0xff]
      %v2971 = vld [vmem:[#allocation3 + $0xd0] sm:$0xff]
      %v2972 = vld [vmem:[#allocation3 + $0xd8] sm:$0xff]
      %v2973 = vld [vmem:[#allocation3 + $0xe0] sm:$0xff]
      %v2974 = vld [vmem:[#allocation3 + $0xe8] sm:$0xff]
      %v2975 = vld [vmem:[#allocation3 + $0xf0] sm:$0xff]
      %v2976 = vld [vmem:[#allocation3 + $0xf8] sm:$0xff]
      %v2977 = vadd.f32 %v2945, %v2850
      %v2978 = vadd.f32 %v2946, %v2853
      %v2979 = vadd.f32 %v2947, %v2856
      %v2980 = vadd.f32 %v2948, %v2859
      %v2981 = vadd.f32 %v2949, %v2862
      %v2982 = vadd.f32 %v2950, %v2865
      %v2983 = vadd.f32 %v2951, %v2868
      %v2984 = vadd.f32 %v2952, %v2871
      %v2985 = vadd.f32 %v2953, %v2874
      %v2986 = vadd.f32 %v2954, %v2877
      %v2987 = vadd.f32 %v2955, %v2880
      %v2988 = vadd.f32 %v2956, %v2883
      %v2989 = vadd.f32 %v2957, %v2886
      %v2990 = vadd.f32 %v2958, %v2889
      %v2991 = vadd.f32 %v2959, %v2892
      %v2992 = vadd.f32 %v2960, %v2895
      %v2993 = vadd.f32 %v2961, %v2898
      %v2994 = vadd.f32 %v2962, %v2901
      %v2995 = vadd.f32 %v2963, %v2904
      %v2996 = vadd.f32 %v2964, %v2907
      %v2997 = vadd.f32 %v2965, %v2910
      %v2998 = vadd.f32 %v2966, %v2913
      %v2999 = vadd.f32 %v2967, %v2916
      %v3000 = vadd.f32 %v2968, %v2919
      %v3001 = vadd.f32 %v2969, %v2922
      %v3002 = vadd.f32 %v2970, %v2925
      %v3003 = vadd.f32 %v2971, %v2928
      %v3004 = vadd.f32 %v2972, %v2931
      %v3005 = vadd.f32 %v2973, %v2934
      %v3006 = vadd.f32 %v2974, %v2937
      %v3007 = vadd.f32 %v2975, %v2940
      %v3008 = vadd.f32 %v2976, %v2943
      %3009 = vst.msk [vmem:[#allocation3] sm:$0xff] %vm257, %v2977
      %3010 = vst.msk [vmem:[#allocation3 + $0x8] sm:$0xff] %vm257, %v2978
      %3011 = vst.msk [vmem:[#allocation3 + $0x10] sm:$0xff] %vm257, %v2979
      %3012 = vst.msk [vmem:[#allocation3 + $0x18] sm:$0xff] %vm257, %v2980
      %3013 = vst.msk [vmem:[#allocation3 + $0x20] sm:$0xff] %vm257, %v2981
      %3014 = vst.msk [vmem:[#allocation3 + $0x28] sm:$0xff] %vm257, %v2982
      %3015 = vst.msk [vmem:[#allocation3 + $0x30] sm:$0xff] %vm257, %v2983
      %3016 = vst.msk [vmem:[#allocation3 + $0x38] sm:$0xff] %vm257, %v2984
      %3017 = vst.msk [vmem:[#allocation3 + $0x40] sm:$0xff] %vm257, %v2985
      %3018 = vst.msk [vmem:[#allocation3 + $0x48] sm:$0xff] %vm257, %v2986
      %3019 = vst.msk [vmem:[#allocation3 + $0x50] sm:$0xff] %vm257, %v2987
      %3020 = vst.msk [vmem:[#allocation3 + $0x58] sm:$0xff] %vm257, %v2988
      %3021 = vst.msk [vmem:[#allocation3 + $0x60] sm:$0xff] %vm257, %v2989
      %3022 = vst.msk [vmem:[#allocation3 + $0x68] sm:$0xff] %vm257, %v2990
      %3023 = vst.msk [vmem:[#allocation3 + $0x70] sm:$0xff] %vm257, %v2991
      %3024 = vst.msk [vmem:[#allocation3 + $0x78] sm:$0xff] %vm257, %v2992
      %3025 = vst.msk [vmem:[#allocation3 + $0x80] sm:$0xff] %vm257, %v2993
      %3026 = vst.msk [vmem:[#allocation3 + $0x88] sm:$0xff] %vm257, %v2994
      %3027 = vst.msk [vmem:[#allocation3 + $0x90] sm:$0xff] %vm257, %v2995
      %3028 = vst.msk [vmem:[#allocation3 + $0x98] sm:$0xff] %vm257, %v2996
      %3029 = vst.msk [vmem:[#allocation3 + $0xa0] sm:$0xff] %vm257, %v2997
      %3030 = vst.msk [vmem:[#allocation3 + $0xa8] sm:$0xff] %vm257, %v2998
      %3031 = vst.msk [vmem:[#allocation3 + $0xb0] sm:$0xff] %vm257, %v2999
      %3032 = vst.msk [vmem:[#allocation3 + $0xb8] sm:$0xff] %vm257, %v3000
      %3033 = vst.msk [vmem:[#allocation3 + $0xc0] sm:$0xff] %vm257, %v3001
      %3034 = vst.msk [vmem:[#allocation3 + $0xc8] sm:$0xff] %vm257, %v3002
      %3035 = vst.msk [vmem:[#allocation3 + $0xd0] sm:$0xff] %vm257, %v3003
      %3036 = vst.msk [vmem:[#allocation3 + $0xd8] sm:$0xff] %vm257, %v3004
      %3037 = vst.msk [vmem:[#allocation3 + $0xe0] sm:$0xff] %vm257, %v3005
      %3038 = vst.msk [vmem:[#allocation3 + $0xe8] sm:$0xff] %vm257, %v3006
      %3039 = vst.msk [vmem:[#allocation3 + $0xf0] sm:$0xff] %vm257, %v3007
      %3040 = vst.msk [vmem:[#allocation3 + $0xf8] sm:$0xff] %vm257, %v3008
      %v3041 = vld [vmem:[%s1310] sm:$0xff]
      %v3042 = vld [vmem:[%s1310 + $0x8] sm:$0xff]
      %v3043 = vld [vmem:[%s1310 + $0x10] sm:$0xff]
      %v3044 = vld [vmem:[%s1310 + $0x18] sm:$0xff]
      %v3045 = vld [vmem:[%s1310 + $0x20] sm:$0xff]
      %v3046 = vld [vmem:[%s1310 + $0x28] sm:$0xff]
      %v3047 = vld [vmem:[%s1310 + $0x30] sm:$0xff]
      %v3048 = vld [vmem:[%s1310 + $0x38] sm:$0xff]
      %v3049 = vld [vmem:[%s1310 + $0x40] sm:$0xff]
      %v3050 = vld [vmem:[%s1310 + $0x48] sm:$0xff]
      %v3051 = vld [vmem:[%s1310 + $0x50] sm:$0xff]
      %v3052 = vld [vmem:[%s1310 + $0x58] sm:$0xff]
      %v3053 = vld [vmem:[%s1310 + $0x60] sm:$0xff]
      %v3054 = vld [vmem:[%s1310 + $0x68] sm:$0xff]
      %v3055 = vld [vmem:[%s1310 + $0x70] sm:$0xff]
      %v3056 = vld [vmem:[%s1310 + $0x78] sm:$0xff]
      %v3057 = vld [vmem:[%s1310 + $0x80] sm:$0xff]
      %v3058 = vld [vmem:[%s1310 + $0x88] sm:$0xff]
      %v3059 = vld [vmem:[%s1310 + $0x90] sm:$0xff]
      %v3060 = vld [vmem:[%s1310 + $0x98] sm:$0xff]
      %v3061 = vld [vmem:[%s1310 + $0xa0] sm:$0xff]
      %v3062 = vld [vmem:[%s1310 + $0xa8] sm:$0xff]
      %v3063 = vld [vmem:[%s1310 + $0xb0] sm:$0xff]
      %v3064 = vld [vmem:[%s1310 + $0xb8] sm:$0xff]
      %v3065 = vld [vmem:[%s1310 + $0xc0] sm:$0xff]
      %v3066 = vld [vmem:[%s1310 + $0xc8] sm:$0xff]
      %v3067 = vld [vmem:[%s1310 + $0xd0] sm:$0xff]
      %v3068 = vld [vmem:[%s1310 + $0xd8] sm:$0xff]
      %v3069 = vld [vmem:[%s1310 + $0xe0] sm:$0xff]
      %v3070 = vld [vmem:[%s1310 + $0xe8] sm:$0xff]
      %v3071 = vld [vmem:[%s1310 + $0xf0] sm:$0xff]
      %v3072 = vld [vmem:[%s1310 + $0xf8] sm:$0xff]
      %3105 = vrot.lane.b32.xlu0 %v2850, 124
      %v3106 = vpop.permute.xlu0 %3105
      %3107 = vrot.lane.b32.xlu0 %v2853, 124
      %v3108 = vpop.permute.xlu0 %3107
      %3109 = vrot.lane.b32.xlu0 %v2856, 124
      %v3110 = vpop.permute.xlu0 %3109
      %3111 = vrot.lane.b32.xlu0 %v2859, 124
      %v3112 = vpop.permute.xlu0 %3111
      %3113 = vrot.lane.b32.xlu0 %v2862, 124
      %v3114 = vpop.permute.xlu0 %3113
      %3115 = vrot.lane.b32.xlu0 %v2865, 124
      %v3116 = vpop.permute.xlu0 %3115
      %3117 = vrot.lane.b32.xlu0 %v2868, 124
      %v3118 = vpop.permute.xlu0 %3117
      %3119 = vrot.lane.b32.xlu0 %v2871, 124
      %v3120 = vpop.permute.xlu0 %3119
      %3121 = vrot.lane.b32.xlu0 %v2874, 124
      %v3122 = vpop.permute.xlu0 %3121
      %3123 = vrot.lane.b32.xlu0 %v2877, 124
      %v3124 = vpop.permute.xlu0 %3123
      %3125 = vrot.lane.b32.xlu0 %v2880, 124
      %v3126 = vpop.permute.xlu0 %3125
      %3127 = vrot.lane.b32.xlu0 %v2883, 124
      %v3128 = vpop.permute.xlu0 %3127
      %3129 = vrot.lane.b32.xlu0 %v2886, 124
      %v3130 = vpop.permute.xlu0 %3129
      %3131 = vrot.lane.b32.xlu0 %v2889, 124
      %v3132 = vpop.permute.xlu0 %3131
      %3133 = vrot.lane.b32.xlu0 %v2892, 124
      %v3134 = vpop.permute.xlu0 %3133
      %3135 = vrot.lane.b32.xlu0 %v2895, 124
      %v3136 = vpop.permute.xlu0 %3135
      %3137 = vrot.lane.b32.xlu0 %v2898, 124
      %v3138 = vpop.permute.xlu0 %3137
      %3139 = vrot.lane.b32.xlu0 %v2901, 124
      %v3140 = vpop.permute.xlu0 %3139
      %3141 = vrot.lane.b32.xlu0 %v2904, 124
      %v3142 = vpop.permute.xlu0 %3141
      %3143 = vrot.lane.b32.xlu0 %v2907, 124
      %v3144 = vpop.permute.xlu0 %3143
      %3145 = vrot.lane.b32.xlu0 %v2910, 124
      %v3146 = vpop.permute.xlu0 %3145
      %3147 = vrot.lane.b32.xlu0 %v2913, 124
      %v3148 = vpop.permute.xlu0 %3147
      %3149 = vrot.lane.b32.xlu0 %v2916, 124
      %v3150 = vpop.permute.xlu0 %3149
      %3151 = vrot.lane.b32.xlu0 %v2919, 124
      %v3152 = vpop.permute.xlu0 %3151
      %3153 = vrot.lane.b32.xlu0 %v2922, 124
      %v3154 = vpop.permute.xlu0 %3153
      %3155 = vrot.lane.b32.xlu0 %v2925, 124
      %v3156 = vpop.permute.xlu0 %3155
      %3157 = vrot.lane.b32.xlu0 %v2928, 124
      %v3158 = vpop.permute.xlu0 %3157
      %3159 = vrot.lane.b32.xlu0 %v2931, 124
      %v3160 = vpop.permute.xlu0 %3159
      %3161 = vrot.lane.b32.xlu0 %v2934, 124
      %v3162 = vpop.permute.xlu0 %3161
      %3163 = vrot.lane.b32.xlu0 %v2937, 124
      %v3164 = vpop.permute.xlu0 %3163
      %3165 = vrot.lane.b32.xlu0 %v2940, 124
      %v3166 = vpop.permute.xlu0 %3165
      %3167 = vrot.lane.b32.xlu0 %v2943, 124
      %v3168 = vpop.permute.xlu0 %3167
      %v3201 = vadd.f32 %v3041, %v3106
      %v3202 = vadd.f32 %v3042, %v3108
      %v3203 = vadd.f32 %v3043, %v3110
      %v3204 = vadd.f32 %v3044, %v3112
      %v3205 = vadd.f32 %v3045, %v3114
      %v3206 = vadd.f32 %v3046, %v3116
      %v3207 = vadd.f32 %v3047, %v3118
      %v3208 = vadd.f32 %v3048, %v3120
      %v3209 = vadd.f32 %v3049, %v3122
      %v3210 = vadd.f32 %v3050, %v3124
      %v3211 = vadd.f32 %v3051, %v3126
      %v3212 = vadd.f32 %v3052, %v3128
      %v3213 = vadd.f32 %v3053, %v3130
      %v3214 = vadd.f32 %v3054, %v3132
      %v3215 = vadd.f32 %v3055, %v3134
      %v3216 = vadd.f32 %v3056, %v3136
      %v3217 = vadd.f32 %v3057, %v3138
      %v3218 = vadd.f32 %v3058, %v3140
      %v3219 = vadd.f32 %v3059, %v3142
      %v3220 = vadd.f32 %v3060, %v3144
      %v3221 = vadd.f32 %v3061, %v3146
      %v3222 = vadd.f32 %v3062, %v3148
      %v3223 = vadd.f32 %v3063, %v3150
      %v3224 = vadd.f32 %v3064, %v3152
      %v3225 = vadd.f32 %v3065, %v3154
      %v3226 = vadd.f32 %v3066, %v3156
      %v3227 = vadd.f32 %v3067, %v3158
      %v3228 = vadd.f32 %v3068, %v3160
      %v3229 = vadd.f32 %v3069, %v3162
      %v3230 = vadd.f32 %v3070, %v3164
      %v3231 = vadd.f32 %v3071, %v3166
      %v3232 = vadd.f32 %v3072, %v3168
      %3233 = vst.msk [vmem:[%s1310] sm:$0xff] %vm257, %v3201
      %3234 = vst.msk [vmem:[%s1310 + $0x8] sm:$0xff] %vm257, %v3202
      %3235 = vst.msk [vmem:[%s1310 + $0x10] sm:$0xff] %vm257, %v3203
      %3236 = vst.msk [vmem:[%s1310 + $0x18] sm:$0xff] %vm257, %v3204
      %3237 = vst.msk [vmem:[%s1310 + $0x20] sm:$0xff] %vm257, %v3205
      %3238 = vst.msk [vmem:[%s1310 + $0x28] sm:$0xff] %vm257, %v3206
      %3239 = vst.msk [vmem:[%s1310 + $0x30] sm:$0xff] %vm257, %v3207
      %3240 = vst.msk [vmem:[%s1310 + $0x38] sm:$0xff] %vm257, %v3208
      %3241 = vst.msk [vmem:[%s1310 + $0x40] sm:$0xff] %vm257, %v3209
      %3242 = vst.msk [vmem:[%s1310 + $0x48] sm:$0xff] %vm257, %v3210
      %3243 = vst.msk [vmem:[%s1310 + $0x50] sm:$0xff] %vm257, %v3211
      %3244 = vst.msk [vmem:[%s1310 + $0x58] sm:$0xff] %vm257, %v3212
      %3245 = vst.msk [vmem:[%s1310 + $0x60] sm:$0xff] %vm257, %v3213
      %3246 = vst.msk [vmem:[%s1310 + $0x68] sm:$0xff] %vm257, %v3214
      %3247 = vst.msk [vmem:[%s1310 + $0x70] sm:$0xff] %vm257, %v3215
      %3248 = vst.msk [vmem:[%s1310 + $0x78] sm:$0xff] %vm257, %v3216
      %3249 = vst.msk [vmem:[%s1310 + $0x80] sm:$0xff] %vm257, %v3217
      %3250 = vst.msk [vmem:[%s1310 + $0x88] sm:$0xff] %vm257, %v3218
      %3251 = vst.msk [vmem:[%s1310 + $0x90] sm:$0xff] %vm257, %v3219
      %3252 = vst.msk [vmem:[%s1310 + $0x98] sm:$0xff] %vm257, %v3220
      %3253 = vst.msk [vmem:[%s1310 + $0xa0] sm:$0xff] %vm257, %v3221
      %3254 = vst.msk [vmem:[%s1310 + $0xa8] sm:$0xff] %vm257, %v3222
      %3255 = vst.msk [vmem:[%s1310 + $0xb0] sm:$0xff] %vm257, %v3223
      %3256 = vst.msk [vmem:[%s1310 + $0xb8] sm:$0xff] %vm257, %v3224
      %3257 = vst.msk [vmem:[%s1310 + $0xc0] sm:$0xff] %vm257, %v3225
      %3258 = vst.msk [vmem:[%s1310 + $0xc8] sm:$0xff] %vm257, %v3226
      %3259 = vst.msk [vmem:[%s1310 + $0xd0] sm:$0xff] %vm257, %v3227
      %3260 = vst.msk [vmem:[%s1310 + $0xd8] sm:$0xff] %vm257, %v3228
      %3261 = vst.msk [vmem:[%s1310 + $0xe0] sm:$0xff] %vm257, %v3229
      %3262 = vst.msk [vmem:[%s1310 + $0xe8] sm:$0xff] %vm257, %v3230
      %3263 = vst.msk [vmem:[%s1310 + $0xf0] sm:$0xff] %vm257, %v3231
      %3264 = vst.msk [vmem:[%s1310 + $0xf8] sm:$0xff] %vm257, %v3232
      %v3265 = vld [vmem:[#allocation2 + $0x19] sm:$0xff]
      %v3266 = vld [vmem:[#allocation2 + $0x21] sm:$0xff]
      %v3267 = vld [vmem:[#allocation2 + $0x29] sm:$0xff]
      %v3268 = vld [vmem:[#allocation2 + $0x31] sm:$0xff]
      %v3269 = vld [vmem:[#allocation2 + $0x39] sm:$0xff]
      %v3270 = vld [vmem:[#allocation2 + $0x41] sm:$0xff]
      %v3271 = vld [vmem:[#allocation2 + $0x49] sm:$0xff]
      %v3272 = vld [vmem:[#allocation2 + $0x51] sm:$0xff]
      %v3273 = vld [vmem:[#allocation2 + $0x59] sm:$0xff]
      %v3274 = vld [vmem:[#allocation2 + $0x61] sm:$0xff]
      %v3275 = vld [vmem:[#allocation2 + $0x69] sm:$0xff]
      %v3276 = vld [vmem:[#allocation2 + $0x71] sm:$0xff]
      %v3277 = vld [vmem:[#allocation2 + $0x79] sm:$0xff]
      %v3278 = vld [vmem:[#allocation2 + $0x81] sm:$0xff]
      %v3279 = vld [vmem:[#allocation2 + $0x89] sm:$0xff]
      %v3280 = vld [vmem:[#allocation2 + $0x91] sm:$0xff]
      %v3281 = vld [vmem:[#allocation2 + $0x99] sm:$0xff]
      %v3282 = vld [vmem:[#allocation2 + $0xa1] sm:$0xff]
      %v3283 = vld [vmem:[#allocation2 + $0xa9] sm:$0xff]
      %v3284 = vld [vmem:[#allocation2 + $0xb1] sm:$0xff]
      %v3285 = vld [vmem:[#allocation2 + $0xb9] sm:$0xff]
      %v3286 = vld [vmem:[#allocation2 + $0xc1] sm:$0xff]
      %v3287 = vld [vmem:[#allocation2 + $0xc9] sm:$0xff]
      %v3288 = vld [vmem:[#allocation2 + $0xd1] sm:$0xff]
      %v3289 = vld [vmem:[#allocation2 + $0xd9] sm:$0xff]
      %v3290 = vld [vmem:[#allocation2 + $0xe1] sm:$0xff]
      %v3291 = vld [vmem:[#allocation2 + $0xe9] sm:$0xff]
      %v3292 = vld [vmem:[#allocation2 + $0xf1] sm:$0xff]
      %v3293 = vld [vmem:[#allocation2 + $0xf9] sm:$0xff]
      %v3294 = vld [vmem:[#allocation2 + $0x101] sm:$0xff]
      %v3295 = vld [vmem:[#allocation2 + $0x109] sm:$0xff]
      %v3296 = vld [vmem:[#allocation2 + $0x111] sm:$0xff]
      %v3297 = vsel %vm743, 1, 0
      %v3298 = vsel %vm744, 1, 0
      %v3299 = vsel %vm745, 1, 0
      %v3300 = vsel %vm746, 1, 0
      %v3301 = vsel %vm747, 1, 0
      %v3302 = vsel %vm748, 1, 0
      %v3303 = vsel %vm749, 1, 0
      %v3304 = vsel %vm750, 1, 0
      %v3305 = vsel %vm751, 1, 0
      %v3306 = vsel %vm752, 1, 0
      %v3307 = vsel %vm753, 1, 0
      %v3308 = vsel %vm754, 1, 0
      %v3309 = vsel %vm755, 1, 0
      %v3310 = vsel %vm756, 1, 0
      %v3311 = vsel %vm757, 1, 0
      %v3312 = vsel %vm758, 1, 0
      %v3313 = vsel %vm759, 1, 0
      %v3314 = vsel %vm760, 1, 0
      %v3315 = vsel %vm761, 1, 0
      %v3316 = vsel %vm762, 1, 0
      %v3317 = vsel %vm763, 1, 0
      %v3318 = vsel %vm764, 1, 0
      %v3319 = vsel %vm765, 1, 0
      %v3320 = vsel %vm766, 1, 0
      %v3321 = vsel %vm767, 1, 0
      %v3322 = vsel %vm768, 1, 0
      %v3323 = vsel %vm769, 1, 0
      %v3324 = vsel %vm770, 1, 0
      %v3325 = vsel %vm771, 1, 0
      %v3326 = vsel %vm772, 1, 0
      %v3327 = vsel %vm773, 1, 0
      %v3328 = vsel %vm774, 1, 0
      %vm3329 = vcmp.eq.s32.totalorder %v3297, 1
      %vm3330 = vcmp.eq.s32.totalorder %v3298, 1
      %vm3331 = vcmp.eq.s32.totalorder %v3299, 1
      %vm3332 = vcmp.eq.s32.totalorder %v3300, 1
      %vm3333 = vcmp.eq.s32.totalorder %v3301, 1
      %vm3334 = vcmp.eq.s32.totalorder %v3302, 1
      %vm3335 = vcmp.eq.s32.totalorder %v3303, 1
      %vm3336 = vcmp.eq.s32.totalorder %v3304, 1
      %vm3337 = vcmp.eq.s32.totalorder %v3305, 1
      %vm3338 = vcmp.eq.s32.totalorder %v3306, 1
      %vm3339 = vcmp.eq.s32.totalorder %v3307, 1
      %vm3340 = vcmp.eq.s32.totalorder %v3308, 1
      %vm3341 = vcmp.eq.s32.totalorder %v3309, 1
      %vm3342 = vcmp.eq.s32.totalorder %v3310, 1
      %vm3343 = vcmp.eq.s32.totalorder %v3311, 1
      %vm3344 = vcmp.eq.s32.totalorder %v3312, 1
      %vm3345 = vcmp.eq.s32.totalorder %v3313, 1
      %vm3346 = vcmp.eq.s32.totalorder %v3314, 1
      %vm3347 = vcmp.eq.s32.totalorder %v3315, 1
      %vm3348 = vcmp.eq.s32.totalorder %v3316, 1
      %vm3349 = vcmp.eq.s32.totalorder %v3317, 1
      %vm3350 = vcmp.eq.s32.totalorder %v3318, 1
      %vm3351 = vcmp.eq.s32.totalorder %v3319, 1
      %vm3352 = vcmp.eq.s32.totalorder %v3320, 1
      %vm3353 = vcmp.eq.s32.totalorder %v3321, 1
      %vm3354 = vcmp.eq.s32.totalorder %v3322, 1
      %vm3355 = vcmp.eq.s32.totalorder %v3323, 1
      %vm3356 = vcmp.eq.s32.totalorder %v3324, 1
      %vm3357 = vcmp.eq.s32.totalorder %v3325, 1
      %vm3358 = vcmp.eq.s32.totalorder %v3326, 1
      %vm3359 = vcmp.eq.s32.totalorder %v3327, 1
      %vm3360 = vcmp.eq.s32.totalorder %v3328, 1
      %v3361 = vsel %vm3329, %v3265, 0.0
      %v3362 = vsel %vm3330, %v3266, 0.0
      %v3363 = vsel %vm3331, %v3267, 0.0
      %v3364 = vsel %vm3332, %v3268, 0.0
      %v3365 = vsel %vm3333, %v3269, 0.0
      %v3366 = vsel %vm3334, %v3270, 0.0
      %v3367 = vsel %vm3335, %v3271, 0.0
      %v3368 = vsel %vm3336, %v3272, 0.0
      %v3369 = vsel %vm3337, %v3273, 0.0
      %v3370 = vsel %vm3338, %v3274, 0.0
      %v3371 = vsel %vm3339, %v3275, 0.0
      %v3372 = vsel %vm3340, %v3276, 0.0
      %v3373 = vsel %vm3341, %v3277, 0.0
      %v3374 = vsel %vm3342, %v3278, 0.0
      %v3375 = vsel %vm3343, %v3279, 0.0
      %v3376 = vsel %vm3344, %v3280, 0.0
      %v3377 = vsel %vm3345, %v3281, 0.0
      %v3378 = vsel %vm3346, %v3282, 0.0
      %v3379 = vsel %vm3347, %v3283, 0.0
      %v3380 = vsel %vm3348, %v3284, 0.0
      %v3381 = vsel %vm3349, %v3285, 0.0
      %v3382 = vsel %vm3350, %v3286, 0.0
      %v3383 = vsel %vm3351, %v3287, 0.0
      %v3384 = vsel %vm3352, %v3288, 0.0
      %v3385 = vsel %vm3353, %v3289, 0.0
      %v3386 = vsel %vm3354, %v3290, 0.0
      %v3387 = vsel %vm3355, %v3291, 0.0
      %v3388 = vsel %vm3356, %v3292, 0.0
      %v3389 = vsel %vm3357, %v3293, 0.0
      %v3390 = vsel %vm3358, %v3294, 0.0
      %v3391 = vsel %vm3359, %v3295, 0.0
      %v3392 = vsel %vm3360, %v3296, 0.0
      %s3393 = scalar_lea.vmem %s2, 12
      %v3394 = vld [vmem:[%s3393] sm:$0xf]
      %v3396 = vsel %vm257, %v3361, 0
      %v3399 = vsel %vm257, %v3362, 0
      %v3402 = vsel %vm257, %v3363, 0
      %v3405 = vsel %vm257, %v3364, 0
      %v3408 = vsel %vm257, %v3365, 0
      %v3411 = vsel %vm257, %v3366, 0
      %v3414 = vsel %vm257, %v3367, 0
      %v3417 = vsel %vm257, %v3368, 0
      %v3420 = vsel %vm257, %v3369, 0
      %v3423 = vsel %vm257, %v3370, 0
      %v3426 = vsel %vm257, %v3371, 0
      %v3429 = vsel %vm257, %v3372, 0
      %v3432 = vsel %vm257, %v3373, 0
      %v3435 = vsel %vm257, %v3374, 0
      %v3438 = vsel %vm257, %v3375, 0
      %v3441 = vsel %vm257, %v3376, 0
      %v3444 = vsel %vm257, %v3377, 0
      %v3447 = vsel %vm257, %v3378, 0
      %v3450 = vsel %vm257, %v3379, 0
      %v3453 = vsel %vm257, %v3380, 0
      %v3456 = vsel %vm257, %v3381, 0
      %v3459 = vsel %vm257, %v3382, 0
      %v3462 = vsel %vm257, %v3383, 0
      %v3465 = vsel %vm257, %v3384, 0
      %v3468 = vsel %vm257, %v3385, 0
      %v3471 = vsel %vm257, %v3386, 0
      %v3474 = vsel %vm257, %v3387, 0
      %v3477 = vsel %vm257, %v3388, 0
      %v3480 = vsel %vm257, %v3389, 0
      %v3483 = vsel %vm257, %v3390, 0
      %v3486 = vsel %vm257, %v3391, 0
      %v3489 = vsel %vm257, %v3392, 0
      %v3492 = vsel %vm904, %v3394, 0
      %3494 = vmatpush.msra.mxu0 0.0
      %3495 = vmatpush.msra.mxu0 0.0
      %3496 = vmatpush.msra.mxu0 0.0
      %3497 = vmatpush.msra.mxu0 0.0
      %3498 = vmatpush.msra.mxu0 0.0
      %3499 = vmatpush.msra.mxu0 0.0
      %3500 = vmatpush.msra.mxu0 0.0
      %3501 = vmatpush.msra.mxu0 0.0
      %3502 = vmatpush.msra.mxu0 0.0
      %3503 = vmatpush.msra.mxu0 0.0
      %3504 = vmatpush.msra.mxu0 0.0
      %3505 = vmatpush.msra.mxu0 0.0
      %3506 = vmatpush.msra.mxu0 0.0
      %3507 = vmatpush.msra.mxu0 0.0
      %3508 = vmatpush.msra.mxu0 0.0
      %3509 = vmatpush.msra.mxu0 %v3492
      %3510 = vmatmul.f32.gmra.mxu0 %v3396
      %v3511 = vpop.f32.mrf.mxu0
      %v3512 = vadd.f32 0.0, %v3511
      %3513 = vmatmul.f32.gmra.mxu0 %v3399
      %v3514 = vpop.f32.mrf.mxu0
      %v3515 = vadd.f32 0.0, %v3514
      %3516 = vmatmul.f32.gmra.mxu0 %v3402
      %v3517 = vpop.f32.mrf.mxu0
      %v3518 = vadd.f32 0.0, %v3517
      %3519 = vmatmul.f32.gmra.mxu0 %v3405
      %v3520 = vpop.f32.mrf.mxu0
      %v3521 = vadd.f32 0.0, %v3520
      %3522 = vmatmul.f32.gmra.mxu0 %v3408
      %v3523 = vpop.f32.mrf.mxu0
      %v3524 = vadd.f32 0.0, %v3523
      %3525 = vmatmul.f32.gmra.mxu0 %v3411
      %v3526 = vpop.f32.mrf.mxu0
      %v3527 = vadd.f32 0.0, %v3526
      %3528 = vmatmul.f32.gmra.mxu0 %v3414
      %v3529 = vpop.f32.mrf.mxu0
      %v3530 = vadd.f32 0.0, %v3529
      %3531 = vmatmul.f32.gmra.mxu0 %v3417
      %v3532 = vpop.f32.mrf.mxu0
      %v3533 = vadd.f32 0.0, %v3532
      %3534 = vmatmul.f32.gmra.mxu0 %v3420
      %v3535 = vpop.f32.mrf.mxu0
      %v3536 = vadd.f32 0.0, %v3535
      %3537 = vmatmul.f32.gmra.mxu0 %v3423
      %v3538 = vpop.f32.mrf.mxu0
      %v3539 = vadd.f32 0.0, %v3538
      %3540 = vmatmul.f32.gmra.mxu0 %v3426
      %v3541 = vpop.f32.mrf.mxu0
      %v3542 = vadd.f32 0.0, %v3541
      %3543 = vmatmul.f32.gmra.mxu0 %v3429
      %v3544 = vpop.f32.mrf.mxu0
      %v3545 = vadd.f32 0.0, %v3544
      %3546 = vmatmul.f32.gmra.mxu0 %v3432
      %v3547 = vpop.f32.mrf.mxu0
      %v3548 = vadd.f32 0.0, %v3547
      %3549 = vmatmul.f32.gmra.mxu0 %v3435
      %v3550 = vpop.f32.mrf.mxu0
      %v3551 = vadd.f32 0.0, %v3550
      %3552 = vmatmul.f32.gmra.mxu0 %v3438
      %v3553 = vpop.f32.mrf.mxu0
      %v3554 = vadd.f32 0.0, %v3553
      %3555 = vmatmul.f32.gmra.mxu0 %v3441
      %v3556 = vpop.f32.mrf.mxu0
      %v3557 = vadd.f32 0.0, %v3556
      %3558 = vmatmul.f32.gmra.mxu0 %v3444
      %v3559 = vpop.f32.mrf.mxu0
      %v3560 = vadd.f32 0.0, %v3559
      %3561 = vmatmul.f32.gmra.mxu0 %v3447
      %v3562 = vpop.f32.mrf.mxu0
      %v3563 = vadd.f32 0.0, %v3562
      %3564 = vmatmul.f32.gmra.mxu0 %v3450
      %v3565 = vpop.f32.mrf.mxu0
      %v3566 = vadd.f32 0.0, %v3565
      %3567 = vmatmul.f32.gmra.mxu0 %v3453
      %v3568 = vpop.f32.mrf.mxu0
      %v3569 = vadd.f32 0.0, %v3568
      %3570 = vmatmul.f32.gmra.mxu0 %v3456
      %v3571 = vpop.f32.mrf.mxu0
      %v3572 = vadd.f32 0.0, %v3571
      %3573 = vmatmul.f32.gmra.mxu0 %v3459
      %v3574 = vpop.f32.mrf.mxu0
      %v3575 = vadd.f32 0.0, %v3574
      %3576 = vmatmul.f32.gmra.mxu0 %v3462
      %v3577 = vpop.f32.mrf.mxu0
      %v3578 = vadd.f32 0.0, %v3577
      %3579 = vmatmul.f32.gmra.mxu0 %v3465
      %v3580 = vpop.f32.mrf.mxu0
      %v3581 = vadd.f32 0.0, %v3580
      %3582 = vmatmul.f32.gmra.mxu0 %v3468
      %v3583 = vpop.f32.mrf.mxu0
      %v3584 = vadd.f32 0.0, %v3583
      %3585 = vmatmul.f32.gmra.mxu0 %v3471
      %v3586 = vpop.f32.mrf.mxu0
      %v3587 = vadd.f32 0.0, %v3586
      %3588 = vmatmul.f32.gmra.mxu0 %v3474
      %v3589 = vpop.f32.mrf.mxu0
      %v3590 = vadd.f32 0.0, %v3589
      %3591 = vmatmul.f32.gmra.mxu0 %v3477
      %v3592 = vpop.f32.mrf.mxu0
      %v3593 = vadd.f32 0.0, %v3592
      %3594 = vmatmul.f32.gmra.mxu0 %v3480
      %v3595 = vpop.f32.mrf.mxu0
      %v3596 = vadd.f32 0.0, %v3595
      %3597 = vmatmul.f32.gmra.mxu0 %v3483
      %v3598 = vpop.f32.mrf.mxu0
      %v3599 = vadd.f32 0.0, %v3598
      %3600 = vmatmul.f32.gmra.mxu0 %v3486
      %v3601 = vpop.f32.mrf.mxu0
      %v3602 = vadd.f32 0.0, %v3601
      %3603 = vmatmul.f32.gmra.mxu0 %v3489
      %v3604 = vpop.f32.mrf.mxu0
      %v3605 = vadd.f32 0.0, %v3604
      %3606 = vdwg.mxu0
      %v3607 = vld [vmem:[%s1181] sm:$0xff]
      %v3608 = vld [vmem:[%s1181 + $0x8] sm:$0xff]
      %v3609 = vld [vmem:[%s1181 + $0x10] sm:$0xff]
      %v3610 = vld [vmem:[%s1181 + $0x18] sm:$0xff]
      %v3611 = vld [vmem:[%s1181 + $0x20] sm:$0xff]
      %v3612 = vld [vmem:[%s1181 + $0x28] sm:$0xff]
      %v3613 = vld [vmem:[%s1181 + $0x30] sm:$0xff]
      %v3614 = vld [vmem:[%s1181 + $0x38] sm:$0xff]
      %v3615 = vld [vmem:[%s1181 + $0x40] sm:$0xff]
      %v3616 = vld [vmem:[%s1181 + $0x48] sm:$0xff]
      %v3617 = vld [vmem:[%s1181 + $0x50] sm:$0xff]
      %v3618 = vld [vmem:[%s1181 + $0x58] sm:$0xff]
      %v3619 = vld [vmem:[%s1181 + $0x60] sm:$0xff]
      %v3620 = vld [vmem:[%s1181 + $0x68] sm:$0xff]
      %v3621 = vld [vmem:[%s1181 + $0x70] sm:$0xff]
      %v3622 = vld [vmem:[%s1181 + $0x78] sm:$0xff]
      %v3623 = vld [vmem:[%s1181 + $0x80] sm:$0xff]
      %v3624 = vld [vmem:[%s1181 + $0x88] sm:$0xff]
      %v3625 = vld [vmem:[%s1181 + $0x90] sm:$0xff]
      %v3626 = vld [vmem:[%s1181 + $0x98] sm:$0xff]
      %v3627 = vld [vmem:[%s1181 + $0xa0] sm:$0xff]
      %v3628 = vld [vmem:[%s1181 + $0xa8] sm:$0xff]
      %v3629 = vld [vmem:[%s1181 + $0xb0] sm:$0xff]
      %v3630 = vld [vmem:[%s1181 + $0xb8] sm:$0xff]
      %v3631 = vld [vmem:[%s1181 + $0xc0] sm:$0xff]
      %v3632 = vld [vmem:[%s1181 + $0xc8] sm:$0xff]
      %v3633 = vld [vmem:[%s1181 + $0xd0] sm:$0xff]
      %v3634 = vld [vmem:[%s1181 + $0xd8] sm:$0xff]
      %v3635 = vld [vmem:[%s1181 + $0xe0] sm:$0xff]
      %v3636 = vld [vmem:[%s1181 + $0xe8] sm:$0xff]
      %v3637 = vld [vmem:[%s1181 + $0xf0] sm:$0xff]
      %v3638 = vld [vmem:[%s1181 + $0xf8] sm:$0xff]
      %v3639 = vadd.f32 %v3607, %v3512
      %v3640 = vadd.f32 %v3608, %v3515
      %v3641 = vadd.f32 %v3609, %v3518
      %v3642 = vadd.f32 %v3610, %v3521
      %v3643 = vadd.f32 %v3611, %v3524
      %v3644 = vadd.f32 %v3612, %v3527
      %v3645 = vadd.f32 %v3613, %v3530
      %v3646 = vadd.f32 %v3614, %v3533
      %v3647 = vadd.f32 %v3615, %v3536
      %v3648 = vadd.f32 %v3616, %v3539
      %v3649 = vadd.f32 %v3617, %v3542
      %v3650 = vadd.f32 %v3618, %v3545
      %v3651 = vadd.f32 %v3619, %v3548
      %v3652 = vadd.f32 %v3620, %v3551
      %v3653 = vadd.f32 %v3621, %v3554
      %v3654 = vadd.f32 %v3622, %v3557
      %v3655 = vadd.f32 %v3623, %v3560
      %v3656 = vadd.f32 %v3624, %v3563
      %v3657 = vadd.f32 %v3625, %v3566
      %v3658 = vadd.f32 %v3626, %v3569
      %v3659 = vadd.f32 %v3627, %v3572
      %v3660 = vadd.f32 %v3628, %v3575
      %v3661 = vadd.f32 %v3629, %v3578
      %v3662 = vadd.f32 %v3630, %v3581
      %v3663 = vadd.f32 %v3631, %v3584
      %v3664 = vadd.f32 %v3632, %v3587
      %v3665 = vadd.f32 %v3633, %v3590
      %v3666 = vadd.f32 %v3634, %v3593
      %v3667 = vadd.f32 %v3635, %v3596
      %v3668 = vadd.f32 %v3636, %v3599
      %v3669 = vadd.f32 %v3637, %v3602
      %v3670 = vadd.f32 %v3638, %v3605
      %3671 = vst.msk [vmem:[%s1181] sm:$0xff] %vm257, %v3639
      %3672 = vst.msk [vmem:[%s1181 + $0x8] sm:$0xff] %vm257, %v3640
      %3673 = vst.msk [vmem:[%s1181 + $0x10] sm:$0xff] %vm257, %v3641
      %3674 = vst.msk [vmem:[%s1181 + $0x18] sm:$0xff] %vm257, %v3642
      %3675 = vst.msk [vmem:[%s1181 + $0x20] sm:$0xff] %vm257, %v3643
      %3676 = vst.msk [vmem:[%s1181 + $0x28] sm:$0xff] %vm257, %v3644
      %3677 = vst.msk [vmem:[%s1181 + $0x30] sm:$0xff] %vm257, %v3645
      %3678 = vst.msk [vmem:[%s1181 + $0x38] sm:$0xff] %vm257, %v3646
      %3679 = vst.msk [vmem:[%s1181 + $0x40] sm:$0xff] %vm257, %v3647
      %3680 = vst.msk [vmem:[%s1181 + $0x48] sm:$0xff] %vm257, %v3648
      %3681 = vst.msk [vmem:[%s1181 + $0x50] sm:$0xff] %vm257, %v3649
      %3682 = vst.msk [vmem:[%s1181 + $0x58] sm:$0xff] %vm257, %v3650
      %3683 = vst.msk [vmem:[%s1181 + $0x60] sm:$0xff] %vm257, %v3651
      %3684 = vst.msk [vmem:[%s1181 + $0x68] sm:$0xff] %vm257, %v3652
      %3685 = vst.msk [vmem:[%s1181 + $0x70] sm:$0xff] %vm257, %v3653
      %3686 = vst.msk [vmem:[%s1181 + $0x78] sm:$0xff] %vm257, %v3654
      %3687 = vst.msk [vmem:[%s1181 + $0x80] sm:$0xff] %vm257, %v3655
      %3688 = vst.msk [vmem:[%s1181 + $0x88] sm:$0xff] %vm257, %v3656
      %3689 = vst.msk [vmem:[%s1181 + $0x90] sm:$0xff] %vm257, %v3657
      %3690 = vst.msk [vmem:[%s1181 + $0x98] sm:$0xff] %vm257, %v3658
      %3691 = vst.msk [vmem:[%s1181 + $0xa0] sm:$0xff] %vm257, %v3659
      %3692 = vst.msk [vmem:[%s1181 + $0xa8] sm:$0xff] %vm257, %v3660
      %3693 = vst.msk [vmem:[%s1181 + $0xb0] sm:$0xff] %vm257, %v3661
      %3694 = vst.msk [vmem:[%s1181 + $0xb8] sm:$0xff] %vm257, %v3662
      %3695 = vst.msk [vmem:[%s1181 + $0xc0] sm:$0xff] %vm257, %v3663
      %3696 = vst.msk [vmem:[%s1181 + $0xc8] sm:$0xff] %vm257, %v3664
      %3697 = vst.msk [vmem:[%s1181 + $0xd0] sm:$0xff] %vm257, %v3665
      %3698 = vst.msk [vmem:[%s1181 + $0xd8] sm:$0xff] %vm257, %v3666
      %3699 = vst.msk [vmem:[%s1181 + $0xe0] sm:$0xff] %vm257, %v3667
      %3700 = vst.msk [vmem:[%s1181 + $0xe8] sm:$0xff] %vm257, %v3668
      %3701 = vst.msk [vmem:[%s1181 + $0xf0] sm:$0xff] %vm257, %v3669
      %3702 = vst.msk [vmem:[%s1181 + $0xf8] sm:$0xff] %vm257, %v3670
      %v3703 = vld [vmem:[%s1439] sm:$0xff]
      %v3704 = vld [vmem:[%s1439 + $0x8] sm:$0xff]
      %v3705 = vld [vmem:[%s1439 + $0x10] sm:$0xff]
      %v3706 = vld [vmem:[%s1439 + $0x18] sm:$0xff]
      %v3707 = vld [vmem:[%s1439 + $0x20] sm:$0xff]
      %v3708 = vld [vmem:[%s1439 + $0x28] sm:$0xff]
      %v3709 = vld [vmem:[%s1439 + $0x30] sm:$0xff]
      %v3710 = vld [vmem:[%s1439 + $0x38] sm:$0xff]
      %v3711 = vld [vmem:[%s1439 + $0x40] sm:$0xff]
      %v3712 = vld [vmem:[%s1439 + $0x48] sm:$0xff]
      %v3713 = vld [vmem:[%s1439 + $0x50] sm:$0xff]
      %v3714 = vld [vmem:[%s1439 + $0x58] sm:$0xff]
      %v3715 = vld [vmem:[%s1439 + $0x60] sm:$0xff]
      %v3716 = vld [vmem:[%s1439 + $0x68] sm:$0xff]
      %v3717 = vld [vmem:[%s1439 + $0x70] sm:$0xff]
      %v3718 = vld [vmem:[%s1439 + $0x78] sm:$0xff]
      %v3719 = vld [vmem:[%s1439 + $0x80] sm:$0xff]
      %v3720 = vld [vmem:[%s1439 + $0x88] sm:$0xff]
      %v3721 = vld [vmem:[%s1439 + $0x90] sm:$0xff]
      %v3722 = vld [vmem:[%s1439 + $0x98] sm:$0xff]
      %v3723 = vld [vmem:[%s1439 + $0xa0] sm:$0xff]
      %v3724 = vld [vmem:[%s1439 + $0xa8] sm:$0xff]
      %v3725 = vld [vmem:[%s1439 + $0xb0] sm:$0xff]
      %v3726 = vld [vmem:[%s1439 + $0xb8] sm:$0xff]
      %v3727 = vld [vmem:[%s1439 + $0xc0] sm:$0xff]
      %v3728 = vld [vmem:[%s1439 + $0xc8] sm:$0xff]
      %v3729 = vld [vmem:[%s1439 + $0xd0] sm:$0xff]
      %v3730 = vld [vmem:[%s1439 + $0xd8] sm:$0xff]
      %v3731 = vld [vmem:[%s1439 + $0xe0] sm:$0xff]
      %v3732 = vld [vmem:[%s1439 + $0xe8] sm:$0xff]
      %v3733 = vld [vmem:[%s1439 + $0xf0] sm:$0xff]
      %v3734 = vld [vmem:[%s1439 + $0xf8] sm:$0xff]
      %3767 = vrot.lane.b32.xlu0 %v3512, 124
      %v3768 = vpop.permute.xlu0 %3767
      %3769 = vrot.lane.b32.xlu0 %v3515, 124
      %v3770 = vpop.permute.xlu0 %3769
      %3771 = vrot.lane.b32.xlu0 %v3518, 124
      %v3772 = vpop.permute.xlu0 %3771
      %3773 = vrot.lane.b32.xlu0 %v3521, 124
      %v3774 = vpop.permute.xlu0 %3773
      %3775 = vrot.lane.b32.xlu0 %v3524, 124
      %v3776 = vpop.permute.xlu0 %3775
      %3777 = vrot.lane.b32.xlu0 %v3527, 124
      %v3778 = vpop.permute.xlu0 %3777
      %3779 = vrot.lane.b32.xlu0 %v3530, 124
      %v3780 = vpop.permute.xlu0 %3779
      %3781 = vrot.lane.b32.xlu0 %v3533, 124
      %v3782 = vpop.permute.xlu0 %3781
      %3783 = vrot.lane.b32.xlu0 %v3536, 124
      %v3784 = vpop.permute.xlu0 %3783
      %3785 = vrot.lane.b32.xlu0 %v3539, 124
      %v3786 = vpop.permute.xlu0 %3785
      %3787 = vrot.lane.b32.xlu0 %v3542, 124
      %v3788 = vpop.permute.xlu0 %3787
      %3789 = vrot.lane.b32.xlu0 %v3545, 124
      %v3790 = vpop.permute.xlu0 %3789
      %3791 = vrot.lane.b32.xlu0 %v3548, 124
      %v3792 = vpop.permute.xlu0 %3791
      %3793 = vrot.lane.b32.xlu0 %v3551, 124
      %v3794 = vpop.permute.xlu0 %3793
      %3795 = vrot.lane.b32.xlu0 %v3554, 124
      %v3796 = vpop.permute.xlu0 %3795
      %3797 = vrot.lane.b32.xlu0 %v3557, 124
      %v3798 = vpop.permute.xlu0 %3797
      %3799 = vrot.lane.b32.xlu0 %v3560, 124
      %v3800 = vpop.permute.xlu0 %3799
      %3801 = vrot.lane.b32.xlu0 %v3563, 124
      %v3802 = vpop.permute.xlu0 %3801
      %3803 = vrot.lane.b32.xlu0 %v3566, 124
      %v3804 = vpop.permute.xlu0 %3803
      %3805 = vrot.lane.b32.xlu0 %v3569, 124
      %v3806 = vpop.permute.xlu0 %3805
      %3807 = vrot.lane.b32.xlu0 %v3572, 124
      %v3808 = vpop.permute.xlu0 %3807
      %3809 = vrot.lane.b32.xlu0 %v3575, 124
      %v3810 = vpop.permute.xlu0 %3809
      %3811 = vrot.lane.b32.xlu0 %v3578, 124
      %v3812 = vpop.permute.xlu0 %3811
      %3813 = vrot.lane.b32.xlu0 %v3581, 124
      %v3814 = vpop.permute.xlu0 %3813
      %3815 = vrot.lane.b32.xlu0 %v3584, 124
      %v3816 = vpop.permute.xlu0 %3815
      %3817 = vrot.lane.b32.xlu0 %v3587, 124
      %v3818 = vpop.permute.xlu0 %3817
      %3819 = vrot.lane.b32.xlu0 %v3590, 124
      %v3820 = vpop.permute.xlu0 %3819
      %3821 = vrot.lane.b32.xlu0 %v3593, 124
      %v3822 = vpop.permute.xlu0 %3821
      %3823 = vrot.lane.b32.xlu0 %v3596, 124
      %v3824 = vpop.permute.xlu0 %3823
      %3825 = vrot.lane.b32.xlu0 %v3599, 124
      %v3826 = vpop.permute.xlu0 %3825
      %3827 = vrot.lane.b32.xlu0 %v3602, 124
      %v3828 = vpop.permute.xlu0 %3827
      %3829 = vrot.lane.b32.xlu0 %v3605, 124
      %v3830 = vpop.permute.xlu0 %3829
      %v3863 = vadd.f32 %v3703, %v3768
      %v3864 = vadd.f32 %v3704, %v3770
      %v3865 = vadd.f32 %v3705, %v3772
      %v3866 = vadd.f32 %v3706, %v3774
      %v3867 = vadd.f32 %v3707, %v3776
      %v3868 = vadd.f32 %v3708, %v3778
      %v3869 = vadd.f32 %v3709, %v3780
      %v3870 = vadd.f32 %v3710, %v3782
      %v3871 = vadd.f32 %v3711, %v3784
      %v3872 = vadd.f32 %v3712, %v3786
      %v3873 = vadd.f32 %v3713, %v3788
      %v3874 = vadd.f32 %v3714, %v3790
      %v3875 = vadd.f32 %v3715, %v3792
      %v3876 = vadd.f32 %v3716, %v3794
      %v3877 = vadd.f32 %v3717, %v3796
      %v3878 = vadd.f32 %v3718, %v3798
      %v3879 = vadd.f32 %v3719, %v3800
      %v3880 = vadd.f32 %v3720, %v3802
      %v3881 = vadd.f32 %v3721, %v3804
      %v3882 = vadd.f32 %v3722, %v3806
      %v3883 = vadd.f32 %v3723, %v3808
      %v3884 = vadd.f32 %v3724, %v3810
      %v3885 = vadd.f32 %v3725, %v3812
      %v3886 = vadd.f32 %v3726, %v3814
      %v3887 = vadd.f32 %v3727, %v3816
      %v3888 = vadd.f32 %v3728, %v3818
      %v3889 = vadd.f32 %v3729, %v3820
      %v3890 = vadd.f32 %v3730, %v3822
      %v3891 = vadd.f32 %v3731, %v3824
      %v3892 = vadd.f32 %v3732, %v3826
      %v3893 = vadd.f32 %v3733, %v3828
      %v3894 = vadd.f32 %v3734, %v3830
      %3895 = vst.msk [vmem:[%s1439] sm:$0xff] %vm257, %v3863
      %3896 = vst.msk [vmem:[%s1439 + $0x8] sm:$0xff] %vm257, %v3864
      %3897 = vst.msk [vmem:[%s1439 + $0x10] sm:$0xff] %vm257, %v3865
      %3898 = vst.msk [vmem:[%s1439 + $0x18] sm:$0xff] %vm257, %v3866
      %3899 = vst.msk [vmem:[%s1439 + $0x20] sm:$0xff] %vm257, %v3867
      %3900 = vst.msk [vmem:[%s1439 + $0x28] sm:$0xff] %vm257, %v3868
      %3901 = vst.msk [vmem:[%s1439 + $0x30] sm:$0xff] %vm257, %v3869
      %3902 = vst.msk [vmem:[%s1439 + $0x38] sm:$0xff] %vm257, %v3870
      %3903 = vst.msk [vmem:[%s1439 + $0x40] sm:$0xff] %vm257, %v3871
      %3904 = vst.msk [vmem:[%s1439 + $0x48] sm:$0xff] %vm257, %v3872
      %3905 = vst.msk [vmem:[%s1439 + $0x50] sm:$0xff] %vm257, %v3873
      %3906 = vst.msk [vmem:[%s1439 + $0x58] sm:$0xff] %vm257, %v3874
      %3907 = vst.msk [vmem:[%s1439 + $0x60] sm:$0xff] %vm257, %v3875
      %3908 = vst.msk [vmem:[%s1439 + $0x68] sm:$0xff] %vm257, %v3876
      %3909 = vst.msk [vmem:[%s1439 + $0x70] sm:$0xff] %vm257, %v3877
      %3910 = vst.msk [vmem:[%s1439 + $0x78] sm:$0xff] %vm257, %v3878
      %3911 = vst.msk [vmem:[%s1439 + $0x80] sm:$0xff] %vm257, %v3879
      %3912 = vst.msk [vmem:[%s1439 + $0x88] sm:$0xff] %vm257, %v3880
      %3913 = vst.msk [vmem:[%s1439 + $0x90] sm:$0xff] %vm257, %v3881
      %3914 = vst.msk [vmem:[%s1439 + $0x98] sm:$0xff] %vm257, %v3882
      %3915 = vst.msk [vmem:[%s1439 + $0xa0] sm:$0xff] %vm257, %v3883
      %3916 = vst.msk [vmem:[%s1439 + $0xa8] sm:$0xff] %vm257, %v3884
      %3917 = vst.msk [vmem:[%s1439 + $0xb0] sm:$0xff] %vm257, %v3885
      %3918 = vst.msk [vmem:[%s1439 + $0xb8] sm:$0xff] %vm257, %v3886
      %3919 = vst.msk [vmem:[%s1439 + $0xc0] sm:$0xff] %vm257, %v3887
      %3920 = vst.msk [vmem:[%s1439 + $0xc8] sm:$0xff] %vm257, %v3888
      %3921 = vst.msk [vmem:[%s1439 + $0xd0] sm:$0xff] %vm257, %v3889
      %3922 = vst.msk [vmem:[%s1439 + $0xd8] sm:$0xff] %vm257, %v3890
      %3923 = vst.msk [vmem:[%s1439 + $0xe0] sm:$0xff] %vm257, %v3891
      %3924 = vst.msk [vmem:[%s1439 + $0xe8] sm:$0xff] %vm257, %v3892
      %3925 = vst.msk [vmem:[%s1439 + $0xf0] sm:$0xff] %vm257, %v3893
      %3926 = vst.msk [vmem:[%s1439 + $0xf8] sm:$0xff] %vm257, %v3894
      %v3927 = vld [vmem:[#allocation3] sm:$0xff]
      %v3928 = vld [vmem:[#allocation3 + $0x8] sm:$0xff]
      %v3929 = vld [vmem:[#allocation3 + $0x10] sm:$0xff]
      %v3930 = vld [vmem:[#allocation3 + $0x18] sm:$0xff]
      %v3931 = vld [vmem:[#allocation3 + $0x20] sm:$0xff]
      %v3932 = vld [vmem:[#allocation3 + $0x28] sm:$0xff]
      %v3933 = vld [vmem:[#allocation3 + $0x30] sm:$0xff]
      %v3934 = vld [vmem:[#allocation3 + $0x38] sm:$0xff]
      %v3935 = vld [vmem:[#allocation3 + $0x40] sm:$0xff]
      %v3936 = vld [vmem:[#allocation3 + $0x48] sm:$0xff]
      %v3937 = vld [vmem:[#allocation3 + $0x50] sm:$0xff]
      %v3938 = vld [vmem:[#allocation3 + $0x58] sm:$0xff]
      %v3939 = vld [vmem:[#allocation3 + $0x60] sm:$0xff]
      %v3940 = vld [vmem:[#allocation3 + $0x68] sm:$0xff]
      %v3941 = vld [vmem:[#allocation3 + $0x70] sm:$0xff]
      %v3942 = vld [vmem:[#allocation3 + $0x78] sm:$0xff]
      %v3943 = vld [vmem:[#allocation3 + $0x80] sm:$0xff]
      %v3944 = vld [vmem:[#allocation3 + $0x88] sm:$0xff]
      %v3945 = vld [vmem:[#allocation3 + $0x90] sm:$0xff]
      %v3946 = vld [vmem:[#allocation3 + $0x98] sm:$0xff]
      %v3947 = vld [vmem:[#allocation3 + $0xa0] sm:$0xff]
      %v3948 = vld [vmem:[#allocation3 + $0xa8] sm:$0xff]
      %v3949 = vld [vmem:[#allocation3 + $0xb0] sm:$0xff]
      %v3950 = vld [vmem:[#allocation3 + $0xb8] sm:$0xff]
      %v3951 = vld [vmem:[#allocation3 + $0xc0] sm:$0xff]
      %v3952 = vld [vmem:[#allocation3 + $0xc8] sm:$0xff]
      %v3953 = vld [vmem:[#allocation3 + $0xd0] sm:$0xff]
      %v3954 = vld [vmem:[#allocation3 + $0xd8] sm:$0xff]
      %v3955 = vld [vmem:[#allocation3 + $0xe0] sm:$0xff]
      %v3956 = vld [vmem:[#allocation3 + $0xe8] sm:$0xff]
      %v3957 = vld [vmem:[#allocation3 + $0xf0] sm:$0xff]
      %v3958 = vld [vmem:[#allocation3 + $0xf8] sm:$0xff]
      %v3959 = vld [vmem:[#allocation2 + $0x7] sm:$0xff]
      %v3960 = vld [vmem:[#allocation2 + $0xf] sm:$0xff]
      %v3961 = vld [vmem:[#allocation2 + $0x17] sm:$0xff]
      %v3962 = vld [vmem:[#allocation2 + $0x1f] sm:$0xff]
      %v3963 = vld [vmem:[#allocation2 + $0x27] sm:$0xff]
      %v3964 = vld [vmem:[#allocation2 + $0x2f] sm:$0xff]
      %v3965 = vld [vmem:[#allocation2 + $0x37] sm:$0xff]
      %v3966 = vld [vmem:[#allocation2 + $0x3f] sm:$0xff]
      %v3967 = vld [vmem:[#allocation2 + $0x47] sm:$0xff]
      %v3968 = vld [vmem:[#allocation2 + $0x4f] sm:$0xff]
      %v3969 = vld [vmem:[#allocation2 + $0x57] sm:$0xff]
      %v3970 = vld [vmem:[#allocation2 + $0x5f] sm:$0xff]
      %v3971 = vld [vmem:[#allocation2 + $0x67] sm:$0xff]
      %v3972 = vld [vmem:[#allocation2 + $0x6f] sm:$0xff]
      %v3973 = vld [vmem:[#allocation2 + $0x77] sm:$0xff]
      %v3974 = vld [vmem:[#allocation2 + $0x7f] sm:$0xff]
      %v3975 = vld [vmem:[#allocation2 + $0x87] sm:$0xff]
      %v3976 = vld [vmem:[#allocation2 + $0x8f] sm:$0xff]
      %v3977 = vld [vmem:[#allocation2 + $0x97] sm:$0xff]
      %v3978 = vld [vmem:[#allocation2 + $0x9f] sm:$0xff]
      %v3979 = vld [vmem:[#allocation2 + $0xa7] sm:$0xff]
      %v3980 = vld [vmem:[#allocation2 + $0xaf] sm:$0xff]
      %v3981 = vld [vmem:[#allocation2 + $0xb7] sm:$0xff]
      %v3982 = vld [vmem:[#allocation2 + $0xbf] sm:$0xff]
      %v3983 = vld [vmem:[#allocation2 + $0xc7] sm:$0xff]
      %v3984 = vld [vmem:[#allocation2 + $0xcf] sm:$0xff]
      %v3985 = vld [vmem:[#allocation2 + $0xd7] sm:$0xff]
      %v3986 = vld [vmem:[#allocation2 + $0xdf] sm:$0xff]
      %v3987 = vld [vmem:[#allocation2 + $0xe7] sm:$0xff]
      %v3988 = vld [vmem:[#allocation2 + $0xef] sm:$0xff]
      %v3989 = vld [vmem:[#allocation2 + $0xf7] sm:$0xff]
      %v3990 = vld [vmem:[#allocation2 + $0xff] sm:$0xff]
      %v3991 = vsel %vm2667, %v3959, 0.0
      %v3992 = vsel %vm2668, %v3960, 0.0
      %v3993 = vsel %vm2669, %v3961, 0.0
      %v3994 = vsel %vm2670, %v3962, 0.0
      %v3995 = vsel %vm2671, %v3963, 0.0
      %v3996 = vsel %vm2672, %v3964, 0.0
      %v3997 = vsel %vm2673, %v3965, 0.0
      %v3998 = vsel %vm2674, %v3966, 0.0
      %v3999 = vsel %vm2675, %v3967, 0.0
      %v4000 = vsel %vm2676, %v3968, 0.0
      %v4001 = vsel %vm2677, %v3969, 0.0
      %v4002 = vsel %vm2678, %v3970, 0.0
      %v4003 = vsel %vm2679, %v3971, 0.0
      %v4004 = vsel %vm2680, %v3972, 0.0
      %v4005 = vsel %vm2681, %v3973, 0.0
      %v4006 = vsel %vm2682, %v3974, 0.0
      %v4007 = vsel %vm2683, %v3975, 0.0
      %v4008 = vsel %vm2684, %v3976, 0.0
      %v4009 = vsel %vm2685, %v3977, 0.0
      %v4010 = vsel %vm2686, %v3978, 0.0
      %v4011 = vsel %vm2687, %v3979, 0.0
      %v4012 = vsel %vm2688, %v3980, 0.0
      %v4013 = vsel %vm2689, %v3981, 0.0
      %v4014 = vsel %vm2690, %v3982, 0.0
      %v4015 = vsel %vm2691, %v3983, 0.0
      %v4016 = vsel %vm2692, %v3984, 0.0
      %v4017 = vsel %vm2693, %v3985, 0.0
      %v4018 = vsel %vm2694, %v3986, 0.0
      %v4019 = vsel %vm2695, %v3987, 0.0
      %v4020 = vsel %vm2696, %v3988, 0.0
      %v4021 = vsel %vm2697, %v3989, 0.0
      %v4022 = vsel %vm2698, %v3990, 0.0
      %v4023 = vld [vmem:[%s3] sm:$0xf]
      %v4025 = vsel %vm257, %v3991, 0
      %v4028 = vsel %vm257, %v3992, 0
      %v4031 = vsel %vm257, %v3993, 0
      %v4034 = vsel %vm257, %v3994, 0
      %v4037 = vsel %vm257, %v3995, 0
      %v4040 = vsel %vm257, %v3996, 0
      %v4043 = vsel %vm257, %v3997, 0
      %v4046 = vsel %vm257, %v3998, 0
      %v4049 = vsel %vm257, %v3999, 0
      %v4052 = vsel %vm257, %v4000, 0
      %v4055 = vsel %vm257, %v4001, 0
      %v4058 = vsel %vm257, %v4002, 0
      %v4061 = vsel %vm257, %v4003, 0
      %v4064 = vsel %vm257, %v4004, 0
      %v4067 = vsel %vm257, %v4005, 0
      %v4070 = vsel %vm257, %v4006, 0
      %v4073 = vsel %vm257, %v4007, 0
      %v4076 = vsel %vm257, %v4008, 0
      %v4079 = vsel %vm257, %v4009, 0
      %v4082 = vsel %vm257, %v4010, 0
      %v4085 = vsel %vm257, %v4011, 0
      %v4088 = vsel %vm257, %v4012, 0
      %v4091 = vsel %vm257, %v4013, 0
      %v4094 = vsel %vm257, %v4014, 0
      %v4097 = vsel %vm257, %v4015, 0
      %v4100 = vsel %vm257, %v4016, 0
      %v4103 = vsel %vm257, %v4017, 0
      %v4106 = vsel %vm257, %v4018, 0
      %v4109 = vsel %vm257, %v4019, 0
      %v4112 = vsel %vm257, %v4020, 0
      %v4115 = vsel %vm257, %v4021, 0
      %v4118 = vsel %vm257, %v4022, 0
      %v4121 = vsel %vm904, %v4023, 0
      %4123 = vmatpush.msra.mxu0 0.0
      %4124 = vmatpush.msra.mxu0 0.0
      %4125 = vmatpush.msra.mxu0 0.0
      %4126 = vmatpush.msra.mxu0 0.0
      %4127 = vmatpush.msra.mxu0 0.0
      %4128 = vmatpush.msra.mxu0 0.0
      %4129 = vmatpush.msra.mxu0 0.0
      %4130 = vmatpush.msra.mxu0 0.0
      %4131 = vmatpush.msra.mxu0 0.0
      %4132 = vmatpush.msra.mxu0 0.0
      %4133 = vmatpush.msra.mxu0 0.0
      %4134 = vmatpush.msra.mxu0 0.0
      %4135 = vmatpush.msra.mxu0 0.0
      %4136 = vmatpush.msra.mxu0 0.0
      %4137 = vmatpush.msra.mxu0 0.0
      %4138 = vmatpush.msra.mxu0 %v4121
      %4139 = vmatmul.f32.gmra.mxu0 %v4025
      %v4140 = vpop.f32.mrf.mxu0
      %v4141 = vadd.f32 0.0, %v4140
      %4142 = vmatmul.f32.gmra.mxu0 %v4028
      %v4143 = vpop.f32.mrf.mxu0
      %v4144 = vadd.f32 0.0, %v4143
      %4145 = vmatmul.f32.gmra.mxu0 %v4031
      %v4146 = vpop.f32.mrf.mxu0
      %v4147 = vadd.f32 0.0, %v4146
      %4148 = vmatmul.f32.gmra.mxu0 %v4034
      %v4149 = vpop.f32.mrf.mxu0
      %v4150 = vadd.f32 0.0, %v4149
      %4151 = vmatmul.f32.gmra.mxu0 %v4037
      %v4152 = vpop.f32.mrf.mxu0
      %v4153 = vadd.f32 0.0, %v4152
      %4154 = vmatmul.f32.gmra.mxu0 %v4040
      %v4155 = vpop.f32.mrf.mxu0
      %v4156 = vadd.f32 0.0, %v4155
      %4157 = vmatmul.f32.gmra.mxu0 %v4043
      %v4158 = vpop.f32.mrf.mxu0
      %v4159 = vadd.f32 0.0, %v4158
      %4160 = vmatmul.f32.gmra.mxu0 %v4046
      %v4161 = vpop.f32.mrf.mxu0
      %v4162 = vadd.f32 0.0, %v4161
      %4163 = vmatmul.f32.gmra.mxu0 %v4049
      %v4164 = vpop.f32.mrf.mxu0
      %v4165 = vadd.f32 0.0, %v4164
      %4166 = vmatmul.f32.gmra.mxu0 %v4052
      %v4167 = vpop.f32.mrf.mxu0
      %v4168 = vadd.f32 0.0, %v4167
      %4169 = vmatmul.f32.gmra.mxu0 %v4055
      %v4170 = vpop.f32.mrf.mxu0
      %v4171 = vadd.f32 0.0, %v4170
      %4172 = vmatmul.f32.gmra.mxu0 %v4058
      %v4173 = vpop.f32.mrf.mxu0
      %v4174 = vadd.f32 0.0, %v4173
      %4175 = vmatmul.f32.gmra.mxu0 %v4061
      %v4176 = vpop.f32.mrf.mxu0
      %v4177 = vadd.f32 0.0, %v4176
      %4178 = vmatmul.f32.gmra.mxu0 %v4064
      %v4179 = vpop.f32.mrf.mxu0
      %v4180 = vadd.f32 0.0, %v4179
      %4181 = vmatmul.f32.gmra.mxu0 %v4067
      %v4182 = vpop.f32.mrf.mxu0
      %v4183 = vadd.f32 0.0, %v4182
      %4184 = vmatmul.f32.gmra.mxu0 %v4070
      %v4185 = vpop.f32.mrf.mxu0
      %v4186 = vadd.f32 0.0, %v4185
      %4187 = vmatmul.f32.gmra.mxu0 %v4073
      %v4188 = vpop.f32.mrf.mxu0
      %v4189 = vadd.f32 0.0, %v4188
      %4190 = vmatmul.f32.gmra.mxu0 %v4076
      %v4191 = vpop.f32.mrf.mxu0
      %v4192 = vadd.f32 0.0, %v4191
      %4193 = vmatmul.f32.gmra.mxu0 %v4079
      %v4194 = vpop.f32.mrf.mxu0
      %v4195 = vadd.f32 0.0, %v4194
      %4196 = vmatmul.f32.gmra.mxu0 %v4082
      %v4197 = vpop.f32.mrf.mxu0
      %v4198 = vadd.f32 0.0, %v4197
      %4199 = vmatmul.f32.gmra.mxu0 %v4085
      %v4200 = vpop.f32.mrf.mxu0
      %v4201 = vadd.f32 0.0, %v4200
      %4202 = vmatmul.f32.gmra.mxu0 %v4088
      %v4203 = vpop.f32.mrf.mxu0
      %v4204 = vadd.f32 0.0, %v4203
      %4205 = vmatmul.f32.gmra.mxu0 %v4091
      %v4206 = vpop.f32.mrf.mxu0
      %v4207 = vadd.f32 0.0, %v4206
      %4208 = vmatmul.f32.gmra.mxu0 %v4094
      %v4209 = vpop.f32.mrf.mxu0
      %v4210 = vadd.f32 0.0, %v4209
      %4211 = vmatmul.f32.gmra.mxu0 %v4097
      %v4212 = vpop.f32.mrf.mxu0
      %v4213 = vadd.f32 0.0, %v4212
      %4214 = vmatmul.f32.gmra.mxu0 %v4100
      %v4215 = vpop.f32.mrf.mxu0
      %v4216 = vadd.f32 0.0, %v4215
      %4217 = vmatmul.f32.gmra.mxu0 %v4103
      %v4218 = vpop.f32.mrf.mxu0
      %v4219 = vadd.f32 0.0, %v4218
      %4220 = vmatmul.f32.gmra.mxu0 %v4106
      %v4221 = vpop.f32.mrf.mxu0
      %v4222 = vadd.f32 0.0, %v4221
      %4223 = vmatmul.f32.gmra.mxu0 %v4109
      %v4224 = vpop.f32.mrf.mxu0
      %v4225 = vadd.f32 0.0, %v4224
      %4226 = vmatmul.f32.gmra.mxu0 %v4112
      %v4227 = vpop.f32.mrf.mxu0
      %v4228 = vadd.f32 0.0, %v4227
      %4229 = vmatmul.f32.gmra.mxu0 %v4115
      %v4230 = vpop.f32.mrf.mxu0
      %v4231 = vadd.f32 0.0, %v4230
      %4232 = vmatmul.f32.gmra.mxu0 %v4118
      %v4233 = vpop.f32.mrf.mxu0
      %v4234 = vadd.f32 0.0, %v4233
      %4235 = vdwg.mxu0
      %v4236 = vadd.f32 %v3927, %v4141
      %v4237 = vadd.f32 %v3928, %v4144
      %v4238 = vadd.f32 %v3929, %v4147
      %v4239 = vadd.f32 %v3930, %v4150
      %v4240 = vadd.f32 %v3931, %v4153
      %v4241 = vadd.f32 %v3932, %v4156
      %v4242 = vadd.f32 %v3933, %v4159
      %v4243 = vadd.f32 %v3934, %v4162
      %v4244 = vadd.f32 %v3935, %v4165
      %v4245 = vadd.f32 %v3936, %v4168
      %v4246 = vadd.f32 %v3937, %v4171
      %v4247 = vadd.f32 %v3938, %v4174
      %v4248 = vadd.f32 %v3939, %v4177
      %v4249 = vadd.f32 %v3940, %v4180
      %v4250 = vadd.f32 %v3941, %v4183
      %v4251 = vadd.f32 %v3942, %v4186
      %v4252 = vadd.f32 %v3943, %v4189
      %v4253 = vadd.f32 %v3944, %v4192
      %v4254 = vadd.f32 %v3945, %v4195
      %v4255 = vadd.f32 %v3946, %v4198
      %v4256 = vadd.f32 %v3947, %v4201
      %v4257 = vadd.f32 %v3948, %v4204
      %v4258 = vadd.f32 %v3949, %v4207
      %v4259 = vadd.f32 %v3950, %v4210
      %v4260 = vadd.f32 %v3951, %v4213
      %v4261 = vadd.f32 %v3952, %v4216
      %v4262 = vadd.f32 %v3953, %v4219
      %v4263 = vadd.f32 %v3954, %v4222
      %v4264 = vadd.f32 %v3955, %v4225
      %v4265 = vadd.f32 %v3956, %v4228
      %v4266 = vadd.f32 %v3957, %v4231
      %v4267 = vadd.f32 %v3958, %v4234
      %4268 = vst.msk [vmem:[#allocation3] sm:$0xff] %vm257, %v4236
      %4269 = vst.msk [vmem:[#allocation3 + $0x8] sm:$0xff] %vm257, %v4237
      %4270 = vst.msk [vmem:[#allocation3 + $0x10] sm:$0xff] %vm257, %v4238
      %4271 = vst.msk [vmem:[#allocation3 + $0x18] sm:$0xff] %vm257, %v4239
      %4272 = vst.msk [vmem:[#allocation3 + $0x20] sm:$0xff] %vm257, %v4240
      %4273 = vst.msk [vmem:[#allocation3 + $0x28] sm:$0xff] %vm257, %v4241
      %4274 = vst.msk [vmem:[#allocation3 + $0x30] sm:$0xff] %vm257, %v4242
      %4275 = vst.msk [vmem:[#allocation3 + $0x38] sm:$0xff] %vm257, %v4243
      %4276 = vst.msk [vmem:[#allocation3 + $0x40] sm:$0xff] %vm257, %v4244
      %4277 = vst.msk [vmem:[#allocation3 + $0x48] sm:$0xff] %vm257, %v4245
      %4278 = vst.msk [vmem:[#allocation3 + $0x50] sm:$0xff] %vm257, %v4246
      %4279 = vst.msk [vmem:[#allocation3 + $0x58] sm:$0xff] %vm257, %v4247
      %4280 = vst.msk [vmem:[#allocation3 + $0x60] sm:$0xff] %vm257, %v4248
      %4281 = vst.msk [vmem:[#allocation3 + $0x68] sm:$0xff] %vm257, %v4249
      %4282 = vst.msk [vmem:[#allocation3 + $0x70] sm:$0xff] %vm257, %v4250
      %4283 = vst.msk [vmem:[#allocation3 + $0x78] sm:$0xff] %vm257, %v4251
      %4284 = vst.msk [vmem:[#allocation3 + $0x80] sm:$0xff] %vm257, %v4252
      %4285 = vst.msk [vmem:[#allocation3 + $0x88] sm:$0xff] %vm257, %v4253
      %4286 = vst.msk [vmem:[#allocation3 + $0x90] sm:$0xff] %vm257, %v4254
      %4287 = vst.msk [vmem:[#allocation3 + $0x98] sm:$0xff] %vm257, %v4255
      %4288 = vst.msk [vmem:[#allocation3 + $0xa0] sm:$0xff] %vm257, %v4256
      %4289 = vst.msk [vmem:[#allocation3 + $0xa8] sm:$0xff] %vm257, %v4257
      %4290 = vst.msk [vmem:[#allocation3 + $0xb0] sm:$0xff] %vm257, %v4258
      %4291 = vst.msk [vmem:[#allocation3 + $0xb8] sm:$0xff] %vm257, %v4259
      %4292 = vst.msk [vmem:[#allocation3 + $0xc0] sm:$0xff] %vm257, %v4260
      %4293 = vst.msk [vmem:[#allocation3 + $0xc8] sm:$0xff] %vm257, %v4261
      %4294 = vst.msk [vmem:[#allocation3 + $0xd0] sm:$0xff] %vm257, %v4262
      %4295 = vst.msk [vmem:[#allocation3 + $0xd8] sm:$0xff] %vm257, %v4263
      %4296 = vst.msk [vmem:[#allocation3 + $0xe0] sm:$0xff] %vm257, %v4264
      %4297 = vst.msk [vmem:[#allocation3 + $0xe8] sm:$0xff] %vm257, %v4265
      %4298 = vst.msk [vmem:[#allocation3 + $0xf0] sm:$0xff] %vm257, %v4266
      %4299 = vst.msk [vmem:[#allocation3 + $0xf8] sm:$0xff] %vm257, %v4267
      %v4300 = vld [vmem:[%s1181] sm:$0xff]
      %v4301 = vld [vmem:[%s1181 + $0x8] sm:$0xff]
      %v4302 = vld [vmem:[%s1181 + $0x10] sm:$0xff]
      %v4303 = vld [vmem:[%s1181 + $0x18] sm:$0xff]
      %v4304 = vld [vmem:[%s1181 + $0x20] sm:$0xff]
      %v4305 = vld [vmem:[%s1181 + $0x28] sm:$0xff]
      %v4306 = vld [vmem:[%s1181 + $0x30] sm:$0xff]
      %v4307 = vld [vmem:[%s1181 + $0x38] sm:$0xff]
      %v4308 = vld [vmem:[%s1181 + $0x40] sm:$0xff]
      %v4309 = vld [vmem:[%s1181 + $0x48] sm:$0xff]
      %v4310 = vld [vmem:[%s1181 + $0x50] sm:$0xff]
      %v4311 = vld [vmem:[%s1181 + $0x58] sm:$0xff]
      %v4312 = vld [vmem:[%s1181 + $0x60] sm:$0xff]
      %v4313 = vld [vmem:[%s1181 + $0x68] sm:$0xff]
      %v4314 = vld [vmem:[%s1181 + $0x70] sm:$0xff]
      %v4315 = vld [vmem:[%s1181 + $0x78] sm:$0xff]
      %v4316 = vld [vmem:[%s1181 + $0x80] sm:$0xff]
      %v4317 = vld [vmem:[%s1181 + $0x88] sm:$0xff]
      %v4318 = vld [vmem:[%s1181 + $0x90] sm:$0xff]
      %v4319 = vld [vmem:[%s1181 + $0x98] sm:$0xff]
      %v4320 = vld [vmem:[%s1181 + $0xa0] sm:$0xff]
      %v4321 = vld [vmem:[%s1181 + $0xa8] sm:$0xff]
      %v4322 = vld [vmem:[%s1181 + $0xb0] sm:$0xff]
      %v4323 = vld [vmem:[%s1181 + $0xb8] sm:$0xff]
      %v4324 = vld [vmem:[%s1181 + $0xc0] sm:$0xff]
      %v4325 = vld [vmem:[%s1181 + $0xc8] sm:$0xff]
      %v4326 = vld [vmem:[%s1181 + $0xd0] sm:$0xff]
      %v4327 = vld [vmem:[%s1181 + $0xd8] sm:$0xff]
      %v4328 = vld [vmem:[%s1181 + $0xe0] sm:$0xff]
      %v4329 = vld [vmem:[%s1181 + $0xe8] sm:$0xff]
      %v4330 = vld [vmem:[%s1181 + $0xf0] sm:$0xff]
      %v4331 = vld [vmem:[%s1181 + $0xf8] sm:$0xff]
      %v4332 = vld [vmem:[#allocation2 + $0x9] sm:$0xff]
      %v4333 = vld [vmem:[#allocation2 + $0x11] sm:$0xff]
      %v4334 = vld [vmem:[#allocation2 + $0x19] sm:$0xff]
      %v4335 = vld [vmem:[#allocation2 + $0x21] sm:$0xff]
      %v4336 = vld [vmem:[#allocation2 + $0x29] sm:$0xff]
      %v4337 = vld [vmem:[#allocation2 + $0x31] sm:$0xff]
      %v4338 = vld [vmem:[#allocation2 + $0x39] sm:$0xff]
      %v4339 = vld [vmem:[#allocation2 + $0x41] sm:$0xff]
      %v4340 = vld [vmem:[#allocation2 + $0x49] sm:$0xff]
      %v4341 = vld [vmem:[#allocation2 + $0x51] sm:$0xff]
      %v4342 = vld [vmem:[#allocation2 + $0x59] sm:$0xff]
      %v4343 = vld [vmem:[#allocation2 + $0x61] sm:$0xff]
      %v4344 = vld [vmem:[#allocation2 + $0x69] sm:$0xff]
      %v4345 = vld [vmem:[#allocation2 + $0x71] sm:$0xff]
      %v4346 = vld [vmem:[#allocation2 + $0x79] sm:$0xff]
      %v4347 = vld [vmem:[#allocation2 + $0x81] sm:$0xff]
      %v4348 = vld [vmem:[#allocation2 + $0x89] sm:$0xff]
      %v4349 = vld [vmem:[#allocation2 + $0x91] sm:$0xff]
      %v4350 = vld [vmem:[#allocation2 + $0x99] sm:$0xff]
      %v4351 = vld [vmem:[#allocation2 + $0xa1] sm:$0xff]
      %v4352 = vld [vmem:[#allocation2 + $0xa9] sm:$0xff]
      %v4353 = vld [vmem:[#allocation2 + $0xb1] sm:$0xff]
      %v4354 = vld [vmem:[#allocation2 + $0xb9] sm:$0xff]
      %v4355 = vld [vmem:[#allocation2 + $0xc1] sm:$0xff]
      %v4356 = vld [vmem:[#allocation2 + $0xc9] sm:$0xff]
      %v4357 = vld [vmem:[#allocation2 + $0xd1] sm:$0xff]
      %v4358 = vld [vmem:[#allocation2 + $0xd9] sm:$0xff]
      %v4359 = vld [vmem:[#allocation2 + $0xe1] sm:$0xff]
      %v4360 = vld [vmem:[#allocation2 + $0xe9] sm:$0xff]
      %v4361 = vld [vmem:[#allocation2 + $0xf1] sm:$0xff]
      %v4362 = vld [vmem:[#allocation2 + $0xf9] sm:$0xff]
      %v4363 = vld [vmem:[#allocation2 + $0x101] sm:$0xff]
      %v4364 = vsel %vm3329, %v4332, 0.0
      %v4365 = vsel %vm3330, %v4333, 0.0
      %v4366 = vsel %vm3331, %v4334, 0.0
      %v4367 = vsel %vm3332, %v4335, 0.0
      %v4368 = vsel %vm3333, %v4336, 0.0
      %v4369 = vsel %vm3334, %v4337, 0.0
      %v4370 = vsel %vm3335, %v4338, 0.0
      %v4371 = vsel %vm3336, %v4339, 0.0
      %v4372 = vsel %vm3337, %v4340, 0.0
      %v4373 = vsel %vm3338, %v4341, 0.0
      %v4374 = vsel %vm3339, %v4342, 0.0
      %v4375 = vsel %vm3340, %v4343, 0.0
      %v4376 = vsel %vm3341, %v4344, 0.0
      %v4377 = vsel %vm3342, %v4345, 0.0
      %v4378 = vsel %vm3343, %v4346, 0.0
      %v4379 = vsel %vm3344, %v4347, 0.0
      %v4380 = vsel %vm3345, %v4348, 0.0
      %v4381 = vsel %vm3346, %v4349, 0.0
      %v4382 = vsel %vm3347, %v4350, 0.0
      %v4383 = vsel %vm3348, %v4351, 0.0
      %v4384 = vsel %vm3349, %v4352, 0.0
      %v4385 = vsel %vm3350, %v4353, 0.0
      %v4386 = vsel %vm3351, %v4354, 0.0
      %v4387 = vsel %vm3352, %v4355, 0.0
      %v4388 = vsel %vm3353, %v4356, 0.0
      %v4389 = vsel %vm3354, %v4357, 0.0
      %v4390 = vsel %vm3355, %v4358, 0.0
      %v4391 = vsel %vm3356, %v4359, 0.0
      %v4392 = vsel %vm3357, %v4360, 0.0
      %v4393 = vsel %vm3358, %v4361, 0.0
      %v4394 = vsel %vm3359, %v4362, 0.0
      %v4395 = vsel %vm3360, %v4363, 0.0
      %s4396 = scalar_lea.vmem %s3, 4
      %v4397 = vld [vmem:[%s4396] sm:$0xf]
      %v4399 = vsel %vm257, %v4364, 0
      %v4402 = vsel %vm257, %v4365, 0
      %v4405 = vsel %vm257, %v4366, 0
      %v4408 = vsel %vm257, %v4367, 0
      %v4411 = vsel %vm257, %v4368, 0
      %v4414 = vsel %vm257, %v4369, 0
      %v4417 = vsel %vm257, %v4370, 0
      %v4420 = vsel %vm257, %v4371, 0
      %v4423 = vsel %vm257, %v4372, 0
      %v4426 = vsel %vm257, %v4373, 0
      %v4429 = vsel %vm257, %v4374, 0
      %v4432 = vsel %vm257, %v4375, 0
      %v4435 = vsel %vm257, %v4376, 0
      %v4438 = vsel %vm257, %v4377, 0
      %v4441 = vsel %vm257, %v4378, 0
      %v4444 = vsel %vm257, %v4379, 0
      %v4447 = vsel %vm257, %v4380, 0
      %v4450 = vsel %vm257, %v4381, 0
      %v4453 = vsel %vm257, %v4382, 0
      %v4456 = vsel %vm257, %v4383, 0
      %v4459 = vsel %vm257, %v4384, 0
      %v4462 = vsel %vm257, %v4385, 0
      %v4465 = vsel %vm257, %v4386, 0
      %v4468 = vsel %vm257, %v4387, 0
      %v4471 = vsel %vm257, %v4388, 0
      %v4474 = vsel %vm257, %v4389, 0
      %v4477 = vsel %vm257, %v4390, 0
      %v4480 = vsel %vm257, %v4391, 0
      %v4483 = vsel %vm257, %v4392, 0
      %v4486 = vsel %vm257, %v4393, 0
      %v4489 = vsel %vm257, %v4394, 0
      %v4492 = vsel %vm257, %v4395, 0
      %v4495 = vsel %vm904, %v4397, 0
      %4497 = vmatpush.msra.mxu0 0.0
      %4498 = vmatpush.msra.mxu0 0.0
      %4499 = vmatpush.msra.mxu0 0.0
      %4500 = vmatpush.msra.mxu0 0.0
      %4501 = vmatpush.msra.mxu0 0.0
      %4502 = vmatpush.msra.mxu0 0.0
      %4503 = vmatpush.msra.mxu0 0.0
      %4504 = vmatpush.msra.mxu0 0.0
      %4505 = vmatpush.msra.mxu0 0.0
      %4506 = vmatpush.msra.mxu0 0.0
      %4507 = vmatpush.msra.mxu0 0.0
      %4508 = vmatpush.msra.mxu0 0.0
      %4509 = vmatpush.msra.mxu0 0.0
      %4510 = vmatpush.msra.mxu0 0.0
      %4511 = vmatpush.msra.mxu0 0.0
      %4512 = vmatpush.msra.mxu0 %v4495
      %4513 = vmatmul.f32.gmra.mxu0 %v4399
      %v4514 = vpop.f32.mrf.mxu0
      %v4515 = vadd.f32 0.0, %v4514
      %4516 = vmatmul.f32.gmra.mxu0 %v4402
      %v4517 = vpop.f32.mrf.mxu0
      %v4518 = vadd.f32 0.0, %v4517
      %4519 = vmatmul.f32.gmra.mxu0 %v4405
      %v4520 = vpop.f32.mrf.mxu0
      %v4521 = vadd.f32 0.0, %v4520
      %4522 = vmatmul.f32.gmra.mxu0 %v4408
      %v4523 = vpop.f32.mrf.mxu0
      %v4524 = vadd.f32 0.0, %v4523
      %4525 = vmatmul.f32.gmra.mxu0 %v4411
      %v4526 = vpop.f32.mrf.mxu0
      %v4527 = vadd.f32 0.0, %v4526
      %4528 = vmatmul.f32.gmra.mxu0 %v4414
      %v4529 = vpop.f32.mrf.mxu0
      %v4530 = vadd.f32 0.0, %v4529
      %4531 = vmatmul.f32.gmra.mxu0 %v4417
      %v4532 = vpop.f32.mrf.mxu0
      %v4533 = vadd.f32 0.0, %v4532
      %4534 = vmatmul.f32.gmra.mxu0 %v4420
      %v4535 = vpop.f32.mrf.mxu0
      %v4536 = vadd.f32 0.0, %v4535
      %4537 = vmatmul.f32.gmra.mxu0 %v4423
      %v4538 = vpop.f32.mrf.mxu0
      %v4539 = vadd.f32 0.0, %v4538
      %4540 = vmatmul.f32.gmra.mxu0 %v4426
      %v4541 = vpop.f32.mrf.mxu0
      %v4542 = vadd.f32 0.0, %v4541
      %4543 = vmatmul.f32.gmra.mxu0 %v4429
      %v4544 = vpop.f32.mrf.mxu0
      %v4545 = vadd.f32 0.0, %v4544
      %4546 = vmatmul.f32.gmra.mxu0 %v4432
      %v4547 = vpop.f32.mrf.mxu0
      %v4548 = vadd.f32 0.0, %v4547
      %4549 = vmatmul.f32.gmra.mxu0 %v4435
      %v4550 = vpop.f32.mrf.mxu0
      %v4551 = vadd.f32 0.0, %v4550
      %4552 = vmatmul.f32.gmra.mxu0 %v4438
      %v4553 = vpop.f32.mrf.mxu0
      %v4554 = vadd.f32 0.0, %v4553
      %4555 = vmatmul.f32.gmra.mxu0 %v4441
      %v4556 = vpop.f32.mrf.mxu0
      %v4557 = vadd.f32 0.0, %v4556
      %4558 = vmatmul.f32.gmra.mxu0 %v4444
      %v4559 = vpop.f32.mrf.mxu0
      %v4560 = vadd.f32 0.0, %v4559
      %4561 = vmatmul.f32.gmra.mxu0 %v4447
      %v4562 = vpop.f32.mrf.mxu0
      %v4563 = vadd.f32 0.0, %v4562
      %4564 = vmatmul.f32.gmra.mxu0 %v4450
      %v4565 = vpop.f32.mrf.mxu0
      %v4566 = vadd.f32 0.0, %v4565
      %4567 = vmatmul.f32.gmra.mxu0 %v4453
      %v4568 = vpop.f32.mrf.mxu0
      %v4569 = vadd.f32 0.0, %v4568
      %4570 = vmatmul.f32.gmra.mxu0 %v4456
      %v4571 = vpop.f32.mrf.mxu0
      %v4572 = vadd.f32 0.0, %v4571
      %4573 = vmatmul.f32.gmra.mxu0 %v4459
      %v4574 = vpop.f32.mrf.mxu0
      %v4575 = vadd.f32 0.0, %v4574
      %4576 = vmatmul.f32.gmra.mxu0 %v4462
      %v4577 = vpop.f32.mrf.mxu0
      %v4578 = vadd.f32 0.0, %v4577
      %4579 = vmatmul.f32.gmra.mxu0 %v4465
      %v4580 = vpop.f32.mrf.mxu0
      %v4581 = vadd.f32 0.0, %v4580
      %4582 = vmatmul.f32.gmra.mxu0 %v4468
      %v4583 = vpop.f32.mrf.mxu0
      %v4584 = vadd.f32 0.0, %v4583
      %4585 = vmatmul.f32.gmra.mxu0 %v4471
      %v4586 = vpop.f32.mrf.mxu0
      %v4587 = vadd.f32 0.0, %v4586
      %4588 = vmatmul.f32.gmra.mxu0 %v4474
      %v4589 = vpop.f32.mrf.mxu0
      %v4590 = vadd.f32 0.0, %v4589
      %4591 = vmatmul.f32.gmra.mxu0 %v4477
      %v4592 = vpop.f32.mrf.mxu0
      %v4593 = vadd.f32 0.0, %v4592
      %4594 = vmatmul.f32.gmra.mxu0 %v4480
      %v4595 = vpop.f32.mrf.mxu0
      %v4596 = vadd.f32 0.0, %v4595
      %4597 = vmatmul.f32.gmra.mxu0 %v4483
      %v4598 = vpop.f32.mrf.mxu0
      %v4599 = vadd.f32 0.0, %v4598
      %4600 = vmatmul.f32.gmra.mxu0 %v4486
      %v4601 = vpop.f32.mrf.mxu0
      %v4602 = vadd.f32 0.0, %v4601
      %4603 = vmatmul.f32.gmra.mxu0 %v4489
      %v4604 = vpop.f32.mrf.mxu0
      %v4605 = vadd.f32 0.0, %v4604
      %4606 = vmatmul.f32.gmra.mxu0 %v4492
      %v4607 = vpop.f32.mrf.mxu0
      %v4608 = vadd.f32 0.0, %v4607
      %4609 = vdwg.mxu0
      %v4610 = vadd.f32 %v4300, %v4515
      %v4611 = vadd.f32 %v4301, %v4518
      %v4612 = vadd.f32 %v4302, %v4521
      %v4613 = vadd.f32 %v4303, %v4524
      %v4614 = vadd.f32 %v4304, %v4527
      %v4615 = vadd.f32 %v4305, %v4530
      %v4616 = vadd.f32 %v4306, %v4533
      %v4617 = vadd.f32 %v4307, %v4536
      %v4618 = vadd.f32 %v4308, %v4539
      %v4619 = vadd.f32 %v4309, %v4542
      %v4620 = vadd.f32 %v4310, %v4545
      %v4621 = vadd.f32 %v4311, %v4548
      %v4622 = vadd.f32 %v4312, %v4551
      %v4623 = vadd.f32 %v4313, %v4554
      %v4624 = vadd.f32 %v4314, %v4557
      %v4625 = vadd.f32 %v4315, %v4560
      %v4626 = vadd.f32 %v4316, %v4563
      %v4627 = vadd.f32 %v4317, %v4566
      %v4628 = vadd.f32 %v4318, %v4569
      %v4629 = vadd.f32 %v4319, %v4572
      %v4630 = vadd.f32 %v4320, %v4575
      %v4631 = vadd.f32 %v4321, %v4578
      %v4632 = vadd.f32 %v4322, %v4581
      %v4633 = vadd.f32 %v4323, %v4584
      %v4634 = vadd.f32 %v4324, %v4587
      %v4635 = vadd.f32 %v4325, %v4590
      %v4636 = vadd.f32 %v4326, %v4593
      %v4637 = vadd.f32 %v4327, %v4596
      %v4638 = vadd.f32 %v4328, %v4599
      %v4639 = vadd.f32 %v4329, %v4602
      %v4640 = vadd.f32 %v4330, %v4605
      %v4641 = vadd.f32 %v4331, %v4608
      %4642 = vst.msk [vmem:[%s1181] sm:$0xff] %vm257, %v4610
      %4643 = vst.msk [vmem:[%s1181 + $0x8] sm:$0xff] %vm257, %v4611
      %4644 = vst.msk [vmem:[%s1181 + $0x10] sm:$0xff] %vm257, %v4612
      %4645 = vst.msk [vmem:[%s1181 + $0x18] sm:$0xff] %vm257, %v4613
      %4646 = vst.msk [vmem:[%s1181 + $0x20] sm:$0xff] %vm257, %v4614
      %4647 = vst.msk [vmem:[%s1181 + $0x28] sm:$0xff] %vm257, %v4615
      %4648 = vst.msk [vmem:[%s1181 + $0x30] sm:$0xff] %vm257, %v4616
      %4649 = vst.msk [vmem:[%s1181 + $0x38] sm:$0xff] %vm257, %v4617
      %4650 = vst.msk [vmem:[%s1181 + $0x40] sm:$0xff] %vm257, %v4618
      %4651 = vst.msk [vmem:[%s1181 + $0x48] sm:$0xff] %vm257, %v4619
      %4652 = vst.msk [vmem:[%s1181 + $0x50] sm:$0xff] %vm257, %v4620
      %4653 = vst.msk [vmem:[%s1181 + $0x58] sm:$0xff] %vm257, %v4621
      %4654 = vst.msk [vmem:[%s1181 + $0x60] sm:$0xff] %vm257, %v4622
      %4655 = vst.msk [vmem:[%s1181 + $0x68] sm:$0xff] %vm257, %v4623
      %4656 = vst.msk [vmem:[%s1181 + $0x70] sm:$0xff] %vm257, %v4624
      %4657 = vst.msk [vmem:[%s1181 + $0x78] sm:$0xff] %vm257, %v4625
      %4658 = vst.msk [vmem:[%s1181 + $0x80] sm:$0xff] %vm257, %v4626
      %4659 = vst.msk [vmem:[%s1181 + $0x88] sm:$0xff] %vm257, %v4627
      %4660 = vst.msk [vmem:[%s1181 + $0x90] sm:$0xff] %vm257, %v4628
      %4661 = vst.msk [vmem:[%s1181 + $0x98] sm:$0xff] %vm257, %v4629
      %4662 = vst.msk [vmem:[%s1181 + $0xa0] sm:$0xff] %vm257, %v4630
      %4663 = vst.msk [vmem:[%s1181 + $0xa8] sm:$0xff] %vm257, %v4631
      %4664 = vst.msk [vmem:[%s1181 + $0xb0] sm:$0xff] %vm257, %v4632
      %4665 = vst.msk [vmem:[%s1181 + $0xb8] sm:$0xff] %vm257, %v4633
      %4666 = vst.msk [vmem:[%s1181 + $0xc0] sm:$0xff] %vm257, %v4634
      %4667 = vst.msk [vmem:[%s1181 + $0xc8] sm:$0xff] %vm257, %v4635
      %4668 = vst.msk [vmem:[%s1181 + $0xd0] sm:$0xff] %vm257, %v4636
      %4669 = vst.msk [vmem:[%s1181 + $0xd8] sm:$0xff] %vm257, %v4637
      %4670 = vst.msk [vmem:[%s1181 + $0xe0] sm:$0xff] %vm257, %v4638
      %4671 = vst.msk [vmem:[%s1181 + $0xe8] sm:$0xff] %vm257, %v4639
      %4672 = vst.msk [vmem:[%s1181 + $0xf0] sm:$0xff] %vm257, %v4640
      %4673 = vst.msk [vmem:[%s1181 + $0xf8] sm:$0xff] %vm257, %v4641
      %v4674 = vld [vmem:[%s1310] sm:$0xff]
      %v4675 = vld [vmem:[%s1310 + $0x8] sm:$0xff]
      %v4676 = vld [vmem:[%s1310 + $0x10] sm:$0xff]
      %v4677 = vld [vmem:[%s1310 + $0x18] sm:$0xff]
      %v4678 = vld [vmem:[%s1310 + $0x20] sm:$0xff]
      %v4679 = vld [vmem:[%s1310 + $0x28] sm:$0xff]
      %v4680 = vld [vmem:[%s1310 + $0x30] sm:$0xff]
      %v4681 = vld [vmem:[%s1310 + $0x38] sm:$0xff]
      %v4682 = vld [vmem:[%s1310 + $0x40] sm:$0xff]
      %v4683 = vld [vmem:[%s1310 + $0x48] sm:$0xff]
      %v4684 = vld [vmem:[%s1310 + $0x50] sm:$0xff]
      %v4685 = vld [vmem:[%s1310 + $0x58] sm:$0xff]
      %v4686 = vld [vmem:[%s1310 + $0x60] sm:$0xff]
      %v4687 = vld [vmem:[%s1310 + $0x68] sm:$0xff]
      %v4688 = vld [vmem:[%s1310 + $0x70] sm:$0xff]
      %v4689 = vld [vmem:[%s1310 + $0x78] sm:$0xff]
      %v4690 = vld [vmem:[%s1310 + $0x80] sm:$0xff]
      %v4691 = vld [vmem:[%s1310 + $0x88] sm:$0xff]
      %v4692 = vld [vmem:[%s1310 + $0x90] sm:$0xff]
      %v4693 = vld [vmem:[%s1310 + $0x98] sm:$0xff]
      %v4694 = vld [vmem:[%s1310 + $0xa0] sm:$0xff]
      %v4695 = vld [vmem:[%s1310 + $0xa8] sm:$0xff]
      %v4696 = vld [vmem:[%s1310 + $0xb0] sm:$0xff]
      %v4697 = vld [vmem:[%s1310 + $0xb8] sm:$0xff]
      %v4698 = vld [vmem:[%s1310 + $0xc0] sm:$0xff]
      %v4699 = vld [vmem:[%s1310 + $0xc8] sm:$0xff]
      %v4700 = vld [vmem:[%s1310 + $0xd0] sm:$0xff]
      %v4701 = vld [vmem:[%s1310 + $0xd8] sm:$0xff]
      %v4702 = vld [vmem:[%s1310 + $0xe0] sm:$0xff]
      %v4703 = vld [vmem:[%s1310 + $0xe8] sm:$0xff]
      %v4704 = vld [vmem:[%s1310 + $0xf0] sm:$0xff]
      %v4705 = vld [vmem:[%s1310 + $0xf8] sm:$0xff]
      %v4706 = vld [vmem:[#allocation2 + $0x27] sm:$0xff]
      %v4707 = vld [vmem:[#allocation2 + $0x2f] sm:$0xff]
      %v4708 = vld [vmem:[#allocation2 + $0x37] sm:$0xff]
      %v4709 = vld [vmem:[#allocation2 + $0x3f] sm:$0xff]
      %v4710 = vld [vmem:[#allocation2 + $0x47] sm:$0xff]
      %v4711 = vld [vmem:[#allocation2 + $0x4f] sm:$0xff]
      %v4712 = vld [vmem:[#allocation2 + $0x57] sm:$0xff]
      %v4713 = vld [vmem:[#allocation2 + $0x5f] sm:$0xff]
      %v4714 = vld [vmem:[#allocation2 + $0x67] sm:$0xff]
      %v4715 = vld [vmem:[#allocation2 + $0x6f] sm:$0xff]
      %v4716 = vld [vmem:[#allocation2 + $0x77] sm:$0xff]
      %v4717 = vld [vmem:[#allocation2 + $0x7f] sm:$0xff]
      %v4718 = vld [vmem:[#allocation2 + $0x87] sm:$0xff]
      %v4719 = vld [vmem:[#allocation2 + $0x8f] sm:$0xff]
      %v4720 = vld [vmem:[#allocation2 + $0x97] sm:$0xff]
      %v4721 = vld [vmem:[#allocation2 + $0x9f] sm:$0xff]
      %v4722 = vld [vmem:[#allocation2 + $0xa7] sm:$0xff]
      %v4723 = vld [vmem:[#allocation2 + $0xaf] sm:$0xff]
      %v4724 = vld [vmem:[#allocation2 + $0xb7] sm:$0xff]
      %v4725 = vld [vmem:[#allocation2 + $0xbf] sm:$0xff]
      %v4726 = vld [vmem:[#allocation2 + $0xc7] sm:$0xff]
      %v4727 = vld [vmem:[#allocation2 + $0xcf] sm:$0xff]
      %v4728 = vld [vmem:[#allocation2 + $0xd7] sm:$0xff]
      %v4729 = vld [vmem:[#allocation2 + $0xdf] sm:$0xff]
      %v4730 = vld [vmem:[#allocation2 + $0xe7] sm:$0xff]
      %v4731 = vld [vmem:[#allocation2 + $0xef] sm:$0xff]
      %v4732 = vld [vmem:[#allocation2 + $0xf7] sm:$0xff]
      %v4733 = vld [vmem:[#allocation2 + $0xff] sm:$0xff]
      %v4734 = vld [vmem:[#allocation2 + $0x107] sm:$0xff]
      %v4735 = vld [vmem:[#allocation2 + $0x10f] sm:$0xff]
      %v4736 = vld [vmem:[#allocation2 + $0x117] sm:$0xff]
      %v4737 = vld [vmem:[#allocation2 + $0x11f] sm:$0xff]
      %v4738 = vsel %vm2667, %v4706, 0.0
      %v4739 = vsel %vm2668, %v4707, 0.0
      %v4740 = vsel %vm2669, %v4708, 0.0
      %v4741 = vsel %vm2670, %v4709, 0.0
      %v4742 = vsel %vm2671, %v4710, 0.0
      %v4743 = vsel %vm2672, %v4711, 0.0
      %v4744 = vsel %vm2673, %v4712, 0.0
      %v4745 = vsel %vm2674, %v4713, 0.0
      %v4746 = vsel %vm2675, %v4714, 0.0
      %v4747 = vsel %vm2676, %v4715, 0.0
      %v4748 = vsel %vm2677, %v4716, 0.0
      %v4749 = vsel %vm2678, %v4717, 0.0
      %v4750 = vsel %vm2679, %v4718, 0.0
      %v4751 = vsel %vm2680, %v4719, 0.0
      %v4752 = vsel %vm2681, %v4720, 0.0
      %v4753 = vsel %vm2682, %v4721, 0.0
      %v4754 = vsel %vm2683, %v4722, 0.0
      %v4755 = vsel %vm2684, %v4723, 0.0
      %v4756 = vsel %vm2685, %v4724, 0.0
      %v4757 = vsel %vm2686, %v4725, 0.0
      %v4758 = vsel %vm2687, %v4726, 0.0
      %v4759 = vsel %vm2688, %v4727, 0.0
      %v4760 = vsel %vm2689, %v4728, 0.0
      %v4761 = vsel %vm2690, %v4729, 0.0
      %v4762 = vsel %vm2691, %v4730, 0.0
      %v4763 = vsel %vm2692, %v4731, 0.0
      %v4764 = vsel %vm2693, %v4732, 0.0
      %v4765 = vsel %vm2694, %v4733, 0.0
      %v4766 = vsel %vm2695, %v4734, 0.0
      %v4767 = vsel %vm2696, %v4735, 0.0
      %v4768 = vsel %vm2697, %v4736, 0.0
      %v4769 = vsel %vm2698, %v4737, 0.0
      %s4770 = scalar_lea.vmem %s3, 8
      %v4771 = vld [vmem:[%s4770] sm:$0xf]
      %v4773 = vsel %vm257, %v4738, 0
      %v4776 = vsel %vm257, %v4739, 0
      %v4779 = vsel %vm257, %v4740, 0
      %v4782 = vsel %vm257, %v4741, 0
      %v4785 = vsel %vm257, %v4742, 0
      %v4788 = vsel %vm257, %v4743, 0
      %v4791 = vsel %vm257, %v4744, 0
      %v4794 = vsel %vm257, %v4745, 0
      %v4797 = vsel %vm257, %v4746, 0
      %v4800 = vsel %vm257, %v4747, 0
      %v4803 = vsel %vm257, %v4748, 0
      %v4806 = vsel %vm257, %v4749, 0
      %v4809 = vsel %vm257, %v4750, 0
      %v4812 = vsel %vm257, %v4751, 0
      %v4815 = vsel %vm257, %v4752, 0
      %v4818 = vsel %vm257, %v4753, 0
      %v4821 = vsel %vm257, %v4754, 0
      %v4824 = vsel %vm257, %v4755, 0
      %v4827 = vsel %vm257, %v4756, 0
      %v4830 = vsel %vm257, %v4757, 0
      %v4833 = vsel %vm257, %v4758, 0
      %v4836 = vsel %vm257, %v4759, 0
      %v4839 = vsel %vm257, %v4760, 0
      %v4842 = vsel %vm257, %v4761, 0
      %v4845 = vsel %vm257, %v4762, 0
      %v4848 = vsel %vm257, %v4763, 0
      %v4851 = vsel %vm257, %v4764, 0
      %v4854 = vsel %vm257, %v4765, 0
      %v4857 = vsel %vm257, %v4766, 0
      %v4860 = vsel %vm257, %v4767, 0
      %v4863 = vsel %vm257, %v4768, 0
      %v4866 = vsel %vm257, %v4769, 0
      %v4869 = vsel %vm904, %v4771, 0
      %4871 = vmatpush.msra.mxu0 0.0
      %4872 = vmatpush.msra.mxu0 0.0
      %4873 = vmatpush.msra.mxu0 0.0
      %4874 = vmatpush.msra.mxu0 0.0
      %4875 = vmatpush.msra.mxu0 0.0
      %4876 = vmatpush.msra.mxu0 0.0
      %4877 = vmatpush.msra.mxu0 0.0
      %4878 = vmatpush.msra.mxu0 0.0
      %4879 = vmatpush.msra.mxu0 0.0
      %4880 = vmatpush.msra.mxu0 0.0
      %4881 = vmatpush.msra.mxu0 0.0
      %4882 = vmatpush.msra.mxu0 0.0
      %4883 = vmatpush.msra.mxu0 0.0
      %4884 = vmatpush.msra.mxu0 0.0
      %4885 = vmatpush.msra.mxu0 0.0
      %4886 = vmatpush.msra.mxu0 %v4869
      %4887 = vmatmul.f32.gmra.mxu0 %v4773
      %v4888 = vpop.f32.mrf.mxu0
      %v4889 = vadd.f32 0.0, %v4888
      %4890 = vmatmul.f32.gmra.mxu0 %v4776
      %v4891 = vpop.f32.mrf.mxu0
      %v4892 = vadd.f32 0.0, %v4891
      %4893 = vmatmul.f32.gmra.mxu0 %v4779
      %v4894 = vpop.f32.mrf.mxu0
      %v4895 = vadd.f32 0.0, %v4894
      %4896 = vmatmul.f32.gmra.mxu0 %v4782
      %v4897 = vpop.f32.mrf.mxu0
      %v4898 = vadd.f32 0.0, %v4897
      %4899 = vmatmul.f32.gmra.mxu0 %v4785
      %v4900 = vpop.f32.mrf.mxu0
      %v4901 = vadd.f32 0.0, %v4900
      %4902 = vmatmul.f32.gmra.mxu0 %v4788
      %v4903 = vpop.f32.mrf.mxu0
      %v4904 = vadd.f32 0.0, %v4903
      %4905 = vmatmul.f32.gmra.mxu0 %v4791
      %v4906 = vpop.f32.mrf.mxu0
      %v4907 = vadd.f32 0.0, %v4906
      %4908 = vmatmul.f32.gmra.mxu0 %v4794
      %v4909 = vpop.f32.mrf.mxu0
      %v4910 = vadd.f32 0.0, %v4909
      %4911 = vmatmul.f32.gmra.mxu0 %v4797
      %v4912 = vpop.f32.mrf.mxu0
      %v4913 = vadd.f32 0.0, %v4912
      %4914 = vmatmul.f32.gmra.mxu0 %v4800
      %v4915 = vpop.f32.mrf.mxu0
      %v4916 = vadd.f32 0.0, %v4915
      %4917 = vmatmul.f32.gmra.mxu0 %v4803
      %v4918 = vpop.f32.mrf.mxu0
      %v4919 = vadd.f32 0.0, %v4918
      %4920 = vmatmul.f32.gmra.mxu0 %v4806
      %v4921 = vpop.f32.mrf.mxu0
      %v4922 = vadd.f32 0.0, %v4921
      %4923 = vmatmul.f32.gmra.mxu0 %v4809
      %v4924 = vpop.f32.mrf.mxu0
      %v4925 = vadd.f32 0.0, %v4924
      %4926 = vmatmul.f32.gmra.mxu0 %v4812
      %v4927 = vpop.f32.mrf.mxu0
      %v4928 = vadd.f32 0.0, %v4927
      %4929 = vmatmul.f32.gmra.mxu0 %v4815
      %v4930 = vpop.f32.mrf.mxu0
      %v4931 = vadd.f32 0.0, %v4930
      %4932 = vmatmul.f32.gmra.mxu0 %v4818
      %v4933 = vpop.f32.mrf.mxu0
      %v4934 = vadd.f32 0.0, %v4933
      %4935 = vmatmul.f32.gmra.mxu0 %v4821
      %v4936 = vpop.f32.mrf.mxu0
      %v4937 = vadd.f32 0.0, %v4936
      %4938 = vmatmul.f32.gmra.mxu0 %v4824
      %v4939 = vpop.f32.mrf.mxu0
      %v4940 = vadd.f32 0.0, %v4939
      %4941 = vmatmul.f32.gmra.mxu0 %v4827
      %v4942 = vpop.f32.mrf.mxu0
      %v4943 = vadd.f32 0.0, %v4942
      %4944 = vmatmul.f32.gmra.mxu0 %v4830
      %v4945 = vpop.f32.mrf.mxu0
      %v4946 = vadd.f32 0.0, %v4945
      %4947 = vmatmul.f32.gmra.mxu0 %v4833
      %v4948 = vpop.f32.mrf.mxu0
      %v4949 = vadd.f32 0.0, %v4948
      %4950 = vmatmul.f32.gmra.mxu0 %v4836
      %v4951 = vpop.f32.mrf.mxu0
      %v4952 = vadd.f32 0.0, %v4951
      %4953 = vmatmul.f32.gmra.mxu0 %v4839
      %v4954 = vpop.f32.mrf.mxu0
      %v4955 = vadd.f32 0.0, %v4954
      %4956 = vmatmul.f32.gmra.mxu0 %v4842
      %v4957 = vpop.f32.mrf.mxu0
      %v4958 = vadd.f32 0.0, %v4957
      %4959 = vmatmul.f32.gmra.mxu0 %v4845
      %v4960 = vpop.f32.mrf.mxu0
      %v4961 = vadd.f32 0.0, %v4960
      %4962 = vmatmul.f32.gmra.mxu0 %v4848
      %v4963 = vpop.f32.mrf.mxu0
      %v4964 = vadd.f32 0.0, %v4963
      %4965 = vmatmul.f32.gmra.mxu0 %v4851
      %v4966 = vpop.f32.mrf.mxu0
      %v4967 = vadd.f32 0.0, %v4966
      %4968 = vmatmul.f32.gmra.mxu0 %v4854
      %v4969 = vpop.f32.mrf.mxu0
      %v4970 = vadd.f32 0.0, %v4969
      %4971 = vmatmul.f32.gmra.mxu0 %v4857
      %v4972 = vpop.f32.mrf.mxu0
      %v4973 = vadd.f32 0.0, %v4972
      %4974 = vmatmul.f32.gmra.mxu0 %v4860
      %v4975 = vpop.f32.mrf.mxu0
      %v4976 = vadd.f32 0.0, %v4975
      %4977 = vmatmul.f32.gmra.mxu0 %v4863
      %v4978 = vpop.f32.mrf.mxu0
      %v4979 = vadd.f32 0.0, %v4978
      %4980 = vmatmul.f32.gmra.mxu0 %v4866
      %v4981 = vpop.f32.mrf.mxu0
      %v4982 = vadd.f32 0.0, %v4981
      %4983 = vdwg.mxu0
      %v4984 = vadd.f32 %v4674, %v4889
      %v4985 = vadd.f32 %v4675, %v4892
      %v4986 = vadd.f32 %v4676, %v4895
      %v4987 = vadd.f32 %v4677, %v4898
      %v4988 = vadd.f32 %v4678, %v4901
      %v4989 = vadd.f32 %v4679, %v4904
      %v4990 = vadd.f32 %v4680, %v4907
      %v4991 = vadd.f32 %v4681, %v4910
      %v4992 = vadd.f32 %v4682, %v4913
      %v4993 = vadd.f32 %v4683, %v4916
      %v4994 = vadd.f32 %v4684, %v4919
      %v4995 = vadd.f32 %v4685, %v4922
      %v4996 = vadd.f32 %v4686, %v4925
      %v4997 = vadd.f32 %v4687, %v4928
      %v4998 = vadd.f32 %v4688, %v4931
      %v4999 = vadd.f32 %v4689, %v4934
      %v5000 = vadd.f32 %v4690, %v4937
      %v5001 = vadd.f32 %v4691, %v4940
      %v5002 = vadd.f32 %v4692, %v4943
      %v5003 = vadd.f32 %v4693, %v4946
      %v5004 = vadd.f32 %v4694, %v4949
      %v5005 = vadd.f32 %v4695, %v4952
      %v5006 = vadd.f32 %v4696, %v4955
      %v5007 = vadd.f32 %v4697, %v4958
      %v5008 = vadd.f32 %v4698, %v4961
      %v5009 = vadd.f32 %v4699, %v4964
      %v5010 = vadd.f32 %v4700, %v4967
      %v5011 = vadd.f32 %v4701, %v4970
      %v5012 = vadd.f32 %v4702, %v4973
      %v5013 = vadd.f32 %v4703, %v4976
      %v5014 = vadd.f32 %v4704, %v4979
      %v5015 = vadd.f32 %v4705, %v4982
      %5016 = vst.msk [vmem:[%s1310] sm:$0xff] %vm257, %v4984
      %5017 = vst.msk [vmem:[%s1310 + $0x8] sm:$0xff] %vm257, %v4985
      %5018 = vst.msk [vmem:[%s1310 + $0x10] sm:$0xff] %vm257, %v4986
      %5019 = vst.msk [vmem:[%s1310 + $0x18] sm:$0xff] %vm257, %v4987
      %5020 = vst.msk [vmem:[%s1310 + $0x20] sm:$0xff] %vm257, %v4988
      %5021 = vst.msk [vmem:[%s1310 + $0x28] sm:$0xff] %vm257, %v4989
      %5022 = vst.msk [vmem:[%s1310 + $0x30] sm:$0xff] %vm257, %v4990
      %5023 = vst.msk [vmem:[%s1310 + $0x38] sm:$0xff] %vm257, %v4991
      %5024 = vst.msk [vmem:[%s1310 + $0x40] sm:$0xff] %vm257, %v4992
      %5025 = vst.msk [vmem:[%s1310 + $0x48] sm:$0xff] %vm257, %v4993
      %5026 = vst.msk [vmem:[%s1310 + $0x50] sm:$0xff] %vm257, %v4994
      %5027 = vst.msk [vmem:[%s1310 + $0x58] sm:$0xff] %vm257, %v4995
      %5028 = vst.msk [vmem:[%s1310 + $0x60] sm:$0xff] %vm257, %v4996
      %5029 = vst.msk [vmem:[%s1310 + $0x68] sm:$0xff] %vm257, %v4997
      %5030 = vst.msk [vmem:[%s1310 + $0x70] sm:$0xff] %vm257, %v4998
      %5031 = vst.msk [vmem:[%s1310 + $0x78] sm:$0xff] %vm257, %v4999
      %5032 = vst.msk [vmem:[%s1310 + $0x80] sm:$0xff] %vm257, %v5000
      %5033 = vst.msk [vmem:[%s1310 + $0x88] sm:$0xff] %vm257, %v5001
      %5034 = vst.msk [vmem:[%s1310 + $0x90] sm:$0xff] %vm257, %v5002
      %5035 = vst.msk [vmem:[%s1310 + $0x98] sm:$0xff] %vm257, %v5003
      %5036 = vst.msk [vmem:[%s1310 + $0xa0] sm:$0xff] %vm257, %v5004
      %5037 = vst.msk [vmem:[%s1310 + $0xa8] sm:$0xff] %vm257, %v5005
      %5038 = vst.msk [vmem:[%s1310 + $0xb0] sm:$0xff] %vm257, %v5006
      %5039 = vst.msk [vmem:[%s1310 + $0xb8] sm:$0xff] %vm257, %v5007
      %5040 = vst.msk [vmem:[%s1310 + $0xc0] sm:$0xff] %vm257, %v5008
      %5041 = vst.msk [vmem:[%s1310 + $0xc8] sm:$0xff] %vm257, %v5009
      %5042 = vst.msk [vmem:[%s1310 + $0xd0] sm:$0xff] %vm257, %v5010
      %5043 = vst.msk [vmem:[%s1310 + $0xd8] sm:$0xff] %vm257, %v5011
      %5044 = vst.msk [vmem:[%s1310 + $0xe0] sm:$0xff] %vm257, %v5012
      %5045 = vst.msk [vmem:[%s1310 + $0xe8] sm:$0xff] %vm257, %v5013
      %5046 = vst.msk [vmem:[%s1310 + $0xf0] sm:$0xff] %vm257, %v5014
      %5047 = vst.msk [vmem:[%s1310 + $0xf8] sm:$0xff] %vm257, %v5015
      %v5048 = vld [vmem:[%s1439] sm:$0xff]
      %v5049 = vld [vmem:[%s1439 + $0x8] sm:$0xff]
      %v5050 = vld [vmem:[%s1439 + $0x10] sm:$0xff]
      %v5051 = vld [vmem:[%s1439 + $0x18] sm:$0xff]
      %v5052 = vld [vmem:[%s1439 + $0x20] sm:$0xff]
      %v5053 = vld [vmem:[%s1439 + $0x28] sm:$0xff]
      %v5054 = vld [vmem:[%s1439 + $0x30] sm:$0xff]
      %v5055 = vld [vmem:[%s1439 + $0x38] sm:$0xff]
      %v5056 = vld [vmem:[%s1439 + $0x40] sm:$0xff]
      %v5057 = vld [vmem:[%s1439 + $0x48] sm:$0xff]
      %v5058 = vld [vmem:[%s1439 + $0x50] sm:$0xff]
      %v5059 = vld [vmem:[%s1439 + $0x58] sm:$0xff]
      %v5060 = vld [vmem:[%s1439 + $0x60] sm:$0xff]
      %v5061 = vld [vmem:[%s1439 + $0x68] sm:$0xff]
      %v5062 = vld [vmem:[%s1439 + $0x70] sm:$0xff]
      %v5063 = vld [vmem:[%s1439 + $0x78] sm:$0xff]
      %v5064 = vld [vmem:[%s1439 + $0x80] sm:$0xff]
      %v5065 = vld [vmem:[%s1439 + $0x88] sm:$0xff]
      %v5066 = vld [vmem:[%s1439 + $0x90] sm:$0xff]
      %v5067 = vld [vmem:[%s1439 + $0x98] sm:$0xff]
      %v5068 = vld [vmem:[%s1439 + $0xa0] sm:$0xff]
      %v5069 = vld [vmem:[%s1439 + $0xa8] sm:$0xff]
      %v5070 = vld [vmem:[%s1439 + $0xb0] sm:$0xff]
      %v5071 = vld [vmem:[%s1439 + $0xb8] sm:$0xff]
      %v5072 = vld [vmem:[%s1439 + $0xc0] sm:$0xff]
      %v5073 = vld [vmem:[%s1439 + $0xc8] sm:$0xff]
      %v5074 = vld [vmem:[%s1439 + $0xd0] sm:$0xff]
      %v5075 = vld [vmem:[%s1439 + $0xd8] sm:$0xff]
      %v5076 = vld [vmem:[%s1439 + $0xe0] sm:$0xff]
      %v5077 = vld [vmem:[%s1439 + $0xe8] sm:$0xff]
      %v5078 = vld [vmem:[%s1439 + $0xf0] sm:$0xff]
      %v5079 = vld [vmem:[%s1439 + $0xf8] sm:$0xff]
      %v5080 = vld [vmem:[#allocation2 + $0x29] sm:$0xff]
      %v5081 = vld [vmem:[#allocation2 + $0x31] sm:$0xff]
      %v5082 = vld [vmem:[#allocation2 + $0x39] sm:$0xff]
      %v5083 = vld [vmem:[#allocation2 + $0x41] sm:$0xff]
      %v5084 = vld [vmem:[#allocation2 + $0x49] sm:$0xff]
      %v5085 = vld [vmem:[#allocation2 + $0x51] sm:$0xff]
      %v5086 = vld [vmem:[#allocation2 + $0x59] sm:$0xff]
      %v5087 = vld [vmem:[#allocation2 + $0x61] sm:$0xff]
      %v5088 = vld [vmem:[#allocation2 + $0x69] sm:$0xff]
      %v5089 = vld [vmem:[#allocation2 + $0x71] sm:$0xff]
      %v5090 = vld [vmem:[#allocation2 + $0x79] sm:$0xff]
      %v5091 = vld [vmem:[#allocation2 + $0x81] sm:$0xff]
      %v5092 = vld [vmem:[#allocation2 + $0x89] sm:$0xff]
      %v5093 = vld [vmem:[#allocation2 + $0x91] sm:$0xff]
      %v5094 = vld [vmem:[#allocation2 + $0x99] sm:$0xff]
      %v5095 = vld [vmem:[#allocation2 + $0xa1] sm:$0xff]
      %v5096 = vld [vmem:[#allocation2 + $0xa9] sm:$0xff]
      %v5097 = vld [vmem:[#allocation2 + $0xb1] sm:$0xff]
      %v5098 = vld [vmem:[#allocation2 + $0xb9] sm:$0xff]
      %v5099 = vld [vmem:[#allocation2 + $0xc1] sm:$0xff]
      %v5100 = vld [vmem:[#allocation2 + $0xc9] sm:$0xff]
      %v5101 = vld [vmem:[#allocation2 + $0xd1] sm:$0xff]
      %v5102 = vld [vmem:[#allocation2 + $0xd9] sm:$0xff]
      %v5103 = vld [vmem:[#allocation2 + $0xe1] sm:$0xff]
      %v5104 = vld [vmem:[#allocation2 + $0xe9] sm:$0xff]
      %v5105 = vld [vmem:[#allocation2 + $0xf1] sm:$0xff]
      %v5106 = vld [vmem:[#allocation2 + $0xf9] sm:$0xff]
      %v5107 = vld [vmem:[#allocation2 + $0x101] sm:$0xff]
      %v5108 = vld [vmem:[#allocation2 + $0x109] sm:$0xff]
      %v5109 = vld [vmem:[#allocation2 + $0x111] sm:$0xff]
      %v5110 = vld [vmem:[#allocation2 + $0x119] sm:$0xff]
      %v5111 = vld [vmem:[#allocation2 + $0x121] sm:$0xff]
      %v5112 = vsel %vm3329, %v5080, 0.0
      %v5113 = vsel %vm3330, %v5081, 0.0
      %v5114 = vsel %vm3331, %v5082, 0.0
      %v5115 = vsel %vm3332, %v5083, 0.0
      %v5116 = vsel %vm3333, %v5084, 0.0
      %v5117 = vsel %vm3334, %v5085, 0.0
      %v5118 = vsel %vm3335, %v5086, 0.0
      %v5119 = vsel %vm3336, %v5087, 0.0
      %v5120 = vsel %vm3337, %v5088, 0.0
      %v5121 = vsel %vm3338, %v5089, 0.0
      %v5122 = vsel %vm3339, %v5090, 0.0
      %v5123 = vsel %vm3340, %v5091, 0.0
      %v5124 = vsel %vm3341, %v5092, 0.0
      %v5125 = vsel %vm3342, %v5093, 0.0
      %v5126 = vsel %vm3343, %v5094, 0.0
      %v5127 = vsel %vm3344, %v5095, 0.0
      %v5128 = vsel %vm3345, %v5096, 0.0
      %v5129 = vsel %vm3346, %v5097, 0.0
      %v5130 = vsel %vm3347, %v5098, 0.0
      %v5131 = vsel %vm3348, %v5099, 0.0
      %v5132 = vsel %vm3349, %v5100, 0.0
      %v5133 = vsel %vm3350, %v5101, 0.0
      %v5134 = vsel %vm3351, %v5102, 0.0
      %v5135 = vsel %vm3352, %v5103, 0.0
      %v5136 = vsel %vm3353, %v5104, 0.0
      %v5137 = vsel %vm3354, %v5105, 0.0
      %v5138 = vsel %vm3355, %v5106, 0.0
      %v5139 = vsel %vm3356, %v5107, 0.0
      %v5140 = vsel %vm3357, %v5108, 0.0
      %v5141 = vsel %vm3358, %v5109, 0.0
      %v5142 = vsel %vm3359, %v5110, 0.0
      %v5143 = vsel %vm3360, %v5111, 0.0
      %s5144 = scalar_lea.vmem %s3, 12
      %v5145 = vld [vmem:[%s5144] sm:$0xf]
      %v5147 = vsel %vm257, %v5112, 0
      %v5150 = vsel %vm257, %v5113, 0
      %v5153 = vsel %vm257, %v5114, 0
      %v5156 = vsel %vm257, %v5115, 0
      %v5159 = vsel %vm257, %v5116, 0
      %v5162 = vsel %vm257, %v5117, 0
      %v5165 = vsel %vm257, %v5118, 0
      %v5168 = vsel %vm257, %v5119, 0
      %v5171 = vsel %vm257, %v5120, 0
      %v5174 = vsel %vm257, %v5121, 0
      %v5177 = vsel %vm257, %v5122, 0
      %v5180 = vsel %vm257, %v5123, 0
      %v5183 = vsel %vm257, %v5124, 0
      %v5186 = vsel %vm257, %v5125, 0
      %v5189 = vsel %vm257, %v5126, 0
      %v5192 = vsel %vm257, %v5127, 0
      %v5195 = vsel %vm257, %v5128, 0
      %v5198 = vsel %vm257, %v5129, 0
      %v5201 = vsel %vm257, %v5130, 0
      %v5204 = vsel %vm257, %v5131, 0
      %v5207 = vsel %vm257, %v5132, 0
      %v5210 = vsel %vm257, %v5133, 0
      %v5213 = vsel %vm257, %v5134, 0
      %v5216 = vsel %vm257, %v5135, 0
      %v5219 = vsel %vm257, %v5136, 0
      %v5222 = vsel %vm257, %v5137, 0
      %v5225 = vsel %vm257, %v5138, 0
      %v5228 = vsel %vm257, %v5139, 0
      %v5231 = vsel %vm257, %v5140, 0
      %v5234 = vsel %vm257, %v5141, 0
      %v5237 = vsel %vm257, %v5142, 0
      %v5240 = vsel %vm257, %v5143, 0
      %v5243 = vsel %vm904, %v5145, 0
      %5245 = vmatpush.msra.mxu0 0.0
      %5246 = vmatpush.msra.mxu0 0.0
      %5247 = vmatpush.msra.mxu0 0.0
      %5248 = vmatpush.msra.mxu0 0.0
      %5249 = vmatpush.msra.mxu0 0.0
      %5250 = vmatpush.msra.mxu0 0.0
      %5251 = vmatpush.msra.mxu0 0.0
      %5252 = vmatpush.msra.mxu0 0.0
      %5253 = vmatpush.msra.mxu0 0.0
      %5254 = vmatpush.msra.mxu0 0.0
      %5255 = vmatpush.msra.mxu0 0.0
      %5256 = vmatpush.msra.mxu0 0.0
      %5257 = vmatpush.msra.mxu0 0.0
      %5258 = vmatpush.msra.mxu0 0.0
      %5259 = vmatpush.msra.mxu0 0.0
      %5260 = vmatpush.msra.mxu0 %v5243
      %5261 = vmatmul.f32.gmra.mxu0 %v5147
      %v5262 = vpop.f32.mrf.mxu0
      %v5263 = vadd.f32 0.0, %v5262
      %5264 = vmatmul.f32.gmra.mxu0 %v5150
      %v5265 = vpop.f32.mrf.mxu0
      %v5266 = vadd.f32 0.0, %v5265
      %5267 = vmatmul.f32.gmra.mxu0 %v5153
      %v5268 = vpop.f32.mrf.mxu0
      %v5269 = vadd.f32 0.0, %v5268
      %5270 = vmatmul.f32.gmra.mxu0 %v5156
      %v5271 = vpop.f32.mrf.mxu0
      %v5272 = vadd.f32 0.0, %v5271
      %5273 = vmatmul.f32.gmra.mxu0 %v5159
      %v5274 = vpop.f32.mrf.mxu0
      %v5275 = vadd.f32 0.0, %v5274
      %5276 = vmatmul.f32.gmra.mxu0 %v5162
      %v5277 = vpop.f32.mrf.mxu0
      %v5278 = vadd.f32 0.0, %v5277
      %5279 = vmatmul.f32.gmra.mxu0 %v5165
      %v5280 = vpop.f32.mrf.mxu0
      %v5281 = vadd.f32 0.0, %v5280
      %5282 = vmatmul.f32.gmra.mxu0 %v5168
      %v5283 = vpop.f32.mrf.mxu0
      %v5284 = vadd.f32 0.0, %v5283
      %5285 = vmatmul.f32.gmra.mxu0 %v5171
      %v5286 = vpop.f32.mrf.mxu0
      %v5287 = vadd.f32 0.0, %v5286
      %5288 = vmatmul.f32.gmra.mxu0 %v5174
      %v5289 = vpop.f32.mrf.mxu0
      %v5290 = vadd.f32 0.0, %v5289
      %5291 = vmatmul.f32.gmra.mxu0 %v5177
      %v5292 = vpop.f32.mrf.mxu0
      %v5293 = vadd.f32 0.0, %v5292
      %5294 = vmatmul.f32.gmra.mxu0 %v5180
      %v5295 = vpop.f32.mrf.mxu0
      %v5296 = vadd.f32 0.0, %v5295
      %5297 = vmatmul.f32.gmra.mxu0 %v5183
      %v5298 = vpop.f32.mrf.mxu0
      %v5299 = vadd.f32 0.0, %v5298
      %5300 = vmatmul.f32.gmra.mxu0 %v5186
      %v5301 = vpop.f32.mrf.mxu0
      %v5302 = vadd.f32 0.0, %v5301
      %5303 = vmatmul.f32.gmra.mxu0 %v5189
      %v5304 = vpop.f32.mrf.mxu0
      %v5305 = vadd.f32 0.0, %v5304
      %5306 = vmatmul.f32.gmra.mxu0 %v5192
      %v5307 = vpop.f32.mrf.mxu0
      %v5308 = vadd.f32 0.0, %v5307
      %5309 = vmatmul.f32.gmra.mxu0 %v5195
      %v5310 = vpop.f32.mrf.mxu0
      %v5311 = vadd.f32 0.0, %v5310
      %5312 = vmatmul.f32.gmra.mxu0 %v5198
      %v5313 = vpop.f32.mrf.mxu0
      %v5314 = vadd.f32 0.0, %v5313
      %5315 = vmatmul.f32.gmra.mxu0 %v5201
      %v5316 = vpop.f32.mrf.mxu0
      %v5317 = vadd.f32 0.0, %v5316
      %5318 = vmatmul.f32.gmra.mxu0 %v5204
      %v5319 = vpop.f32.mrf.mxu0
      %v5320 = vadd.f32 0.0, %v5319
      %5321 = vmatmul.f32.gmra.mxu0 %v5207
      %v5322 = vpop.f32.mrf.mxu0
      %v5323 = vadd.f32 0.0, %v5322
      %5324 = vmatmul.f32.gmra.mxu0 %v5210
      %v5325 = vpop.f32.mrf.mxu0
      %v5326 = vadd.f32 0.0, %v5325
      %5327 = vmatmul.f32.gmra.mxu0 %v5213
      %v5328 = vpop.f32.mrf.mxu0
      %v5329 = vadd.f32 0.0, %v5328
      %5330 = vmatmul.f32.gmra.mxu0 %v5216
      %v5331 = vpop.f32.mrf.mxu0
      %v5332 = vadd.f32 0.0, %v5331
      %5333 = vmatmul.f32.gmra.mxu0 %v5219
      %v5334 = vpop.f32.mrf.mxu0
      %v5335 = vadd.f32 0.0, %v5334
      %5336 = vmatmul.f32.gmra.mxu0 %v5222
      %v5337 = vpop.f32.mrf.mxu0
      %v5338 = vadd.f32 0.0, %v5337
      %5339 = vmatmul.f32.gmra.mxu0 %v5225
      %v5340 = vpop.f32.mrf.mxu0
      %v5341 = vadd.f32 0.0, %v5340
      %5342 = vmatmul.f32.gmra.mxu0 %v5228
      %v5343 = vpop.f32.mrf.mxu0
      %v5344 = vadd.f32 0.0, %v5343
      %5345 = vmatmul.f32.gmra.mxu0 %v5231
      %v5346 = vpop.f32.mrf.mxu0
      %v5347 = vadd.f32 0.0, %v5346
      %5348 = vmatmul.f32.gmra.mxu0 %v5234
      %v5349 = vpop.f32.mrf.mxu0
      %v5350 = vadd.f32 0.0, %v5349
      %5351 = vmatmul.f32.gmra.mxu0 %v5237
      %v5352 = vpop.f32.mrf.mxu0
      %v5353 = vadd.f32 0.0, %v5352
      %5354 = vmatmul.f32.gmra.mxu0 %v5240
      %v5355 = vpop.f32.mrf.mxu0
      %v5356 = vadd.f32 0.0, %v5355
      %5357 = vdwg.mxu0
      %v5358 = vadd.f32 %v5048, %v5263
      %v5359 = vadd.f32 %v5049, %v5266
      %v5360 = vadd.f32 %v5050, %v5269
      %v5361 = vadd.f32 %v5051, %v5272
      %v5362 = vadd.f32 %v5052, %v5275
      %v5363 = vadd.f32 %v5053, %v5278
      %v5364 = vadd.f32 %v5054, %v5281
      %v5365 = vadd.f32 %v5055, %v5284
      %v5366 = vadd.f32 %v5056, %v5287
      %v5367 = vadd.f32 %v5057, %v5290
      %v5368 = vadd.f32 %v5058, %v5293
      %v5369 = vadd.f32 %v5059, %v5296
      %v5370 = vadd.f32 %v5060, %v5299
      %v5371 = vadd.f32 %v5061, %v5302
      %v5372 = vadd.f32 %v5062, %v5305
      %v5373 = vadd.f32 %v5063, %v5308
      %v5374 = vadd.f32 %v5064, %v5311
      %v5375 = vadd.f32 %v5065, %v5314
      %v5376 = vadd.f32 %v5066, %v5317
      %v5377 = vadd.f32 %v5067, %v5320
      %v5378 = vadd.f32 %v5068, %v5323
      %v5379 = vadd.f32 %v5069, %v5326
      %v5380 = vadd.f32 %v5070, %v5329
      %v5381 = vadd.f32 %v5071, %v5332
      %v5382 = vadd.f32 %v5072, %v5335
      %v5383 = vadd.f32 %v5073, %v5338
      %v5384 = vadd.f32 %v5074, %v5341
      %v5385 = vadd.f32 %v5075, %v5344
      %v5386 = vadd.f32 %v5076, %v5347
      %v5387 = vadd.f32 %v5077, %v5350
      %v5388 = vadd.f32 %v5078, %v5353
      %v5389 = vadd.f32 %v5079, %v5356
      %5390 = vst.msk [vmem:[%s1439] sm:$0xff] %vm257, %v5358
      %5391 = vst.msk [vmem:[%s1439 + $0x8] sm:$0xff] %vm257, %v5359
      %5392 = vst.msk [vmem:[%s1439 + $0x10] sm:$0xff] %vm257, %v5360
      %5393 = vst.msk [vmem:[%s1439 + $0x18] sm:$0xff] %vm257, %v5361
      %5394 = vst.msk [vmem:[%s1439 + $0x20] sm:$0xff] %vm257, %v5362
      %5395 = vst.msk [vmem:[%s1439 + $0x28] sm:$0xff] %vm257, %v5363
      %5396 = vst.msk [vmem:[%s1439 + $0x30] sm:$0xff] %vm257, %v5364
      %5397 = vst.msk [vmem:[%s1439 + $0x38] sm:$0xff] %vm257, %v5365
      %5398 = vst.msk [vmem:[%s1439 + $0x40] sm:$0xff] %vm257, %v5366
      %5399 = vst.msk [vmem:[%s1439 + $0x48] sm:$0xff] %vm257, %v5367
      %5400 = vst.msk [vmem:[%s1439 + $0x50] sm:$0xff] %vm257, %v5368
      %5401 = vst.msk [vmem:[%s1439 + $0x58] sm:$0xff] %vm257, %v5369
      %5402 = vst.msk [vmem:[%s1439 + $0x60] sm:$0xff] %vm257, %v5370
      %5403 = vst.msk [vmem:[%s1439 + $0x68] sm:$0xff] %vm257, %v5371
      %5404 = vst.msk [vmem:[%s1439 + $0x70] sm:$0xff] %vm257, %v5372
      %5405 = vst.msk [vmem:[%s1439 + $0x78] sm:$0xff] %vm257, %v5373
      %5406 = vst.msk [vmem:[%s1439 + $0x80] sm:$0xff] %vm257, %v5374
      %5407 = vst.msk [vmem:[%s1439 + $0x88] sm:$0xff] %vm257, %v5375
      %5408 = vst.msk [vmem:[%s1439 + $0x90] sm:$0xff] %vm257, %v5376
      %5409 = vst.msk [vmem:[%s1439 + $0x98] sm:$0xff] %vm257, %v5377
      %5410 = vst.msk [vmem:[%s1439 + $0xa0] sm:$0xff] %vm257, %v5378
      %5411 = vst.msk [vmem:[%s1439 + $0xa8] sm:$0xff] %vm257, %v5379
      %5412 = vst.msk [vmem:[%s1439 + $0xb0] sm:$0xff] %vm257, %v5380
      %5413 = vst.msk [vmem:[%s1439 + $0xb8] sm:$0xff] %vm257, %v5381
      %5414 = vst.msk [vmem:[%s1439 + $0xc0] sm:$0xff] %vm257, %v5382
      %5415 = vst.msk [vmem:[%s1439 + $0xc8] sm:$0xff] %vm257, %v5383
      %5416 = vst.msk [vmem:[%s1439 + $0xd0] sm:$0xff] %vm257, %v5384
      %5417 = vst.msk [vmem:[%s1439 + $0xd8] sm:$0xff] %vm257, %v5385
      %5418 = vst.msk [vmem:[%s1439 + $0xe0] sm:$0xff] %vm257, %v5386
      %5419 = vst.msk [vmem:[%s1439 + $0xe8] sm:$0xff] %vm257, %v5387
      %5420 = vst.msk [vmem:[%s1439 + $0xf0] sm:$0xff] %vm257, %v5388
      %5421 = vst.msk [vmem:[%s1439 + $0xf8] sm:$0xff] %vm257, %v5389
      %v5422 = vld [vmem:[#allocation3] sm:$0xff]
      %v5423 = vld [vmem:[#allocation3 + $0x8] sm:$0xff]
      %v5424 = vld [vmem:[#allocation3 + $0x10] sm:$0xff]
      %v5425 = vld [vmem:[#allocation3 + $0x18] sm:$0xff]
      %v5426 = vld [vmem:[#allocation3 + $0x20] sm:$0xff]
      %v5427 = vld [vmem:[#allocation3 + $0x28] sm:$0xff]
      %v5428 = vld [vmem:[#allocation3 + $0x30] sm:$0xff]
      %v5429 = vld [vmem:[#allocation3 + $0x38] sm:$0xff]
      %v5430 = vld [vmem:[#allocation3 + $0x40] sm:$0xff]
      %v5431 = vld [vmem:[#allocation3 + $0x48] sm:$0xff]
      %v5432 = vld [vmem:[#allocation3 + $0x50] sm:$0xff]
      %v5433 = vld [vmem:[#allocation3 + $0x58] sm:$0xff]
      %v5434 = vld [vmem:[#allocation3 + $0x60] sm:$0xff]
      %v5435 = vld [vmem:[#allocation3 + $0x68] sm:$0xff]
      %v5436 = vld [vmem:[#allocation3 + $0x70] sm:$0xff]
      %v5437 = vld [vmem:[#allocation3 + $0x78] sm:$0xff]
      %v5438 = vld [vmem:[#allocation3 + $0x80] sm:$0xff]
      %v5439 = vld [vmem:[#allocation3 + $0x88] sm:$0xff]
      %v5440 = vld [vmem:[#allocation3 + $0x90] sm:$0xff]
      %v5441 = vld [vmem:[#allocation3 + $0x98] sm:$0xff]
      %v5442 = vld [vmem:[#allocation3 + $0xa0] sm:$0xff]
      %v5443 = vld [vmem:[#allocation3 + $0xa8] sm:$0xff]
      %v5444 = vld [vmem:[#allocation3 + $0xb0] sm:$0xff]
      %v5445 = vld [vmem:[#allocation3 + $0xb8] sm:$0xff]
      %v5446 = vld [vmem:[#allocation3 + $0xc0] sm:$0xff]
      %v5447 = vld [vmem:[#allocation3 + $0xc8] sm:$0xff]
      %v5448 = vld [vmem:[#allocation3 + $0xd0] sm:$0xff]
      %v5449 = vld [vmem:[#allocation3 + $0xd8] sm:$0xff]
      %v5450 = vld [vmem:[#allocation3 + $0xe0] sm:$0xff]
      %v5451 = vld [vmem:[#allocation3 + $0xe8] sm:$0xff]
      %v5452 = vld [vmem:[#allocation3 + $0xf0] sm:$0xff]
      %v5453 = vld [vmem:[#allocation3 + $0xf8] sm:$0xff]
      %v5454 = vld [vmem:[%s4] sm:$0x1]
      %v5456 = vperm.slane %v5454, 0
      %v5458 = vadd.f32 %v5422, %v5456
      %v5459 = vadd.f32 %v5423, %v5456
      %v5460 = vadd.f32 %v5424, %v5456
      %v5461 = vadd.f32 %v5425, %v5456
      %v5462 = vadd.f32 %v5426, %v5456
      %v5463 = vadd.f32 %v5427, %v5456
      %v5464 = vadd.f32 %v5428, %v5456
      %v5465 = vadd.f32 %v5429, %v5456
      %v5466 = vadd.f32 %v5430, %v5456
      %v5467 = vadd.f32 %v5431, %v5456
      %v5468 = vadd.f32 %v5432, %v5456
      %v5469 = vadd.f32 %v5433, %v5456
      %v5470 = vadd.f32 %v5434, %v5456
      %v5471 = vadd.f32 %v5435, %v5456
      %v5472 = vadd.f32 %v5436, %v5456
      %v5473 = vadd.f32 %v5437, %v5456
      %v5474 = vadd.f32 %v5438, %v5456
      %v5475 = vadd.f32 %v5439, %v5456
      %v5476 = vadd.f32 %v5440, %v5456
      %v5477 = vadd.f32 %v5441, %v5456
      %v5478 = vadd.f32 %v5442, %v5456
      %v5479 = vadd.f32 %v5443, %v5456
      %v5480 = vadd.f32 %v5444, %v5456
      %v5481 = vadd.f32 %v5445, %v5456
      %v5482 = vadd.f32 %v5446, %v5456
      %v5483 = vadd.f32 %v5447, %v5456
      %v5484 = vadd.f32 %v5448, %v5456
      %v5485 = vadd.f32 %v5449, %v5456
      %v5486 = vadd.f32 %v5450, %v5456
      %v5487 = vadd.f32 %v5451, %v5456
      %v5488 = vadd.f32 %v5452, %v5456
      %v5489 = vadd.f32 %v5453, %v5456
      %5490 = vst.msk [vmem:[%s224] sm:$0xff] %vm257, %v5458
      %5491 = vst.msk [vmem:[%s224 + $0x8] sm:$0xff] %vm257, %v5459
      %5492 = vst.msk [vmem:[%s224 + $0x10] sm:$0xff] %vm257, %v5460
      %5493 = vst.msk [vmem:[%s224 + $0x18] sm:$0xff] %vm257, %v5461
      %5494 = vst.msk [vmem:[%s224 + $0x20] sm:$0xff] %vm257, %v5462
      %5495 = vst.msk [vmem:[%s224 + $0x28] sm:$0xff] %vm257, %v5463
      %5496 = vst.msk [vmem:[%s224 + $0x30] sm:$0xff] %vm257, %v5464
      %5497 = vst.msk [vmem:[%s224 + $0x38] sm:$0xff] %vm257, %v5465
      %5498 = vst.msk [vmem:[%s224 + $0x40] sm:$0xff] %vm257, %v5466
      %5499 = vst.msk [vmem:[%s224 + $0x48] sm:$0xff] %vm257, %v5467
      %5500 = vst.msk [vmem:[%s224 + $0x50] sm:$0xff] %vm257, %v5468
      %5501 = vst.msk [vmem:[%s224 + $0x58] sm:$0xff] %vm257, %v5469
      %5502 = vst.msk [vmem:[%s224 + $0x60] sm:$0xff] %vm257, %v5470
      %5503 = vst.msk [vmem:[%s224 + $0x68] sm:$0xff] %vm257, %v5471
      %5504 = vst.msk [vmem:[%s224 + $0x70] sm:$0xff] %vm257, %v5472
      %5505 = vst.msk [vmem:[%s224 + $0x78] sm:$0xff] %vm257, %v5473
      %5506 = vst.msk [vmem:[%s224 + $0x80] sm:$0xff] %vm257, %v5474
      %5507 = vst.msk [vmem:[%s224 + $0x88] sm:$0xff] %vm257, %v5475
      %5508 = vst.msk [vmem:[%s224 + $0x90] sm:$0xff] %vm257, %v5476
      %5509 = vst.msk [vmem:[%s224 + $0x98] sm:$0xff] %vm257, %v5477
      %5510 = vst.msk [vmem:[%s224 + $0xa0] sm:$0xff] %vm257, %v5478
      %5511 = vst.msk [vmem:[%s224 + $0xa8] sm:$0xff] %vm257, %v5479
      %5512 = vst.msk [vmem:[%s224 + $0xb0] sm:$0xff] %vm257, %v5480
      %5513 = vst.msk [vmem:[%s224 + $0xb8] sm:$0xff] %vm257, %v5481
      %5514 = vst.msk [vmem:[%s224 + $0xc0] sm:$0xff] %vm257, %v5482
      %5515 = vst.msk [vmem:[%s224 + $0xc8] sm:$0xff] %vm257, %v5483
      %5516 = vst.msk [vmem:[%s224 + $0xd0] sm:$0xff] %vm257, %v5484
      %5517 = vst.msk [vmem:[%s224 + $0xd8] sm:$0xff] %vm257, %v5485
      %5518 = vst.msk [vmem:[%s224 + $0xe0] sm:$0xff] %vm257, %v5486
      %5519 = vst.msk [vmem:[%s224 + $0xe8] sm:$0xff] %vm257, %v5487
      %5520 = vst.msk [vmem:[%s224 + $0xf0] sm:$0xff] %vm257, %v5488
      %5521 = vst.msk [vmem:[%s224 + $0xf8] sm:$0xff] %vm257, %v5489
      %v5522 = vld [vmem:[%s1181] sm:$0xff]
      %v5523 = vld [vmem:[%s1181 + $0x8] sm:$0xff]
      %v5524 = vld [vmem:[%s1181 + $0x10] sm:$0xff]
      %v5525 = vld [vmem:[%s1181 + $0x18] sm:$0xff]
      %v5526 = vld [vmem:[%s1181 + $0x20] sm:$0xff]
      %v5527 = vld [vmem:[%s1181 + $0x28] sm:$0xff]
      %v5528 = vld [vmem:[%s1181 + $0x30] sm:$0xff]
      %v5529 = vld [vmem:[%s1181 + $0x38] sm:$0xff]
      %v5530 = vld [vmem:[%s1181 + $0x40] sm:$0xff]
      %v5531 = vld [vmem:[%s1181 + $0x48] sm:$0xff]
      %v5532 = vld [vmem:[%s1181 + $0x50] sm:$0xff]
      %v5533 = vld [vmem:[%s1181 + $0x58] sm:$0xff]
      %v5534 = vld [vmem:[%s1181 + $0x60] sm:$0xff]
      %v5535 = vld [vmem:[%s1181 + $0x68] sm:$0xff]
      %v5536 = vld [vmem:[%s1181 + $0x70] sm:$0xff]
      %v5537 = vld [vmem:[%s1181 + $0x78] sm:$0xff]
      %v5538 = vld [vmem:[%s1181 + $0x80] sm:$0xff]
      %v5539 = vld [vmem:[%s1181 + $0x88] sm:$0xff]
      %v5540 = vld [vmem:[%s1181 + $0x90] sm:$0xff]
      %v5541 = vld [vmem:[%s1181 + $0x98] sm:$0xff]
      %v5542 = vld [vmem:[%s1181 + $0xa0] sm:$0xff]
      %v5543 = vld [vmem:[%s1181 + $0xa8] sm:$0xff]
      %v5544 = vld [vmem:[%s1181 + $0xb0] sm:$0xff]
      %v5545 = vld [vmem:[%s1181 + $0xb8] sm:$0xff]
      %v5546 = vld [vmem:[%s1181 + $0xc0] sm:$0xff]
      %v5547 = vld [vmem:[%s1181 + $0xc8] sm:$0xff]
      %v5548 = vld [vmem:[%s1181 + $0xd0] sm:$0xff]
      %v5549 = vld [vmem:[%s1181 + $0xd8] sm:$0xff]
      %v5550 = vld [vmem:[%s1181 + $0xe0] sm:$0xff]
      %v5551 = vld [vmem:[%s1181 + $0xe8] sm:$0xff]
      %v5552 = vld [vmem:[%s1181 + $0xf0] sm:$0xff]
      %v5553 = vld [vmem:[%s1181 + $0xf8] sm:$0xff]
      %v5554 = vld [vmem:[%s4] sm:$0x1]
      %v5556 = vperm.slane %v5554, 0
      %v5558 = vadd.f32 %v5522, %v5556
      %v5559 = vadd.f32 %v5523, %v5556
      %v5560 = vadd.f32 %v5524, %v5556
      %v5561 = vadd.f32 %v5525, %v5556
      %v5562 = vadd.f32 %v5526, %v5556
      %v5563 = vadd.f32 %v5527, %v5556
      %v5564 = vadd.f32 %v5528, %v5556
      %v5565 = vadd.f32 %v5529, %v5556
      %v5566 = vadd.f32 %v5530, %v5556
      %v5567 = vadd.f32 %v5531, %v5556
      %v5568 = vadd.f32 %v5532, %v5556
      %v5569 = vadd.f32 %v5533, %v5556
      %v5570 = vadd.f32 %v5534, %v5556
      %v5571 = vadd.f32 %v5535, %v5556
      %v5572 = vadd.f32 %v5536, %v5556
      %v5573 = vadd.f32 %v5537, %v5556
      %v5574 = vadd.f32 %v5538, %v5556
      %v5575 = vadd.f32 %v5539, %v5556
      %v5576 = vadd.f32 %v5540, %v5556
      %v5577 = vadd.f32 %v5541, %v5556
      %v5578 = vadd.f32 %v5542, %v5556
      %v5579 = vadd.f32 %v5543, %v5556
      %v5580 = vadd.f32 %v5544, %v5556
      %v5581 = vadd.f32 %v5545, %v5556
      %v5582 = vadd.f32 %v5546, %v5556
      %v5583 = vadd.f32 %v5547, %v5556
      %v5584 = vadd.f32 %v5548, %v5556
      %v5585 = vadd.f32 %v5549, %v5556
      %v5586 = vadd.f32 %v5550, %v5556
      %v5587 = vadd.f32 %v5551, %v5556
      %v5588 = vadd.f32 %v5552, %v5556
      %v5589 = vadd.f32 %v5553, %v5556
      %s5590 = scalar_lea.vmem %s224, 256
      %5591 = vst.msk [vmem:[%s5590] sm:$0xff] %vm257, %v5558
      %5592 = vst.msk [vmem:[%s5590 + $0x8] sm:$0xff] %vm257, %v5559
      %5593 = vst.msk [vmem:[%s5590 + $0x10] sm:$0xff] %vm257, %v5560
      %5594 = vst.msk [vmem:[%s5590 + $0x18] sm:$0xff] %vm257, %v5561
      %5595 = vst.msk [vmem:[%s5590 + $0x20] sm:$0xff] %vm257, %v5562
      %5596 = vst.msk [vmem:[%s5590 + $0x28] sm:$0xff] %vm257, %v5563
      %5597 = vst.msk [vmem:[%s5590 + $0x30] sm:$0xff] %vm257, %v5564
      %5598 = vst.msk [vmem:[%s5590 + $0x38] sm:$0xff] %vm257, %v5565
      %5599 = vst.msk [vmem:[%s5590 + $0x40] sm:$0xff] %vm257, %v5566
      %5600 = vst.msk [vmem:[%s5590 + $0x48] sm:$0xff] %vm257, %v5567
      %5601 = vst.msk [vmem:[%s5590 + $0x50] sm:$0xff] %vm257, %v5568
      %5602 = vst.msk [vmem:[%s5590 + $0x58] sm:$0xff] %vm257, %v5569
      %5603 = vst.msk [vmem:[%s5590 + $0x60] sm:$0xff] %vm257, %v5570
      %5604 = vst.msk [vmem:[%s5590 + $0x68] sm:$0xff] %vm257, %v5571
      %5605 = vst.msk [vmem:[%s5590 + $0x70] sm:$0xff] %vm257, %v5572
      %5606 = vst.msk [vmem:[%s5590 + $0x78] sm:$0xff] %vm257, %v5573
      %5607 = vst.msk [vmem:[%s5590 + $0x80] sm:$0xff] %vm257, %v5574
      %5608 = vst.msk [vmem:[%s5590 + $0x88] sm:$0xff] %vm257, %v5575
      %5609 = vst.msk [vmem:[%s5590 + $0x90] sm:$0xff] %vm257, %v5576
      %5610 = vst.msk [vmem:[%s5590 + $0x98] sm:$0xff] %vm257, %v5577
      %5611 = vst.msk [vmem:[%s5590 + $0xa0] sm:$0xff] %vm257, %v5578
      %5612 = vst.msk [vmem:[%s5590 + $0xa8] sm:$0xff] %vm257, %v5579
      %5613 = vst.msk [vmem:[%s5590 + $0xb0] sm:$0xff] %vm257, %v5580
      %5614 = vst.msk [vmem:[%s5590 + $0xb8] sm:$0xff] %vm257, %v5581
      %5615 = vst.msk [vmem:[%s5590 + $0xc0] sm:$0xff] %vm257, %v5582
      %5616 = vst.msk [vmem:[%s5590 + $0xc8] sm:$0xff] %vm257, %v5583
      %5617 = vst.msk [vmem:[%s5590 + $0xd0] sm:$0xff] %vm257, %v5584
      %5618 = vst.msk [vmem:[%s5590 + $0xd8] sm:$0xff] %vm257, %v5585
      %5619 = vst.msk [vmem:[%s5590 + $0xe0] sm:$0xff] %vm257, %v5586
      %5620 = vst.msk [vmem:[%s5590 + $0xe8] sm:$0xff] %vm257, %v5587
      %5621 = vst.msk [vmem:[%s5590 + $0xf0] sm:$0xff] %vm257, %v5588
      %5622 = vst.msk [vmem:[%s5590 + $0xf8] sm:$0xff] %vm257, %v5589
      %v5623 = vld [vmem:[%s1310] sm:$0xff]
      %v5624 = vld [vmem:[%s1310 + $0x8] sm:$0xff]
      %v5625 = vld [vmem:[%s1310 + $0x10] sm:$0xff]
      %v5626 = vld [vmem:[%s1310 + $0x18] sm:$0xff]
      %v5627 = vld [vmem:[%s1310 + $0x20] sm:$0xff]
      %v5628 = vld [vmem:[%s1310 + $0x28] sm:$0xff]
      %v5629 = vld [vmem:[%s1310 + $0x30] sm:$0xff]
      %v5630 = vld [vmem:[%s1310 + $0x38] sm:$0xff]
      %v5631 = vld [vmem:[%s1310 + $0x40] sm:$0xff]
      %v5632 = vld [vmem:[%s1310 + $0x48] sm:$0xff]
      %v5633 = vld [vmem:[%s1310 + $0x50] sm:$0xff]
      %v5634 = vld [vmem:[%s1310 + $0x58] sm:$0xff]
      %v5635 = vld [vmem:[%s1310 + $0x60] sm:$0xff]
      %v5636 = vld [vmem:[%s1310 + $0x68] sm:$0xff]
      %v5637 = vld [vmem:[%s1310 + $0x70] sm:$0xff]
      %v5638 = vld [vmem:[%s1310 + $0x78] sm:$0xff]
      %v5639 = vld [vmem:[%s1310 + $0x80] sm:$0xff]
      %v5640 = vld [vmem:[%s1310 + $0x88] sm:$0xff]
      %v5641 = vld [vmem:[%s1310 + $0x90] sm:$0xff]
      %v5642 = vld [vmem:[%s1310 + $0x98] sm:$0xff]
      %v5643 = vld [vmem:[%s1310 + $0xa0] sm:$0xff]
      %v5644 = vld [vmem:[%s1310 + $0xa8] sm:$0xff]
      %v5645 = vld [vmem:[%s1310 + $0xb0] sm:$0xff]
      %v5646 = vld [vmem:[%s1310 + $0xb8] sm:$0xff]
      %v5647 = vld [vmem:[%s1310 + $0xc0] sm:$0xff]
      %v5648 = vld [vmem:[%s1310 + $0xc8] sm:$0xff]
      %v5649 = vld [vmem:[%s1310 + $0xd0] sm:$0xff]
      %v5650 = vld [vmem:[%s1310 + $0xd8] sm:$0xff]
      %v5651 = vld [vmem:[%s1310 + $0xe0] sm:$0xff]
      %v5652 = vld [vmem:[%s1310 + $0xe8] sm:$0xff]
      %v5653 = vld [vmem:[%s1310 + $0xf0] sm:$0xff]
      %v5654 = vld [vmem:[%s1310 + $0xf8] sm:$0xff]
      %v5655 = vld [vmem:[%s4] sm:$0x1]
      %v5657 = vperm.slane %v5655, 0
      %v5659 = vadd.f32 %v5623, %v5657
      %v5660 = vadd.f32 %v5624, %v5657
      %v5661 = vadd.f32 %v5625, %v5657
      %v5662 = vadd.f32 %v5626, %v5657
      %v5663 = vadd.f32 %v5627, %v5657
      %v5664 = vadd.f32 %v5628, %v5657
      %v5665 = vadd.f32 %v5629, %v5657
      %v5666 = vadd.f32 %v5630, %v5657
      %v5667 = vadd.f32 %v5631, %v5657
      %v5668 = vadd.f32 %v5632, %v5657
      %v5669 = vadd.f32 %v5633, %v5657
      %v5670 = vadd.f32 %v5634, %v5657
      %v5671 = vadd.f32 %v5635, %v5657
      %v5672 = vadd.f32 %v5636, %v5657
      %v5673 = vadd.f32 %v5637, %v5657
      %v5674 = vadd.f32 %v5638, %v5657
      %v5675 = vadd.f32 %v5639, %v5657
      %v5676 = vadd.f32 %v5640, %v5657
      %v5677 = vadd.f32 %v5641, %v5657
      %v5678 = vadd.f32 %v5642, %v5657
      %v5679 = vadd.f32 %v5643, %v5657
      %v5680 = vadd.f32 %v5644, %v5657
      %v5681 = vadd.f32 %v5645, %v5657
      %v5682 = vadd.f32 %v5646, %v5657
      %v5683 = vadd.f32 %v5647, %v5657
      %v5684 = vadd.f32 %v5648, %v5657
      %v5685 = vadd.f32 %v5649, %v5657
      %v5686 = vadd.f32 %v5650, %v5657
      %v5687 = vadd.f32 %v5651, %v5657
      %v5688 = vadd.f32 %v5652, %v5657
      %v5689 = vadd.f32 %v5653, %v5657
      %v5690 = vadd.f32 %v5654, %v5657
      %s5691 = scalar_lea.vmem %s224, 512
      %5692 = vst.msk [vmem:[%s5691] sm:$0xff] %vm257, %v5659
      %5693 = vst.msk [vmem:[%s5691 + $0x8] sm:$0xff] %vm257, %v5660
      %5694 = vst.msk [vmem:[%s5691 + $0x10] sm:$0xff] %vm257, %v5661
      %5695 = vst.msk [vmem:[%s5691 + $0x18] sm:$0xff] %vm257, %v5662
      %5696 = vst.msk [vmem:[%s5691 + $0x20] sm:$0xff] %vm257, %v5663
      %5697 = vst.msk [vmem:[%s5691 + $0x28] sm:$0xff] %vm257, %v5664
      %5698 = vst.msk [vmem:[%s5691 + $0x30] sm:$0xff] %vm257, %v5665
      %5699 = vst.msk [vmem:[%s5691 + $0x38] sm:$0xff] %vm257, %v5666
      %5700 = vst.msk [vmem:[%s5691 + $0x40] sm:$0xff] %vm257, %v5667
      %5701 = vst.msk [vmem:[%s5691 + $0x48] sm:$0xff] %vm257, %v5668
      %5702 = vst.msk [vmem:[%s5691 + $0x50] sm:$0xff] %vm257, %v5669
      %5703 = vst.msk [vmem:[%s5691 + $0x58] sm:$0xff] %vm257, %v5670
      %5704 = vst.msk [vmem:[%s5691 + $0x60] sm:$0xff] %vm257, %v5671
      %5705 = vst.msk [vmem:[%s5691 + $0x68] sm:$0xff] %vm257, %v5672
      %5706 = vst.msk [vmem:[%s5691 + $0x70] sm:$0xff] %vm257, %v5673
      %5707 = vst.msk [vmem:[%s5691 + $0x78] sm:$0xff] %vm257, %v5674
      %5708 = vst.msk [vmem:[%s5691 + $0x80] sm:$0xff] %vm257, %v5675
      %5709 = vst.msk [vmem:[%s5691 + $0x88] sm:$0xff] %vm257, %v5676
      %5710 = vst.msk [vmem:[%s5691 + $0x90] sm:$0xff] %vm257, %v5677
      %5711 = vst.msk [vmem:[%s5691 + $0x98] sm:$0xff] %vm257, %v5678
      %5712 = vst.msk [vmem:[%s5691 + $0xa0] sm:$0xff] %vm257, %v5679
      %5713 = vst.msk [vmem:[%s5691 + $0xa8] sm:$0xff] %vm257, %v5680
      %5714 = vst.msk [vmem:[%s5691 + $0xb0] sm:$0xff] %vm257, %v5681
      %5715 = vst.msk [vmem:[%s5691 + $0xb8] sm:$0xff] %vm257, %v5682
      %5716 = vst.msk [vmem:[%s5691 + $0xc0] sm:$0xff] %vm257, %v5683
      %5717 = vst.msk [vmem:[%s5691 + $0xc8] sm:$0xff] %vm257, %v5684
      %5718 = vst.msk [vmem:[%s5691 + $0xd0] sm:$0xff] %vm257, %v5685
      %5719 = vst.msk [vmem:[%s5691 + $0xd8] sm:$0xff] %vm257, %v5686
      %5720 = vst.msk [vmem:[%s5691 + $0xe0] sm:$0xff] %vm257, %v5687
      %5721 = vst.msk [vmem:[%s5691 + $0xe8] sm:$0xff] %vm257, %v5688
      %5722 = vst.msk [vmem:[%s5691 + $0xf0] sm:$0xff] %vm257, %v5689
      %5723 = vst.msk [vmem:[%s5691 + $0xf8] sm:$0xff] %vm257, %v5690
      %v5724 = vld [vmem:[%s1439] sm:$0xff]
      %v5725 = vld [vmem:[%s1439 + $0x8] sm:$0xff]
      %v5726 = vld [vmem:[%s1439 + $0x10] sm:$0xff]
      %v5727 = vld [vmem:[%s1439 + $0x18] sm:$0xff]
      %v5728 = vld [vmem:[%s1439 + $0x20] sm:$0xff]
      %v5729 = vld [vmem:[%s1439 + $0x28] sm:$0xff]
      %v5730 = vld [vmem:[%s1439 + $0x30] sm:$0xff]
      %v5731 = vld [vmem:[%s1439 + $0x38] sm:$0xff]
      %v5732 = vld [vmem:[%s1439 + $0x40] sm:$0xff]
      %v5733 = vld [vmem:[%s1439 + $0x48] sm:$0xff]
      %v5734 = vld [vmem:[%s1439 + $0x50] sm:$0xff]
      %v5735 = vld [vmem:[%s1439 + $0x58] sm:$0xff]
      %v5736 = vld [vmem:[%s1439 + $0x60] sm:$0xff]
      %v5737 = vld [vmem:[%s1439 + $0x68] sm:$0xff]
      %v5738 = vld [vmem:[%s1439 + $0x70] sm:$0xff]
      %v5739 = vld [vmem:[%s1439 + $0x78] sm:$0xff]
      %v5740 = vld [vmem:[%s1439 + $0x80] sm:$0xff]
      %v5741 = vld [vmem:[%s1439 + $0x88] sm:$0xff]
      %v5742 = vld [vmem:[%s1439 + $0x90] sm:$0xff]
      %v5743 = vld [vmem:[%s1439 + $0x98] sm:$0xff]
      %v5744 = vld [vmem:[%s1439 + $0xa0] sm:$0xff]
      %v5745 = vld [vmem:[%s1439 + $0xa8] sm:$0xff]
      %v5746 = vld [vmem:[%s1439 + $0xb0] sm:$0xff]
      %v5747 = vld [vmem:[%s1439 + $0xb8] sm:$0xff]
      %v5748 = vld [vmem:[%s1439 + $0xc0] sm:$0xff]
      %v5749 = vld [vmem:[%s1439 + $0xc8] sm:$0xff]
      %v5750 = vld [vmem:[%s1439 + $0xd0] sm:$0xff]
      %v5751 = vld [vmem:[%s1439 + $0xd8] sm:$0xff]
      %v5752 = vld [vmem:[%s1439 + $0xe0] sm:$0xff]
      %v5753 = vld [vmem:[%s1439 + $0xe8] sm:$0xff]
      %v5754 = vld [vmem:[%s1439 + $0xf0] sm:$0xff]
      %v5755 = vld [vmem:[%s1439 + $0xf8] sm:$0xff]
      %v5756 = vld [vmem:[%s4] sm:$0x1]
      %v5758 = vperm.slane %v5756, 0
      %v5760 = vadd.f32 %v5724, %v5758
      %v5761 = vadd.f32 %v5725, %v5758
      %v5762 = vadd.f32 %v5726, %v5758
      %v5763 = vadd.f32 %v5727, %v5758
      %v5764 = vadd.f32 %v5728, %v5758
      %v5765 = vadd.f32 %v5729, %v5758
      %v5766 = vadd.f32 %v5730, %v5758
      %v5767 = vadd.f32 %v5731, %v5758
      %v5768 = vadd.f32 %v5732, %v5758
      %v5769 = vadd.f32 %v5733, %v5758
      %v5770 = vadd.f32 %v5734, %v5758
      %v5771 = vadd.f32 %v5735, %v5758
      %v5772 = vadd.f32 %v5736, %v5758
      %v5773 = vadd.f32 %v5737, %v5758
      %v5774 = vadd.f32 %v5738, %v5758
      %v5775 = vadd.f32 %v5739, %v5758
      %v5776 = vadd.f32 %v5740, %v5758
      %v5777 = vadd.f32 %v5741, %v5758
      %v5778 = vadd.f32 %v5742, %v5758
      %v5779 = vadd.f32 %v5743, %v5758
      %v5780 = vadd.f32 %v5744, %v5758
      %v5781 = vadd.f32 %v5745, %v5758
      %v5782 = vadd.f32 %v5746, %v5758
      %v5783 = vadd.f32 %v5747, %v5758
      %v5784 = vadd.f32 %v5748, %v5758
      %v5785 = vadd.f32 %v5749, %v5758
      %v5786 = vadd.f32 %v5750, %v5758
      %v5787 = vadd.f32 %v5751, %v5758
      %v5788 = vadd.f32 %v5752, %v5758
      %v5789 = vadd.f32 %v5753, %v5758
      %v5790 = vadd.f32 %v5754, %v5758
      %v5791 = vadd.f32 %v5755, %v5758
      %s5792 = scalar_lea.vmem %s224, 768
      %5793 = vst.msk [vmem:[%s5792] sm:$0xff] %vm257, %v5760
      %5794 = vst.msk [vmem:[%s5792 + $0x8] sm:$0xff] %vm257, %v5761
      %5795 = vst.msk [vmem:[%s5792 + $0x10] sm:$0xff] %vm257, %v5762
      %5796 = vst.msk [vmem:[%s5792 + $0x18] sm:$0xff] %vm257, %v5763
      %5797 = vst.msk [vmem:[%s5792 + $0x20] sm:$0xff] %vm257, %v5764
      %5798 = vst.msk [vmem:[%s5792 + $0x28] sm:$0xff] %vm257, %v5765
      %5799 = vst.msk [vmem:[%s5792 + $0x30] sm:$0xff] %vm257, %v5766
      %5800 = vst.msk [vmem:[%s5792 + $0x38] sm:$0xff] %vm257, %v5767
      %5801 = vst.msk [vmem:[%s5792 + $0x40] sm:$0xff] %vm257, %v5768
      %5802 = vst.msk [vmem:[%s5792 + $0x48] sm:$0xff] %vm257, %v5769
      %5803 = vst.msk [vmem:[%s5792 + $0x50] sm:$0xff] %vm257, %v5770
      %5804 = vst.msk [vmem:[%s5792 + $0x58] sm:$0xff] %vm257, %v5771
      %5805 = vst.msk [vmem:[%s5792 + $0x60] sm:$0xff] %vm257, %v5772
      %5806 = vst.msk [vmem:[%s5792 + $0x68] sm:$0xff] %vm257, %v5773
      %5807 = vst.msk [vmem:[%s5792 + $0x70] sm:$0xff] %vm257, %v5774
      %5808 = vst.msk [vmem:[%s5792 + $0x78] sm:$0xff] %vm257, %v5775
      %5809 = vst.msk [vmem:[%s5792 + $0x80] sm:$0xff] %vm257, %v5776
      %5810 = vst.msk [vmem:[%s5792 + $0x88] sm:$0xff] %vm257, %v5777
      %5811 = vst.msk [vmem:[%s5792 + $0x90] sm:$0xff] %vm257, %v5778
      %5812 = vst.msk [vmem:[%s5792 + $0x98] sm:$0xff] %vm257, %v5779
      %5813 = vst.msk [vmem:[%s5792 + $0xa0] sm:$0xff] %vm257, %v5780
      %5814 = vst.msk [vmem:[%s5792 + $0xa8] sm:$0xff] %vm257, %v5781
      %5815 = vst.msk [vmem:[%s5792 + $0xb0] sm:$0xff] %vm257, %v5782
      %5816 = vst.msk [vmem:[%s5792 + $0xb8] sm:$0xff] %vm257, %v5783
      %5817 = vst.msk [vmem:[%s5792 + $0xc0] sm:$0xff] %vm257, %v5784
      %5818 = vst.msk [vmem:[%s5792 + $0xc8] sm:$0xff] %vm257, %v5785
      %5819 = vst.msk [vmem:[%s5792 + $0xd0] sm:$0xff] %vm257, %v5786
      %5820 = vst.msk [vmem:[%s5792 + $0xd8] sm:$0xff] %vm257, %v5787
      %5821 = vst.msk [vmem:[%s5792 + $0xe0] sm:$0xff] %vm257, %v5788
      %5822 = vst.msk [vmem:[%s5792 + $0xe8] sm:$0xff] %vm257, %v5789
      %5823 = vst.msk [vmem:[%s5792 + $0xf0] sm:$0xff] %vm257, %v5790
      %5824 = vst.msk [vmem:[%s5792 + $0xf8] sm:$0xff] %vm257, %v5791
      %p5825 = scmp.lt.s32.totalorder %s16, 1
      %s5826 = scalar_select %p5825, %s16, 1
      %s5827 = smul.addr %s5826, 128
      %s5828 = smul.addr %s5827, 8
      %s5829 = scalar_lea.vmem %s5, %s5828
      // Predicated region
      $region41: #{upsample_forward.1} parent=39 // pred_check
        %p5830 = pneg %p144
      $region42: #{upsample_forward.1} parent=39 // pred_check_branch
        %5832 = sbr.rel (%p5830) target = $region44
      $region43: #{upsample_forward.1} parent=39 // pred_region
        _
      $region44: #{upsample_forward.1} parent=39 // pred_fallthru
        _
    $region40: #{upsample_forward.1} parent=5 // pred_fallthru
      _
    %p5833 = scmp.le.s32.totalorder 2, %s11
    // Predicated region
    $region45: #{upsample_forward.1} parent=5 // pred_check
      %p5834 = pneg %p5833
    $region46: #{upsample_forward.1} parent=5 // pred_check_branch
      %5836 = sbr.rel (%p5834) target = $region48
    $region47: #{upsample_forward.1} parent=5 // pred_region
      %s5837 = ssub.s32 %s11, 2
      // Predicated region
      $region49: #{upsample_forward.1} parent=47 // pred_check
        %p5838 = pneg %p150
      $region50: #{upsample_forward.1} parent=47 // pred_check_branch
        %5840 = sbr.rel (%p5838) target = $region52
      $region51: #{upsample_forward.1} parent=47 // pred_region
        %p5841 = scmp.lt.s32.totalorder %s17, 1
        %s5842 = scalar_select %p5841, %s17, 1
        %s5843 = smul.addr %s5842, 128
        %s5844 = smul.addr %s5843, 8
        %s5845 = scalar_lea.vmem %s5, %s5844
      $region52: #{upsample_forward.1} parent=47 // pred_fallthru
        _
    $region48: #{upsample_forward.1} parent=5 // pred_fallthru
      _
  $region6: #{upsample_forward.1} parent=0 // loop_footer
    %s15 = sadd.s32 1, %s11
  $region7: #{upsample_forward.1} parent=0 // loop_footer_branch
    %10 = sbr.rel target = $region3
  $region8: #{upsample_forward.1} parent=0 // loop_exit
    _

</llo_original>
